<compile_context>
chip_gen: v5e
topology: v5e:2x2
jax: 0.10.0
libtpu: 0.0.40
codegen_flags: <defaults>
</compile_context>

<pallas_src>
import functools

import jax
import jax.numpy as jnp
import numpy as np
from jax import lax
from jax.experimental import pallas as pl
from jax.experimental.pallas import tpu as pltpu


# Raised from 32 MiB per the review (128 MiB physical on v5e/v6e, 64 MiB per
# TC on v7x).  Per-step usage with the tile sizes below is <= ~12 MiB.
_VMEM_LIMIT = 48 * 1024 * 1024


def _round_up(x, m):
    return (x + m - 1) // m * m


def _pick_th(h, cap):
    """Largest divisor of h that is a multiple of 4 and <= cap (output rows/step)."""
    th = min(cap, h)
    while h % th or th % 4:
        th -= 1
    return th


# ----------------------------------------------------------------------------
# Kernels
# ----------------------------------------------------------------------------
def _conv_taps(xa_ref, xb_ref, w_ref, b_ref, fold):
    """relu(conv3x3_same + bias) for one flattened row tile.

    xa_ref: (TH*Wp, Cin)  bf16, padded rows [t*TH, t*TH+TH) of the image, flat.
    xb_ref: (4*Wp, Cin)   bf16, the next 4 padded rows (halo; only 2 + 2 flat
                          elements are actually consumed, the rest is slack so
                          every tap slice stays in bounds).
    w_ref:  fold -> (9*Cin, Cout), else (9, Cin, Cout)   bf16.
    b_ref:  (1, Cout) f32.
    Returns a (TH*Wp, Cout) f32 tile.  Columns w >= W of every row are garbage
    (conv of the zero padding) and MUST be sliced off by the wrapper.
    """
    M = xa_ref.shape[0]                       # TH * Wp
    Wp = xb_ref.shape[0] // 4

    # One concat per step; every tap operand below is a view/aligned slice.
    ext = jnp.concatenate([xa_ref[...], xb_ref[...]], axis=0)   # (M + 4*Wp, Cin)
    n = M + 2 * Wp
    # dx-shifted windows, built once (dx = 1, 2 cost one realigning copy each).
    wins = [ext[dx:dx + n] for dx in range(3)]

    if fold:
        # All 9 taps folded into K; for Cin=128 every piece is 128-lane aligned
        # so this is plain copies, and the MXU sees a single K=1152 dot.
        patch = jnp.concatenate(
            [wins[dx][dy * Wp:dy * Wp + M] for dy in range(3) for dx in range(3)],
            axis=-1)                                             # (M, 9*Cin)
        acc = jnp.dot(patch, w_ref[...], preferred_element_type=jnp.float32)
    else:
        # 9 aligned K=Cin dots (dy*Wp is a multiple of 8 -> whole-vreg offsets),
        # accumulated in f32.  No patch materialization at all.
        acc = None
        for dy in range(3):
            for dx in range(3):
                part = jnp.dot(wins[dx][dy * Wp:dy * Wp + M],
                               w_ref[dy * 3 + dx],
                               preferred_element_type=jnp.float32)
                acc = part if acc is None else acc + part

    return jnp.maximum(acc + b_ref[...], 0.0)                    # (M, Cout) f32


def _conv3x3_relu_kernel(xa_ref, xb_ref, w_ref, b_ref, o_ref, *, fold):
    """Conv3x3 + ReLU.  o_ref block: (TH*Wp, Cout) (flat row tile)."""
    y = _conv_taps(xa_ref, xb_ref, w_ref, b_ref, fold)
    o_ref[...] = y.astype(o_ref.dtype)


def _conv3x3_relu_pool_kernel(xa_ref, xb_ref, w_ref, b_ref, o_ref, rm_ref, *, fold):
    """Conv3x3 + ReLU + fused 2x2/2 maxpool.

    o_ref:  (TH//2, Wp//2, Cout)
    rm_ref: VMEM scratch (TH//2, Wp, Cout) f32 (row-pooled intermediate; only
            the already half-sized row-pooled tile round-trips through it).
    """
    M = xa_ref.shape[0]
    Wp = xb_ref.shape[0] // 4
    TH = M // Wp
    Cout = o_ref.shape[-1]

    y = _conv_taps(xa_ref, xb_ref, w_ref, b_ref, fold)           # (TH*Wp, Cout)
    # Row-direction pool: adjacent row pairs sit Wp apart in the flat layout,
    # so a free leading-axis reshape + aligned max does it.
    yr = y.reshape(TH // 2, 2 * Wp, Cout)
    rm_ref[...] = jnp.maximum(yr[:, :Wp, :], yr[:, Wp:, :])      # (TH/2, Wp, Cout)
    # Column-direction pool via stride-2 reads of the scratch.
    pooled = jnp.maximum(rm_ref[:, pl.ds(0, Wp // 2, stride=2), :],
                         rm_ref[:, pl.ds(1, Wp // 2, stride=2), :])
    o_ref[...] = pooled.astype(o_ref.dtype)


def _matmul_bias_relu_kernel(x_ref, w_ref, b_ref, o_ref):
    """Layer 1: plain relu(x @ w + b) over one flat row tile."""
    acc = jnp.dot(x_ref[...], w_ref[...], preferred_element_type=jnp.float32)
    o_ref[...] = jnp.maximum(acc + b_ref[...], 0.0).astype(o_ref.dtype)


# ----------------------------------------------------------------------------
# Wrappers
# ----------------------------------------------------------------------------
def conv3x3_relu(x, w, b, *, pool, fold, th_cap=32):
    """x: (N,H,W,Cin) (Cin % 8 == 0), w: (3,3,Cin,Cout), b: (Cout,).

    Returns relu(conv3x3_same(x) + b) (optionally followed by a fused 2x2/2
    maxpool) as an (N, H', W', Cout) bf16 array.
    """
    N, H, W, Cin = x.shape
    Cout = w.shape[-1]
    assert w.shape[:3] == (3, 3, Cin)
    assert Cin % 8 == 0
    assert H % 4 == 0, "row tiling requires H to be a multiple of 4"
    assert (not pool) or (W % 2 == 0)

    Wp = _round_up(W + 2, 8)          # padded row width (>= W+2, sublane mult.)
    TH = _pick_th(H, th_cap)          # output rows per grid step
    assert TH % 4 == 0 and H % TH == 0      # halo block below is 4*Wp flat rows
    T = H // TH
    M = TH * Wp

    # Zero pad: 1 top row, 3 bottom rows (the 4-row halo of the last tile must
    # stay in bounds), 1 left column, Wp-1-W right columns; flatten rows.
    xp = jnp.pad(x, ((0, 0), (1, 3), (1, Wp - 1 - W), (0, 0))).astype(jnp.bfloat16)
    xf = xp.reshape(N, (H + 4) * Wp, Cin)                         # flat layout

    b2 = b.reshape(1, Cout).astype(jnp.float32)
    if fold:
        wk = w.reshape(9 * Cin, Cout).astype(jnp.bfloat16)        # K = 9*Cin
        w_spec = pl.BlockSpec((9 * Cin, Cout), lambda n, t: (0, 0))
    else:
        wk = w.reshape(9, Cin, Cout).astype(jnp.bfloat16)         # 9 taps, K=Cin
        w_spec = pl.BlockSpec((9, Cin, Cout), lambda n, t: (0, 0, 0))

    in_specs = [
        # Main TH-row block (flat).
        pl.BlockSpec((None, M, Cin), lambda n, t: (n, t, 0)),
        # 4-padded-row halo right below it (block units of 4*Wp flat rows; the
        # index map relies on TH % 4 == 0 -- see the assert above).
        pl.BlockSpec((None, 4 * Wp, Cin), lambda n, t: (n, (t + 1) * (TH // 4), 0)),
        w_spec,
        pl.BlockSpec((1, Cout), lambda n, t: (0, 0)),
    ]
    cp = pltpu.CompilerParams(
        dimension_semantics=("parallel", "parallel"),
        vmem_limit_bytes=_VMEM_LIMIT)

    if pool:
        out = pl.pallas_call(
            functools.partial(_conv3x3_relu_pool_kernel, fold=fold),
            out_shape=jax.ShapeDtypeStruct((N, H // 2, Wp // 2, Cout), jnp.bfloat16),
            grid=(N, T),
            in_specs=in_specs,
            out_specs=pl.BlockSpec((None, TH // 2, Wp // 2, Cout),
                                   lambda n, t: (n, t, 0, 0)),
            scratch_shapes=[pltpu.VMEM((TH // 2, Wp, Cout), jnp.float32)],
            compiler_params=cp,
        )(xf, xf, wk, b2)
        # Columns >= W//2 hold conv-of-padding garbage; they MUST be sliced off.
        return out[:, :, :W // 2, :]

    out = pl.pallas_call(
        functools.partial(_conv3x3_relu_kernel, fold=fold),
        out_shape=jax.ShapeDtypeStruct((N, H * Wp, Cout), jnp.bfloat16),
        grid=(N, T),
        in_specs=in_specs,
        out_specs=pl.BlockSpec((None, M, Cout), lambda n, t: (n, t, 0)),
        compiler_params=cp,
    )(xf, xf, wk, b2)
    out = out.reshape(N, H, Wp, Cout)       # free relabel of the flat layout
    # Columns >= W hold conv-of-padding garbage; they MUST be sliced off.
    return out[:, :, :W, :]


def conv3x3_relu_layer1(x, w, b, *, th_cap=32):
    """First conv (Cin=3).  The 3x3 patch (K=27 -> 32) is built wrapper-side
    (im2col over the tiny 3-channel input) so the kernel is a single dense
    matmul + bias + ReLU per row tile -- Cin=3 is too narrow to fold usefully
    in-kernel."""
    N, H, W, Cin = x.shape
    Cout = w.shape[-1]
    assert H % 4 == 0

    Wp = _round_up(W + 2, 8)
    TH = _pick_th(H, th_cap)
    T = H // TH
    M = TH * Wp

    xp = jnp.pad(x, ((0, 0), (1, 1), (1, Wp + 1 - W), (0, 0)))    # (N,H+2,Wp+2,Cin)
    patch = jnp.concatenate(
        [xp[:, dy:dy + H, dx:dx + Wp, :] for dy in range(3) for dx in range(3)],
        axis=-1)                                                  # (N,H,Wp,9*Cin)
    K = 9 * Cin
    Kp = _round_up(K, 8)
    if Kp != K:
        patch = jnp.pad(patch, ((0, 0), (0, 0), (0, 0), (0, Kp - K)))
    patch = patch.reshape(N, H * Wp, Kp).astype(jnp.bfloat16)

    wk = w.reshape(K, Cout)
    if Kp != K:
        wk = jnp.pad(wk, ((0, Kp - K), (0, 0)))
    wk = wk.astype(jnp.bfloat16)
    b2 = b.reshape(1, Cout).astype(jnp.float32)

    out = pl.pallas_call(
        _matmul_bias_relu_kernel,
        out_shape=jax.ShapeDtypeStruct((N, H * Wp, Cout), jnp.bfloat16),
        grid=(N, T),
        in_specs=[pl.BlockSpec((None, M, Kp), lambda n, t: (n, t, 0)),
                  pl.BlockSpec((Kp, Cout), lambda n, t: (0, 0)),
                  pl.BlockSpec((1, Cout), lambda n, t: (0, 0))],
        out_specs=pl.BlockSpec((None, M, Cout), lambda n, t: (n, t, 0)),
        compiler_params=pltpu.CompilerParams(
            dimension_semantics=("parallel", "parallel"),
            vmem_limit_bytes=_VMEM_LIMIT),
    )(patch, wk, b2)
    out = out.reshape(N, H, Wp, Cout)
    return out[:, :, :W, :]


# ----------------------------------------------------------------------------
# Vgg19.slice1 forward (features[0:12])
# ----------------------------------------------------------------------------
def vgg19_slice1(x_nchw, params):
    x = jnp.transpose(x_nchw, (0, 2, 3, 1))                        # NCHW -> NHWC
    x = conv3x3_relu_layer1(x, params["w1"], params["b1"], th_cap=32)
    x = conv3x3_relu(x, params["w2"], params["b2"], pool=True, fold=False)   # Cin=64
    x = conv3x3_relu(x, params["w3"], params["b3"], pool=False, fold=False)  # Cin=64
    x = conv3x3_relu(x, params["w4"], params["b4"], pool=True, fold=True)    # Cin=128
    x = conv3x3_relu(x, params["w5"], params["b5"], pool=False, fold=True)   # Cin=128
    return jnp.transpose(x, (0, 3, 1, 2)).astype(jnp.float32)      # -> NCHW


def init_params(key):
    # VGG19 features[0:12] conv shapes, stored as (kh, kw, Cin, Cout).
    shapes = [(3, 3, 3, 64), (3, 3, 64, 64), (3, 3, 64, 128),
              (3, 3, 128, 128), (3, 3, 128, 256)]
    params = {}
    for i, s in enumerate(shapes, start=1):
        key, kw_key, kb_key = jax.random.split(key, 3)
        fan_in = s[0] * s[1] * s[2]
        params[f"w{i}"] = (jax.random.normal(kw_key, s, jnp.float32)
                           * np.sqrt(2.0 / fan_in)).astype(jnp.float32)
        params[f"b{i}"] = (jax.random.normal(kb_key, (s[3],), jnp.float32)
                           * 0.01).astype(jnp.float32)
    return params


# ----------------------------------------------------------------------------
# Pure-JAX reference (mirrors the bf16-in / f32-accumulate MXU precision)
# ----------------------------------------------------------------------------
def _ref_forward(x_nchw, params):
    def conv(x, w, b):
        w_oihw = jnp.transpose(w, (3, 2, 0, 1)).astype(jnp.bfloat16)
        y = lax.conv_general_dilated(
            x.astype(jnp.bfloat16), w_oihw, window_strides=(1, 1),
            padding="SAME", dimension_numbers=("NCHW", "OIHW", "NCHW"),
            preferred_element_type=jnp.float32)
        return jnp.maximum(y + b[None, :, None, None], 0.0)

    def pool(x):
        return lax.reduce_window(x, -jnp.inf, lax.max,
                                 (1, 1, 2, 2), (1, 1, 2, 2), "VALID")

    x = conv(x_nchw, params["w1"], params["b1"])
    x = conv(x, params["w2"], params["b2"])
    x = pool(x)
    x = conv(x, params["w3"], params["b3"])
    x = conv(x, params["w4"], params["b4"])
    x = pool(x)
    x = conv(x, params["w5"], params["b5"])
    return x


if __name__ == "__main__":
    key = jax.random.PRNGKey(0)
    key, pkey, xkey = jax.random.split(key, 3)

    params = init_params(pkey)
    fwd = jax.jit(functools.partial(vgg19_slice1, params=params))

    # Small smoke test (batch=2) plus a taller / padded-width case that
    # exercises multiple row tiles per image (T=2, halo across tiles) and the
    # Wp > W+2 garbage-column path.
    cases = (((2, 3, 16, 16), (2, 256, 4, 4)),
             ((1, 3, 64, 48), (1, 256, 16, 12)))
    for i, (shape, expect) in enumerate(cases):
        x = jax.random.normal(jax.random.fold_in(xkey, i), shape, jnp.float32)
        out = jax.block_until_ready(fwd(x))
        assert out.shape == expect, (out.shape, expect)
        ref = jax.block_until_ready(_ref_forward(x, params))
        # bf16 MXU inputs on both sides; tolerance covers accumulation-order
        # and bf16 rounding differences vs the XLA reference.
        assert np.allclose(np.asarray(out), np.asarray(ref),
                           rtol=2e-2, atol=2e-2), f"mismatch vs reference {shape}"

    print("KERNEL_OK")
</pallas_src>

<mosaic_0001>
module attributes {stable_mosaic.version = 11 : i64} {
  func.func @_matmul_bias_relu_kernel(%arg0: i32, %arg1: i32, %arg2: memref<1x384x32xbf16, #tpu.memory_space<vmem>>, %arg3: memref<32x64xbf16, #tpu.memory_space<vmem>>, %arg4: memref<1x64xf32, #tpu.memory_space<vmem>>, %arg5: memref<1x384x64xbf16, #tpu.memory_space<vmem>>) attributes {dimension_semantics = [#tpu.dimension_semantics<parallel>, #tpu.dimension_semantics<parallel>], iteration_bounds = array<i64: 2, 1>, scalar_prefetch = 0 : i64, scratch_operands = 0 : i64, tpu.core_type = #tpu.core_type<tc>, window_params = [{transform_indices = @transform_0, window_bounds = array<i64: 1, 384, 32>}, {pipeline_mode = #tpu.pipeline_mode<synchronous>, transform_indices = @transform_1, window_bounds = array<i64: 32, 64>}, {pipeline_mode = #tpu.pipeline_mode<synchronous>, transform_indices = @transform_2, window_bounds = array<i64: 1, 64>}, {transform_indices = @transform_3, window_bounds = array<i64: 1, 384, 64>}]} {
    %c0 = arith.constant 0 : index
    %c0_0 = arith.constant 0 : index
    %c0_1 = arith.constant 0 : index
    %0 = vector.load %arg2[%c0, %c0_0, %c0_1] : memref<1x384x32xbf16, #tpu.memory_space<vmem>>, vector<1x384x32xbf16>
    %1 = vector.shape_cast %0 : vector<1x384x32xbf16> to vector<384x32xbf16>
    %c0_2 = arith.constant 0 : index
    %c0_3 = arith.constant 0 : index
    %2 = vector.load %arg3[%c0_2, %c0_3] : memref<32x64xbf16, #tpu.memory_space<vmem>>, vector<32x64xbf16>
    %cst = arith.constant dense<0.000000e+00> : vector<384x64xf32>
    %3 = tpu.matmul %1, %2, %cst {dimension_numbers = #tpu.dot_dimension_numbers<[1], [0], [0], [1], [0, 0, 1, 1], [], []>} : vector<384x32xbf16>, vector<32x64xbf16>, vector<384x64xf32> -> vector<384x64xf32>
    %c0_4 = arith.constant 0 : index
    %c0_5 = arith.constant 0 : index
    %4 = vector.load %arg4[%c0_4, %c0_5] : memref<1x64xf32, #tpu.memory_space<vmem>>, vector<1x64xf32>
    %5 = vector.broadcast %4 : vector<1x64xf32> to vector<384x64xf32>
    %6 = arith.addf %3, %5 : vector<384x64xf32>
    %cst_6 = arith.constant 0.000000e+00 : f32
    %7 = vector.broadcast %cst_6 : f32 to vector<384x64xf32>
    %8 = arith.maximumf %6, %7 : vector<384x64xf32>
    %9 = arith.truncf %8 : vector<384x64xf32> to vector<384x64xbf16>
    %c0_7 = arith.constant 0 : index
    %c0_8 = arith.constant 0 : index
    %c0_9 = arith.constant 0 : index
    %10 = vector.load %arg5[%c0_7, %c0_8, %c0_9] : memref<1x384x64xbf16, #tpu.memory_space<vmem>>, vector<1x384x64xbf16>
    %11 = vector.shape_cast %10 : vector<1x384x64xbf16> to vector<384x64xbf16>
    %12 = vector.shape_cast %9 : vector<384x64xbf16> to vector<1x384x64xbf16>
    tpu.vector_store %arg5[%c0_7, %c0_8, %c0_9], %12 {strides = array<i32>} : memref<1x384x64xbf16, #tpu.memory_space<vmem>>, vector<1x384x64xbf16>,
    return
  }
  func.func @transform_0(%arg0: i32, %arg1: i32) -> (i32, i32, i32) {
    %c0_i32 = arith.constant 0 : i32
    %c0_i32_0 = arith.constant 0 : i32
    return %arg0, %arg1, %c0_i32 : i32, i32, i32
  }
  func.func @transform_1(%arg0: i32, %arg1: i32) -> (i32, i32) {
    %c0_i32 = arith.constant 0 : i32
    %c0_i32_0 = arith.constant 0 : i32
    %c0_i32_1 = arith.constant 0 : i32
    return %c0_i32, %c0_i32_0 : i32, i32
  }
  func.func @transform_2(%arg0: i32, %arg1: i32) -> (i32, i32) {
    %c0_i32 = arith.constant 0 : i32
    %c0_i32_0 = arith.constant 0 : i32
    %c0_i32_1 = arith.constant 0 : i32
    return %c0_i32, %c0_i32_0 : i32, i32
  }
  func.func @transform_3(%arg0: i32, %arg1: i32) -> (i32, i32, i32) {
    %c0_i32 = arith.constant 0 : i32
    %c0_i32_0 = arith.constant 0 : i32
    return %arg0, %arg1, %c0_i32 : i32, i32, i32
  }
}

module attributes {stable_mosaic.version = 11 : i64} {
  func.func @_conv3x3_relu_pool_kernel(%arg0: i32, %arg1: i32, %arg2: memref<1x384x64xbf16, #tpu.memory_space<vmem>>, %arg3: memref<1x96x64xbf16, #tpu.memory_space<vmem>>, %arg4: memref<9x64x64xbf16, #tpu.memory_space<vmem>>, %arg5: memref<1x64xf32, #tpu.memory_space<vmem>>, %arg6: memref<1x8x12x64xbf16, #tpu.memory_space<vmem>>, %arg7: memref<8x24x64xf32, #tpu.memory_space<vmem>>) attributes {dimension_semantics = [#tpu.dimension_semantics<parallel>, #tpu.dimension_semantics<parallel>], iteration_bounds = array<i64: 2, 1>, scalar_prefetch = 0 : i64, scratch_operands = 1 : i64, tpu.core_type = #tpu.core_type<tc>, window_params = [{transform_indices = @transform_0, window_bounds = array<i64: 1, 384, 64>}, {transform_indices = @transform_1, window_bounds = array<i64: 1, 96, 64>}, {pipeline_mode = #tpu.pipeline_mode<synchronous>, transform_indices = @transform_2, window_bounds = array<i64: 9, 64, 64>}, {pipeline_mode = #tpu.pipeline_mode<synchronous>, transform_indices = @transform_3, window_bounds = array<i64: 1, 64>}, {transform_indices = @transform_4, window_bounds = array<i64: 1, 8, 12, 64>}]} {
    %c0 = arith.constant 0 : index
    %c0_0 = arith.constant 0 : index
    %c0_1 = arith.constant 0 : index
    %0 = vector.load %arg2[%c0, %c0_0, %c0_1] : memref<1x384x64xbf16, #tpu.memory_space<vmem>>, vector<1x384x64xbf16>
    %1 = vector.shape_cast %0 : vector<1x384x64xbf16> to vector<384x64xbf16>
    %c0_2 = arith.constant 0 : index
    %c0_3 = arith.constant 0 : index
    %c0_4 = arith.constant 0 : index
    %2 = vector.load %arg3[%c0_2, %c0_3, %c0_4] : memref<1x96x64xbf16, #tpu.memory_space<vmem>>, vector<1x96x64xbf16>
    %3 = vector.shape_cast %2 : vector<1x96x64xbf16> to vector<96x64xbf16>
    %4 = tpu.concatenate %1, %3 in 0 : vector<384x64xbf16>, vector<96x64xbf16> -> vector<480x64xbf16>
    %5 = vector.extract_strided_slice %4 {offsets = [0, 0], sizes = [432, 64], strides = [1, 1]} : vector<480x64xbf16> to vector<432x64xbf16>
    %6 = vector.extract_strided_slice %4 {offsets = [1, 0], sizes = [432, 64], strides = [1, 1]} : vector<480x64xbf16> to vector<432x64xbf16>
    %7 = vector.extract_strided_slice %4 {offsets = [2, 0], sizes = [432, 64], strides = [1, 1]} : vector<480x64xbf16> to vector<432x64xbf16>
    %8 = vector.extract_strided_slice %5 {offsets = [0, 0], sizes = [384, 64], strides = [1, 1]} : vector<432x64xbf16> to vector<384x64xbf16>
    %c0_5 = arith.constant 0 : index
    %c0_6 = arith.constant 0 : index
    %c0_7 = arith.constant 0 : index
    %9 = vector.load %arg4[%c0_5, %c0_6, %c0_7] : memref<9x64x64xbf16, #tpu.memory_space<vmem>>, vector<1x64x64xbf16>
    %10 = vector.shape_cast %9 : vector<1x64x64xbf16> to vector<64x64xbf16>
    %cst = arith.constant dense<0.000000e+00> : vector<384x64xf32>
    %11 = tpu.matmul %8, %10, %cst {dimension_numbers = #tpu.dot_dimension_numbers<[1], [0], [0], [1], [0, 0, 1, 1], [], []>} : vector<384x64xbf16>, vector<64x64xbf16>, vector<384x64xf32> -> vector<384x64xf32>
    %12 = vector.extract_strided_slice %6 {offsets = [0, 0], sizes = [384, 64], strides = [1, 1]} : vector<432x64xbf16> to vector<384x64xbf16>
    %c1 = arith.constant 1 : index
    %c0_8 = arith.constant 0 : index
    %c0_9 = arith.constant 0 : index
    %13 = vector.load %arg4[%c1, %c0_8, %c0_9] : memref<9x64x64xbf16, #tpu.memory_space<vmem>>, vector<1x64x64xbf16>
    %14 = vector.shape_cast %13 : vector<1x64x64xbf16> to vector<64x64xbf16>
    %cst_10 = arith.constant dense<0.000000e+00> : vector<384x64xf32>
    %15 = tpu.matmul %12, %14, %cst_10 {dimension_numbers = #tpu.dot_dimension_numbers<[1], [0], [0], [1], [0, 0, 1, 1], [], []>} : vector<384x64xbf16>, vector<64x64xbf16>, vector<384x64xf32> -> vector<384x64xf32>
    %16 = arith.addf %11, %15 : vector<384x64xf32>
    %17 = vector.extract_strided_slice %7 {offsets = [0, 0], sizes = [384, 64], strides = [1, 1]} : vector<432x64xbf16> to vector<384x64xbf16>
    %c2 = arith.constant 2 : index
    %c0_11 = arith.constant 0 : index
    %c0_12 = arith.constant 0 : index
    %18 = vector.load %arg4[%c2, %c0_11, %c0_12] : memref<9x64x64xbf16, #tpu.memory_space<vmem>>, vector<1x64x64xbf16>
    %19 = vector.shape_cast %18 : vector<1x64x64xbf16> to vector<64x64xbf16>
    %cst_13 = arith.constant dense<0.000000e+00> : vector<384x64xf32>
    %20 = tpu.matmul %17, %19, %cst_13 {dimension_numbers = #tpu.dot_dimension_numbers<[1], [0], [0], [1], [0, 0, 1, 1], [], []>} : vector<384x64xbf16>, vector<64x64xbf16>, vector<384x64xf32> -> vector<384x64xf32>
    %21 = arith.addf %16, %20 : vector<384x64xf32>
    %22 = vector.extract_strided_slice %5 {offsets = [24, 0], sizes = [384, 64], strides = [1, 1]} : vector<432x64xbf16> to vector<384x64xbf16>
    %c3 = arith.constant 3 : index
    %c0_14 = arith.constant 0 : index
    %c0_15 = arith.constant 0 : index
    %23 = vector.load %arg4[%c3, %c0_14, %c0_15] : memref<9x64x64xbf16, #tpu.memory_space<vmem>>, vector<1x64x64xbf16>
    %24 = vector.shape_cast %23 : vector<1x64x64xbf16> to vector<64x64xbf16>
    %cst_16 = arith.constant dense<0.000000e+00> : vector<384x64xf32>
    %25 = tpu.matmul %22, %24, %cst_16 {dimension_numbers = #tpu.dot_dimension_numbers<[1], [0], [0], [1], [0, 0, 1, 1], [], []>} : vector<384x64xbf16>, vector<64x64xbf16>, vector<384x64xf32> -> vector<384x64xf32>
    %26 = arith.addf %21, %25 : vector<384x64xf32>
    %27 = vector.extract_strided_slice %6 {offsets = [24, 0], sizes = [384, 64], strides = [1, 1]} : vector<432x64xbf16> to vector<384x64xbf16>
    %c4 = arith.constant 4 : index
    %c0_17 = arith.constant 0 : index
    %c0_18 = arith.constant 0 : index
    %28 = vector.load %arg4[%c4, %c0_17, %c0_18] : memref<9x64x64xbf16, #tpu.memory_space<vmem>>, vector<1x64x64xbf16>
    %29 = vector.shape_cast %28 : vector<1x64x64xbf16> to vector<64x64xbf16>
    %cst_19 = arith.constant dense<0.000000e+00> : vector<384x64xf32>
    %30 = tpu.matmul %27, %29, %cst_19 {dimension_numbers = #tpu.dot_dimension_numbers<[1], [0], [0], [1], [0, 0, 1, 1], [], []>} : vector<384x64xbf16>, vector<64x64xbf16>, vector<384x64xf32> -> vector<384x64xf32>
    %31 = arith.addf %26, %30 : vector<384x64xf32>
    %32 = vector.extract_strided_slice %7 {offsets = [24, 0], sizes = [384, 64], strides = [1, 1]} : vector<432x64xbf16> to vector<384x64xbf16>
    %c5 = arith.constant 5 : index
    %c0_20 = arith.constant 0 : index
    %c0_21 = arith.constant 0 : index
    %33 = vector.load %arg4[%c5, %c0_20, %c0_21] : memref<9x64x64xbf16, #tpu.memory_space<vmem>>, vector<1x64x64xbf16>
    %34 = vector.shape_cast %33 : vector<1x64x64xbf16> to vector<64x64xbf16>
    %cst_22 = arith.constant dense<0.000000e+00> : vector<384x64xf32>
    %35 = tpu.matmul %32, %34, %cst_22 {dimension_numbers = #tpu.dot_dimension_numbers<[1], [0], [0], [1], [0, 0, 1, 1], [], []>} : vector<384x64xbf16>, vector<64x64xbf16>, vector<384x64xf32> -> vector<384x64xf32>
    %36 = arith.addf %31, %35 : vector<384x64xf32>
    %37 = vector.extract_strided_slice %5 {offsets = [48, 0], sizes = [384, 64], strides = [1, 1]} : vector<432x64xbf16> to vector<384x64xbf16>
    %c6 = arith.constant 6 : index
    %c0_23 = arith.constant 0 : index
    %c0_24 = arith.constant 0 : index
    %38 = vector.load %arg4[%c6, %c0_23, %c0_24] : memref<9x64x64xbf16, #tpu.memory_space<vmem>>, vector<1x64x64xbf16>
    %39 = vector.shape_cast %38 : vector<1x64x64xbf16> to vector<64x64xbf16>
    %cst_25 = arith.constant dense<0.000000e+00> : vector<384x64xf32>
    %40 = tpu.matmul %37, %39, %cst_25 {dimension_numbers = #tpu.dot_dimension_numbers<[1], [0], [0], [1], [0, 0, 1, 1], [], []>} : vector<384x64xbf16>, vector<64x64xbf16>, vector<384x64xf32> -> vector<384x64xf32>
    %41 = arith.addf %36, %40 : vector<384x64xf32>
    %42 = vector.extract_strided_slice %6 {offsets = [48, 0], sizes = [384, 64], strides = [1, 1]} : vector<432x64xbf16> to vector<384x64xbf16>
    %c7 = arith.constant 7 : index
    %c0_26 = arith.constant 0 : index
    %c0_27 = arith.constant 0 : index
    %43 = vector.load %arg4[%c7, %c0_26, %c0_27] : memref<9x64x64xbf16, #tpu.memory_space<vmem>>, vector<1x64x64xbf16>
    %44 = vector.shape_cast %43 : vector<1x64x64xbf16> to vector<64x64xbf16>
    %cst_28 = arith.constant dense<0.000000e+00> : vector<384x64xf32>
    %45 = tpu.matmul %42, %44, %cst_28 {dimension_numbers = #tpu.dot_dimension_numbers<[1], [0], [0], [1], [0, 0, 1, 1], [], []>} : vector<384x64xbf16>, vector<64x64xbf16>, vector<384x64xf32> -> vector<384x64xf32>
    %46 = arith.addf %41, %45 : vector<384x64xf32>
    %47 = vector.extract_strided_slice %7 {offsets = [48, 0], sizes = [384, 64], strides = [1, 1]} : vector<432x64xbf16> to vector<384x64xbf16>
    %c8 = arith.constant 8 : index
    %c0_29 = arith.constant 0 : index
    %c0_30 = arith.constant 0 : index
    %48 = vector.load %arg4[%c8, %c0_29, %c0_30] : memref<9x64x64xbf16, #tpu.memory_space<vmem>>, vector<1x64x64xbf16>
    %49 = vector.shape_cast %48 : vector<1x64x64xbf16> to vector<64x64xbf16>
    %cst_31 = arith.constant dense<0.000000e+00> : vector<384x64xf32>
    %50 = tpu.matmul %47, %49, %cst_31 {dimension_numbers = #tpu.dot_dimension_numbers<[1], [0], [0], [1], [0, 0, 1, 1], [], []>} : vector<384x64xbf16>, vector<64x64xbf16>, vector<384x64xf32> -> vector<384x64xf32>
    %51 = arith.addf %46, %50 : vector<384x64xf32>
    %c0_32 = arith.constant 0 : index
    %c0_33 = arith.constant 0 : index
    %52 = vector.load %arg5[%c0_32, %c0_33] : memref<1x64xf32, #tpu.memory_space<vmem>>, vector<1x64xf32>
    %53 = vector.broadcast %52 : vector<1x64xf32> to vector<384x64xf32>
    %54 = arith.addf %51, %53 : vector<384x64xf32>
    %cst_34 = arith.constant 0.000000e+00 : f32
    %55 = vector.broadcast %cst_34 : f32 to vector<384x64xf32>
    %56 = arith.maximumf %54, %55 : vector<384x64xf32>
    %57 = vector.shape_cast %56 : vector<384x64xf32> to vector<8x48x64xf32>
    %58 = vector.extract_strided_slice %57 {offsets = [0, 0, 0], sizes = [8, 24, 64], strides = [1, 1, 1]} : vector<8x48x64xf32> to vector<8x24x64xf32>
    %59 = vector.extract_strided_slice %57 {offsets = [0, 24, 0], sizes = [8, 24, 64], strides = [1, 1, 1]} : vector<8x48x64xf32> to vector<8x24x64xf32>
    %60 = arith.maximumf %58, %59 : vector<8x24x64xf32>
    %c0_35 = arith.constant 0 : index
    %c0_36 = arith.constant 0 : index
    %c0_37 = arith.constant 0 : index
    %61 = vector.load %arg7[%c0_35, %c0_36, %c0_37] : memref<8x24x64xf32, #tpu.memory_space<vmem>>, vector<8x24x64xf32>
    tpu.vector_store %arg7[%c0_35, %c0_36, %c0_37], %60 {strides = array<i32>} : memref<8x24x64xf32, #tpu.memory_space<vmem>>, vector<8x24x64xf32>,
    %c0_38 = arith.constant 0 : index
    %c0_39 = arith.constant 0 : index
    %c0_40 = arith.constant 0 : index
    %62 = tpu.strided_load %arg7[%c0_38, %c0_39, %c0_40] {strides = array<i32: 1, 2, 1>} : memref<8x24x64xf32, #tpu.memory_space<vmem>>, vector<8x12x64xf32>
    %c0_41 = arith.constant 0 : index
    %c1_42 = arith.constant 1 : index
    %c0_43 = arith.constant 0 : index
    %63 = tpu.strided_load %arg7[%c0_41, %c1_42, %c0_43] {strides = array<i32: 1, 2, 1>} : memref<8x24x64xf32, #tpu.memory_space<vmem>>, vector<8x12x64xf32>
    %64 = arith.maximumf %62, %63 : vector<8x12x64xf32>
    %65 = arith.truncf %64 : vector<8x12x64xf32> to vector<8x12x64xbf16>
    %c0_44 = arith.constant 0 : index
    %c0_45 = arith.constant 0 : index
    %c0_46 = arith.constant 0 : index
    %c0_47 = arith.constant 0 : index
    %66 = vector.load %arg6[%c0_44, %c0_45, %c0_46, %c0_47] : memref<1x8x12x64xbf16, #tpu.memory_space<vmem>>, vector<1x8x12x64xbf16>
    %67 = vector.shape_cast %66 : vector<1x8x12x64xbf16> to vector<8x12x64xbf16>
    %68 = vector.shape_cast %65 : vector<8x12x64xbf16> to vector<1x8x12x64xbf16>
    tpu.vector_store %arg6[%c0_44, %c0_45, %c0_46, %c0_47], %68 {strides = array<i32>} : memref<1x8x12x64xbf16, #tpu.memory_space<vmem>>, vector<1x8x12x64xbf16>,
    return
  }
  func.func @transform_0(%arg0: i32, %arg1: i32) -> (i32, i32, i32) {
    %c0_i32 = arith.constant 0 : i32
    %c0_i32_0 = arith.constant 0 : i32
    return %arg0, %arg1, %c0_i32 : i32, i32, i32
  }
  func.func @transform_1(%arg0: i32, %arg1: i32) -> (i32, i32, i32) {
    %c1_i32 = arith.constant 1 : i32
    %0 = arith.addi %arg1, %c1_i32 : i32
    %c4_i32 = arith.constant 4 : i32
    %1 = arith.muli %0, %c4_i32 : i32
    %c0_i32 = arith.constant 0 : i32
    %c0_i32_0 = arith.constant 0 : i32
    return %arg0, %1, %c0_i32 : i32, i32, i32
  }
  func.func @transform_2(%arg0: i32, %arg1: i32) -> (i32, i32, i32) {
    %c0_i32 = arith.constant 0 : i32
    %c0_i32_0 = arith.constant 0 : i32
    %c0_i32_1 = arith.constant 0 : i32
    %c0_i32_2 = arith.constant 0 : i32
    return %c0_i32, %c0_i32_0, %c0_i32_1 : i32, i32, i32
  }
  func.func @transform_3(%arg0: i32, %arg1: i32) -> (i32, i32) {
    %c0_i32 = arith.constant 0 : i32
    %c0_i32_0 = arith.constant 0 : i32
    %c0_i32_1 = arith.constant 0 : i32
    return %c0_i32, %c0_i32_0 : i32, i32
  }
  func.func @transform_4(%arg0: i32, %arg1: i32) -> (i32, i32, i32, i32) {
    %c0_i32 = arith.constant 0 : i32
    %c0_i32_0 = arith.constant 0 : i32
    %c0_i32_1 = arith.constant 0 : i32
    return %arg0, %arg1, %c0_i32, %c0_i32_0 : i32, i32, i32, i32
  }
}

module attributes {stable_mosaic.version = 11 : i64} {
  func.func @_conv3x3_relu_kernel(%arg0: i32, %arg1: i32, %arg2: memref<1x128x64xbf16, #tpu.memory_space<vmem>>, %arg3: memref<1x64x64xbf16, #tpu.memory_space<vmem>>, %arg4: memref<9x64x128xbf16, #tpu.memory_space<vmem>>, %arg5: memref<1x128xf32, #tpu.memory_space<vmem>>, %arg6: memref<1x128x128xbf16, #tpu.memory_space<vmem>>) attributes {dimension_semantics = [#tpu.dimension_semantics<parallel>, #tpu.dimension_semantics<parallel>], iteration_bounds = array<i64: 2, 1>, scalar_prefetch = 0 : i64, scratch_operands = 0 : i64, tpu.core_type = #tpu.core_type<tc>, window_params = [{transform_indices = @transform_0, window_bounds = array<i64: 1, 128, 64>}, {transform_indices = @transform_1, window_bounds = array<i64: 1, 64, 64>}, {pipeline_mode = #tpu.pipeline_mode<synchronous>, transform_indices = @transform_2, window_bounds = array<i64: 9, 64, 128>}, {pipeline_mode = #tpu.pipeline_mode<synchronous>, transform_indices = @transform_3, window_bounds = array<i64: 1, 128>}, {transform_indices = @transform_4, window_bounds = array<i64: 1, 128, 128>}]} {
    %c0 = arith.constant 0 : index
    %c0_0 = arith.constant 0 : index
    %c0_1 = arith.constant 0 : index
    %0 = vector.load %arg2[%c0, %c0_0, %c0_1] : memref<1x128x64xbf16, #tpu.memory_space<vmem>>, vector<1x128x64xbf16>
    %1 = vector.shape_cast %0 : vector<1x128x64xbf16> to vector<128x64xbf16>
    %c0_2 = arith.constant 0 : index
    %c0_3 = arith.constant 0 : index
    %c0_4 = arith.constant 0 : index
    %2 = vector.load %arg3[%c0_2, %c0_3, %c0_4] : memref<1x64x64xbf16, #tpu.memory_space<vmem>>, vector<1x64x64xbf16>
    %3 = vector.shape_cast %2 : vector<1x64x64xbf16> to vector<64x64xbf16>
    %4 = tpu.concatenate %1, %3 in 0 : vector<128x64xbf16>, vector<64x64xbf16> -> vector<192x64xbf16>
    %5 = vector.extract_strided_slice %4 {offsets = [0, 0], sizes = [160, 64], strides = [1, 1]} : vector<192x64xbf16> to vector<160x64xbf16>
    %6 = vector.extract_strided_slice %4 {offsets = [1, 0], sizes = [160, 64], strides = [1, 1]} : vector<192x64xbf16> to vector<160x64xbf16>
    %7 = vector.extract_strided_slice %4 {offsets = [2, 0], sizes = [160, 64], strides = [1, 1]} : vector<192x64xbf16> to vector<160x64xbf16>
    %8 = vector.extract_strided_slice %5 {offsets = [0, 0], sizes = [128, 64], strides = [1, 1]} : vector<160x64xbf16> to vector<128x64xbf16>
    %c0_5 = arith.constant 0 : index
    %c0_6 = arith.constant 0 : index
    %c0_7 = arith.constant 0 : index
    %9 = vector.load %arg4[%c0_5, %c0_6, %c0_7] : memref<9x64x128xbf16, #tpu.memory_space<vmem>>, vector<1x64x128xbf16>
    %10 = vector.shape_cast %9 : vector<1x64x128xbf16> to vector<64x128xbf16>
    %cst = arith.constant dense<0.000000e+00> : vector<128x128xf32>
    %11 = tpu.matmul %8, %10, %cst {dimension_numbers = #tpu.dot_dimension_numbers<[1], [0], [0], [1], [0, 0, 1, 1], [], []>} : vector<128x64xbf16>, vector<64x128xbf16>, vector<128x128xf32> -> vector<128x128xf32>
    %12 = vector.extract_strided_slice %6 {offsets = [0, 0], sizes = [128, 64], strides = [1, 1]} : vector<160x64xbf16> to vector<128x64xbf16>
    %c1 = arith.constant 1 : index
    %c0_8 = arith.constant 0 : index
    %c0_9 = arith.constant 0 : index
    %13 = vector.load %arg4[%c1, %c0_8, %c0_9] : memref<9x64x128xbf16, #tpu.memory_space<vmem>>, vector<1x64x128xbf16>
    %14 = vector.shape_cast %13 : vector<1x64x128xbf16> to vector<64x128xbf16>
    %cst_10 = arith.constant dense<0.000000e+00> : vector<128x128xf32>
    %15 = tpu.matmul %12, %14, %cst_10 {dimension_numbers = #tpu.dot_dimension_numbers<[1], [0], [0], [1], [0, 0, 1, 1], [], []>} : vector<128x64xbf16>, vector<64x128xbf16>, vector<128x128xf32> -> vector<128x128xf32>
    %16 = arith.addf %11, %15 : vector<128x128xf32>
    %17 = vector.extract_strided_slice %7 {offsets = [0, 0], sizes = [128, 64], strides = [1, 1]} : vector<160x64xbf16> to vector<128x64xbf16>
    %c2 = arith.constant 2 : index
    %c0_11 = arith.constant 0 : index
    %c0_12 = arith.constant 0 : index
    %18 = vector.load %arg4[%c2, %c0_11, %c0_12] : memref<9x64x128xbf16, #tpu.memory_space<vmem>>, vector<1x64x128xbf16>
    %19 = vector.shape_cast %18 : vector<1x64x128xbf16> to vector<64x128xbf16>
    %cst_13 = arith.constant dense<0.000000e+00> : vector<128x128xf32>
    %20 = tpu.matmul %17, %19, %cst_13 {dimension_numbers = #tpu.dot_dimension_numbers<[1], [0], [0], [1], [0, 0, 1, 1], [], []>} : vector<128x64xbf16>, vector<64x128xbf16>, vector<128x128xf32> -> vector<128x128xf32>
    %21 = arith.addf %16, %20 : vector<128x128xf32>
    %22 = vector.extract_strided_slice %5 {offsets = [16, 0], sizes = [128, 64], strides = [1, 1]} : vector<160x64xbf16> to vector<128x64xbf16>
    %c3 = arith.constant 3 : index
    %c0_14 = arith.constant 0 : index
    %c0_15 = arith.constant 0 : index
    %23 = vector.load %arg4[%c3, %c0_14, %c0_15] : memref<9x64x128xbf16, #tpu.memory_space<vmem>>, vector<1x64x128xbf16>
    %24 = vector.shape_cast %23 : vector<1x64x128xbf16> to vector<64x128xbf16>
    %cst_16 = arith.constant dense<0.000000e+00> : vector<128x128xf32>
    %25 = tpu.matmul %22, %24, %cst_16 {dimension_numbers = #tpu.dot_dimension_numbers<[1], [0], [0], [1], [0, 0, 1, 1], [], []>} : vector<128x64xbf16>, vector<64x128xbf16>, vector<128x128xf32> -> vector<128x128xf32>
    %26 = arith.addf %21, %25 : vector<128x128xf32>
    %27 = vector.extract_strided_slice %6 {offsets = [16, 0], sizes = [128, 64], strides = [1, 1]} : vector<160x64xbf16> to vector<128x64xbf16>
    %c4 = arith.constant 4 : index
    %c0_17 = arith.constant 0 : index
    %c0_18 = arith.constant 0 : index
    %28 = vector.load %arg4[%c4, %c0_17, %c0_18] : memref<9x64x128xbf16, #tpu.memory_space<vmem>>, vector<1x64x128xbf16>
    %29 = vector.shape_cast %28 : vector<1x64x128xbf16> to vector<64x128xbf16>
    %cst_19 = arith.constant dense<0.000000e+00> : vector<128x128xf32>
    %30 = tpu.matmul %27, %29, %cst_19 {dimension_numbers = #tpu.dot_dimension_numbers<[1], [0], [0], [1], [0, 0, 1, 1], [], []>} : vector<128x64xbf16>, vector<64x128xbf16>, vector<128x128xf32> -> vector<128x128xf32>
    %31 = arith.addf %26, %30 : vector<128x128xf32>
    %32 = vector.extract_strided_slice %7 {offsets = [16, 0], sizes = [128, 64], strides = [1, 1]} : vector<160x64xbf16> to vector<128x64xbf16>
    %c5 = arith.constant 5 : index
    %c0_20 = arith.constant 0 : index
    %c0_21 = arith.constant 0 : index
    %33 = vector.load %arg4[%c5, %c0_20, %c0_21] : memref<9x64x128xbf16, #tpu.memory_space<vmem>>, vector<1x64x128xbf16>
    %34 = vector.shape_cast %33 : vector<1x64x128xbf16> to vector<64x128xbf16>
    %cst_22 = arith.constant dense<0.000000e+00> : vector<128x128xf32>
    %35 = tpu.matmul %32, %34, %cst_22 {dimension_numbers = #tpu.dot_dimension_numbers<[1], [0], [0], [1], [0, 0, 1, 1], [], []>} : vector<128x64xbf16>, vector<64x128xbf16>, vector<128x128xf32> -> vector<128x128xf32>
    %36 = arith.addf %31, %35 : vector<128x128xf32>
    %37 = vector.extract_strided_slice %5 {offsets = [32, 0], sizes = [128, 64], strides = [1, 1]} : vector<160x64xbf16> to vector<128x64xbf16>
    %c6 = arith.constant 6 : index
    %c0_23 = arith.constant 0 : index
    %c0_24 = arith.constant 0 : index
    %38 = vector.load %arg4[%c6, %c0_23, %c0_24] : memref<9x64x128xbf16, #tpu.memory_space<vmem>>, vector<1x64x128xbf16>
    %39 = vector.shape_cast %38 : vector<1x64x128xbf16> to vector<64x128xbf16>
    %cst_25 = arith.constant dense<0.000000e+00> : vector<128x128xf32>
    %40 = tpu.matmul %37, %39, %cst_25 {dimension_numbers = #tpu.dot_dimension_numbers<[1], [0], [0], [1], [0, 0, 1, 1], [], []>} : vector<128x64xbf16>, vector<64x128xbf16>, vector<128x128xf32> -> vector<128x128xf32>
    %41 = arith.addf %36, %40 : vector<128x128xf32>
    %42 = vector.extract_strided_slice %6 {offsets = [32, 0], sizes = [128, 64], strides = [1, 1]} : vector<160x64xbf16> to vector<128x64xbf16>
    %c7 = arith.constant 7 : index
    %c0_26 = arith.constant 0 : index
    %c0_27 = arith.constant 0 : index
    %43 = vector.load %arg4[%c7, %c0_26, %c0_27] : memref<9x64x128xbf16, #tpu.memory_space<vmem>>, vector<1x64x128xbf16>
    %44 = vector.shape_cast %43 : vector<1x64x128xbf16> to vector<64x128xbf16>
    %cst_28 = arith.constant dense<0.000000e+00> : vector<128x128xf32>
    %45 = tpu.matmul %42, %44, %cst_28 {dimension_numbers = #tpu.dot_dimension_numbers<[1], [0], [0], [1], [0, 0, 1, 1], [], []>} : vector<128x64xbf16>, vector<64x128xbf16>, vector<128x128xf32> -> vector<128x128xf32>
    %46 = arith.addf %41, %45 : vector<128x128xf32>
    %47 = vector.extract_strided_slice %7 {offsets = [32, 0], sizes = [128, 64], strides = [1, 1]} : vector<160x64xbf16> to vector<128x64xbf16>
    %c8 = arith.constant 8 : index
    %c0_29 = arith.constant 0 : index
    %c0_30 = arith.constant 0 : index
    %48 = vector.load %arg4[%c8, %c0_29, %c0_30] : memref<9x64x128xbf16, #tpu.memory_space<vmem>>, vector<1x64x128xbf16>
    %49 = vector.shape_cast %48 : vector<1x64x128xbf16> to vector<64x128xbf16>
    %cst_31 = arith.constant dense<0.000000e+00> : vector<128x128xf32>
    %50 = tpu.matmul %47, %49, %cst_31 {dimension_numbers = #tpu.dot_dimension_numbers<[1], [0], [0], [1], [0, 0, 1, 1], [], []>} : vector<128x64xbf16>, vector<64x128xbf16>, vector<128x128xf32> -> vector<128x128xf32>
    %51 = arith.addf %46, %50 : vector<128x128xf32>
    %c0_32 = arith.constant 0 : index
    %c0_33 = arith.constant 0 : index
    %52 = vector.load %arg5[%c0_32, %c0_33] : memref<1x128xf32, #tpu.memory_space<vmem>>, vector<1x128xf32>
    %53 = vector.broadcast %52 : vector<1x128xf32> to vector<128x128xf32>
    %54 = arith.addf %51, %53 : vector<128x128xf32>
    %cst_34 = arith.constant 0.000000e+00 : f32
    %55 = vector.broadcast %cst_34 : f32 to vector<128x128xf32>
    %56 = arith.maximumf %54, %55 : vector<128x128xf32>
    %57 = arith.truncf %56 : vector<128x128xf32> to vector<128x128xbf16>
    %c0_35 = arith.constant 0 : index
    %c0_36 = arith.constant 0 : index
    %c0_37 = arith.constant 0 : index
    %58 = vector.load %arg6[%c0_35, %c0_36, %c0_37] : memref<1x128x128xbf16, #tpu.memory_space<vmem>>, vector<1x128x128xbf16>
    %59 = vector.shape_cast %58 : vector<1x128x128xbf16> to vector<128x128xbf16>
    %60 = vector.shape_cast %57 : vector<128x128xbf16> to vector<1x128x128xbf16>
    tpu.vector_store %arg6[%c0_35, %c0_36, %c0_37], %60 {strides = array<i32>} : memref<1x128x128xbf16, #tpu.memory_space<vmem>>, vector<1x128x128xbf16>,
    return
  }
  func.func @transform_0(%arg0: i32, %arg1: i32) -> (i32, i32, i32) {
    %c0_i32 = arith.constant 0 : i32
    %c0_i32_0 = arith.constant 0 : i32
    return %arg0, %arg1, %c0_i32 : i32, i32, i32
  }
  func.func @transform_1(%arg0: i32, %arg1: i32) -> (i32, i32, i32) {
    %c1_i32 = arith.constant 1 : i32
    %0 = arith.addi %arg1, %c1_i32 : i32
    %c2_i32 = arith.constant 2 : i32
    %1 = arith.muli %0, %c2_i32 : i32
    %c0_i32 = arith.constant 0 : i32
    %c0_i32_0 = arith.constant 0 : i32
    return %arg0, %1, %c0_i32 : i32, i32, i32
  }
  func.func @transform_2(%arg0: i32, %arg1: i32) -> (i32, i32, i32) {
    %c0_i32 = arith.constant 0 : i32
    %c0_i32_0 = arith.constant 0 : i32
    %c0_i32_1 = arith.constant 0 : i32
    %c0_i32_2 = arith.constant 0 : i32
    return %c0_i32, %c0_i32_0, %c0_i32_1 : i32, i32, i32
  }
  func.func @transform_3(%arg0: i32, %arg1: i32) -> (i32, i32) {
    %c0_i32 = arith.constant 0 : i32
    %c0_i32_0 = arith.constant 0 : i32
    %c0_i32_1 = arith.constant 0 : i32
    return %c0_i32, %c0_i32_0 : i32, i32
  }
  func.func @transform_4(%arg0: i32, %arg1: i32) -> (i32, i32, i32) {
    %c0_i32 = arith.constant 0 : i32
    %c0_i32_0 = arith.constant 0 : i32
    return %arg0, %arg1, %c0_i32 : i32, i32, i32
  }
}

module attributes {stable_mosaic.version = 11 : i64} {
  func.func @_conv3x3_relu_pool_kernel(%arg0: i32, %arg1: i32, %arg2: memref<1x128x128xbf16, #tpu.memory_space<vmem>>, %arg3: memref<1x64x128xbf16, #tpu.memory_space<vmem>>, %arg4: memref<1152x128xbf16, #tpu.memory_space<vmem>>, %arg5: memref<1x128xf32, #tpu.memory_space<vmem>>, %arg6: memref<1x4x8x128xbf16, #tpu.memory_space<vmem>>, %arg7: memref<4x16x128xf32, #tpu.memory_space<vmem>>) attributes {dimension_semantics = [#tpu.dimension_semantics<parallel>, #tpu.dimension_semantics<parallel>], iteration_bounds = array<i64: 2, 1>, scalar_prefetch = 0 : i64, scratch_operands = 1 : i64, tpu.core_type = #tpu.core_type<tc>, window_params = [{transform_indices = @transform_0, window_bounds = array<i64: 1, 128, 128>}, {transform_indices = @transform_1, window_bounds = array<i64: 1, 64, 128>}, {pipeline_mode = #tpu.pipeline_mode<synchronous>, transform_indices = @transform_2, window_bounds = array<i64: 1152, 128>}, {pipeline_mode = #tpu.pipeline_mode<synchronous>, transform_indices = @transform_3, window_bounds = array<i64: 1, 128>}, {transform_indices = @transform_4, window_bounds = array<i64: 1, 4, 8, 128>}]} {
    %c0 = arith.constant 0 : index
    %c0_0 = arith.constant 0 : index
    %c0_1 = arith.constant 0 : index
    %0 = vector.load %arg2[%c0, %c0_0, %c0_1] : memref<1x128x128xbf16, #tpu.memory_space<vmem>>, vector<1x128x128xbf16>
    %1 = vector.shape_cast %0 : vector<1x128x128xbf16> to vector<128x128xbf16>
    %c0_2 = arith.constant 0 : index
    %c0_3 = arith.constant 0 : index
    %c0_4 = arith.constant 0 : index
    %2 = vector.load %arg3[%c0_2, %c0_3, %c0_4] : memref<1x64x128xbf16, #tpu.memory_space<vmem>>, vector<1x64x128xbf16>
    %3 = vector.shape_cast %2 : vector<1x64x128xbf16> to vector<64x128xbf16>
    %4 = tpu.concatenate %1, %3 in 0 : vector<128x128xbf16>, vector<64x128xbf16> -> vector<192x128xbf16>
    %5 = vector.extract_strided_slice %4 {offsets = [0, 0], sizes = [160, 128], strides = [1, 1]} : vector<192x128xbf16> to vector<160x128xbf16>
    %6 = vector.extract_strided_slice %4 {offsets = [1, 0], sizes = [160, 128], strides = [1, 1]} : vector<192x128xbf16> to vector<160x128xbf16>
    %7 = vector.extract_strided_slice %4 {offsets = [2, 0], sizes = [160, 128], strides = [1, 1]} : vector<192x128xbf16> to vector<160x128xbf16>
    %8 = vector.extract_strided_slice %5 {offsets = [0, 0], sizes = [128, 128], strides = [1, 1]} : vector<160x128xbf16> to vector<128x128xbf16>
    %9 = vector.extract_strided_slice %6 {offsets = [0, 0], sizes = [128, 128], strides = [1, 1]} : vector<160x128xbf16> to vector<128x128xbf16>
    %10 = vector.extract_strided_slice %7 {offsets = [0, 0], sizes = [128, 128], strides = [1, 1]} : vector<160x128xbf16> to vector<128x128xbf16>
    %11 = vector.extract_strided_slice %5 {offsets = [16, 0], sizes = [128, 128], strides = [1, 1]} : vector<160x128xbf16> to vector<128x128xbf16>
    %12 = vector.extract_strided_slice %6 {offsets = [16, 0], sizes = [128, 128], strides = [1, 1]} : vector<160x128xbf16> to vector<128x128xbf16>
    %13 = vector.extract_strided_slice %7 {offsets = [16, 0], sizes = [128, 128], strides = [1, 1]} : vector<160x128xbf16> to vector<128x128xbf16>
    %14 = vector.extract_strided_slice %5 {offsets = [32, 0], sizes = [128, 128], strides = [1, 1]} : vector<160x128xbf16> to vector<128x128xbf16>
    %15 = vector.extract_strided_slice %6 {offsets = [32, 0], sizes = [128, 128], strides = [1, 1]} : vector<160x128xbf16> to vector<128x128xbf16>
    %16 = vector.extract_strided_slice %7 {offsets = [32, 0], sizes = [128, 128], strides = [1, 1]} : vector<160x128xbf16> to vector<128x128xbf16>
    %17 = tpu.concatenate %8, %9, %10, %11, %12, %13, %14, %15, %16 in 1 : vector<128x128xbf16>, vector<128x128xbf16>, vector<128x128xbf16>, vector<128x128xbf16>, vector<128x128xbf16>, vector<128x128xbf16>, vector<128x128xbf16>, vector<128x128xbf16>, vector<128x128xbf16> -> vector<128x1152xbf16>
    %c0_5 = arith.constant 0 : index
    %c0_6 = arith.constant 0 : index
    %18 = vector.load %arg4[%c0_5, %c0_6] : memref<1152x128xbf16, #tpu.memory_space<vmem>>, vector<1152x128xbf16>
    %cst = arith.constant dense<0.000000e+00> : vector<128x128xf32>
    %19 = tpu.matmul %17, %18, %cst {dimension_numbers = #tpu.dot_dimension_numbers<[1], [0], [0], [1], [0, 0, 1, 1], [], []>} : vector<128x1152xbf16>, vector<1152x128xbf16>, vector<128x128xf32> -> vector<128x128xf32>
    %c0_7 = arith.constant 0 : index
    %c0_8 = arith.constant 0 : index
    %20 = vector.load %arg5[%c0_7, %c0_8] : memref<1x128xf32, #tpu.memory_space<vmem>>, vector<1x128xf32>
    %21 = vector.broadcast %20 : vector<1x128xf32> to vector<128x128xf32>
    %22 = arith.addf %19, %21 : vector<128x128xf32>
    %cst_9 = arith.constant 0.000000e+00 : f32
    %23 = vector.broadcast %cst_9 : f32 to vector<128x128xf32>
    %24 = arith.maximumf %22, %23 : vector<128x128xf32>
    %25 = vector.shape_cast %24 : vector<128x128xf32> to vector<4x32x128xf32>
    %26 = vector.extract_strided_slice %25 {offsets = [0, 0, 0], sizes = [4, 16, 128], strides = [1, 1, 1]} : vector<4x32x128xf32> to vector<4x16x128xf32>
    %27 = vector.extract_strided_slice %25 {offsets = [0, 16, 0], sizes = [4, 16, 128], strides = [1, 1, 1]} : vector<4x32x128xf32> to vector<4x16x128xf32>
    %28 = arith.maximumf %26, %27 : vector<4x16x128xf32>
    %c0_10 = arith.constant 0 : index
    %c0_11 = arith.constant 0 : index
    %c0_12 = arith.constant 0 : index
    %29 = vector.load %arg7[%c0_10, %c0_11, %c0_12] : memref<4x16x128xf32, #tpu.memory_space<vmem>>, vector<4x16x128xf32>
    tpu.vector_store %arg7[%c0_10, %c0_11, %c0_12], %28 {strides = array<i32>} : memref<4x16x128xf32, #tpu.memory_space<vmem>>, vector<4x16x128xf32>,
    %c0_13 = arith.constant 0 : index
    %c0_14 = arith.constant 0 : index
    %c0_15 = arith.constant 0 : index
    %30 = tpu.strided_load %arg7[%c0_13, %c0_14, %c0_15] {strides = array<i32: 1, 2, 1>} : memref<4x16x128xf32, #tpu.memory_space<vmem>>, vector<4x8x128xf32>
    %c0_16 = arith.constant 0 : index
    %c1 = arith.constant 1 : index
    %c0_17 = arith.constant 0 : index
    %31 = tpu.strided_load %arg7[%c0_16, %c1, %c0_17] {strides = array<i32: 1, 2, 1>} : memref<4x16x128xf32, #tpu.memory_space<vmem>>, vector<4x8x128xf32>
    %32 = arith.maximumf %30, %31 : vector<4x8x128xf32>
    %33 = arith.truncf %32 : vector<4x8x128xf32> to vector<4x8x128xbf16>
    %c0_18 = arith.constant 0 : index
    %c0_19 = arith.constant 0 : index
    %c0_20 = arith.constant 0 : index
    %c0_21 = arith.constant 0 : index
    %34 = vector.load %arg6[%c0_18, %c0_19, %c0_20, %c0_21] : memref<1x4x8x128xbf16, #tpu.memory_space<vmem>>, vector<1x4x8x128xbf16>
    %35 = vector.shape_cast %34 : vector<1x4x8x128xbf16> to vector<4x8x128xbf16>
    %36 = vector.shape_cast %33 : vector<4x8x128xbf16> to vector<1x4x8x128xbf16>
    tpu.vector_store %arg6[%c0_18, %c0_19, %c0_20, %c0_21], %36 {strides = array<i32>} : memref<1x4x8x128xbf16, #tpu.memory_space<vmem>>, vector<1x4x8x128xbf16>,
    return
  }
  func.func @transform_0(%arg0: i32, %arg1: i32) -> (i32, i32, i32) {
    %c0_i32 = arith.constant 0 : i32
    %c0_i32_0 = arith.constant 0 : i32
    return %arg0, %arg1, %c0_i32 : i32, i32, i32
  }
  func.func @transform_1(%arg0: i32, %arg1: i32) -> (i32, i32, i32) {
    %c1_i32 = arith.constant 1 : i32
    %0 = arith.addi %arg1, %c1_i32 : i32
    %c2_i32 = arith.constant 2 : i32
    %1 = arith.muli %0, %c2_i32 : i32
    %c0_i32 = arith.constant 0 : i32
    %c0_i32_0 = arith.constant 0 : i32
    return %arg0, %1, %c0_i32 : i32, i32, i32
  }
  func.func @transform_2(%arg0: i32, %arg1: i32) -> (i32, i32) {
    %c0_i32 = arith.constant 0 : i32
    %c0_i32_0 = arith.constant 0 : i32
    %c0_i32_1 = arith.constant 0 : i32
    return %c0_i32, %c0_i32_0 : i32, i32
  }
  func.func @transform_3(%arg0: i32, %arg1: i32) -> (i32, i32) {
    %c0_i32 = arith.constant 0 : i32
    %c0_i32_0 = arith.constant 0 : i32
    %c0_i32_1 = arith.constant 0 : i32
    return %c0_i32, %c0_i32_0 : i32, i32
  }
  func.func @transform_4(%arg0: i32, %arg1: i32) -> (i32, i32, i32, i32) {
    %c0_i32 = arith.constant 0 : i32
    %c0_i32_0 = arith.constant 0 : i32
    %c0_i32_1 = arith.constant 0 : i32
    return %arg0, %arg1, %c0_i32, %c0_i32_0 : i32, i32, i32, i32
  }
}

module attributes {stable_mosaic.version = 11 : i64} {
  func.func @_conv3x3_relu_kernel(%arg0: i32, %arg1: i32, %arg2: memref<1x32x128xbf16, #tpu.memory_space<vmem>>, %arg3: memref<1x32x128xbf16, #tpu.memory_space<vmem>>, %arg4: memref<1152x256xbf16, #tpu.memory_space<vmem>>, %arg5: memref<1x256xf32, #tpu.memory_space<vmem>>, %arg6: memref<1x32x256xbf16, #tpu.memory_space<vmem>>) attributes {dimension_semantics = [#tpu.dimension_semantics<parallel>, #tpu.dimension_semantics<parallel>], iteration_bounds = array<i64: 2, 1>, scalar_prefetch = 0 : i64, scratch_operands = 0 : i64, tpu.core_type = #tpu.core_type<tc>, window_params = [{transform_indices = @transform_0, window_bounds = array<i64: 1, 32, 128>}, {transform_indices = @transform_1, window_bounds = array<i64: 1, 32, 128>}, {pipeline_mode = #tpu.pipeline_mode<synchronous>, transform_indices = @transform_2, window_bounds = array<i64: 1152, 256>}, {pipeline_mode = #tpu.pipeline_mode<synchronous>, transform_indices = @transform_3, window_bounds = array<i64: 1, 256>}, {transform_indices = @transform_4, window_bounds = array<i64: 1, 32, 256>}]} {
    %c0 = arith.constant 0 : index
    %c0_0 = arith.constant 0 : index
    %c0_1 = arith.constant 0 : index
    %0 = vector.load %arg2[%c0, %c0_0, %c0_1] : memref<1x32x128xbf16, #tpu.memory_space<vmem>>, vector<1x32x128xbf16>
    %1 = vector.shape_cast %0 : vector<1x32x128xbf16> to vector<32x128xbf16>
    %c0_2 = arith.constant 0 : index
    %c0_3 = arith.constant 0 : index
    %c0_4 = arith.constant 0 : index
    %2 = vector.load %arg3[%c0_2, %c0_3, %c0_4] : memref<1x32x128xbf16, #tpu.memory_space<vmem>>, vector<1x32x128xbf16>
    %3 = vector.shape_cast %2 : vector<1x32x128xbf16> to vector<32x128xbf16>
    %4 = tpu.concatenate %1, %3 in 0 : vector<32x128xbf16>, vector<32x128xbf16> -> vector<64x128xbf16>
    %5 = vector.extract_strided_slice %4 {offsets = [0, 0], sizes = [48, 128], strides = [1, 1]} : vector<64x128xbf16> to vector<48x128xbf16>
    %6 = vector.extract_strided_slice %4 {offsets = [1, 0], sizes = [48, 128], strides = [1, 1]} : vector<64x128xbf16> to vector<48x128xbf16>
    %7 = vector.extract_strided_slice %4 {offsets = [2, 0], sizes = [48, 128], strides = [1, 1]} : vector<64x128xbf16> to vector<48x128xbf16>
    %8 = vector.extract_strided_slice %5 {offsets = [0, 0], sizes = [32, 128], strides = [1, 1]} : vector<48x128xbf16> to vector<32x128xbf16>
    %9 = vector.extract_strided_slice %6 {offsets = [0, 0], sizes = [32, 128], strides = [1, 1]} : vector<48x128xbf16> to vector<32x128xbf16>
    %10 = vector.extract_strided_slice %7 {offsets = [0, 0], sizes = [32, 128], strides = [1, 1]} : vector<48x128xbf16> to vector<32x128xbf16>
    %11 = vector.extract_strided_slice %5 {offsets = [8, 0], sizes = [32, 128], strides = [1, 1]} : vector<48x128xbf16> to vector<32x128xbf16>
    %12 = vector.extract_strided_slice %6 {offsets = [8, 0], sizes = [32, 128], strides = [1, 1]} : vector<48x128xbf16> to vector<32x128xbf16>
    %13 = vector.extract_strided_slice %7 {offsets = [8, 0], sizes = [32, 128], strides = [1, 1]} : vector<48x128xbf16> to vector<32x128xbf16>
    %14 = vector.extract_strided_slice %5 {offsets = [16, 0], sizes = [32, 128], strides = [1, 1]} : vector<48x128xbf16> to vector<32x128xbf16>
    %15 = vector.extract_strided_slice %6 {offsets = [16, 0], sizes = [32, 128], strides = [1, 1]} : vector<48x128xbf16> to vector<32x128xbf16>
    %16 = vector.extract_strided_slice %7 {offsets = [16, 0], sizes = [32, 128], strides = [1, 1]} : vector<48x128xbf16> to vector<32x128xbf16>
    %17 = tpu.concatenate %8, %9, %10, %11, %12, %13, %14, %15, %16 in 1 : vector<32x128xbf16>, vector<32x128xbf16>, vector<32x128xbf16>, vector<32x128xbf16>, vector<32x128xbf16>, vector<32x128xbf16>, vector<32x128xbf16>, vector<32x128xbf16>, vector<32x128xbf16> -> vector<32x1152xbf16>
    %c0_5 = arith.constant 0 : index
    %c0_6 = arith.constant 0 : index
    %18 = vector.load %arg4[%c0_5, %c0_6] : memref<1152x256xbf16, #tpu.memory_space<vmem>>, vector<1152x256xbf16>
    %cst = arith.constant dense<0.000000e+00> : vector<32x256xf32>
    %19 = tpu.matmul %17, %18, %cst {dimension_numbers = #tpu.dot_dimension_numbers<[1], [0], [0], [1], [0, 0, 1, 1], [], []>} : vector<32x1152xbf16>, vector<1152x256xbf16>, vector<32x256xf32> -> vector<32x256xf32>
    %c0_7 = arith.constant 0 : index
    %c0_8 = arith.constant 0 : index
    %20 = vector.load %arg5[%c0_7, %c0_8] : memref<1x256xf32, #tpu.memory_space<vmem>>, vector<1x256xf32>
    %21 = vector.broadcast %20 : vector<1x256xf32> to vector<32x256xf32>
    %22 = arith.addf %19, %21 : vector<32x256xf32>
    %cst_9 = arith.constant 0.000000e+00 : f32
    %23 = vector.broadcast %cst_9 : f32 to vector<32x256xf32>
    %24 = arith.maximumf %22, %23 : vector<32x256xf32>
    %25 = arith.truncf %24 : vector<32x256xf32> to vector<32x256xbf16>
    %c0_10 = arith.constant 0 : index
    %c0_11 = arith.constant 0 : index
    %c0_12 = arith.constant 0 : index
    %26 = vector.load %arg6[%c0_10, %c0_11, %c0_12] : memref<1x32x256xbf16, #tpu.memory_space<vmem>>, vector<1x32x256xbf16>
    %27 = vector.shape_cast %26 : vector<1x32x256xbf16> to vector<32x256xbf16>
    %28 = vector.shape_cast %25 : vector<32x256xbf16> to vector<1x32x256xbf16>
    tpu.vector_store %arg6[%c0_10, %c0_11, %c0_12], %28 {strides = array<i32>} : memref<1x32x256xbf16, #tpu.memory_space<vmem>>, vector<1x32x256xbf16>,
    return
  }
  func.func @transform_0(%arg0: i32, %arg1: i32) -> (i32, i32, i32) {
    %c0_i32 = arith.constant 0 : i32
    %c0_i32_0 = arith.constant 0 : i32
    return %arg0, %arg1, %c0_i32 : i32, i32, i32
  }
  func.func @transform_1(%arg0: i32, %arg1: i32) -> (i32, i32, i32) {
    %c1_i32 = arith.constant 1 : i32
    %0 = arith.addi %arg1, %c1_i32 : i32
    %c1_i32_0 = arith.constant 1 : i32
    %1 = arith.muli %0, %c1_i32_0 : i32
    %c0_i32 = arith.constant 0 : i32
    %c0_i32_1 = arith.constant 0 : i32
    return %arg0, %1, %c0_i32 : i32, i32, i32
  }
  func.func @transform_2(%arg0: i32, %arg1: i32) -> (i32, i32) {
    %c0_i32 = arith.constant 0 : i32
    %c0_i32_0 = arith.constant 0 : i32
    %c0_i32_1 = arith.constant 0 : i32
    return %c0_i32, %c0_i32_0 : i32, i32
  }
  func.func @transform_3(%arg0: i32, %arg1: i32) -> (i32, i32) {
    %c0_i32 = arith.constant 0 : i32
    %c0_i32_0 = arith.constant 0 : i32
    %c0_i32_1 = arith.constant 0 : i32
    return %c0_i32, %c0_i32_0 : i32, i32
  }
  func.func @transform_4(%arg0: i32, %arg1: i32) -> (i32, i32, i32) {
    %c0_i32 = arith.constant 0 : i32
    %c0_i32_0 = arith.constant 0 : i32
    return %arg0, %arg1, %c0_i32 : i32, i32, i32
  }
}

</mosaic_0001>

<llo_original>
// kernel: vgg19_slice1.5
$region0: #{vgg19_slice1.5}
  #allocation0 [shape = 'u32[]', space=smem, size = 0x4, offset = 0x4, fixed_abs, tag = 'smem constant byte address 0x4 - core index']
  #allocation1 [shape = 'u32[72,128]{1,0:T(1,128)}', space=vmem, size = 0x9000, scoped, tag = 'internal scratch']
  %s0 = inlined_call_operand.vmem [shape: bf16[2,384,32], index: 0, kind: input, shape index: {}]
  %s1 = inlined_call_operand.vmem [shape: bf16[32,64], index: 1, kind: input, shape index: {}]
  %s2 = inlined_call_operand.vmem [shape: f32[1,64], index: 2, kind: input, shape index: {}]
  %s3 = inlined_call_operand.vmem [shape: bf16[2,384,64], index: 3, kind: output, shape index: {}]
  %s4 = sld [smem:[#allocation0]]
  $region45: #{vgg19_slice1.5} parent=0
    _
  %s6 = ssub.s32 1, %s4
  %s7 = scalar_select 0, %s6, %s4
  loop: start=0, step=1, limit=4
  $region2: #{vgg19_slice1.5} parent=0 // loop_pre_header
    _
  $region3: #{vgg19_slice1.5} parent=0 // loop_header
    %s9 = sphi 0, %s13
    %p10 = scmp.ge.s32.totalorder %s9, 4
    %s16 = sphi 0, %s28
    %s17 = sphi 0, %s24
    %s18 = sphi 0, %s16
    %s19 = sphi 0, %s17
    %s20 = sphi 0, %s18
    %s21 = sphi 0, %s19
    %s33 = sphi 0, %s35
    %s36 = sphi 0, %s33
    %s37 = sphi 0, %s36
    %s53 = sphi 0, %s37
    %s57 = sphi 0, %s57
    %s59 = sphi 0, %s57
    %s60 = sphi 0, %s59
    %s74 = sphi 0, %s60
    %s78 = sphi 0, %s78
    %s80 = sphi 0, %s78
    %s81 = sphi 0, %s80
    %s95 = sphi 0, %s81
    %s103 = sphi 0, %s105
    %s106 = sphi 0, %s103
    %s107 = sphi 0, %s106
    %s123 = sphi 0, %s107
  $region4: #{vgg19_slice1.5} parent=0 // loop_header_branch
    %12 = sbr.rel (%p10) target = $region8
  $region5: #{vgg19_slice1.5} parent=0 // loop_body
    %s14 = ssub.s32 %s9, 1
    %s15 = ssub.s32 %s9, 2
    %s22 = sadd.s32 1, %s17
    %p23 = scmp.ge.s32.totalorder %s22, 1
    %s24 = scalar_select %p23, 0, %s22
    %s25 = sadd.s32 1, %s16
    %s26 = scalar_select %p23, %s25, %s16
    %p27 = scmp.ge.s32.totalorder %s26, 2
    %s28 = scalar_select %p27, 0, %s26
    %s29 = ssub.s32 %s16, %s28
    %s30 = ssub.s32 %s17, %s24
    %s31 = sor.u32 %s29, %s30
    %p32 = scmp.eq.s32.totalorder %s31, 0
    %s34 = sadd.s32 %s33, 1
    %s35 = scalar_select %p32, %s33, %s34
    %p38 = pneg %p32
    %p39 = scmp.eq.s32.totalorder %s9, 1
    %p40 = por %p38, %p39
    %p41 = scmp.ne.s32.totalorder %s33, %s36
    %p42 = scmp.eq.s32.totalorder %s9, 0
    %p43 = por %p41, %p42
    %p44 = scmp.ne.s32.totalorder %s33, %s36
    %p45 = scmp.eq.s32.totalorder %s14, 1
    %p46 = por %p44, %p45
    %p47 = scmp.ne.s32.totalorder %s36, %s37
    %p48 = scmp.eq.s32.totalorder %s14, 0
    %p49 = por %p47, %p48
    %p50 = scmp.ne.s32.totalorder %s36, %s37
    %p51 = scmp.eq.s32.totalorder %s15, 1
    %p52 = por %p50, %p51
    %p54 = scmp.ne.s32.totalorder %s37, %s53
    %p55 = scmp.eq.s32.totalorder %s15, 0
    %p56 = por %p54, %p55
    %s58 = sadd.s32 %s57, 1
    %p61 = scmp.eq.s32.totalorder %s9, 1
    %p62 = scmp.ne.s32.totalorder %s57, %s59
    %p63 = scmp.eq.s32.totalorder %s9, 0
    %p64 = por %p62, %p63
    %p65 = scmp.ne.s32.totalorder %s57, %s59
    %p66 = scmp.eq.s32.totalorder %s14, 1
    %p67 = por %p65, %p66
    %p68 = scmp.ne.s32.totalorder %s59, %s60
    %p69 = scmp.eq.s32.totalorder %s14, 0
    %p70 = por %p68, %p69
    %p71 = scmp.ne.s32.totalorder %s59, %s60
    %p72 = scmp.eq.s32.totalorder %s15, 1
    %p73 = por %p71, %p72
    %p75 = scmp.ne.s32.totalorder %s60, %s74
    %p76 = scmp.eq.s32.totalorder %s15, 0
    %p77 = por %p75, %p76
    %s79 = sadd.s32 %s78, 1
    %p82 = scmp.eq.s32.totalorder %s9, 1
    %p83 = scmp.ne.s32.totalorder %s78, %s80
    %p84 = scmp.eq.s32.totalorder %s9, 0
    %p85 = por %p83, %p84
    %p86 = scmp.ne.s32.totalorder %s78, %s80
    %p87 = scmp.eq.s32.totalorder %s14, 1
    %p88 = por %p86, %p87
    %p89 = scmp.ne.s32.totalorder %s80, %s81
    %p90 = scmp.eq.s32.totalorder %s14, 0
    %p91 = por %p89, %p90
    %p92 = scmp.ne.s32.totalorder %s80, %s81
    %p93 = scmp.eq.s32.totalorder %s15, 1
    %p94 = por %p92, %p93
    %p96 = scmp.ne.s32.totalorder %s81, %s95
    %p97 = scmp.eq.s32.totalorder %s15, 0
    %p98 = por %p96, %p97
    %s99 = ssub.s32 %s16, %s28
    %s100 = ssub.s32 %s17, %s24
    %s101 = sor.u32 %s99, %s100
    %p102 = scmp.eq.s32.totalorder %s101, 0
    %s104 = sadd.s32 %s103, 1
    %s105 = scalar_select %p102, %s103, %s104
    %p108 = pneg %p102
    %p109 = scmp.eq.s32.totalorder %s9, 1
    %p110 = por %p108, %p109
    %p111 = scmp.ne.s32.totalorder %s103, %s106
    %p112 = scmp.eq.s32.totalorder %s9, 0
    %p113 = por %p111, %p112
    %p114 = scmp.ne.s32.totalorder %s103, %s106
    %p115 = scmp.eq.s32.totalorder %s14, 1
    %p116 = por %p114, %p115
    %p117 = scmp.ne.s32.totalorder %s106, %s107
    %p118 = scmp.eq.s32.totalorder %s14, 0
    %p119 = por %p117, %p118
    %p120 = scmp.ne.s32.totalorder %s106, %s107
    %p121 = scmp.eq.s32.totalorder %s15, 1
    %p122 = por %p120, %p121
    %p124 = scmp.ne.s32.totalorder %s107, %s123
    %p125 = scmp.eq.s32.totalorder %s15, 0
    %p126 = por %p124, %p125
    %p127 = scmp.le.s32.totalorder 1, %s9
    %p128 = scmp.lt.s32.totalorder %s9, 3
    %p129 = pnand %p127, %p128
    %p130 = pneg %p129
    // Predicated region
    $region9: #{vgg19_slice1.5} parent=5 // pred_check
      _
    $region10: #{vgg19_slice1.5} parent=5 // pred_check_branch
      %132 = sbr.rel (%p129) target = $region12
    $region11: #{vgg19_slice1.5} parent=5 // pred_region
      %s133 = ssub.s32 %s9, 1
      // Predicated region
      $region13: #{vgg19_slice1.5} parent=11 // pred_check
        %p134 = pneg %p70
      $region14: #{vgg19_slice1.5} parent=11 // pred_check_branch
        %136 = sbr.rel (%p134) target = $region16
      $region15: #{vgg19_slice1.5} parent=11 // pred_region
        _
      $region16: #{vgg19_slice1.5} parent=11 // pred_fallthru
        _
      // Predicated region
      $region17: #{vgg19_slice1.5} parent=11 // pred_check
        %p137 = pneg %p91
      $region18: #{vgg19_slice1.5} parent=11 // pred_check_branch
        %139 = sbr.rel (%p137) target = $region20
      $region19: #{vgg19_slice1.5} parent=11 // pred_region
        _
      $region20: #{vgg19_slice1.5} parent=11 // pred_fallthru
        _
    $region12: #{vgg19_slice1.5} parent=5 // pred_fallthru
      _
    %p140 = scmp.lt.s32.totalorder %s9, 2
    // Predicated region
    $region21: #{vgg19_slice1.5} parent=5 // pred_check
      %p141 = pneg %p140
    $region22: #{vgg19_slice1.5} parent=5 // pred_check_branch
      %143 = sbr.rel (%p141) target = $region24
    $region23: #{vgg19_slice1.5} parent=5 // pred_region
      // Predicated region
      $region25: #{vgg19_slice1.5} parent=23 // pred_check
        %p144 = pneg %p43
      $region26: #{vgg19_slice1.5} parent=23 // pred_check_branch
        %146 = sbr.rel (%p144) target = $region28
      $region27: #{vgg19_slice1.5} parent=23 // pred_region
        %s147 = smul.u32 48, %s17
        %p148 = scmp.lt.s32.totalorder %s16, 1
        %s149 = scalar_select %p148, %s16, 1
        %p150 = scmp.lt.s32.totalorder %s147, 47
        %s151 = scalar_select %p150, %s147, 47
        %s152 = smul.addr %s149, 48
        %s153 = sadd.s32 %s151, %s152
        %s154 = smul.addr %s153, 4
        %s155 = scalar_lea.vmem %s0, %s154
        %s156 = smul.u32 48, %s17
      $region28: #{vgg19_slice1.5} parent=23 // pred_fallthru
        _
    $region24: #{vgg19_slice1.5} parent=5 // pred_fallthru
      _
    %p157 = scmp.le.s32.totalorder 1, %s9
    %p158 = scmp.lt.s32.totalorder %s9, 3
    %p159 = pnand %p157, %p158
    %p160 = pneg %p159
    // Predicated region
    $region29: #{vgg19_slice1.5} parent=5 // pred_check
      _
    $region30: #{vgg19_slice1.5} parent=5 // pred_check_branch
      %162 = sbr.rel (%p159) target = $region32
    $region31: #{vgg19_slice1.5} parent=5 // pred_region
      %s163 = ssub.s32 %s9, 1
      %s164 = smul.u32 48, %s19
      %p165 = scmp.lt.s32.totalorder %s18, 1
      %s166 = scalar_select %p165, %s18, 1
      %p167 = scmp.lt.s32.totalorder %s164, 47
      %s168 = scalar_select %p167, %s164, 47
      %s169 = smul.addr %s166, 48
      %s170 = sadd.s32 %s168, %s169
      %s171 = smul.addr %s170, 4
      %s172 = scalar_lea.vmem %s0, %s171
      %p173 = pneg %p49
      %p174 = pneg %p46
      %p175 = pneg %p70
      %p176 = pneg %p67
      %p177 = pneg %p91
      %p178 = pneg %p88
      %p179 = pneg %p119
      %p180 = pneg %p116
      %s181 = smul.u32 48, %s19
      %p182 = scmp.lt.s32.totalorder %s18, 1
      %s183 = scalar_select %p182, %s18, 1
      %p184 = scmp.lt.s32.totalorder %s181, 47
      %s185 = scalar_select %p184, %s181, 47
      %s186 = smul.addr %s183, 48
      %s187 = sadd.s32 %s185, %s186
      %s188 = smul.addr %s187, 4
      %s189 = scalar_lea.vmem %s3, %s188
      %s190 = smul.u32 48, %s19
      %p191 = scmp.lt.s32.totalorder %s18, 1
      %s192 = scalar_select %p191, %s18, 1
      %p193 = scmp.lt.s32.totalorder %s190, 47
      %s194 = scalar_select %p193, %s190, 47
      %s195 = smul.addr %s192, 48
      %s196 = sadd.s32 %s194, %s195
      %s197 = smul.addr %s196, 4
      %s198 = scalar_lea.vmem %s0, %s197
      %s199 = smul.u32 48, %s19
      %s200 = smul.u32 48, %s19
      %p201 = scmp.lt.s32.totalorder %s18, 1
      %s202 = scalar_select %p201, %s18, 1
      %p203 = scmp.lt.s32.totalorder %s200, 47
      %s204 = scalar_select %p203, %s200, 47
      %s205 = smul.addr %s202, 48
      %s206 = sadd.s32 %s204, %s205
      %s207 = smul.addr %s206, 4
      %s208 = scalar_lea.vmem %s3, %s207
      %s209 = smul.u32 48, %s19
      %v211 = vld [vmem:[%s198] sm:$0xf]
      %v212 = vld [vmem:[%s198 + $0x4] sm:$0xf]
      %v213 = vld [vmem:[%s198 + $0x8] sm:$0xf]
      %v214 = vld [vmem:[%s198 + $0xc] sm:$0xf]
      %v215 = vld [vmem:[%s198 + $0x10] sm:$0xf]
      %v216 = vld [vmem:[%s198 + $0x14] sm:$0xf]
      %v217 = vld [vmem:[%s198 + $0x18] sm:$0xf]
      %v218 = vld [vmem:[%s198 + $0x1c] sm:$0xf]
      %v219 = vld [vmem:[%s198 + $0x20] sm:$0xf]
      %v220 = vld [vmem:[%s198 + $0x24] sm:$0xf]
      %v221 = vld [vmem:[%s198 + $0x28] sm:$0xf]
      %v222 = vld [vmem:[%s198 + $0x2c] sm:$0xf]
      %v223 = vld [vmem:[%s198 + $0x30] sm:$0xf]
      %v224 = vld [vmem:[%s198 + $0x34] sm:$0xf]
      %v225 = vld [vmem:[%s198 + $0x38] sm:$0xf]
      %v226 = vld [vmem:[%s198 + $0x3c] sm:$0xf]
      %v227 = vld [vmem:[%s198 + $0x40] sm:$0xf]
      %v228 = vld [vmem:[%s198 + $0x44] sm:$0xf]
      %v229 = vld [vmem:[%s198 + $0x48] sm:$0xf]
      %v230 = vld [vmem:[%s198 + $0x4c] sm:$0xf]
      %v231 = vld [vmem:[%s198 + $0x50] sm:$0xf]
      %v232 = vld [vmem:[%s198 + $0x54] sm:$0xf]
      %v233 = vld [vmem:[%s198 + $0x58] sm:$0xf]
      %v234 = vld [vmem:[%s198 + $0x5c] sm:$0xf]
      %v235 = vld [vmem:[%s198 + $0x60] sm:$0xf]
      %v236 = vld [vmem:[%s198 + $0x64] sm:$0xf]
      %v237 = vld [vmem:[%s198 + $0x68] sm:$0xf]
      %v238 = vld [vmem:[%s198 + $0x6c] sm:$0xf]
      %v239 = vld [vmem:[%s198 + $0x70] sm:$0xf]
      %v240 = vld [vmem:[%s198 + $0x74] sm:$0xf]
      %v241 = vld [vmem:[%s198 + $0x78] sm:$0xf]
      %v242 = vld [vmem:[%s198 + $0x7c] sm:$0xf]
      %v243 = vld [vmem:[%s198 + $0x80] sm:$0xf]
      %v244 = vld [vmem:[%s198 + $0x84] sm:$0xf]
      %v245 = vld [vmem:[%s198 + $0x88] sm:$0xf]
      %v246 = vld [vmem:[%s198 + $0x8c] sm:$0xf]
      %v247 = vld [vmem:[%s198 + $0x90] sm:$0xf]
      %v248 = vld [vmem:[%s198 + $0x94] sm:$0xf]
      %v249 = vld [vmem:[%s198 + $0x98] sm:$0xf]
      %v250 = vld [vmem:[%s198 + $0x9c] sm:$0xf]
      %v251 = vld [vmem:[%s198 + $0xa0] sm:$0xf]
      %v252 = vld [vmem:[%s198 + $0xa4] sm:$0xf]
      %v253 = vld [vmem:[%s198 + $0xa8] sm:$0xf]
      %v254 = vld [vmem:[%s198 + $0xac] sm:$0xf]
      %v255 = vld [vmem:[%s198 + $0xb0] sm:$0xf]
      %v256 = vld [vmem:[%s198 + $0xb4] sm:$0xf]
      %v257 = vld [vmem:[%s198 + $0xb8] sm:$0xf]
      %v258 = vld [vmem:[%s198 + $0xbc] sm:$0xf]
      %v259 = vld [vmem:[%s1] sm:$0xf]
      %v260 = vld [vmem:[%s1 + $0x4] sm:$0xf]
      %v261 = vld [vmem:[%s1 + $0x8] sm:$0xf]
      %v262 = vld [vmem:[%s1 + $0xc] sm:$0xf]
      %v263 = vld [vmem:[%s2] sm:$0x1]
      %v265 = vperm.slane %v263, 0
      %v315 = vunpack.c.l.b16 %v211
      %v316 = vunpack.c.l.b16 %v212
      %v317 = vunpack.c.l.b16 %v213
      %v318 = vunpack.c.l.b16 %v214
      %v319 = vunpack.c.l.b16 %v215
      %v320 = vunpack.c.l.b16 %v216
      %v321 = vunpack.c.l.b16 %v217
      %v322 = vunpack.c.l.b16 %v218
      %v323 = vunpack.c.l.b16 %v219
      %v324 = vunpack.c.l.b16 %v220
      %v325 = vunpack.c.l.b16 %v221
      %v326 = vunpack.c.l.b16 %v222
      %v327 = vunpack.c.l.b16 %v223
      %v328 = vunpack.c.l.b16 %v224
      %v329 = vunpack.c.l.b16 %v225
      %v330 = vunpack.c.l.b16 %v226
      %v331 = vunpack.c.l.b16 %v227
      %v332 = vunpack.c.l.b16 %v228
      %v333 = vunpack.c.l.b16 %v229
      %v334 = vunpack.c.l.b16 %v230
      %v335 = vunpack.c.l.b16 %v231
      %v336 = vunpack.c.l.b16 %v232
      %v337 = vunpack.c.l.b16 %v233
      %v338 = vunpack.c.l.b16 %v234
      %v339 = vunpack.c.l.b16 %v235
      %v340 = vunpack.c.l.b16 %v236
      %v341 = vunpack.c.l.b16 %v237
      %v342 = vunpack.c.l.b16 %v238
      %v343 = vunpack.c.l.b16 %v239
      %v344 = vunpack.c.l.b16 %v240
      %v345 = vunpack.c.l.b16 %v241
      %v346 = vunpack.c.l.b16 %v242
      %v347 = vunpack.c.l.b16 %v243
      %v348 = vunpack.c.l.b16 %v244
      %v349 = vunpack.c.l.b16 %v245
      %v350 = vunpack.c.l.b16 %v246
      %v351 = vunpack.c.l.b16 %v247
      %v352 = vunpack.c.l.b16 %v248
      %v353 = vunpack.c.l.b16 %v249
      %v354 = vunpack.c.l.b16 %v250
      %v355 = vunpack.c.l.b16 %v251
      %v356 = vunpack.c.l.b16 %v252
      %v357 = vunpack.c.l.b16 %v253
      %v358 = vunpack.c.l.b16 %v254
      %v359 = vunpack.c.l.b16 %v255
      %v360 = vunpack.c.l.b16 %v256
      %v361 = vunpack.c.l.b16 %v257
      %v362 = vunpack.c.l.b16 %v258
      %v363 = vpack.c.b16 %v316, %v315
      %v364 = vpack.c.b16 %v318, %v317
      %v365 = vpack.c.b16 %v320, %v319
      %v366 = vpack.c.b16 %v322, %v321
      %v367 = vpack.c.b16 %v324, %v323
      %v368 = vpack.c.b16 %v326, %v325
      %v369 = vpack.c.b16 %v328, %v327
      %v370 = vpack.c.b16 %v330, %v329
      %v371 = vpack.c.b16 %v332, %v331
      %v372 = vpack.c.b16 %v334, %v333
      %v373 = vpack.c.b16 %v336, %v335
      %v374 = vpack.c.b16 %v338, %v337
      %v375 = vpack.c.b16 %v340, %v339
      %v376 = vpack.c.b16 %v342, %v341
      %v377 = vpack.c.b16 %v344, %v343
      %v378 = vpack.c.b16 %v346, %v345
      %v379 = vpack.c.b16 %v348, %v347
      %v380 = vpack.c.b16 %v350, %v349
      %v381 = vpack.c.b16 %v352, %v351
      %v382 = vpack.c.b16 %v354, %v353
      %v383 = vpack.c.b16 %v356, %v355
      %v384 = vpack.c.b16 %v358, %v357
      %v385 = vpack.c.b16 %v360, %v359
      %v386 = vpack.c.b16 %v362, %v361
      %v391 = vunpack.c.l.b16 %v259
      %v392 = vunpack.c.l.b16 %v260
      %v393 = vunpack.c.l.b16 %v261
      %v394 = vunpack.c.l.b16 %v262
      %v395 = vpack.c.b16 %v392, %v391
      %v396 = vpack.c.b16 %v394, %v393
      %vm399 = vcmask 261120
      %v401 = vsel %vm399, %v363, 0
      %v404 = vsel %vm399, %v364, 0
      %v407 = vsel %vm399, %v365, 0
      %v410 = vsel %vm399, %v366, 0
      %v413 = vsel %vm399, %v367, 0
      %v416 = vsel %vm399, %v368, 0
      %v419 = vsel %vm399, %v369, 0
      %v422 = vsel %vm399, %v370, 0
      %v425 = vsel %vm399, %v371, 0
      %v428 = vsel %vm399, %v372, 0
      %v431 = vsel %vm399, %v373, 0
      %v434 = vsel %vm399, %v374, 0
      %v437 = vsel %vm399, %v375, 0
      %v440 = vsel %vm399, %v376, 0
      %v443 = vsel %vm399, %v377, 0
      %v446 = vsel %vm399, %v378, 0
      %v449 = vsel %vm399, %v379, 0
      %v452 = vsel %vm399, %v380, 0
      %v455 = vsel %vm399, %v381, 0
      %v458 = vsel %vm399, %v382, 0
      %v461 = vsel %vm399, %v383, 0
      %v464 = vsel %vm399, %v384, 0
      %v467 = vsel %vm399, %v385, 0
      %v470 = vsel %vm399, %v386, 0
      %472 = vmatpush.bf16.msra.mxu0 0
      %473 = vmatpush.bf16.msra.mxu0 0
      %474 = vmatpush.bf16.msra.mxu0 0
      %475 = vmatpush.bf16.msra.mxu0 0
      %476 = vmatpush.bf16.msra.mxu0 0
      %477 = vmatpush.bf16.msra.mxu0 0
      %478 = vmatpush.bf16.msra.mxu0 %v396
      %479 = vmatpush.bf16.msra.mxu0 %v395
      %480 = vmatmul.bf16.gmra.mxu0 %v401
      %v481 = vpop.f32.mrf.mxu0
      %v482 = vadd.f32 %v265, %v481
      %v483 = vpop.f32.mrf.mxu0
      %v484 = vadd.f32 %v265, %v483
      %485 = vmatmul.bf16.gmra.mxu0 %v404
      %v486 = vpop.f32.mrf.mxu0
      %v487 = vadd.f32 %v265, %v486
      %v488 = vpop.f32.mrf.mxu0
      %v489 = vadd.f32 %v265, %v488
      %490 = vmatmul.bf16.gmra.mxu0 %v407
      %v491 = vpop.f32.mrf.mxu0
      %v492 = vadd.f32 %v265, %v491
      %v493 = vpop.f32.mrf.mxu0
      %v494 = vadd.f32 %v265, %v493
      %495 = vmatmul.bf16.gmra.mxu0 %v410
      %v496 = vpop.f32.mrf.mxu0
      %v497 = vadd.f32 %v265, %v496
      %v498 = vpop.f32.mrf.mxu0
      %v499 = vadd.f32 %v265, %v498
      %500 = vmatmul.bf16.gmra.mxu0 %v413
      %v501 = vpop.f32.mrf.mxu0
      %v502 = vadd.f32 %v265, %v501
      %v503 = vpop.f32.mrf.mxu0
      %v504 = vadd.f32 %v265, %v503
      %505 = vmatmul.bf16.gmra.mxu0 %v416
      %v506 = vpop.f32.mrf.mxu0
      %v507 = vadd.f32 %v265, %v506
      %v508 = vpop.f32.mrf.mxu0
      %v509 = vadd.f32 %v265, %v508
      %510 = vmatmul.bf16.gmra.mxu0 %v419
      %v511 = vpop.f32.mrf.mxu0
      %v512 = vadd.f32 %v265, %v511
      %v513 = vpop.f32.mrf.mxu0
      %v514 = vadd.f32 %v265, %v513
      %515 = vmatmul.bf16.gmra.mxu0 %v422
      %v516 = vpop.f32.mrf.mxu0
      %v517 = vadd.f32 %v265, %v516
      %v518 = vpop.f32.mrf.mxu0
      %v519 = vadd.f32 %v265, %v518
      %520 = vmatmul.bf16.gmra.mxu0 %v425
      %v521 = vpop.f32.mrf.mxu0
      %v522 = vadd.f32 %v265, %v521
      %v523 = vpop.f32.mrf.mxu0
      %v524 = vadd.f32 %v265, %v523
      %525 = vmatmul.bf16.gmra.mxu0 %v428
      %v526 = vpop.f32.mrf.mxu0
      %v527 = vadd.f32 %v265, %v526
      %v528 = vpop.f32.mrf.mxu0
      %v529 = vadd.f32 %v265, %v528
      %530 = vmatmul.bf16.gmra.mxu0 %v431
      %v531 = vpop.f32.mrf.mxu0
      %v532 = vadd.f32 %v265, %v531
      %v533 = vpop.f32.mrf.mxu0
      %v534 = vadd.f32 %v265, %v533
      %535 = vmatmul.bf16.gmra.mxu0 %v434
      %v536 = vpop.f32.mrf.mxu0
      %v537 = vadd.f32 %v265, %v536
      %v538 = vpop.f32.mrf.mxu0
      %v539 = vadd.f32 %v265, %v538
      %540 = vmatmul.bf16.gmra.mxu0 %v437
      %v541 = vpop.f32.mrf.mxu0
      %v542 = vadd.f32 %v265, %v541
      %v543 = vpop.f32.mrf.mxu0
      %v544 = vadd.f32 %v265, %v543
      %545 = vmatmul.bf16.gmra.mxu0 %v440
      %v546 = vpop.f32.mrf.mxu0
      %v547 = vadd.f32 %v265, %v546
      %v548 = vpop.f32.mrf.mxu0
      %v549 = vadd.f32 %v265, %v548
      %550 = vmatmul.bf16.gmra.mxu0 %v443
      %v551 = vpop.f32.mrf.mxu0
      %v552 = vadd.f32 %v265, %v551
      %v553 = vpop.f32.mrf.mxu0
      %v554 = vadd.f32 %v265, %v553
      %555 = vmatmul.bf16.gmra.mxu0 %v446
      %v556 = vpop.f32.mrf.mxu0
      %v557 = vadd.f32 %v265, %v556
      %v558 = vpop.f32.mrf.mxu0
      %v559 = vadd.f32 %v265, %v558
      %560 = vmatmul.bf16.gmra.mxu0 %v449
      %v561 = vpop.f32.mrf.mxu0
      %v562 = vadd.f32 %v265, %v561
      %v563 = vpop.f32.mrf.mxu0
      %v564 = vadd.f32 %v265, %v563
      %565 = vmatmul.bf16.gmra.mxu0 %v452
      %v566 = vpop.f32.mrf.mxu0
      %v567 = vadd.f32 %v265, %v566
      %v568 = vpop.f32.mrf.mxu0
      %v569 = vadd.f32 %v265, %v568
      %570 = vmatmul.bf16.gmra.mxu0 %v455
      %v571 = vpop.f32.mrf.mxu0
      %v572 = vadd.f32 %v265, %v571
      %v573 = vpop.f32.mrf.mxu0
      %v574 = vadd.f32 %v265, %v573
      %575 = vmatmul.bf16.gmra.mxu0 %v458
      %v576 = vpop.f32.mrf.mxu0
      %v577 = vadd.f32 %v265, %v576
      %v578 = vpop.f32.mrf.mxu0
      %v579 = vadd.f32 %v265, %v578
      %580 = vmatmul.bf16.gmra.mxu0 %v461
      %v581 = vpop.f32.mrf.mxu0
      %v582 = vadd.f32 %v265, %v581
      %v583 = vpop.f32.mrf.mxu0
      %v584 = vadd.f32 %v265, %v583
      %585 = vmatmul.bf16.gmra.mxu0 %v464
      %v586 = vpop.f32.mrf.mxu0
      %v587 = vadd.f32 %v265, %v586
      %v588 = vpop.f32.mrf.mxu0
      %v589 = vadd.f32 %v265, %v588
      %590 = vmatmul.bf16.gmra.mxu0 %v467
      %v591 = vpop.f32.mrf.mxu0
      %v592 = vadd.f32 %v265, %v591
      %v593 = vpop.f32.mrf.mxu0
      %v594 = vadd.f32 %v265, %v593
      %595 = vmatmul.bf16.gmra.mxu0 %v470
      %v596 = vpop.f32.mrf.mxu0
      %v597 = vadd.f32 %v265, %v596
      %v598 = vpop.f32.mrf.mxu0
      %v599 = vadd.f32 %v265, %v598
      %600 = vdwg.mxu0
      %v601 = vmax.f32 %v482, 0.0
      %v602 = vmax.f32 %v484, 0.0
      %v603 = vmax.f32 %v487, 0.0
      %v604 = vmax.f32 %v489, 0.0
      %v605 = vmax.f32 %v492, 0.0
      %v606 = vmax.f32 %v494, 0.0
      %v607 = vmax.f32 %v497, 0.0
      %v608 = vmax.f32 %v499, 0.0
      %v609 = vmax.f32 %v502, 0.0
      %v610 = vmax.f32 %v504, 0.0
      %v611 = vmax.f32 %v507, 0.0
      %v612 = vmax.f32 %v509, 0.0
      %v613 = vmax.f32 %v512, 0.0
      %v614 = vmax.f32 %v514, 0.0
      %v615 = vmax.f32 %v517, 0.0
      %v616 = vmax.f32 %v519, 0.0
      %v617 = vmax.f32 %v522, 0.0
      %v618 = vmax.f32 %v524, 0.0
      %v619 = vmax.f32 %v527, 0.0
      %v620 = vmax.f32 %v529, 0.0
      %v621 = vmax.f32 %v532, 0.0
      %v622 = vmax.f32 %v534, 0.0
      %v623 = vmax.f32 %v537, 0.0
      %v624 = vmax.f32 %v539, 0.0
      %v625 = vmax.f32 %v542, 0.0
      %v626 = vmax.f32 %v544, 0.0
      %v627 = vmax.f32 %v547, 0.0
      %v628 = vmax.f32 %v549, 0.0
      %v629 = vmax.f32 %v552, 0.0
      %v630 = vmax.f32 %v554, 0.0
      %v631 = vmax.f32 %v557, 0.0
      %v632 = vmax.f32 %v559, 0.0
      %v633 = vmax.f32 %v562, 0.0
      %v634 = vmax.f32 %v564, 0.0
      %v635 = vmax.f32 %v567, 0.0
      %v636 = vmax.f32 %v569, 0.0
      %v637 = vmax.f32 %v572, 0.0
      %v638 = vmax.f32 %v574, 0.0
      %v639 = vmax.f32 %v577, 0.0
      %v640 = vmax.f32 %v579, 0.0
      %v641 = vmax.f32 %v582, 0.0
      %v642 = vmax.f32 %v584, 0.0
      %v643 = vmax.f32 %v587, 0.0
      %v644 = vmax.f32 %v589, 0.0
      %v645 = vmax.f32 %v592, 0.0
      %v646 = vmax.f32 %v594, 0.0
      %v647 = vmax.f32 %v597, 0.0
      %v648 = vmax.f32 %v599, 0.0
      %v649 = vpack.c.bf16 %v601, %v601
      %v650 = vpack.c.bf16 %v602, %v602
      %v651 = vpack.c.bf16 %v603, %v603
      %v652 = vpack.c.bf16 %v604, %v604
      %v653 = vpack.c.bf16 %v605, %v605
      %v654 = vpack.c.bf16 %v606, %v606
      %v655 = vpack.c.bf16 %v607, %v607
      %v656 = vpack.c.bf16 %v608, %v608
      %v657 = vpack.c.bf16 %v609, %v609
      %v658 = vpack.c.bf16 %v610, %v610
      %v659 = vpack.c.bf16 %v611, %v611
      %v660 = vpack.c.bf16 %v612, %v612
      %v661 = vpack.c.bf16 %v613, %v613
      %v662 = vpack.c.bf16 %v614, %v614
      %v663 = vpack.c.bf16 %v615, %v615
      %v664 = vpack.c.bf16 %v616, %v616
      %v665 = vpack.c.bf16 %v617, %v617
      %v666 = vpack.c.bf16 %v618, %v618
      %v667 = vpack.c.bf16 %v619, %v619
      %v668 = vpack.c.bf16 %v620, %v620
      %v669 = vpack.c.bf16 %v621, %v621
      %v670 = vpack.c.bf16 %v622, %v622
      %v671 = vpack.c.bf16 %v623, %v623
      %v672 = vpack.c.bf16 %v624, %v624
      %v673 = vpack.c.bf16 %v625, %v625
      %v674 = vpack.c.bf16 %v626, %v626
      %v675 = vpack.c.bf16 %v627, %v627
      %v676 = vpack.c.bf16 %v628, %v628
      %v677 = vpack.c.bf16 %v629, %v629
      %v678 = vpack.c.bf16 %v630, %v630
      %v679 = vpack.c.bf16 %v631, %v631
      %v680 = vpack.c.bf16 %v632, %v632
      %v681 = vpack.c.bf16 %v633, %v633
      %v682 = vpack.c.bf16 %v634, %v634
      %v683 = vpack.c.bf16 %v635, %v635
      %v684 = vpack.c.bf16 %v636, %v636
      %v685 = vpack.c.bf16 %v637, %v637
      %v686 = vpack.c.bf16 %v638, %v638
      %v687 = vpack.c.bf16 %v639, %v639
      %v688 = vpack.c.bf16 %v640, %v640
      %v689 = vpack.c.bf16 %v641, %v641
      %v690 = vpack.c.bf16 %v642, %v642
      %v691 = vpack.c.bf16 %v643, %v643
      %v692 = vpack.c.bf16 %v644, %v644
      %v693 = vpack.c.bf16 %v645, %v645
      %v694 = vpack.c.bf16 %v646, %v646
      %v695 = vpack.c.bf16 %v647, %v647
      %v696 = vpack.c.bf16 %v648, %v648
      %vm697 = vcmask 519168
      %698 = vst.msk [vmem:[%s208] sm:$0xf] %vm697, %v649
      %699 = vst.msk [vmem:[%s208 + $0x4] sm:$0xf] %vm697, %v650
      %700 = vst.msk [vmem:[%s208 + $0x8] sm:$0xf] %vm697, %v651
      %701 = vst.msk [vmem:[%s208 + $0xc] sm:$0xf] %vm697, %v652
      %702 = vst.msk [vmem:[%s208 + $0x10] sm:$0xf] %vm697, %v653
      %703 = vst.msk [vmem:[%s208 + $0x14] sm:$0xf] %vm697, %v654
      %704 = vst.msk [vmem:[%s208 + $0x18] sm:$0xf] %vm697, %v655
      %705 = vst.msk [vmem:[%s208 + $0x1c] sm:$0xf] %vm697, %v656
      %706 = vst.msk [vmem:[%s208 + $0x20] sm:$0xf] %vm697, %v657
      %707 = vst.msk [vmem:[%s208 + $0x24] sm:$0xf] %vm697, %v658
      %708 = vst.msk [vmem:[%s208 + $0x28] sm:$0xf] %vm697, %v659
      %709 = vst.msk [vmem:[%s208 + $0x2c] sm:$0xf] %vm697, %v660
      %710 = vst.msk [vmem:[%s208 + $0x30] sm:$0xf] %vm697, %v661
      %711 = vst.msk [vmem:[%s208 + $0x34] sm:$0xf] %vm697, %v662
      %712 = vst.msk [vmem:[%s208 + $0x38] sm:$0xf] %vm697, %v663
      %713 = vst.msk [vmem:[%s208 + $0x3c] sm:$0xf] %vm697, %v664
      %714 = vst.msk [vmem:[%s208 + $0x40] sm:$0xf] %vm697, %v665
      %715 = vst.msk [vmem:[%s208 + $0x44] sm:$0xf] %vm697, %v666
      %716 = vst.msk [vmem:[%s208 + $0x48] sm:$0xf] %vm697, %v667
      %717 = vst.msk [vmem:[%s208 + $0x4c] sm:$0xf] %vm697, %v668
      %718 = vst.msk [vmem:[%s208 + $0x50] sm:$0xf] %vm697, %v669
      %719 = vst.msk [vmem:[%s208 + $0x54] sm:$0xf] %vm697, %v670
      %720 = vst.msk [vmem:[%s208 + $0x58] sm:$0xf] %vm697, %v671
      %721 = vst.msk [vmem:[%s208 + $0x5c] sm:$0xf] %vm697, %v672
      %722 = vst.msk [vmem:[%s208 + $0x60] sm:$0xf] %vm697, %v673
      %723 = vst.msk [vmem:[%s208 + $0x64] sm:$0xf] %vm697, %v674
      %724 = vst.msk [vmem:[%s208 + $0x68] sm:$0xf] %vm697, %v675
      %725 = vst.msk [vmem:[%s208 + $0x6c] sm:$0xf] %vm697, %v676
      %726 = vst.msk [vmem:[%s208 + $0x70] sm:$0xf] %vm697, %v677
      %727 = vst.msk [vmem:[%s208 + $0x74] sm:$0xf] %vm697, %v678
      %728 = vst.msk [vmem:[%s208 + $0x78] sm:$0xf] %vm697, %v679
      %729 = vst.msk [vmem:[%s208 + $0x7c] sm:$0xf] %vm697, %v680
      %730 = vst.msk [vmem:[%s208 + $0x80] sm:$0xf] %vm697, %v681
      %731 = vst.msk [vmem:[%s208 + $0x84] sm:$0xf] %vm697, %v682
      %732 = vst.msk [vmem:[%s208 + $0x88] sm:$0xf] %vm697, %v683
      %733 = vst.msk [vmem:[%s208 + $0x8c] sm:$0xf] %vm697, %v684
      %734 = vst.msk [vmem:[%s208 + $0x90] sm:$0xf] %vm697, %v685
      %735 = vst.msk [vmem:[%s208 + $0x94] sm:$0xf] %vm697, %v686
      %736 = vst.msk [vmem:[%s208 + $0x98] sm:$0xf] %vm697, %v687
      %737 = vst.msk [vmem:[%s208 + $0x9c] sm:$0xf] %vm697, %v688
      %738 = vst.msk [vmem:[%s208 + $0xa0] sm:$0xf] %vm697, %v689
      %739 = vst.msk [vmem:[%s208 + $0xa4] sm:$0xf] %vm697, %v690
      %740 = vst.msk [vmem:[%s208 + $0xa8] sm:$0xf] %vm697, %v691
      %741 = vst.msk [vmem:[%s208 + $0xac] sm:$0xf] %vm697, %v692
      %742 = vst.msk [vmem:[%s208 + $0xb0] sm:$0xf] %vm697, %v693
      %743 = vst.msk [vmem:[%s208 + $0xb4] sm:$0xf] %vm697, %v694
      %744 = vst.msk [vmem:[%s208 + $0xb8] sm:$0xf] %vm697, %v695
      %745 = vst.msk [vmem:[%s208 + $0xbc] sm:$0xf] %vm697, %v696
      %s746 = smul.u32 48, %s19
      %p747 = scmp.lt.s32.totalorder %s18, 1
      %s748 = scalar_select %p747, %s18, 1
      %p749 = scmp.lt.s32.totalorder %s746, 47
      %s750 = scalar_select %p749, %s746, 47
      %s751 = smul.addr %s748, 48
      %s752 = sadd.s32 %s750, %s751
      %s753 = smul.addr %s752, 4
      %s754 = scalar_lea.vmem %s3, %s753
      // Predicated region
      $region33: #{vgg19_slice1.5} parent=31 // pred_check
        %p755 = pneg %p116
      $region34: #{vgg19_slice1.5} parent=31 // pred_check_branch
        %757 = sbr.rel (%p755) target = $region36
      $region35: #{vgg19_slice1.5} parent=31 // pred_region
        %s758 = smul.u32 48, %s19
      $region36: #{vgg19_slice1.5} parent=31 // pred_fallthru
        _
    $region32: #{vgg19_slice1.5} parent=5 // pred_fallthru
      _
    %p759 = scmp.le.s32.totalorder 2, %s9
    // Predicated region
    $region37: #{vgg19_slice1.5} parent=5 // pred_check
      %p760 = pneg %p759
    $region38: #{vgg19_slice1.5} parent=5 // pred_check_branch
      %762 = sbr.rel (%p760) target = $region40
    $region39: #{vgg19_slice1.5} parent=5 // pred_region
      %s763 = ssub.s32 %s9, 2
      // Predicated region
      $region41: #{vgg19_slice1.5} parent=39 // pred_check
        %p764 = pneg %p122
      $region42: #{vgg19_slice1.5} parent=39 // pred_check_branch
        %766 = sbr.rel (%p764) target = $region44
      $region43: #{vgg19_slice1.5} parent=39 // pred_region
        %s767 = smul.u32 48, %s21
        %p768 = scmp.lt.s32.totalorder %s20, 1
        %s769 = scalar_select %p768, %s20, 1
        %p770 = scmp.lt.s32.totalorder %s767, 47
        %s771 = scalar_select %p770, %s767, 47
        %s772 = smul.addr %s769, 48
        %s773 = sadd.s32 %s771, %s772
        %s774 = smul.addr %s773, 4
        %s775 = scalar_lea.vmem %s3, %s774
      $region44: #{vgg19_slice1.5} parent=39 // pred_fallthru
        _
    $region40: #{vgg19_slice1.5} parent=5 // pred_fallthru
      _
  $region6: #{vgg19_slice1.5} parent=0 // loop_footer
    %s13 = sadd.s32 1, %s9
  $region7: #{vgg19_slice1.5} parent=0 // loop_footer_branch
    %8 = sbr.rel target = $region3
  $region8: #{vgg19_slice1.5} parent=0 // loop_exit
    _

// kernel: vgg19_slice1.7
$region0: #{vgg19_slice1.7}
  #allocation0 [shape = 'u32[]', space=smem, size = 0x4, offset = 0x4, fixed_abs, tag = 'smem constant byte address 0x4 - core index']
  #allocation1 [shape = 'u32[72,128]{1,0:T(1,128)}', space=vmem, size = 0x9000, scoped, tag = 'internal scratch']
  %s0 = inlined_call_operand.vmem [shape: bf16[2,192,64], index: 0, kind: input, shape index: {}, may-alias: {0,1}]
  %s1 = inlined_call_operand.vmem [shape: bf16[2,192,64], index: 1, kind: input, shape index: {}, may-alias: {0,1}]
  %s2 = inlined_call_operand.vmem [shape: bf16[9,64,128], index: 2, kind: input, shape index: {}]
  %s3 = inlined_call_operand.vmem [shape: f32[1,128], index: 3, kind: input, shape index: {}]
  %s4 = inlined_call_operand.vmem [shape: bf16[2,128,128], index: 4, kind: output, shape index: {}]
  %s5 = sld [smem:[#allocation0]]
  $region49: #{vgg19_slice1.7} parent=0
    _
  %s7 = ssub.s32 1, %s5
  %s8 = scalar_select 0, %s7, %s5
  loop: start=0, step=1, limit=4
  $region2: #{vgg19_slice1.7} parent=0 // loop_pre_header
    _
  $region3: #{vgg19_slice1.7} parent=0 // loop_header
    %s10 = sphi 0, %s14
    %p11 = scmp.ge.s32.totalorder %s10, 4
    %s17 = sphi 0, %s29
    %s18 = sphi 0, %s25
    %s19 = sphi 0, %s17
    %s20 = sphi 0, %s18
    %s21 = sphi 0, %s19
    %s22 = sphi 0, %s20
    %s34 = sphi 0, %s36
    %s37 = sphi 0, %s34
    %s38 = sphi 0, %s37
    %s54 = sphi 0, %s38
    %s66 = sphi 0, %s68
    %s69 = sphi 0, %s66
    %s70 = sphi 0, %s69
    %s86 = sphi 0, %s70
    %s90 = sphi 0, %s90
    %s92 = sphi 0, %s90
    %s93 = sphi 0, %s92
    %s107 = sphi 0, %s93
    %s111 = sphi 0, %s111
    %s113 = sphi 0, %s111
    %s114 = sphi 0, %s113
    %s128 = sphi 0, %s114
    %s136 = sphi 0, %s138
    %s139 = sphi 0, %s136
    %s140 = sphi 0, %s139
    %s156 = sphi 0, %s140
  $region4: #{vgg19_slice1.7} parent=0 // loop_header_branch
    %13 = sbr.rel (%p11) target = $region8
  $region5: #{vgg19_slice1.7} parent=0 // loop_body
    %s15 = ssub.s32 %s10, 1
    %s16 = ssub.s32 %s10, 2
    %s23 = sadd.s32 1, %s18
    %p24 = scmp.ge.s32.totalorder %s23, 1
    %s25 = scalar_select %p24, 0, %s23
    %s26 = sadd.s32 1, %s17
    %s27 = scalar_select %p24, %s26, %s17
    %p28 = scmp.ge.s32.totalorder %s27, 2
    %s29 = scalar_select %p28, 0, %s27
    %s30 = ssub.s32 %s17, %s29
    %s31 = ssub.s32 %s18, %s25
    %s32 = sor.u32 %s30, %s31
    %p33 = scmp.eq.s32.totalorder %s32, 0
    %s35 = sadd.s32 %s34, 1
    %s36 = scalar_select %p33, %s34, %s35
    %p39 = pneg %p33
    %p40 = scmp.eq.s32.totalorder %s10, 1
    %p41 = por %p39, %p40
    %p42 = scmp.ne.s32.totalorder %s34, %s37
    %p43 = scmp.eq.s32.totalorder %s10, 0
    %p44 = por %p42, %p43
    %p45 = scmp.ne.s32.totalorder %s34, %s37
    %p46 = scmp.eq.s32.totalorder %s15, 1
    %p47 = por %p45, %p46
    %p48 = scmp.ne.s32.totalorder %s37, %s38
    %p49 = scmp.eq.s32.totalorder %s15, 0
    %p50 = por %p48, %p49
    %p51 = scmp.ne.s32.totalorder %s37, %s38
    %p52 = scmp.eq.s32.totalorder %s16, 1
    %p53 = por %p51, %p52
    %p55 = scmp.ne.s32.totalorder %s38, %s54
    %p56 = scmp.eq.s32.totalorder %s16, 0
    %p57 = por %p55, %p56
    %s58 = sadd.s32 %s18, 1
    %s59 = smul.u32 %s58, 2
    %s60 = sadd.s32 %s25, 1
    %s61 = smul.u32 %s60, 2
    %s62 = ssub.s32 %s17, %s29
    %s63 = ssub.s32 %s59, %s61
    %s64 = sor.u32 %s62, %s63
    %p65 = scmp.eq.s32.totalorder %s64, 0
    %s67 = sadd.s32 %s66, 1
    %s68 = scalar_select %p65, %s66, %s67
    %p71 = pneg %p65
    %p72 = scmp.eq.s32.totalorder %s10, 1
    %p73 = por %p71, %p72
    %p74 = scmp.ne.s32.totalorder %s66, %s69
    %p75 = scmp.eq.s32.totalorder %s10, 0
    %p76 = por %p74, %p75
    %p77 = scmp.ne.s32.totalorder %s66, %s69
    %p78 = scmp.eq.s32.totalorder %s15, 1
    %p79 = por %p77, %p78
    %p80 = scmp.ne.s32.totalorder %s69, %s70
    %p81 = scmp.eq.s32.totalorder %s15, 0
    %p82 = por %p80, %p81
    %p83 = scmp.ne.s32.totalorder %s69, %s70
    %p84 = scmp.eq.s32.totalorder %s16, 1
    %p85 = por %p83, %p84
    %p87 = scmp.ne.s32.totalorder %s70, %s86
    %p88 = scmp.eq.s32.totalorder %s16, 0
    %p89 = por %p87, %p88
    %s91 = sadd.s32 %s90, 1
    %p94 = scmp.eq.s32.totalorder %s10, 1
    %p95 = scmp.ne.s32.totalorder %s90, %s92
    %p96 = scmp.eq.s32.totalorder %s10, 0
    %p97 = por %p95, %p96
    %p98 = scmp.ne.s32.totalorder %s90, %s92
    %p99 = scmp.eq.s32.totalorder %s15, 1
    %p100 = por %p98, %p99
    %p101 = scmp.ne.s32.totalorder %s92, %s93
    %p102 = scmp.eq.s32.totalorder %s15, 0
    %p103 = por %p101, %p102
    %p104 = scmp.ne.s32.totalorder %s92, %s93
    %p105 = scmp.eq.s32.totalorder %s16, 1
    %p106 = por %p104, %p105
    %p108 = scmp.ne.s32.totalorder %s93, %s107
    %p109 = scmp.eq.s32.totalorder %s16, 0
    %p110 = por %p108, %p109
    %s112 = sadd.s32 %s111, 1
    %p115 = scmp.eq.s32.totalorder %s10, 1
    %p116 = scmp.ne.s32.totalorder %s111, %s113
    %p117 = scmp.eq.s32.totalorder %s10, 0
    %p118 = por %p116, %p117
    %p119 = scmp.ne.s32.totalorder %s111, %s113
    %p120 = scmp.eq.s32.totalorder %s15, 1
    %p121 = por %p119, %p120
    %p122 = scmp.ne.s32.totalorder %s113, %s114
    %p123 = scmp.eq.s32.totalorder %s15, 0
    %p124 = por %p122, %p123
    %p125 = scmp.ne.s32.totalorder %s113, %s114
    %p126 = scmp.eq.s32.totalorder %s16, 1
    %p127 = por %p125, %p126
    %p129 = scmp.ne.s32.totalorder %s114, %s128
    %p130 = scmp.eq.s32.totalorder %s16, 0
    %p131 = por %p129, %p130
    %s132 = ssub.s32 %s17, %s29
    %s133 = ssub.s32 %s18, %s25
    %s134 = sor.u32 %s132, %s133
    %p135 = scmp.eq.s32.totalorder %s134, 0
    %s137 = sadd.s32 %s136, 1
    %s138 = scalar_select %p135, %s136, %s137
    %p141 = pneg %p135
    %p142 = scmp.eq.s32.totalorder %s10, 1
    %p143 = por %p141, %p142
    %p144 = scmp.ne.s32.totalorder %s136, %s139
    %p145 = scmp.eq.s32.totalorder %s10, 0
    %p146 = por %p144, %p145
    %p147 = scmp.ne.s32.totalorder %s136, %s139
    %p148 = scmp.eq.s32.totalorder %s15, 1
    %p149 = por %p147, %p148
    %p150 = scmp.ne.s32.totalorder %s139, %s140
    %p151 = scmp.eq.s32.totalorder %s15, 0
    %p152 = por %p150, %p151
    %p153 = scmp.ne.s32.totalorder %s139, %s140
    %p154 = scmp.eq.s32.totalorder %s16, 1
    %p155 = por %p153, %p154
    %p157 = scmp.ne.s32.totalorder %s140, %s156
    %p158 = scmp.eq.s32.totalorder %s16, 0
    %p159 = por %p157, %p158
    %p160 = scmp.le.s32.totalorder 1, %s10
    %p161 = scmp.lt.s32.totalorder %s10, 3
    %p162 = pnand %p160, %p161
    %p163 = pneg %p162
    // Predicated region
    $region9: #{vgg19_slice1.7} parent=5 // pred_check
      _
    $region10: #{vgg19_slice1.7} parent=5 // pred_check_branch
      %165 = sbr.rel (%p162) target = $region12
    $region11: #{vgg19_slice1.7} parent=5 // pred_region
      %s166 = ssub.s32 %s10, 1
      // Predicated region
      $region13: #{vgg19_slice1.7} parent=11 // pred_check
        %p167 = pneg %p103
      $region14: #{vgg19_slice1.7} parent=11 // pred_check_branch
        %169 = sbr.rel (%p167) target = $region16
      $region15: #{vgg19_slice1.7} parent=11 // pred_region
        _
      $region16: #{vgg19_slice1.7} parent=11 // pred_fallthru
        _
      // Predicated region
      $region17: #{vgg19_slice1.7} parent=11 // pred_check
        %p170 = pneg %p124
      $region18: #{vgg19_slice1.7} parent=11 // pred_check_branch
        %172 = sbr.rel (%p170) target = $region20
      $region19: #{vgg19_slice1.7} parent=11 // pred_region
        _
      $region20: #{vgg19_slice1.7} parent=11 // pred_fallthru
        _
    $region12: #{vgg19_slice1.7} parent=5 // pred_fallthru
      _
    %p173 = scmp.lt.s32.totalorder %s10, 2
    // Predicated region
    $region21: #{vgg19_slice1.7} parent=5 // pred_check
      %p174 = pneg %p173
    $region22: #{vgg19_slice1.7} parent=5 // pred_check_branch
      %176 = sbr.rel (%p174) target = $region24
    $region23: #{vgg19_slice1.7} parent=5 // pred_region
      // Predicated region
      $region25: #{vgg19_slice1.7} parent=23 // pred_check
        %p177 = pneg %p44
      $region26: #{vgg19_slice1.7} parent=23 // pred_check_branch
        %179 = sbr.rel (%p177) target = $region28
      $region27: #{vgg19_slice1.7} parent=23 // pred_region
        %s180 = smul.u32 16, %s18
        %s181 = ssub.s32 24, %s180
        %p182 = scmp.lt.s32.totalorder %s181, 16
        %s183 = scalar_select %p182, %s181, 16
        %s184 = smul.u32 4, %s183
        %p185 = scmp.lt.s32.totalorder %s17, 1
        %s186 = scalar_select %p185, %s17, 1
        %p187 = scmp.lt.s32.totalorder %s180, 23
        %s188 = scalar_select %p187, %s180, 23
        %s189 = smul.addr %s186, 24
        %s190 = sadd.s32 %s188, %s189
        %s191 = smul.addr %s190, 4
        %s192 = scalar_lea.vmem %s0, %s191
        %s193 = smul.u32 16, %s18
        %s194 = ssub.s32 24, %s193
        %p195 = scmp.lt.s32.totalorder %s194, 16
        %s196 = scalar_select %p195, %s194, 16
        %s197 = smul.u32 4, %s196
      $region28: #{vgg19_slice1.7} parent=23 // pred_fallthru
        _
      // Predicated region
      $region29: #{vgg19_slice1.7} parent=23 // pred_check
        %p198 = pneg %p76
      $region30: #{vgg19_slice1.7} parent=23 // pred_check_branch
        %200 = sbr.rel (%p198) target = $region32
      $region31: #{vgg19_slice1.7} parent=23 // pred_region
        %s201 = sadd.s32 %s18, 1
        %s202 = smul.u32 %s201, 2
        %s203 = smul.u32 8, %s202
        %p204 = scmp.lt.s32.totalorder %s17, 1
        %s205 = scalar_select %p204, %s17, 1
        %p206 = scmp.lt.s32.totalorder %s203, 23
        %s207 = scalar_select %p206, %s203, 23
        %s208 = smul.addr %s205, 24
        %s209 = sadd.s32 %s207, %s208
        %s210 = smul.addr %s209, 4
        %s211 = scalar_lea.vmem %s1, %s210
        %s212 = sadd.s32 %s18, 1
        %s213 = smul.u32 %s212, 2
        %s214 = smul.u32 8, %s213
      $region32: #{vgg19_slice1.7} parent=23 // pred_fallthru
        _
    $region24: #{vgg19_slice1.7} parent=5 // pred_fallthru
      _
    %p215 = scmp.le.s32.totalorder 1, %s10
    %p216 = scmp.lt.s32.totalorder %s10, 3
    %p217 = pnand %p215, %p216
    %p218 = pneg %p217
    // Predicated region
    $region33: #{vgg19_slice1.7} parent=5 // pred_check
      _
    $region34: #{vgg19_slice1.7} parent=5 // pred_check_branch
      %220 = sbr.rel (%p217) target = $region36
    $region35: #{vgg19_slice1.7} parent=5 // pred_region
      %s221 = ssub.s32 %s10, 1
      %s222 = smul.u32 16, %s20
      %s223 = ssub.s32 24, %s222
      %p224 = scmp.lt.s32.totalorder %s223, 16
      %s225 = scalar_select %p224, %s223, 16
      %s226 = smul.u32 4, %s225
      %p227 = scmp.lt.s32.totalorder %s19, 1
      %s228 = scalar_select %p227, %s19, 1
      %p229 = scmp.lt.s32.totalorder %s222, 23
      %s230 = scalar_select %p229, %s222, 23
      %s231 = smul.addr %s228, 24
      %s232 = sadd.s32 %s230, %s231
      %s233 = smul.addr %s232, 4
      %s234 = scalar_lea.vmem %s0, %s233
      %p235 = pneg %p50
      %p236 = pneg %p47
      %s237 = sadd.s32 %s20, 1
      %s238 = smul.u32 %s237, 2
      %s239 = smul.u32 8, %s238
      %p240 = scmp.lt.s32.totalorder %s19, 1
      %s241 = scalar_select %p240, %s19, 1
      %p242 = scmp.lt.s32.totalorder %s239, 23
      %s243 = scalar_select %p242, %s239, 23
      %s244 = smul.addr %s241, 24
      %s245 = sadd.s32 %s243, %s244
      %s246 = smul.addr %s245, 4
      %s247 = scalar_lea.vmem %s1, %s246
      %p248 = pneg %p82
      %p249 = pneg %p79
      %p250 = pneg %p103
      %p251 = pneg %p100
      %p252 = pneg %p124
      %p253 = pneg %p121
      %p254 = pneg %p152
      %p255 = pneg %p149
      %s256 = smul.u32 16, %s20
      %p257 = scmp.lt.s32.totalorder %s19, 1
      %s258 = scalar_select %p257, %s19, 1
      %p259 = scmp.lt.s32.totalorder %s256, 15
      %s260 = scalar_select %p259, %s256, 15
      %s261 = smul.addr %s258, 16
      %s262 = sadd.s32 %s260, %s261
      %s263 = smul.addr %s262, 4
      %s264 = scalar_lea.vmem %s4, %s263
      %s265 = smul.u32 16, %s20
      %s266 = ssub.s32 24, %s265
      %p267 = scmp.lt.s32.totalorder %s266, 16
      %s268 = scalar_select %p267, %s266, 16
      %s269 = smul.u32 4, %s268
      %p270 = scmp.lt.s32.totalorder %s19, 1
      %s271 = scalar_select %p270, %s19, 1
      %p272 = scmp.lt.s32.totalorder %s265, 23
      %s273 = scalar_select %p272, %s265, 23
      %s274 = smul.addr %s271, 24
      %s275 = sadd.s32 %s273, %s274
      %s276 = smul.addr %s275, 4
      %s277 = scalar_lea.vmem %s0, %s276
      %s278 = smul.u32 16, %s20
      %s279 = ssub.s32 24, %s278
      %p280 = scmp.lt.s32.totalorder %s279, 16
      %s281 = scalar_select %p280, %s279, 16
      %s282 = smul.u32 4, %s281
      %s283 = sadd.s32 %s20, 1
      %s284 = smul.u32 %s283, 2
      %s285 = smul.u32 8, %s284
      %p286 = scmp.lt.s32.totalorder %s19, 1
      %s287 = scalar_select %p286, %s19, 1
      %p288 = scmp.lt.s32.totalorder %s285, 23
      %s289 = scalar_select %p288, %s285, 23
      %s290 = smul.addr %s287, 24
      %s291 = sadd.s32 %s289, %s290
      %s292 = smul.addr %s291, 4
      %s293 = scalar_lea.vmem %s1, %s292
      %s294 = sadd.s32 %s20, 1
      %s295 = smul.u32 %s294, 2
      %s296 = smul.u32 8, %s295
      %s297 = smul.u32 16, %s20
      %p298 = scmp.lt.s32.totalorder %s19, 1
      %s299 = scalar_select %p298, %s19, 1
      %p300 = scmp.lt.s32.totalorder %s297, 15
      %s301 = scalar_select %p300, %s297, 15
      %s302 = smul.addr %s299, 16
      %s303 = sadd.s32 %s301, %s302
      %s304 = smul.addr %s303, 4
      %s305 = scalar_lea.vmem %s4, %s304
      %s306 = smul.u32 16, %s20
      %v308 = vld [vmem:[%s277] sm:$0xf]
      %v309 = vld [vmem:[%s277 + $0x4] sm:$0xf]
      %v310 = vld [vmem:[%s277 + $0x8] sm:$0xf]
      %v311 = vld [vmem:[%s277 + $0xc] sm:$0xf]
      %v312 = vld [vmem:[%s277 + $0x10] sm:$0xf]
      %v313 = vld [vmem:[%s277 + $0x14] sm:$0xf]
      %v314 = vld [vmem:[%s277 + $0x18] sm:$0xf]
      %v315 = vld [vmem:[%s277 + $0x1c] sm:$0xf]
      %v316 = vld [vmem:[%s277 + $0x20] sm:$0xf]
      %v317 = vld [vmem:[%s277 + $0x24] sm:$0xf]
      %v318 = vld [vmem:[%s277 + $0x28] sm:$0xf]
      %v319 = vld [vmem:[%s277 + $0x2c] sm:$0xf]
      %v320 = vld [vmem:[%s277 + $0x30] sm:$0xf]
      %v321 = vld [vmem:[%s277 + $0x34] sm:$0xf]
      %v322 = vld [vmem:[%s277 + $0x38] sm:$0xf]
      %v323 = vld [vmem:[%s277 + $0x3c] sm:$0xf]
      %v324 = vld [vmem:[%s293] sm:$0xf]
      %v325 = vld [vmem:[%s293 + $0x4] sm:$0xf]
      %v326 = vld [vmem:[%s293 + $0x8] sm:$0xf]
      %v327 = vld [vmem:[%s293 + $0xc] sm:$0xf]
      %v328 = vld [vmem:[%s293 + $0x10] sm:$0xf]
      %v329 = vld [vmem:[%s293 + $0x14] sm:$0xf]
      %v346 = vunpack.c.l.b16 %v308
      %v347 = vunpack.c.l.b16 %v309
      %v348 = vunpack.c.l.b16 %v310
      %v349 = vunpack.c.l.b16 %v311
      %v350 = vunpack.c.l.b16 %v312
      %v351 = vunpack.c.l.b16 %v313
      %v352 = vunpack.c.l.b16 %v314
      %v353 = vunpack.c.l.b16 %v315
      %v354 = vunpack.c.l.b16 %v316
      %v355 = vunpack.c.l.b16 %v317
      %v356 = vunpack.c.l.b16 %v318
      %v357 = vunpack.c.l.b16 %v319
      %v358 = vunpack.c.l.b16 %v320
      %v359 = vunpack.c.l.b16 %v321
      %v360 = vunpack.c.l.b16 %v322
      %v361 = vunpack.c.l.b16 %v323
      %v362 = vpack.c.b16 %v347, %v346
      %v363 = vpack.c.b16 %v349, %v348
      %v364 = vpack.c.b16 %v351, %v350
      %v365 = vpack.c.b16 %v353, %v352
      %v366 = vpack.c.b16 %v355, %v354
      %v367 = vpack.c.b16 %v357, %v356
      %v368 = vpack.c.b16 %v359, %v358
      %v369 = vpack.c.b16 %v361, %v360
      %v376 = vunpack.c.l.b16 %v324
      %v377 = vunpack.c.l.b16 %v325
      %v378 = vunpack.c.l.b16 %v326
      %v379 = vunpack.c.l.b16 %v327
      %v380 = vunpack.c.l.b16 %v328
      %v381 = vunpack.c.l.b16 %v329
      %v382 = vpack.c.b16 %v377, %v376
      %v383 = vpack.c.b16 %v379, %v378
      %v384 = vpack.c.b16 %v381, %v380
      %v385 = vld [vmem:[%s2] sm:$0xf]
      %v386 = vld [vmem:[%s2 + $0x4] sm:$0xf]
      %v387 = vld [vmem:[%s2 + $0x8] sm:$0xf]
      %v388 = vld [vmem:[%s2 + $0xc] sm:$0xf]
      %v389 = vld [vmem:[%s2 + $0x10] sm:$0xf]
      %v390 = vld [vmem:[%s2 + $0x14] sm:$0xf]
      %v391 = vld [vmem:[%s2 + $0x18] sm:$0xf]
      %v392 = vld [vmem:[%s2 + $0x1c] sm:$0xf]
      %s393 = scalar_lea.vmem %s2, 32
      %v394 = vld [vmem:[%s393] sm:$0xf]
      %v395 = vld [vmem:[%s393 + $0x4] sm:$0xf]
      %v396 = vld [vmem:[%s393 + $0x8] sm:$0xf]
      %v397 = vld [vmem:[%s393 + $0xc] sm:$0xf]
      %v398 = vld [vmem:[%s393 + $0x10] sm:$0xf]
      %v399 = vld [vmem:[%s393 + $0x14] sm:$0xf]
      %v400 = vld [vmem:[%s393 + $0x18] sm:$0xf]
      %v401 = vld [vmem:[%s393 + $0x1c] sm:$0xf]
      %vm402 = vsmask.f32 7424
      %v404 = vshrl.u32 %v362, 16
      %v406 = vshll.u32 %v362, 16
      %v408 = vrot.slane %v406, 1
      %v409 = vor.u32 %v404, %v408
      %v411 = vshll.u32 %v363, 16
      %v413 = vrot.slane %v411, 1
      %v414 = vsel %vm402, %v409, %v413
      %v415 = vshrl.u32 %v363, 16
      %v417 = vor.u32 %v415, %v413
      %v419 = vshll.u32 %v364, 16
      %v421 = vrot.slane %v419, 1
      %v422 = vsel %vm402, %v417, %v421
      %v423 = vshrl.u32 %v364, 16
      %v425 = vor.u32 %v423, %v421
      %v427 = vshll.u32 %v365, 16
      %v429 = vrot.slane %v427, 1
      %v430 = vsel %vm402, %v425, %v429
      %v431 = vshrl.u32 %v365, 16
      %v433 = vor.u32 %v431, %v429
      %v435 = vshll.u32 %v366, 16
      %v437 = vrot.slane %v435, 1
      %v438 = vsel %vm402, %v433, %v437
      %v439 = vshrl.u32 %v366, 16
      %v441 = vor.u32 %v439, %v437
      %v443 = vshll.u32 %v367, 16
      %v445 = vrot.slane %v443, 1
      %v446 = vsel %vm402, %v441, %v445
      %v447 = vshrl.u32 %v367, 16
      %v449 = vor.u32 %v447, %v445
      %v451 = vshll.u32 %v368, 16
      %v453 = vrot.slane %v451, 1
      %v454 = vsel %vm402, %v449, %v453
      %v455 = vshrl.u32 %v368, 16
      %v457 = vor.u32 %v455, %v453
      %v459 = vshll.u32 %v369, 16
      %v461 = vrot.slane %v459, 1
      %v462 = vsel %vm402, %v457, %v461
      %v463 = vshrl.u32 %v369, 16
      %v465 = vor.u32 %v463, %v461
      %v467 = vshll.u32 %v382, 16
      %v469 = vrot.slane %v467, 1
      %v470 = vsel %vm402, %v465, %v469
      %v479 = vunpack.c.l.b16 %v394
      %v480 = vunpack.c.l.b16 %v395
      %v481 = vunpack.c.l.b16 %v396
      %v482 = vunpack.c.l.b16 %v397
      %v483 = vunpack.c.l.b16 %v398
      %v484 = vunpack.c.l.b16 %v399
      %v485 = vunpack.c.l.b16 %v400
      %v486 = vunpack.c.l.b16 %v401
      %v487 = vpack.c.b16 %v480, %v479
      %v488 = vpack.c.b16 %v482, %v481
      %v489 = vpack.c.b16 %v484, %v483
      %v490 = vpack.c.b16 %v486, %v485
      %vm495 = vcmask 523264
      %v497 = vsel %vm495, %v414, 0
      %v500 = vsel %vm495, %v422, 0
      %v503 = vsel %vm495, %v430, 0
      %v506 = vsel %vm495, %v438, 0
      %v509 = vsel %vm495, %v446, 0
      %v512 = vsel %vm495, %v454, 0
      %v515 = vsel %vm495, %v462, 0
      %v518 = vsel %vm495, %v470, 0
      %520 = vmatpush.bf16.msra.mxu0 0
      %521 = vmatpush.bf16.msra.mxu0 0
      %522 = vmatpush.bf16.msra.mxu0 0
      %523 = vmatpush.bf16.msra.mxu0 0
      %524 = vmatpush.bf16.msra.mxu0 %v490
      %525 = vmatpush.bf16.msra.mxu0 %v489
      %526 = vmatpush.bf16.msra.mxu0 %v488
      %527 = vmatpush.bf16.msra.mxu0 %v487
      %528 = vmatmul.bf16.gmra.mxu0 %v497
      %v529 = vpop.f32.mrf.mxu0
      %v530 = vadd.f32 0.0, %v529
      %v531 = vpop.f32.mrf.mxu0
      %v532 = vadd.f32 0.0, %v531
      %533 = vmatmul.bf16.gmra.mxu0 %v500
      %v534 = vpop.f32.mrf.mxu0
      %v535 = vadd.f32 0.0, %v534
      %v536 = vpop.f32.mrf.mxu0
      %v537 = vadd.f32 0.0, %v536
      %538 = vmatmul.bf16.gmra.mxu0 %v503
      %v539 = vpop.f32.mrf.mxu0
      %v540 = vadd.f32 0.0, %v539
      %v541 = vpop.f32.mrf.mxu0
      %v542 = vadd.f32 0.0, %v541
      %543 = vmatmul.bf16.gmra.mxu0 %v506
      %v544 = vpop.f32.mrf.mxu0
      %v545 = vadd.f32 0.0, %v544
      %v546 = vpop.f32.mrf.mxu0
      %v547 = vadd.f32 0.0, %v546
      %548 = vmatmul.bf16.gmra.mxu0 %v509
      %v549 = vpop.f32.mrf.mxu0
      %v550 = vadd.f32 0.0, %v549
      %v551 = vpop.f32.mrf.mxu0
      %v552 = vadd.f32 0.0, %v551
      %553 = vmatmul.bf16.gmra.mxu0 %v512
      %v554 = vpop.f32.mrf.mxu0
      %v555 = vadd.f32 0.0, %v554
      %v556 = vpop.f32.mrf.mxu0
      %v557 = vadd.f32 0.0, %v556
      %558 = vmatmul.bf16.gmra.mxu0 %v515
      %v559 = vpop.f32.mrf.mxu0
      %v560 = vadd.f32 0.0, %v559
      %v561 = vpop.f32.mrf.mxu0
      %v562 = vadd.f32 0.0, %v561
      %563 = vmatmul.bf16.gmra.mxu0 %v518
      %v564 = vpop.f32.mrf.mxu0
      %v565 = vadd.f32 0.0, %v564
      %v566 = vpop.f32.mrf.mxu0
      %v567 = vadd.f32 0.0, %v566
      %568 = vdwg.mxu0
      %v577 = vunpack.c.l.b16 %v385
      %v578 = vunpack.c.l.b16 %v386
      %v579 = vunpack.c.l.b16 %v387
      %v580 = vunpack.c.l.b16 %v388
      %v581 = vunpack.c.l.b16 %v389
      %v582 = vunpack.c.l.b16 %v390
      %v583 = vunpack.c.l.b16 %v391
      %v584 = vunpack.c.l.b16 %v392
      %v585 = vpack.c.b16 %v578, %v577
      %v586 = vpack.c.b16 %v580, %v579
      %v587 = vpack.c.b16 %v582, %v581
      %v588 = vpack.c.b16 %v584, %v583
      %v593 = vsel %vm495, %v362, 0
      %v595 = vsel %vm495, %v363, 0
      %v597 = vsel %vm495, %v364, 0
      %v599 = vsel %vm495, %v365, 0
      %v601 = vsel %vm495, %v366, 0
      %v603 = vsel %vm495, %v367, 0
      %v605 = vsel %vm495, %v368, 0
      %v607 = vsel %vm495, %v369, 0
      %609 = vmatpush.bf16.msra.mxu0 0
      %610 = vmatpush.bf16.msra.mxu0 0
      %611 = vmatpush.bf16.msra.mxu0 0
      %612 = vmatpush.bf16.msra.mxu0 0
      %613 = vmatpush.bf16.msra.mxu0 %v588
      %614 = vmatpush.bf16.msra.mxu0 %v587
      %615 = vmatpush.bf16.msra.mxu0 %v586
      %616 = vmatpush.bf16.msra.mxu0 %v585
      %617 = vmatmul.bf16.gmra.mxu0 %v593
      %v618 = vpop.f32.mrf.mxu0
      %v619 = vadd.f32 %v530, %v618
      %v620 = vpop.f32.mrf.mxu0
      %v621 = vadd.f32 %v532, %v620
      %622 = vmatmul.bf16.gmra.mxu0 %v595
      %v623 = vpop.f32.mrf.mxu0
      %v624 = vadd.f32 %v535, %v623
      %v625 = vpop.f32.mrf.mxu0
      %v626 = vadd.f32 %v537, %v625
      %627 = vmatmul.bf16.gmra.mxu0 %v597
      %v628 = vpop.f32.mrf.mxu0
      %v629 = vadd.f32 %v540, %v628
      %v630 = vpop.f32.mrf.mxu0
      %v631 = vadd.f32 %v542, %v630
      %632 = vmatmul.bf16.gmra.mxu0 %v599
      %v633 = vpop.f32.mrf.mxu0
      %v634 = vadd.f32 %v545, %v633
      %v635 = vpop.f32.mrf.mxu0
      %v636 = vadd.f32 %v547, %v635
      %637 = vmatmul.bf16.gmra.mxu0 %v601
      %v638 = vpop.f32.mrf.mxu0
      %v639 = vadd.f32 %v550, %v638
      %v640 = vpop.f32.mrf.mxu0
      %v641 = vadd.f32 %v552, %v640
      %642 = vmatmul.bf16.gmra.mxu0 %v603
      %v643 = vpop.f32.mrf.mxu0
      %v644 = vadd.f32 %v555, %v643
      %v645 = vpop.f32.mrf.mxu0
      %v646 = vadd.f32 %v557, %v645
      %647 = vmatmul.bf16.gmra.mxu0 %v605
      %v648 = vpop.f32.mrf.mxu0
      %v649 = vadd.f32 %v560, %v648
      %v650 = vpop.f32.mrf.mxu0
      %v651 = vadd.f32 %v562, %v650
      %652 = vmatmul.bf16.gmra.mxu0 %v607
      %v653 = vpop.f32.mrf.mxu0
      %v654 = vadd.f32 %v565, %v653
      %v655 = vpop.f32.mrf.mxu0
      %v656 = vadd.f32 %v567, %v655
      %657 = vdwg.mxu0
      %s658 = scalar_lea.vmem %s2, 64
      %v659 = vld [vmem:[%s658] sm:$0xf]
      %v660 = vld [vmem:[%s658 + $0x4] sm:$0xf]
      %v661 = vld [vmem:[%s658 + $0x8] sm:$0xf]
      %v662 = vld [vmem:[%s658 + $0xc] sm:$0xf]
      %v663 = vld [vmem:[%s658 + $0x10] sm:$0xf]
      %v664 = vld [vmem:[%s658 + $0x14] sm:$0xf]
      %v665 = vld [vmem:[%s658 + $0x18] sm:$0xf]
      %v666 = vld [vmem:[%s658 + $0x1c] sm:$0xf]
      %vm667 = vcmask 1046528
      %v668 = vrot.slane %v362, 1
      %v669 = vrot.slane %v363, 1
      %v670 = vsel %vm667, %v668, %v669
      %v671 = vrot.slane %v364, 1
      %v672 = vsel %vm667, %v669, %v671
      %v673 = vrot.slane %v365, 1
      %v674 = vsel %vm667, %v671, %v673
      %v675 = vrot.slane %v366, 1
      %v676 = vsel %vm667, %v673, %v675
      %v677 = vrot.slane %v367, 1
      %v678 = vsel %vm667, %v675, %v677
      %v679 = vrot.slane %v368, 1
      %v680 = vsel %vm667, %v677, %v679
      %v681 = vrot.slane %v369, 1
      %v682 = vsel %vm667, %v679, %v681
      %v683 = vrot.slane %v382, 1
      %v684 = vsel %vm667, %v681, %v683
      %v693 = vunpack.c.l.b16 %v659
      %v694 = vunpack.c.l.b16 %v660
      %v695 = vunpack.c.l.b16 %v661
      %v696 = vunpack.c.l.b16 %v662
      %v697 = vunpack.c.l.b16 %v663
      %v698 = vunpack.c.l.b16 %v664
      %v699 = vunpack.c.l.b16 %v665
      %v700 = vunpack.c.l.b16 %v666
      %v701 = vpack.c.b16 %v694, %v693
      %v702 = vpack.c.b16 %v696, %v695
      %v703 = vpack.c.b16 %v698, %v697
      %v704 = vpack.c.b16 %v700, %v699
      %v710 = vsel %vm495, %v670, 0
      %v713 = vsel %vm495, %v672, 0
      %v716 = vsel %vm495, %v674, 0
      %v719 = vsel %vm495, %v676, 0
      %v722 = vsel %vm495, %v678, 0
      %v725 = vsel %vm495, %v680, 0
      %v728 = vsel %vm495, %v682, 0
      %v731 = vsel %vm495, %v684, 0
      %733 = vmatpush.bf16.msra.mxu0 0
      %734 = vmatpush.bf16.msra.mxu0 0
      %735 = vmatpush.bf16.msra.mxu0 0
      %736 = vmatpush.bf16.msra.mxu0 0
      %737 = vmatpush.bf16.msra.mxu0 %v704
      %738 = vmatpush.bf16.msra.mxu0 %v703
      %739 = vmatpush.bf16.msra.mxu0 %v702
      %740 = vmatpush.bf16.msra.mxu0 %v701
      %741 = vmatmul.bf16.gmra.mxu0 %v710
      %v742 = vpop.f32.mrf.mxu0
      %v743 = vadd.f32 0.0, %v742
      %v744 = vpop.f32.mrf.mxu0
      %v745 = vadd.f32 0.0, %v744
      %746 = vmatmul.bf16.gmra.mxu0 %v713
      %v747 = vpop.f32.mrf.mxu0
      %v748 = vadd.f32 0.0, %v747
      %v749 = vpop.f32.mrf.mxu0
      %v750 = vadd.f32 0.0, %v749
      %751 = vmatmul.bf16.gmra.mxu0 %v716
      %v752 = vpop.f32.mrf.mxu0
      %v753 = vadd.f32 0.0, %v752
      %v754 = vpop.f32.mrf.mxu0
      %v755 = vadd.f32 0.0, %v754
      %756 = vmatmul.bf16.gmra.mxu0 %v719
      %v757 = vpop.f32.mrf.mxu0
      %v758 = vadd.f32 0.0, %v757
      %v759 = vpop.f32.mrf.mxu0
      %v760 = vadd.f32 0.0, %v759
      %761 = vmatmul.bf16.gmra.mxu0 %v722
      %v762 = vpop.f32.mrf.mxu0
      %v763 = vadd.f32 0.0, %v762
      %v764 = vpop.f32.mrf.mxu0
      %v765 = vadd.f32 0.0, %v764
      %766 = vmatmul.bf16.gmra.mxu0 %v725
      %v767 = vpop.f32.mrf.mxu0
      %v768 = vadd.f32 0.0, %v767
      %v769 = vpop.f32.mrf.mxu0
      %v770 = vadd.f32 0.0, %v769
      %771 = vmatmul.bf16.gmra.mxu0 %v728
      %v772 = vpop.f32.mrf.mxu0
      %v773 = vadd.f32 0.0, %v772
      %v774 = vpop.f32.mrf.mxu0
      %v775 = vadd.f32 0.0, %v774
      %776 = vmatmul.bf16.gmra.mxu0 %v731
      %v777 = vpop.f32.mrf.mxu0
      %v778 = vadd.f32 0.0, %v777
      %v779 = vpop.f32.mrf.mxu0
      %v780 = vadd.f32 0.0, %v779
      %781 = vdwg.mxu0
      %v782 = vadd.f32 %v619, %v743
      %v783 = vadd.f32 %v621, %v745
      %v784 = vadd.f32 %v624, %v748
      %v785 = vadd.f32 %v626, %v750
      %v786 = vadd.f32 %v629, %v753
      %v787 = vadd.f32 %v631, %v755
      %v788 = vadd.f32 %v634, %v758
      %v789 = vadd.f32 %v636, %v760
      %v790 = vadd.f32 %v639, %v763
      %v791 = vadd.f32 %v641, %v765
      %v792 = vadd.f32 %v644, %v768
      %v793 = vadd.f32 %v646, %v770
      %v794 = vadd.f32 %v649, %v773
      %v795 = vadd.f32 %v651, %v775
      %v796 = vadd.f32 %v654, %v778
      %v797 = vadd.f32 %v656, %v780
      %s798 = scalar_lea.vmem %s2, 96
      %v799 = vld [vmem:[%s798] sm:$0xf]
      %v800 = vld [vmem:[%s798 + $0x4] sm:$0xf]
      %v801 = vld [vmem:[%s798 + $0x8] sm:$0xf]
      %v802 = vld [vmem:[%s798 + $0xc] sm:$0xf]
      %v803 = vld [vmem:[%s798 + $0x10] sm:$0xf]
      %v804 = vld [vmem:[%s798 + $0x14] sm:$0xf]
      %v805 = vld [vmem:[%s798 + $0x18] sm:$0xf]
      %v806 = vld [vmem:[%s798 + $0x1c] sm:$0xf]
      %v815 = vunpack.c.l.b16 %v799
      %v816 = vunpack.c.l.b16 %v800
      %v817 = vunpack.c.l.b16 %v801
      %v818 = vunpack.c.l.b16 %v802
      %v819 = vunpack.c.l.b16 %v803
      %v820 = vunpack.c.l.b16 %v804
      %v821 = vunpack.c.l.b16 %v805
      %v822 = vunpack.c.l.b16 %v806
      %v823 = vpack.c.b16 %v816, %v815
      %v824 = vpack.c.b16 %v818, %v817
      %v825 = vpack.c.b16 %v820, %v819
      %v826 = vpack.c.b16 %v822, %v821
      %v831 = vsel %vm495, %v382, 0
      %833 = vmatpush.bf16.msra.mxu0 0
      %834 = vmatpush.bf16.msra.mxu0 0
      %835 = vmatpush.bf16.msra.mxu0 0
      %836 = vmatpush.bf16.msra.mxu0 0
      %837 = vmatpush.bf16.msra.mxu0 %v826
      %838 = vmatpush.bf16.msra.mxu0 %v825
      %839 = vmatpush.bf16.msra.mxu0 %v824
      %840 = vmatpush.bf16.msra.mxu0 %v823
      %841 = vmatmul.bf16.gmra.mxu0 %v595
      %v842 = vpop.f32.mrf.mxu0
      %v843 = vadd.f32 0.0, %v842
      %v844 = vpop.f32.mrf.mxu0
      %v845 = vadd.f32 0.0, %v844
      %846 = vmatmul.bf16.gmra.mxu0 %v597
      %v847 = vpop.f32.mrf.mxu0
      %v848 = vadd.f32 0.0, %v847
      %v849 = vpop.f32.mrf.mxu0
      %v850 = vadd.f32 0.0, %v849
      %851 = vmatmul.bf16.gmra.mxu0 %v599
      %v852 = vpop.f32.mrf.mxu0
      %v853 = vadd.f32 0.0, %v852
      %v854 = vpop.f32.mrf.mxu0
      %v855 = vadd.f32 0.0, %v854
      %856 = vmatmul.bf16.gmra.mxu0 %v601
      %v857 = vpop.f32.mrf.mxu0
      %v858 = vadd.f32 0.0, %v857
      %v859 = vpop.f32.mrf.mxu0
      %v860 = vadd.f32 0.0, %v859
      %861 = vmatmul.bf16.gmra.mxu0 %v603
      %v862 = vpop.f32.mrf.mxu0
      %v863 = vadd.f32 0.0, %v862
      %v864 = vpop.f32.mrf.mxu0
      %v865 = vadd.f32 0.0, %v864
      %866 = vmatmul.bf16.gmra.mxu0 %v605
      %v867 = vpop.f32.mrf.mxu0
      %v868 = vadd.f32 0.0, %v867
      %v869 = vpop.f32.mrf.mxu0
      %v870 = vadd.f32 0.0, %v869
      %871 = vmatmul.bf16.gmra.mxu0 %v607
      %v872 = vpop.f32.mrf.mxu0
      %v873 = vadd.f32 0.0, %v872
      %v874 = vpop.f32.mrf.mxu0
      %v875 = vadd.f32 0.0, %v874
      %876 = vmatmul.bf16.gmra.mxu0 %v831
      %v877 = vpop.f32.mrf.mxu0
      %v878 = vadd.f32 0.0, %v877
      %v879 = vpop.f32.mrf.mxu0
      %v880 = vadd.f32 0.0, %v879
      %881 = vdwg.mxu0
      %v882 = vadd.f32 %v782, %v843
      %v883 = vadd.f32 %v783, %v845
      %v884 = vadd.f32 %v784, %v848
      %v885 = vadd.f32 %v785, %v850
      %v886 = vadd.f32 %v786, %v853
      %v887 = vadd.f32 %v787, %v855
      %v888 = vadd.f32 %v788, %v858
      %v889 = vadd.f32 %v789, %v860
      %v890 = vadd.f32 %v790, %v863
      %v891 = vadd.f32 %v791, %v865
      %v892 = vadd.f32 %v792, %v868
      %v893 = vadd.f32 %v793, %v870
      %v894 = vadd.f32 %v794, %v873
      %v895 = vadd.f32 %v795, %v875
      %v896 = vadd.f32 %v796, %v878
      %v897 = vadd.f32 %v797, %v880
      %s898 = scalar_lea.vmem %s2, 128
      %v899 = vld [vmem:[%s898] sm:$0xf]
      %v900 = vld [vmem:[%s898 + $0x4] sm:$0xf]
      %v901 = vld [vmem:[%s898 + $0x8] sm:$0xf]
      %v902 = vld [vmem:[%s898 + $0xc] sm:$0xf]
      %v903 = vld [vmem:[%s898 + $0x10] sm:$0xf]
      %v904 = vld [vmem:[%s898 + $0x14] sm:$0xf]
      %v905 = vld [vmem:[%s898 + $0x18] sm:$0xf]
      %v906 = vld [vmem:[%s898 + $0x1c] sm:$0xf]
      %v907 = vshrl.u32 %v382, 16
      %v909 = vor.u32 %v907, %v469
      %v911 = vshll.u32 %v383, 16
      %v913 = vrot.slane %v911, 1
      %v914 = vsel %vm402, %v909, %v913
      %v923 = vunpack.c.l.b16 %v899
      %v924 = vunpack.c.l.b16 %v900
      %v925 = vunpack.c.l.b16 %v901
      %v926 = vunpack.c.l.b16 %v902
      %v927 = vunpack.c.l.b16 %v903
      %v928 = vunpack.c.l.b16 %v904
      %v929 = vunpack.c.l.b16 %v905
      %v930 = vunpack.c.l.b16 %v906
      %v931 = vpack.c.b16 %v924, %v923
      %v932 = vpack.c.b16 %v926, %v925
      %v933 = vpack.c.b16 %v928, %v927
      %v934 = vpack.c.b16 %v930, %v929
      %v940 = vsel %vm495, %v914, 0
      %942 = vmatpush.bf16.msra.mxu0 0
      %943 = vmatpush.bf16.msra.mxu0 0
      %944 = vmatpush.bf16.msra.mxu0 0
      %945 = vmatpush.bf16.msra.mxu0 0
      %946 = vmatpush.bf16.msra.mxu0 %v934
      %947 = vmatpush.bf16.msra.mxu0 %v933
      %948 = vmatpush.bf16.msra.mxu0 %v932
      %949 = vmatpush.bf16.msra.mxu0 %v931
      %950 = vmatmul.bf16.gmra.mxu0 %v500
      %v951 = vpop.f32.mrf.mxu0
      %v952 = vadd.f32 0.0, %v951
      %v953 = vpop.f32.mrf.mxu0
      %v954 = vadd.f32 0.0, %v953
      %955 = vmatmul.bf16.gmra.mxu0 %v503
      %v956 = vpop.f32.mrf.mxu0
      %v957 = vadd.f32 0.0, %v956
      %v958 = vpop.f32.mrf.mxu0
      %v959 = vadd.f32 0.0, %v958
      %960 = vmatmul.bf16.gmra.mxu0 %v506
      %v961 = vpop.f32.mrf.mxu0
      %v962 = vadd.f32 0.0, %v961
      %v963 = vpop.f32.mrf.mxu0
      %v964 = vadd.f32 0.0, %v963
      %965 = vmatmul.bf16.gmra.mxu0 %v509
      %v966 = vpop.f32.mrf.mxu0
      %v967 = vadd.f32 0.0, %v966
      %v968 = vpop.f32.mrf.mxu0
      %v969 = vadd.f32 0.0, %v968
      %970 = vmatmul.bf16.gmra.mxu0 %v512
      %v971 = vpop.f32.mrf.mxu0
      %v972 = vadd.f32 0.0, %v971
      %v973 = vpop.f32.mrf.mxu0
      %v974 = vadd.f32 0.0, %v973
      %975 = vmatmul.bf16.gmra.mxu0 %v515
      %v976 = vpop.f32.mrf.mxu0
      %v977 = vadd.f32 0.0, %v976
      %v978 = vpop.f32.mrf.mxu0
      %v979 = vadd.f32 0.0, %v978
      %980 = vmatmul.bf16.gmra.mxu0 %v518
      %v981 = vpop.f32.mrf.mxu0
      %v982 = vadd.f32 0.0, %v981
      %v983 = vpop.f32.mrf.mxu0
      %v984 = vadd.f32 0.0, %v983
      %985 = vmatmul.bf16.gmra.mxu0 %v940
      %v986 = vpop.f32.mrf.mxu0
      %v987 = vadd.f32 0.0, %v986
      %v988 = vpop.f32.mrf.mxu0
      %v989 = vadd.f32 0.0, %v988
      %990 = vdwg.mxu0
      %v991 = vadd.f32 %v882, %v952
      %v992 = vadd.f32 %v883, %v954
      %v993 = vadd.f32 %v884, %v957
      %v994 = vadd.f32 %v885, %v959
      %v995 = vadd.f32 %v886, %v962
      %v996 = vadd.f32 %v887, %v964
      %v997 = vadd.f32 %v888, %v967
      %v998 = vadd.f32 %v889, %v969
      %v999 = vadd.f32 %v890, %v972
      %v1000 = vadd.f32 %v891, %v974
      %v1001 = vadd.f32 %v892, %v977
      %v1002 = vadd.f32 %v893, %v979
      %v1003 = vadd.f32 %v894, %v982
      %v1004 = vadd.f32 %v895, %v984
      %v1005 = vadd.f32 %v896, %v987
      %v1006 = vadd.f32 %v897, %v989
      %s1007 = scalar_lea.vmem %s2, 160
      %v1008 = vld [vmem:[%s1007] sm:$0xf]
      %v1009 = vld [vmem:[%s1007 + $0x4] sm:$0xf]
      %v1010 = vld [vmem:[%s1007 + $0x8] sm:$0xf]
      %v1011 = vld [vmem:[%s1007 + $0xc] sm:$0xf]
      %v1012 = vld [vmem:[%s1007 + $0x10] sm:$0xf]
      %v1013 = vld [vmem:[%s1007 + $0x14] sm:$0xf]
      %v1014 = vld [vmem:[%s1007 + $0x18] sm:$0xf]
      %v1015 = vld [vmem:[%s1007 + $0x1c] sm:$0xf]
      %v1016 = vrot.slane %v383, 1
      %v1017 = vsel %vm667, %v683, %v1016
      %v1026 = vunpack.c.l.b16 %v1008
      %v1027 = vunpack.c.l.b16 %v1009
      %v1028 = vunpack.c.l.b16 %v1010
      %v1029 = vunpack.c.l.b16 %v1011
      %v1030 = vunpack.c.l.b16 %v1012
      %v1031 = vunpack.c.l.b16 %v1013
      %v1032 = vunpack.c.l.b16 %v1014
      %v1033 = vunpack.c.l.b16 %v1015
      %v1034 = vpack.c.b16 %v1027, %v1026
      %v1035 = vpack.c.b16 %v1029, %v1028
      %v1036 = vpack.c.b16 %v1031, %v1030
      %v1037 = vpack.c.b16 %v1033, %v1032
      %v1043 = vsel %vm495, %v1017, 0
      %1045 = vmatpush.bf16.msra.mxu0 0
      %1046 = vmatpush.bf16.msra.mxu0 0
      %1047 = vmatpush.bf16.msra.mxu0 0
      %1048 = vmatpush.bf16.msra.mxu0 0
      %1049 = vmatpush.bf16.msra.mxu0 %v1037
      %1050 = vmatpush.bf16.msra.mxu0 %v1036
      %1051 = vmatpush.bf16.msra.mxu0 %v1035
      %1052 = vmatpush.bf16.msra.mxu0 %v1034
      %1053 = vmatmul.bf16.gmra.mxu0 %v713
      %v1054 = vpop.f32.mrf.mxu0
      %v1055 = vadd.f32 0.0, %v1054
      %v1056 = vpop.f32.mrf.mxu0
      %v1057 = vadd.f32 0.0, %v1056
      %1058 = vmatmul.bf16.gmra.mxu0 %v716
      %v1059 = vpop.f32.mrf.mxu0
      %v1060 = vadd.f32 0.0, %v1059
      %v1061 = vpop.f32.mrf.mxu0
      %v1062 = vadd.f32 0.0, %v1061
      %1063 = vmatmul.bf16.gmra.mxu0 %v719
      %v1064 = vpop.f32.mrf.mxu0
      %v1065 = vadd.f32 0.0, %v1064
      %v1066 = vpop.f32.mrf.mxu0
      %v1067 = vadd.f32 0.0, %v1066
      %1068 = vmatmul.bf16.gmra.mxu0 %v722
      %v1069 = vpop.f32.mrf.mxu0
      %v1070 = vadd.f32 0.0, %v1069
      %v1071 = vpop.f32.mrf.mxu0
      %v1072 = vadd.f32 0.0, %v1071
      %1073 = vmatmul.bf16.gmra.mxu0 %v725
      %v1074 = vpop.f32.mrf.mxu0
      %v1075 = vadd.f32 0.0, %v1074
      %v1076 = vpop.f32.mrf.mxu0
      %v1077 = vadd.f32 0.0, %v1076
      %1078 = vmatmul.bf16.gmra.mxu0 %v728
      %v1079 = vpop.f32.mrf.mxu0
      %v1080 = vadd.f32 0.0, %v1079
      %v1081 = vpop.f32.mrf.mxu0
      %v1082 = vadd.f32 0.0, %v1081
      %1083 = vmatmul.bf16.gmra.mxu0 %v731
      %v1084 = vpop.f32.mrf.mxu0
      %v1085 = vadd.f32 0.0, %v1084
      %v1086 = vpop.f32.mrf.mxu0
      %v1087 = vadd.f32 0.0, %v1086
      %1088 = vmatmul.bf16.gmra.mxu0 %v1043
      %v1089 = vpop.f32.mrf.mxu0
      %v1090 = vadd.f32 0.0, %v1089
      %v1091 = vpop.f32.mrf.mxu0
      %v1092 = vadd.f32 0.0, %v1091
      %1093 = vdwg.mxu0
      %v1094 = vadd.f32 %v991, %v1055
      %v1095 = vadd.f32 %v992, %v1057
      %v1096 = vadd.f32 %v993, %v1060
      %v1097 = vadd.f32 %v994, %v1062
      %v1098 = vadd.f32 %v995, %v1065
      %v1099 = vadd.f32 %v996, %v1067
      %v1100 = vadd.f32 %v997, %v1070
      %v1101 = vadd.f32 %v998, %v1072
      %v1102 = vadd.f32 %v999, %v1075
      %v1103 = vadd.f32 %v1000, %v1077
      %v1104 = vadd.f32 %v1001, %v1080
      %v1105 = vadd.f32 %v1002, %v1082
      %v1106 = vadd.f32 %v1003, %v1085
      %v1107 = vadd.f32 %v1004, %v1087
      %v1108 = vadd.f32 %v1005, %v1090
      %v1109 = vadd.f32 %v1006, %v1092
      %s1110 = scalar_lea.vmem %s2, 192
      %v1111 = vld [vmem:[%s1110] sm:$0xf]
      %v1112 = vld [vmem:[%s1110 + $0x4] sm:$0xf]
      %v1113 = vld [vmem:[%s1110 + $0x8] sm:$0xf]
      %v1114 = vld [vmem:[%s1110 + $0xc] sm:$0xf]
      %v1115 = vld [vmem:[%s1110 + $0x10] sm:$0xf]
      %v1116 = vld [vmem:[%s1110 + $0x14] sm:$0xf]
      %v1117 = vld [vmem:[%s1110 + $0x18] sm:$0xf]
      %v1118 = vld [vmem:[%s1110 + $0x1c] sm:$0xf]
      %v1127 = vunpack.c.l.b16 %v1111
      %v1128 = vunpack.c.l.b16 %v1112
      %v1129 = vunpack.c.l.b16 %v1113
      %v1130 = vunpack.c.l.b16 %v1114
      %v1131 = vunpack.c.l.b16 %v1115
      %v1132 = vunpack.c.l.b16 %v1116
      %v1133 = vunpack.c.l.b16 %v1117
      %v1134 = vunpack.c.l.b16 %v1118
      %v1135 = vpack.c.b16 %v1128, %v1127
      %v1136 = vpack.c.b16 %v1130, %v1129
      %v1137 = vpack.c.b16 %v1132, %v1131
      %v1138 = vpack.c.b16 %v1134, %v1133
      %v1143 = vsel %vm495, %v383, 0
      %1145 = vmatpush.bf16.msra.mxu0 0
      %1146 = vmatpush.bf16.msra.mxu0 0
      %1147 = vmatpush.bf16.msra.mxu0 0
      %1148 = vmatpush.bf16.msra.mxu0 0
      %1149 = vmatpush.bf16.msra.mxu0 %v1138
      %1150 = vmatpush.bf16.msra.mxu0 %v1137
      %1151 = vmatpush.bf16.msra.mxu0 %v1136
      %1152 = vmatpush.bf16.msra.mxu0 %v1135
      %1153 = vmatmul.bf16.gmra.mxu0 %v597
      %v1154 = vpop.f32.mrf.mxu0
      %v1155 = vadd.f32 0.0, %v1154
      %v1156 = vpop.f32.mrf.mxu0
      %v1157 = vadd.f32 0.0, %v1156
      %1158 = vmatmul.bf16.gmra.mxu0 %v599
      %v1159 = vpop.f32.mrf.mxu0
      %v1160 = vadd.f32 0.0, %v1159
      %v1161 = vpop.f32.mrf.mxu0
      %v1162 = vadd.f32 0.0, %v1161
      %1163 = vmatmul.bf16.gmra.mxu0 %v601
      %v1164 = vpop.f32.mrf.mxu0
      %v1165 = vadd.f32 0.0, %v1164
      %v1166 = vpop.f32.mrf.mxu0
      %v1167 = vadd.f32 0.0, %v1166
      %1168 = vmatmul.bf16.gmra.mxu0 %v603
      %v1169 = vpop.f32.mrf.mxu0
      %v1170 = vadd.f32 0.0, %v1169
      %v1171 = vpop.f32.mrf.mxu0
      %v1172 = vadd.f32 0.0, %v1171
      %1173 = vmatmul.bf16.gmra.mxu0 %v605
      %v1174 = vpop.f32.mrf.mxu0
      %v1175 = vadd.f32 0.0, %v1174
      %v1176 = vpop.f32.mrf.mxu0
      %v1177 = vadd.f32 0.0, %v1176
      %1178 = vmatmul.bf16.gmra.mxu0 %v607
      %v1179 = vpop.f32.mrf.mxu0
      %v1180 = vadd.f32 0.0, %v1179
      %v1181 = vpop.f32.mrf.mxu0
      %v1182 = vadd.f32 0.0, %v1181
      %1183 = vmatmul.bf16.gmra.mxu0 %v831
      %v1184 = vpop.f32.mrf.mxu0
      %v1185 = vadd.f32 0.0, %v1184
      %v1186 = vpop.f32.mrf.mxu0
      %v1187 = vadd.f32 0.0, %v1186
      %1188 = vmatmul.bf16.gmra.mxu0 %v1143
      %v1189 = vpop.f32.mrf.mxu0
      %v1190 = vadd.f32 0.0, %v1189
      %v1191 = vpop.f32.mrf.mxu0
      %v1192 = vadd.f32 0.0, %v1191
      %1193 = vdwg.mxu0
      %v1194 = vadd.f32 %v1094, %v1155
      %v1195 = vadd.f32 %v1095, %v1157
      %v1196 = vadd.f32 %v1096, %v1160
      %v1197 = vadd.f32 %v1097, %v1162
      %v1198 = vadd.f32 %v1098, %v1165
      %v1199 = vadd.f32 %v1099, %v1167
      %v1200 = vadd.f32 %v1100, %v1170
      %v1201 = vadd.f32 %v1101, %v1172
      %v1202 = vadd.f32 %v1102, %v1175
      %v1203 = vadd.f32 %v1103, %v1177
      %v1204 = vadd.f32 %v1104, %v1180
      %v1205 = vadd.f32 %v1105, %v1182
      %v1206 = vadd.f32 %v1106, %v1185
      %v1207 = vadd.f32 %v1107, %v1187
      %v1208 = vadd.f32 %v1108, %v1190
      %v1209 = vadd.f32 %v1109, %v1192
      %s1210 = scalar_lea.vmem %s2, 224
      %v1211 = vld [vmem:[%s1210] sm:$0xf]
      %v1212 = vld [vmem:[%s1210 + $0x4] sm:$0xf]
      %v1213 = vld [vmem:[%s1210 + $0x8] sm:$0xf]
      %v1214 = vld [vmem:[%s1210 + $0xc] sm:$0xf]
      %v1215 = vld [vmem:[%s1210 + $0x10] sm:$0xf]
      %v1216 = vld [vmem:[%s1210 + $0x14] sm:$0xf]
      %v1217 = vld [vmem:[%s1210 + $0x18] sm:$0xf]
      %v1218 = vld [vmem:[%s1210 + $0x1c] sm:$0xf]
      %v1219 = vshrl.u32 %v383, 16
      %v1221 = vor.u32 %v1219, %v913
      %v1223 = vshll.u32 %v384, 16
      %v1225 = vrot.slane %v1223, 1
      %v1226 = vsel %vm402, %v1221, %v1225
      %v1235 = vunpack.c.l.b16 %v1211
      %v1236 = vunpack.c.l.b16 %v1212
      %v1237 = vunpack.c.l.b16 %v1213
      %v1238 = vunpack.c.l.b16 %v1214
      %v1239 = vunpack.c.l.b16 %v1215
      %v1240 = vunpack.c.l.b16 %v1216
      %v1241 = vunpack.c.l.b16 %v1217
      %v1242 = vunpack.c.l.b16 %v1218
      %v1243 = vpack.c.b16 %v1236, %v1235
      %v1244 = vpack.c.b16 %v1238, %v1237
      %v1245 = vpack.c.b16 %v1240, %v1239
      %v1246 = vpack.c.b16 %v1242, %v1241
      %v1252 = vsel %vm495, %v1226, 0
      %1254 = vmatpush.bf16.msra.mxu0 0
      %1255 = vmatpush.bf16.msra.mxu0 0
      %1256 = vmatpush.bf16.msra.mxu0 0
      %1257 = vmatpush.bf16.msra.mxu0 0
      %1258 = vmatpush.bf16.msra.mxu0 %v1246
      %1259 = vmatpush.bf16.msra.mxu0 %v1245
      %1260 = vmatpush.bf16.msra.mxu0 %v1244
      %1261 = vmatpush.bf16.msra.mxu0 %v1243
      %1262 = vmatmul.bf16.gmra.mxu0 %v503
      %v1263 = vpop.f32.mrf.mxu0
      %v1264 = vadd.f32 0.0, %v1263
      %v1265 = vpop.f32.mrf.mxu0
      %v1266 = vadd.f32 0.0, %v1265
      %1267 = vmatmul.bf16.gmra.mxu0 %v506
      %v1268 = vpop.f32.mrf.mxu0
      %v1269 = vadd.f32 0.0, %v1268
      %v1270 = vpop.f32.mrf.mxu0
      %v1271 = vadd.f32 0.0, %v1270
      %1272 = vmatmul.bf16.gmra.mxu0 %v509
      %v1273 = vpop.f32.mrf.mxu0
      %v1274 = vadd.f32 0.0, %v1273
      %v1275 = vpop.f32.mrf.mxu0
      %v1276 = vadd.f32 0.0, %v1275
      %1277 = vmatmul.bf16.gmra.mxu0 %v512
      %v1278 = vpop.f32.mrf.mxu0
      %v1279 = vadd.f32 0.0, %v1278
      %v1280 = vpop.f32.mrf.mxu0
      %v1281 = vadd.f32 0.0, %v1280
      %1282 = vmatmul.bf16.gmra.mxu0 %v515
      %v1283 = vpop.f32.mrf.mxu0
      %v1284 = vadd.f32 0.0, %v1283
      %v1285 = vpop.f32.mrf.mxu0
      %v1286 = vadd.f32 0.0, %v1285
      %1287 = vmatmul.bf16.gmra.mxu0 %v518
      %v1288 = vpop.f32.mrf.mxu0
      %v1289 = vadd.f32 0.0, %v1288
      %v1290 = vpop.f32.mrf.mxu0
      %v1291 = vadd.f32 0.0, %v1290
      %1292 = vmatmul.bf16.gmra.mxu0 %v940
      %v1293 = vpop.f32.mrf.mxu0
      %v1294 = vadd.f32 0.0, %v1293
      %v1295 = vpop.f32.mrf.mxu0
      %v1296 = vadd.f32 0.0, %v1295
      %1297 = vmatmul.bf16.gmra.mxu0 %v1252
      %v1298 = vpop.f32.mrf.mxu0
      %v1299 = vadd.f32 0.0, %v1298
      %v1300 = vpop.f32.mrf.mxu0
      %v1301 = vadd.f32 0.0, %v1300
      %1302 = vdwg.mxu0
      %v1303 = vadd.f32 %v1194, %v1264
      %v1304 = vadd.f32 %v1195, %v1266
      %v1305 = vadd.f32 %v1196, %v1269
      %v1306 = vadd.f32 %v1197, %v1271
      %v1307 = vadd.f32 %v1198, %v1274
      %v1308 = vadd.f32 %v1199, %v1276
      %v1309 = vadd.f32 %v1200, %v1279
      %v1310 = vadd.f32 %v1201, %v1281
      %v1311 = vadd.f32 %v1202, %v1284
      %v1312 = vadd.f32 %v1203, %v1286
      %v1313 = vadd.f32 %v1204, %v1289
      %v1314 = vadd.f32 %v1205, %v1291
      %v1315 = vadd.f32 %v1206, %v1294
      %v1316 = vadd.f32 %v1207, %v1296
      %v1317 = vadd.f32 %v1208, %v1299
      %v1318 = vadd.f32 %v1209, %v1301
      %s1319 = scalar_lea.vmem %s2, 256
      %v1320 = vld [vmem:[%s1319] sm:$0xf]
      %v1321 = vld [vmem:[%s1319 + $0x4] sm:$0xf]
      %v1322 = vld [vmem:[%s1319 + $0x8] sm:$0xf]
      %v1323 = vld [vmem:[%s1319 + $0xc] sm:$0xf]
      %v1324 = vld [vmem:[%s1319 + $0x10] sm:$0xf]
      %v1325 = vld [vmem:[%s1319 + $0x14] sm:$0xf]
      %v1326 = vld [vmem:[%s1319 + $0x18] sm:$0xf]
      %v1327 = vld [vmem:[%s1319 + $0x1c] sm:$0xf]
      %v1328 = vrot.slane %v384, 1
      %v1329 = vsel %vm667, %v1016, %v1328
      %v1338 = vunpack.c.l.b16 %v1320
      %v1339 = vunpack.c.l.b16 %v1321
      %v1340 = vunpack.c.l.b16 %v1322
      %v1341 = vunpack.c.l.b16 %v1323
      %v1342 = vunpack.c.l.b16 %v1324
      %v1343 = vunpack.c.l.b16 %v1325
      %v1344 = vunpack.c.l.b16 %v1326
      %v1345 = vunpack.c.l.b16 %v1327
      %v1346 = vpack.c.b16 %v1339, %v1338
      %v1347 = vpack.c.b16 %v1341, %v1340
      %v1348 = vpack.c.b16 %v1343, %v1342
      %v1349 = vpack.c.b16 %v1345, %v1344
      %v1355 = vsel %vm495, %v1329, 0
      %1357 = vmatpush.bf16.msra.mxu0 0
      %1358 = vmatpush.bf16.msra.mxu0 0
      %1359 = vmatpush.bf16.msra.mxu0 0
      %1360 = vmatpush.bf16.msra.mxu0 0
      %1361 = vmatpush.bf16.msra.mxu0 %v1349
      %1362 = vmatpush.bf16.msra.mxu0 %v1348
      %1363 = vmatpush.bf16.msra.mxu0 %v1347
      %1364 = vmatpush.bf16.msra.mxu0 %v1346
      %1365 = vmatmul.bf16.gmra.mxu0 %v716
      %v1366 = vpop.f32.mrf.mxu0
      %v1367 = vadd.f32 0.0, %v1366
      %v1368 = vpop.f32.mrf.mxu0
      %v1369 = vadd.f32 0.0, %v1368
      %1370 = vmatmul.bf16.gmra.mxu0 %v719
      %v1371 = vpop.f32.mrf.mxu0
      %v1372 = vadd.f32 0.0, %v1371
      %v1373 = vpop.f32.mrf.mxu0
      %v1374 = vadd.f32 0.0, %v1373
      %1375 = vmatmul.bf16.gmra.mxu0 %v722
      %v1376 = vpop.f32.mrf.mxu0
      %v1377 = vadd.f32 0.0, %v1376
      %v1378 = vpop.f32.mrf.mxu0
      %v1379 = vadd.f32 0.0, %v1378
      %1380 = vmatmul.bf16.gmra.mxu0 %v725
      %v1381 = vpop.f32.mrf.mxu0
      %v1382 = vadd.f32 0.0, %v1381
      %v1383 = vpop.f32.mrf.mxu0
      %v1384 = vadd.f32 0.0, %v1383
      %1385 = vmatmul.bf16.gmra.mxu0 %v728
      %v1386 = vpop.f32.mrf.mxu0
      %v1387 = vadd.f32 0.0, %v1386
      %v1388 = vpop.f32.mrf.mxu0
      %v1389 = vadd.f32 0.0, %v1388
      %1390 = vmatmul.bf16.gmra.mxu0 %v731
      %v1391 = vpop.f32.mrf.mxu0
      %v1392 = vadd.f32 0.0, %v1391
      %v1393 = vpop.f32.mrf.mxu0
      %v1394 = vadd.f32 0.0, %v1393
      %1395 = vmatmul.bf16.gmra.mxu0 %v1043
      %v1396 = vpop.f32.mrf.mxu0
      %v1397 = vadd.f32 0.0, %v1396
      %v1398 = vpop.f32.mrf.mxu0
      %v1399 = vadd.f32 0.0, %v1398
      %1400 = vmatmul.bf16.gmra.mxu0 %v1355
      %v1401 = vpop.f32.mrf.mxu0
      %v1402 = vadd.f32 0.0, %v1401
      %v1403 = vpop.f32.mrf.mxu0
      %v1404 = vadd.f32 0.0, %v1403
      %1405 = vdwg.mxu0
      %v1406 = vadd.f32 %v1303, %v1367
      %v1407 = vadd.f32 %v1304, %v1369
      %v1408 = vadd.f32 %v1305, %v1372
      %v1409 = vadd.f32 %v1306, %v1374
      %v1410 = vadd.f32 %v1307, %v1377
      %v1411 = vadd.f32 %v1308, %v1379
      %v1412 = vadd.f32 %v1309, %v1382
      %v1413 = vadd.f32 %v1310, %v1384
      %v1414 = vadd.f32 %v1311, %v1387
      %v1415 = vadd.f32 %v1312, %v1389
      %v1416 = vadd.f32 %v1313, %v1392
      %v1417 = vadd.f32 %v1314, %v1394
      %v1418 = vadd.f32 %v1315, %v1397
      %v1419 = vadd.f32 %v1316, %v1399
      %v1420 = vadd.f32 %v1317, %v1402
      %v1421 = vadd.f32 %v1318, %v1404
      %v1422 = vld [vmem:[%s3] sm:$0x1]
      %v1424 = vperm.slane %v1422, 0
      %v1426 = vadd.f32 %v1406, %v1424
      %v1427 = vadd.f32 %v1407, %v1424
      %v1428 = vadd.f32 %v1408, %v1424
      %v1429 = vadd.f32 %v1409, %v1424
      %v1430 = vadd.f32 %v1410, %v1424
      %v1431 = vadd.f32 %v1411, %v1424
      %v1432 = vadd.f32 %v1412, %v1424
      %v1433 = vadd.f32 %v1413, %v1424
      %v1434 = vadd.f32 %v1414, %v1424
      %v1435 = vadd.f32 %v1415, %v1424
      %v1436 = vadd.f32 %v1416, %v1424
      %v1437 = vadd.f32 %v1417, %v1424
      %v1438 = vadd.f32 %v1418, %v1424
      %v1439 = vadd.f32 %v1419, %v1424
      %v1440 = vadd.f32 %v1420, %v1424
      %v1441 = vadd.f32 %v1421, %v1424
      %v1442 = vmax.f32 %v1426, 0.0
      %v1443 = vmax.f32 %v1427, 0.0
      %v1444 = vmax.f32 %v1428, 0.0
      %v1445 = vmax.f32 %v1429, 0.0
      %v1446 = vmax.f32 %v1430, 0.0
      %v1447 = vmax.f32 %v1431, 0.0
      %v1448 = vmax.f32 %v1432, 0.0
      %v1449 = vmax.f32 %v1433, 0.0
      %v1450 = vmax.f32 %v1434, 0.0
      %v1451 = vmax.f32 %v1435, 0.0
      %v1452 = vmax.f32 %v1436, 0.0
      %v1453 = vmax.f32 %v1437, 0.0
      %v1454 = vmax.f32 %v1438, 0.0
      %v1455 = vmax.f32 %v1439, 0.0
      %v1456 = vmax.f32 %v1440, 0.0
      %v1457 = vmax.f32 %v1441, 0.0
      %v1458 = vpack.c.bf16 %v1442, %v1442
      %v1459 = vpack.c.bf16 %v1443, %v1443
      %v1460 = vpack.c.bf16 %v1444, %v1444
      %v1461 = vpack.c.bf16 %v1445, %v1445
      %v1462 = vpack.c.bf16 %v1446, %v1446
      %v1463 = vpack.c.bf16 %v1447, %v1447
      %v1464 = vpack.c.bf16 %v1448, %v1448
      %v1465 = vpack.c.bf16 %v1449, %v1449
      %v1466 = vpack.c.bf16 %v1450, %v1450
      %v1467 = vpack.c.bf16 %v1451, %v1451
      %v1468 = vpack.c.bf16 %v1452, %v1452
      %v1469 = vpack.c.bf16 %v1453, %v1453
      %v1470 = vpack.c.bf16 %v1454, %v1454
      %v1471 = vpack.c.bf16 %v1455, %v1455
      %v1472 = vpack.c.bf16 %v1456, %v1456
      %v1473 = vpack.c.bf16 %v1457, %v1457
      %1474 = vst [vmem:[%s305] sm:$0xf] %v1458
      %1475 = vst [vmem:[%s305 + $0x4] sm:$0xf] %v1459
      %1476 = vst [vmem:[%s305 + $0x8] sm:$0xf] %v1460
      %1477 = vst [vmem:[%s305 + $0xc] sm:$0xf] %v1461
      %1478 = vst [vmem:[%s305 + $0x10] sm:$0xf] %v1462
      %1479 = vst [vmem:[%s305 + $0x14] sm:$0xf] %v1463
      %1480 = vst [vmem:[%s305 + $0x18] sm:$0xf] %v1464
      %1481 = vst [vmem:[%s305 + $0x1c] sm:$0xf] %v1465
      %1482 = vst [vmem:[%s305 + $0x20] sm:$0xf] %v1466
      %1483 = vst [vmem:[%s305 + $0x24] sm:$0xf] %v1467
      %1484 = vst [vmem:[%s305 + $0x28] sm:$0xf] %v1468
      %1485 = vst [vmem:[%s305 + $0x2c] sm:$0xf] %v1469
      %1486 = vst [vmem:[%s305 + $0x30] sm:$0xf] %v1470
      %1487 = vst [vmem:[%s305 + $0x34] sm:$0xf] %v1471
      %1488 = vst [vmem:[%s305 + $0x38] sm:$0xf] %v1472
      %1489 = vst [vmem:[%s305 + $0x3c] sm:$0xf] %v1473
      %s1490 = smul.u32 16, %s20
      %p1491 = scmp.lt.s32.totalorder %s19, 1
      %s1492 = scalar_select %p1491, %s19, 1
      %p1493 = scmp.lt.s32.totalorder %s1490, 15
      %s1494 = scalar_select %p1493, %s1490, 15
      %s1495 = smul.addr %s1492, 16
      %s1496 = sadd.s32 %s1494, %s1495
      %s1497 = smul.addr %s1496, 4
      %s1498 = scalar_lea.vmem %s4, %s1497
      // Predicated region
      $region37: #{vgg19_slice1.7} parent=35 // pred_check
        %p1499 = pneg %p149
      $region38: #{vgg19_slice1.7} parent=35 // pred_check_branch
        %1501 = sbr.rel (%p1499) target = $region40
      $region39: #{vgg19_slice1.7} parent=35 // pred_region
        %s1502 = smul.u32 16, %s20
      $region40: #{vgg19_slice1.7} parent=35 // pred_fallthru
        _
    $region36: #{vgg19_slice1.7} parent=5 // pred_fallthru
      _
    %p1503 = scmp.le.s32.totalorder 2, %s10
    // Predicated region
    $region41: #{vgg19_slice1.7} parent=5 // pred_check
      %p1504 = pneg %p1503
    $region42: #{vgg19_slice1.7} parent=5 // pred_check_branch
      %1506 = sbr.rel (%p1504) target = $region44
    $region43: #{vgg19_slice1.7} parent=5 // pred_region
      %s1507 = ssub.s32 %s10, 2
      // Predicated region
      $region45: #{vgg19_slice1.7} parent=43 // pred_check
        %p1508 = pneg %p155
      $region46: #{vgg19_slice1.7} parent=43 // pred_check_branch
        %1510 = sbr.rel (%p1508) target = $region48
      $region47: #{vgg19_slice1.7} parent=43 // pred_region
        %s1511 = smul.u32 16, %s22
        %p1512 = scmp.lt.s32.totalorder %s21, 1
        %s1513 = scalar_select %p1512, %s21, 1
        %p1514 = scmp.lt.s32.totalorder %s1511, 15
        %s1515 = scalar_select %p1514, %s1511, 15
        %s1516 = smul.addr %s1513, 16
        %s1517 = sadd.s32 %s1515, %s1516
        %s1518 = smul.addr %s1517, 4
        %s1519 = scalar_lea.vmem %s4, %s1518
      $region48: #{vgg19_slice1.7} parent=43 // pred_fallthru
        _
    $region44: #{vgg19_slice1.7} parent=5 // pred_fallthru
      _
  $region6: #{vgg19_slice1.7} parent=0 // loop_footer
    %s14 = sadd.s32 1, %s10
  $region7: #{vgg19_slice1.7} parent=0 // loop_footer_branch
    %9 = sbr.rel target = $region3
  $region8: #{vgg19_slice1.7} parent=0 // loop_exit
    _

// kernel: vgg19_slice1.6
$region0: #{vgg19_slice1.6}
  #allocation0 [shape = 'u32[]', space=smem, size = 0x4, offset = 0x4, fixed_abs, tag = 'smem constant byte address 0x4 - core index']
  #allocation1 [shape = 'u32[72,128]{1,0:T(1,128)}', space=vmem, size = 0x9000, scoped, tag = 'internal scratch']
  #allocation2 [shape = 'f32[8,24,64]{2,1,0:T(8,128)}', space=vmem, size = 0x18000, scoped, tag = 'scratch operand']
  %s0 = inlined_call_operand.vmem [shape: bf16[2,480,64], index: 0, kind: input, shape index: {}, may-alias: {0,1}]
  %s1 = inlined_call_operand.vmem [shape: bf16[2,480,64], index: 1, kind: input, shape index: {}, may-alias: {0,1}]
  %s2 = inlined_call_operand.vmem [shape: bf16[9,64,64], index: 2, kind: input, shape index: {}]
  %s3 = inlined_call_operand.vmem [shape: f32[1,64], index: 3, kind: input, shape index: {}]
  %s4 = inlined_call_operand.vmem [shape: bf16[2,8,12,64], index: 4, kind: output, shape index: {}]
  %s5 = sld [smem:[#allocation0]]
  $region49: #{vgg19_slice1.6} parent=0
    _
  %s7 = ssub.s32 1, %s5
  %s8 = scalar_select 0, %s7, %s5
  loop: start=0, step=1, limit=4
  $region2: #{vgg19_slice1.6} parent=0 // loop_pre_header
    _
  $region3: #{vgg19_slice1.6} parent=0 // loop_header
    %s10 = sphi 0, %s14
    %p11 = scmp.ge.s32.totalorder %s10, 4
    %s17 = sphi 0, %s29
    %s18 = sphi 0, %s25
    %s19 = sphi 0, %s17
    %s20 = sphi 0, %s18
    %s21 = sphi 0, %s19
    %s22 = sphi 0, %s20
    %s34 = sphi 0, %s36
    %s37 = sphi 0, %s34
    %s38 = sphi 0, %s37
    %s54 = sphi 0, %s38
    %s66 = sphi 0, %s68
    %s69 = sphi 0, %s66
    %s70 = sphi 0, %s69
    %s86 = sphi 0, %s70
    %s90 = sphi 0, %s90
    %s92 = sphi 0, %s90
    %s93 = sphi 0, %s92
    %s107 = sphi 0, %s93
    %s111 = sphi 0, %s111
    %s113 = sphi 0, %s111
    %s114 = sphi 0, %s113
    %s128 = sphi 0, %s114
    %s136 = sphi 0, %s138
    %s139 = sphi 0, %s136
    %s140 = sphi 0, %s139
    %s156 = sphi 0, %s140
  $region4: #{vgg19_slice1.6} parent=0 // loop_header_branch
    %13 = sbr.rel (%p11) target = $region8
  $region5: #{vgg19_slice1.6} parent=0 // loop_body
    %s15 = ssub.s32 %s10, 1
    %s16 = ssub.s32 %s10, 2
    %s23 = sadd.s32 1, %s18
    %p24 = scmp.ge.s32.totalorder %s23, 1
    %s25 = scalar_select %p24, 0, %s23
    %s26 = sadd.s32 1, %s17
    %s27 = scalar_select %p24, %s26, %s17
    %p28 = scmp.ge.s32.totalorder %s27, 2
    %s29 = scalar_select %p28, 0, %s27
    %s30 = ssub.s32 %s17, %s29
    %s31 = ssub.s32 %s18, %s25
    %s32 = sor.u32 %s30, %s31
    %p33 = scmp.eq.s32.totalorder %s32, 0
    %s35 = sadd.s32 %s34, 1
    %s36 = scalar_select %p33, %s34, %s35
    %p39 = pneg %p33
    %p40 = scmp.eq.s32.totalorder %s10, 1
    %p41 = por %p39, %p40
    %p42 = scmp.ne.s32.totalorder %s34, %s37
    %p43 = scmp.eq.s32.totalorder %s10, 0
    %p44 = por %p42, %p43
    %p45 = scmp.ne.s32.totalorder %s34, %s37
    %p46 = scmp.eq.s32.totalorder %s15, 1
    %p47 = por %p45, %p46
    %p48 = scmp.ne.s32.totalorder %s37, %s38
    %p49 = scmp.eq.s32.totalorder %s15, 0
    %p50 = por %p48, %p49
    %p51 = scmp.ne.s32.totalorder %s37, %s38
    %p52 = scmp.eq.s32.totalorder %s16, 1
    %p53 = por %p51, %p52
    %p55 = scmp.ne.s32.totalorder %s38, %s54
    %p56 = scmp.eq.s32.totalorder %s16, 0
    %p57 = por %p55, %p56
    %s58 = sadd.s32 %s18, 1
    %s59 = smul.u32 %s58, 4
    %s60 = sadd.s32 %s25, 1
    %s61 = smul.u32 %s60, 4
    %s62 = ssub.s32 %s17, %s29
    %s63 = ssub.s32 %s59, %s61
    %s64 = sor.u32 %s62, %s63
    %p65 = scmp.eq.s32.totalorder %s64, 0
    %s67 = sadd.s32 %s66, 1
    %s68 = scalar_select %p65, %s66, %s67
    %p71 = pneg %p65
    %p72 = scmp.eq.s32.totalorder %s10, 1
    %p73 = por %p71, %p72
    %p74 = scmp.ne.s32.totalorder %s66, %s69
    %p75 = scmp.eq.s32.totalorder %s10, 0
    %p76 = por %p74, %p75
    %p77 = scmp.ne.s32.totalorder %s66, %s69
    %p78 = scmp.eq.s32.totalorder %s15, 1
    %p79 = por %p77, %p78
    %p80 = scmp.ne.s32.totalorder %s69, %s70
    %p81 = scmp.eq.s32.totalorder %s15, 0
    %p82 = por %p80, %p81
    %p83 = scmp.ne.s32.totalorder %s69, %s70
    %p84 = scmp.eq.s32.totalorder %s16, 1
    %p85 = por %p83, %p84
    %p87 = scmp.ne.s32.totalorder %s70, %s86
    %p88 = scmp.eq.s32.totalorder %s16, 0
    %p89 = por %p87, %p88
    %s91 = sadd.s32 %s90, 1
    %p94 = scmp.eq.s32.totalorder %s10, 1
    %p95 = scmp.ne.s32.totalorder %s90, %s92
    %p96 = scmp.eq.s32.totalorder %s10, 0
    %p97 = por %p95, %p96
    %p98 = scmp.ne.s32.totalorder %s90, %s92
    %p99 = scmp.eq.s32.totalorder %s15, 1
    %p100 = por %p98, %p99
    %p101 = scmp.ne.s32.totalorder %s92, %s93
    %p102 = scmp.eq.s32.totalorder %s15, 0
    %p103 = por %p101, %p102
    %p104 = scmp.ne.s32.totalorder %s92, %s93
    %p105 = scmp.eq.s32.totalorder %s16, 1
    %p106 = por %p104, %p105
    %p108 = scmp.ne.s32.totalorder %s93, %s107
    %p109 = scmp.eq.s32.totalorder %s16, 0
    %p110 = por %p108, %p109
    %s112 = sadd.s32 %s111, 1
    %p115 = scmp.eq.s32.totalorder %s10, 1
    %p116 = scmp.ne.s32.totalorder %s111, %s113
    %p117 = scmp.eq.s32.totalorder %s10, 0
    %p118 = por %p116, %p117
    %p119 = scmp.ne.s32.totalorder %s111, %s113
    %p120 = scmp.eq.s32.totalorder %s15, 1
    %p121 = por %p119, %p120
    %p122 = scmp.ne.s32.totalorder %s113, %s114
    %p123 = scmp.eq.s32.totalorder %s15, 0
    %p124 = por %p122, %p123
    %p125 = scmp.ne.s32.totalorder %s113, %s114
    %p126 = scmp.eq.s32.totalorder %s16, 1
    %p127 = por %p125, %p126
    %p129 = scmp.ne.s32.totalorder %s114, %s128
    %p130 = scmp.eq.s32.totalorder %s16, 0
    %p131 = por %p129, %p130
    %s132 = ssub.s32 %s17, %s29
    %s133 = ssub.s32 %s18, %s25
    %s134 = sor.u32 %s132, %s133
    %p135 = scmp.eq.s32.totalorder %s134, 0
    %s137 = sadd.s32 %s136, 1
    %s138 = scalar_select %p135, %s136, %s137
    %p141 = pneg %p135
    %p142 = scmp.eq.s32.totalorder %s10, 1
    %p143 = por %p141, %p142
    %p144 = scmp.ne.s32.totalorder %s136, %s139
    %p145 = scmp.eq.s32.totalorder %s10, 0
    %p146 = por %p144, %p145
    %p147 = scmp.ne.s32.totalorder %s136, %s139
    %p148 = scmp.eq.s32.totalorder %s15, 1
    %p149 = por %p147, %p148
    %p150 = scmp.ne.s32.totalorder %s139, %s140
    %p151 = scmp.eq.s32.totalorder %s15, 0
    %p152 = por %p150, %p151
    %p153 = scmp.ne.s32.totalorder %s139, %s140
    %p154 = scmp.eq.s32.totalorder %s16, 1
    %p155 = por %p153, %p154
    %p157 = scmp.ne.s32.totalorder %s140, %s156
    %p158 = scmp.eq.s32.totalorder %s16, 0
    %p159 = por %p157, %p158
    %p160 = scmp.le.s32.totalorder 1, %s10
    %p161 = scmp.lt.s32.totalorder %s10, 3
    %p162 = pnand %p160, %p161
    %p163 = pneg %p162
    // Predicated region
    $region9: #{vgg19_slice1.6} parent=5 // pred_check
      _
    $region10: #{vgg19_slice1.6} parent=5 // pred_check_branch
      %165 = sbr.rel (%p162) target = $region12
    $region11: #{vgg19_slice1.6} parent=5 // pred_region
      %s166 = ssub.s32 %s10, 1
      // Predicated region
      $region13: #{vgg19_slice1.6} parent=11 // pred_check
        %p167 = pneg %p103
      $region14: #{vgg19_slice1.6} parent=11 // pred_check_branch
        %169 = sbr.rel (%p167) target = $region16
      $region15: #{vgg19_slice1.6} parent=11 // pred_region
        _
      $region16: #{vgg19_slice1.6} parent=11 // pred_fallthru
        _
      // Predicated region
      $region17: #{vgg19_slice1.6} parent=11 // pred_check
        %p170 = pneg %p124
      $region18: #{vgg19_slice1.6} parent=11 // pred_check_branch
        %172 = sbr.rel (%p170) target = $region20
      $region19: #{vgg19_slice1.6} parent=11 // pred_region
        _
      $region20: #{vgg19_slice1.6} parent=11 // pred_fallthru
        _
    $region12: #{vgg19_slice1.6} parent=5 // pred_fallthru
      _
    %p173 = scmp.lt.s32.totalorder %s10, 2
    // Predicated region
    $region21: #{vgg19_slice1.6} parent=5 // pred_check
      %p174 = pneg %p173
    $region22: #{vgg19_slice1.6} parent=5 // pred_check_branch
      %176 = sbr.rel (%p174) target = $region24
    $region23: #{vgg19_slice1.6} parent=5 // pred_region
      // Predicated region
      $region25: #{vgg19_slice1.6} parent=23 // pred_check
        %p177 = pneg %p44
      $region26: #{vgg19_slice1.6} parent=23 // pred_check_branch
        %179 = sbr.rel (%p177) target = $region28
      $region27: #{vgg19_slice1.6} parent=23 // pred_region
        %s180 = smul.u32 48, %s18
        %s181 = ssub.s32 60, %s180
        %p182 = scmp.lt.s32.totalorder %s181, 48
        %s183 = scalar_select %p182, %s181, 48
        %s184 = smul.u32 4, %s183
        %p185 = scmp.lt.s32.totalorder %s17, 1
        %s186 = scalar_select %p185, %s17, 1
        %p187 = scmp.lt.s32.totalorder %s180, 59
        %s188 = scalar_select %p187, %s180, 59
        %s189 = smul.addr %s186, 60
        %s190 = sadd.s32 %s188, %s189
        %s191 = smul.addr %s190, 4
        %s192 = scalar_lea.vmem %s0, %s191
        %s193 = smul.u32 48, %s18
        %s194 = ssub.s32 60, %s193
        %p195 = scmp.lt.s32.totalorder %s194, 48
        %s196 = scalar_select %p195, %s194, 48
        %s197 = smul.u32 4, %s196
      $region28: #{vgg19_slice1.6} parent=23 // pred_fallthru
        _
      // Predicated region
      $region29: #{vgg19_slice1.6} parent=23 // pred_check
        %p198 = pneg %p76
      $region30: #{vgg19_slice1.6} parent=23 // pred_check_branch
        %200 = sbr.rel (%p198) target = $region32
      $region31: #{vgg19_slice1.6} parent=23 // pred_region
        %s201 = sadd.s32 %s18, 1
        %s202 = smul.u32 %s201, 4
        %s203 = smul.u32 12, %s202
        %p204 = scmp.lt.s32.totalorder %s17, 1
        %s205 = scalar_select %p204, %s17, 1
        %p206 = scmp.lt.s32.totalorder %s203, 59
        %s207 = scalar_select %p206, %s203, 59
        %s208 = smul.addr %s205, 60
        %s209 = sadd.s32 %s207, %s208
        %s210 = smul.addr %s209, 4
        %s211 = scalar_lea.vmem %s1, %s210
        %s212 = sadd.s32 %s18, 1
        %s213 = smul.u32 %s212, 4
        %s214 = smul.u32 12, %s213
      $region32: #{vgg19_slice1.6} parent=23 // pred_fallthru
        _
    $region24: #{vgg19_slice1.6} parent=5 // pred_fallthru
      _
    %p215 = scmp.le.s32.totalorder 1, %s10
    %p216 = scmp.lt.s32.totalorder %s10, 3
    %p217 = pnand %p215, %p216
    %p218 = pneg %p217
    // Predicated region
    $region33: #{vgg19_slice1.6} parent=5 // pred_check
      _
    $region34: #{vgg19_slice1.6} parent=5 // pred_check_branch
      %220 = sbr.rel (%p217) target = $region36
    $region35: #{vgg19_slice1.6} parent=5 // pred_region
      %s221 = ssub.s32 %s10, 1
      %s222 = smul.u32 48, %s20
      %s223 = ssub.s32 60, %s222
      %p224 = scmp.lt.s32.totalorder %s223, 48
      %s225 = scalar_select %p224, %s223, 48
      %s226 = smul.u32 4, %s225
      %p227 = scmp.lt.s32.totalorder %s19, 1
      %s228 = scalar_select %p227, %s19, 1
      %p229 = scmp.lt.s32.totalorder %s222, 59
      %s230 = scalar_select %p229, %s222, 59
      %s231 = smul.addr %s228, 60
      %s232 = sadd.s32 %s230, %s231
      %s233 = smul.addr %s232, 4
      %s234 = scalar_lea.vmem %s0, %s233
      %p235 = pneg %p50
      %p236 = pneg %p47
      %s237 = sadd.s32 %s20, 1
      %s238 = smul.u32 %s237, 4
      %s239 = smul.u32 12, %s238
      %p240 = scmp.lt.s32.totalorder %s19, 1
      %s241 = scalar_select %p240, %s19, 1
      %p242 = scmp.lt.s32.totalorder %s239, 59
      %s243 = scalar_select %p242, %s239, 59
      %s244 = smul.addr %s241, 60
      %s245 = sadd.s32 %s243, %s244
      %s246 = smul.addr %s245, 4
      %s247 = scalar_lea.vmem %s1, %s246
      %p248 = pneg %p82
      %p249 = pneg %p79
      %p250 = pneg %p103
      %p251 = pneg %p100
      %p252 = pneg %p124
      %p253 = pneg %p121
      %p254 = pneg %p152
      %p255 = pneg %p149
      %s256 = smul.u32 8, %s20
      %p257 = scmp.lt.s32.totalorder %s19, 1
      %s258 = scalar_select %p257, %s19, 1
      %p259 = scmp.lt.s32.totalorder %s256, 7
      %s260 = scalar_select %p259, %s256, 7
      %s261 = smul.addr %s260, 2
      %s262 = smul.addr %s258, 16
      %s263 = sadd.s32 %s261, %s262
      %s264 = smul.addr %s263, 4
      %s265 = scalar_lea.vmem %s4, %s264
      %s266 = smul.u32 48, %s20
      %s267 = ssub.s32 60, %s266
      %p268 = scmp.lt.s32.totalorder %s267, 48
      %s269 = scalar_select %p268, %s267, 48
      %s270 = smul.u32 4, %s269
      %p271 = scmp.lt.s32.totalorder %s19, 1
      %s272 = scalar_select %p271, %s19, 1
      %p273 = scmp.lt.s32.totalorder %s266, 59
      %s274 = scalar_select %p273, %s266, 59
      %s275 = smul.addr %s272, 60
      %s276 = sadd.s32 %s274, %s275
      %s277 = smul.addr %s276, 4
      %s278 = scalar_lea.vmem %s0, %s277
      %s279 = smul.u32 48, %s20
      %s280 = ssub.s32 60, %s279
      %p281 = scmp.lt.s32.totalorder %s280, 48
      %s282 = scalar_select %p281, %s280, 48
      %s283 = smul.u32 4, %s282
      %s284 = sadd.s32 %s20, 1
      %s285 = smul.u32 %s284, 4
      %s286 = smul.u32 12, %s285
      %p287 = scmp.lt.s32.totalorder %s19, 1
      %s288 = scalar_select %p287, %s19, 1
      %p289 = scmp.lt.s32.totalorder %s286, 59
      %s290 = scalar_select %p289, %s286, 59
      %s291 = smul.addr %s288, 60
      %s292 = sadd.s32 %s290, %s291
      %s293 = smul.addr %s292, 4
      %s294 = scalar_lea.vmem %s1, %s293
      %s295 = sadd.s32 %s20, 1
      %s296 = smul.u32 %s295, 4
      %s297 = smul.u32 12, %s296
      %s298 = smul.u32 8, %s20
      %p299 = scmp.lt.s32.totalorder %s19, 1
      %s300 = scalar_select %p299, %s19, 1
      %p301 = scmp.lt.s32.totalorder %s298, 7
      %s302 = scalar_select %p301, %s298, 7
      %s303 = smul.addr %s302, 2
      %s304 = smul.addr %s300, 16
      %s305 = sadd.s32 %s303, %s304
      %s306 = smul.addr %s305, 4
      %s307 = scalar_lea.vmem %s4, %s306
      %s308 = smul.u32 8, %s20
      %v310 = vld [vmem:[%s278] sm:$0xf]
      %v311 = vld [vmem:[%s278 + $0x4] sm:$0xf]
      %v312 = vld [vmem:[%s278 + $0x8] sm:$0xf]
      %v313 = vld [vmem:[%s278 + $0xc] sm:$0xf]
      %v314 = vld [vmem:[%s278 + $0x10] sm:$0xf]
      %v315 = vld [vmem:[%s278 + $0x14] sm:$0xf]
      %v316 = vld [vmem:[%s278 + $0x18] sm:$0xf]
      %v317 = vld [vmem:[%s278 + $0x1c] sm:$0xf]
      %v318 = vld [vmem:[%s278 + $0x20] sm:$0xf]
      %v319 = vld [vmem:[%s278 + $0x24] sm:$0xf]
      %v320 = vld [vmem:[%s278 + $0x28] sm:$0xf]
      %v321 = vld [vmem:[%s278 + $0x2c] sm:$0xf]
      %v322 = vld [vmem:[%s278 + $0x30] sm:$0xf]
      %v323 = vld [vmem:[%s278 + $0x34] sm:$0xf]
      %v324 = vld [vmem:[%s278 + $0x38] sm:$0xf]
      %v325 = vld [vmem:[%s278 + $0x3c] sm:$0xf]
      %v326 = vld [vmem:[%s278 + $0x40] sm:$0xf]
      %v327 = vld [vmem:[%s278 + $0x44] sm:$0xf]
      %v328 = vld [vmem:[%s278 + $0x48] sm:$0xf]
      %v329 = vld [vmem:[%s278 + $0x4c] sm:$0xf]
      %v330 = vld [vmem:[%s278 + $0x50] sm:$0xf]
      %v331 = vld [vmem:[%s278 + $0x54] sm:$0xf]
      %v332 = vld [vmem:[%s278 + $0x58] sm:$0xf]
      %v333 = vld [vmem:[%s278 + $0x5c] sm:$0xf]
      %v334 = vld [vmem:[%s278 + $0x60] sm:$0xf]
      %v335 = vld [vmem:[%s278 + $0x64] sm:$0xf]
      %v336 = vld [vmem:[%s278 + $0x68] sm:$0xf]
      %v337 = vld [vmem:[%s278 + $0x6c] sm:$0xf]
      %v338 = vld [vmem:[%s278 + $0x70] sm:$0xf]
      %v339 = vld [vmem:[%s278 + $0x74] sm:$0xf]
      %v340 = vld [vmem:[%s278 + $0x78] sm:$0xf]
      %v341 = vld [vmem:[%s278 + $0x7c] sm:$0xf]
      %v342 = vld [vmem:[%s278 + $0x80] sm:$0xf]
      %v343 = vld [vmem:[%s278 + $0x84] sm:$0xf]
      %v344 = vld [vmem:[%s278 + $0x88] sm:$0xf]
      %v345 = vld [vmem:[%s278 + $0x8c] sm:$0xf]
      %v346 = vld [vmem:[%s278 + $0x90] sm:$0xf]
      %v347 = vld [vmem:[%s278 + $0x94] sm:$0xf]
      %v348 = vld [vmem:[%s278 + $0x98] sm:$0xf]
      %v349 = vld [vmem:[%s278 + $0x9c] sm:$0xf]
      %v350 = vld [vmem:[%s278 + $0xa0] sm:$0xf]
      %v351 = vld [vmem:[%s278 + $0xa4] sm:$0xf]
      %v352 = vld [vmem:[%s278 + $0xa8] sm:$0xf]
      %v353 = vld [vmem:[%s278 + $0xac] sm:$0xf]
      %v354 = vld [vmem:[%s278 + $0xb0] sm:$0xf]
      %v355 = vld [vmem:[%s278 + $0xb4] sm:$0xf]
      %v356 = vld [vmem:[%s278 + $0xb8] sm:$0xf]
      %v357 = vld [vmem:[%s278 + $0xbc] sm:$0xf]
      %v358 = vld [vmem:[%s294] sm:$0xf]
      %v359 = vld [vmem:[%s294 + $0x4] sm:$0xf]
      %v360 = vld [vmem:[%s294 + $0x8] sm:$0xf]
      %v361 = vld [vmem:[%s294 + $0xc] sm:$0xf]
      %v362 = vld [vmem:[%s294 + $0x10] sm:$0xf]
      %v363 = vld [vmem:[%s294 + $0x14] sm:$0xf]
      %v364 = vld [vmem:[%s294 + $0x18] sm:$0xf]
      %v365 = vld [vmem:[%s294 + $0x1c] sm:$0xf]
      %v414 = vunpack.c.l.b16 %v310
      %v415 = vunpack.c.l.b16 %v311
      %v416 = vunpack.c.l.b16 %v312
      %v417 = vunpack.c.l.b16 %v313
      %v418 = vunpack.c.l.b16 %v314
      %v419 = vunpack.c.l.b16 %v315
      %v420 = vunpack.c.l.b16 %v316
      %v421 = vunpack.c.l.b16 %v317
      %v422 = vunpack.c.l.b16 %v318
      %v423 = vunpack.c.l.b16 %v319
      %v424 = vunpack.c.l.b16 %v320
      %v425 = vunpack.c.l.b16 %v321
      %v426 = vunpack.c.l.b16 %v322
      %v427 = vunpack.c.l.b16 %v323
      %v428 = vunpack.c.l.b16 %v324
      %v429 = vunpack.c.l.b16 %v325
      %v430 = vunpack.c.l.b16 %v326
      %v431 = vunpack.c.l.b16 %v327
      %v432 = vunpack.c.l.b16 %v328
      %v433 = vunpack.c.l.b16 %v329
      %v434 = vunpack.c.l.b16 %v330
      %v435 = vunpack.c.l.b16 %v331
      %v436 = vunpack.c.l.b16 %v332
      %v437 = vunpack.c.l.b16 %v333
      %v438 = vunpack.c.l.b16 %v334
      %v439 = vunpack.c.l.b16 %v335
      %v440 = vunpack.c.l.b16 %v336
      %v441 = vunpack.c.l.b16 %v337
      %v442 = vunpack.c.l.b16 %v338
      %v443 = vunpack.c.l.b16 %v339
      %v444 = vunpack.c.l.b16 %v340
      %v445 = vunpack.c.l.b16 %v341
      %v446 = vunpack.c.l.b16 %v342
      %v447 = vunpack.c.l.b16 %v343
      %v448 = vunpack.c.l.b16 %v344
      %v449 = vunpack.c.l.b16 %v345
      %v450 = vunpack.c.l.b16 %v346
      %v451 = vunpack.c.l.b16 %v347
      %v452 = vunpack.c.l.b16 %v348
      %v453 = vunpack.c.l.b16 %v349
      %v454 = vunpack.c.l.b16 %v350
      %v455 = vunpack.c.l.b16 %v351
      %v456 = vunpack.c.l.b16 %v352
      %v457 = vunpack.c.l.b16 %v353
      %v458 = vunpack.c.l.b16 %v354
      %v459 = vunpack.c.l.b16 %v355
      %v460 = vunpack.c.l.b16 %v356
      %v461 = vunpack.c.l.b16 %v357
      %v462 = vpack.c.b16 %v415, %v414
      %v463 = vpack.c.b16 %v417, %v416
      %v464 = vpack.c.b16 %v419, %v418
      %v465 = vpack.c.b16 %v421, %v420
      %v466 = vpack.c.b16 %v423, %v422
      %v467 = vpack.c.b16 %v425, %v424
      %v468 = vpack.c.b16 %v427, %v426
      %v469 = vpack.c.b16 %v429, %v428
      %v470 = vpack.c.b16 %v431, %v430
      %v471 = vpack.c.b16 %v433, %v432
      %v472 = vpack.c.b16 %v435, %v434
      %v473 = vpack.c.b16 %v437, %v436
      %v474 = vpack.c.b16 %v439, %v438
      %v475 = vpack.c.b16 %v441, %v440
      %v476 = vpack.c.b16 %v443, %v442
      %v477 = vpack.c.b16 %v445, %v444
      %v478 = vpack.c.b16 %v447, %v446
      %v479 = vpack.c.b16 %v449, %v448
      %v480 = vpack.c.b16 %v451, %v450
      %v481 = vpack.c.b16 %v453, %v452
      %v482 = vpack.c.b16 %v455, %v454
      %v483 = vpack.c.b16 %v457, %v456
      %v484 = vpack.c.b16 %v459, %v458
      %v485 = vpack.c.b16 %v461, %v460
      %v494 = vunpack.c.l.b16 %v358
      %v495 = vunpack.c.l.b16 %v359
      %v496 = vunpack.c.l.b16 %v360
      %v497 = vunpack.c.l.b16 %v361
      %v498 = vunpack.c.l.b16 %v362
      %v499 = vunpack.c.l.b16 %v363
      %v500 = vunpack.c.l.b16 %v364
      %v501 = vunpack.c.l.b16 %v365
      %v502 = vpack.c.b16 %v495, %v494
      %v503 = vpack.c.b16 %v497, %v496
      %v504 = vpack.c.b16 %v499, %v498
      %v505 = vpack.c.b16 %v501, %v500
      %v506 = vld [vmem:[%s2] sm:$0xf]
      %v507 = vld [vmem:[%s2 + $0x4] sm:$0xf]
      %v508 = vld [vmem:[%s2 + $0x8] sm:$0xf]
      %v509 = vld [vmem:[%s2 + $0xc] sm:$0xf]
      %v510 = vld [vmem:[%s2 + $0x10] sm:$0xf]
      %v511 = vld [vmem:[%s2 + $0x14] sm:$0xf]
      %v512 = vld [vmem:[%s2 + $0x18] sm:$0xf]
      %v513 = vld [vmem:[%s2 + $0x1c] sm:$0xf]
      %s514 = scalar_lea.vmem %s2, 32
      %v515 = vld [vmem:[%s514] sm:$0xf]
      %v516 = vld [vmem:[%s514 + $0x4] sm:$0xf]
      %v517 = vld [vmem:[%s514 + $0x8] sm:$0xf]
      %v518 = vld [vmem:[%s514 + $0xc] sm:$0xf]
      %v519 = vld [vmem:[%s514 + $0x10] sm:$0xf]
      %v520 = vld [vmem:[%s514 + $0x14] sm:$0xf]
      %v521 = vld [vmem:[%s514 + $0x18] sm:$0xf]
      %v522 = vld [vmem:[%s514 + $0x1c] sm:$0xf]
      %vm523 = vsmask.f32 7424
      %v525 = vshrl.u32 %v462, 16
      %v527 = vshll.u32 %v462, 16
      %v529 = vrot.slane %v527, 1
      %v530 = vor.u32 %v525, %v529
      %v532 = vshll.u32 %v463, 16
      %v534 = vrot.slane %v532, 1
      %v535 = vsel %vm523, %v530, %v534
      %v536 = vshrl.u32 %v463, 16
      %v538 = vor.u32 %v536, %v534
      %v540 = vshll.u32 %v464, 16
      %v542 = vrot.slane %v540, 1
      %v543 = vsel %vm523, %v538, %v542
      %v544 = vshrl.u32 %v464, 16
      %v546 = vor.u32 %v544, %v542
      %v548 = vshll.u32 %v465, 16
      %v550 = vrot.slane %v548, 1
      %v551 = vsel %vm523, %v546, %v550
      %v552 = vshrl.u32 %v465, 16
      %v554 = vor.u32 %v552, %v550
      %v556 = vshll.u32 %v466, 16
      %v558 = vrot.slane %v556, 1
      %v559 = vsel %vm523, %v554, %v558
      %v560 = vshrl.u32 %v466, 16
      %v562 = vor.u32 %v560, %v558
      %v564 = vshll.u32 %v467, 16
      %v566 = vrot.slane %v564, 1
      %v567 = vsel %vm523, %v562, %v566
      %v568 = vshrl.u32 %v467, 16
      %v570 = vor.u32 %v568, %v566
      %v572 = vshll.u32 %v468, 16
      %v574 = vrot.slane %v572, 1
      %v575 = vsel %vm523, %v570, %v574
      %v576 = vshrl.u32 %v468, 16
      %v578 = vor.u32 %v576, %v574
      %v580 = vshll.u32 %v469, 16
      %v582 = vrot.slane %v580, 1
      %v583 = vsel %vm523, %v578, %v582
      %v584 = vshrl.u32 %v469, 16
      %v586 = vor.u32 %v584, %v582
      %v588 = vshll.u32 %v470, 16
      %v590 = vrot.slane %v588, 1
      %v591 = vsel %vm523, %v586, %v590
      %v592 = vshrl.u32 %v470, 16
      %v594 = vor.u32 %v592, %v590
      %v596 = vshll.u32 %v471, 16
      %v598 = vrot.slane %v596, 1
      %v599 = vsel %vm523, %v594, %v598
      %v600 = vshrl.u32 %v471, 16
      %v602 = vor.u32 %v600, %v598
      %v604 = vshll.u32 %v472, 16
      %v606 = vrot.slane %v604, 1
      %v607 = vsel %vm523, %v602, %v606
      %v608 = vshrl.u32 %v472, 16
      %v610 = vor.u32 %v608, %v606
      %v612 = vshll.u32 %v473, 16
      %v614 = vrot.slane %v612, 1
      %v615 = vsel %vm523, %v610, %v614
      %v616 = vshrl.u32 %v473, 16
      %v618 = vor.u32 %v616, %v614
      %v620 = vshll.u32 %v474, 16
      %v622 = vrot.slane %v620, 1
      %v623 = vsel %vm523, %v618, %v622
      %v624 = vshrl.u32 %v474, 16
      %v626 = vor.u32 %v624, %v622
      %v628 = vshll.u32 %v475, 16
      %v630 = vrot.slane %v628, 1
      %v631 = vsel %vm523, %v626, %v630
      %v632 = vshrl.u32 %v475, 16
      %v634 = vor.u32 %v632, %v630
      %v636 = vshll.u32 %v476, 16
      %v638 = vrot.slane %v636, 1
      %v639 = vsel %vm523, %v634, %v638
      %v640 = vshrl.u32 %v476, 16
      %v642 = vor.u32 %v640, %v638
      %v644 = vshll.u32 %v477, 16
      %v646 = vrot.slane %v644, 1
      %v647 = vsel %vm523, %v642, %v646
      %v648 = vshrl.u32 %v477, 16
      %v650 = vor.u32 %v648, %v646
      %v652 = vshll.u32 %v478, 16
      %v654 = vrot.slane %v652, 1
      %v655 = vsel %vm523, %v650, %v654
      %v656 = vshrl.u32 %v478, 16
      %v658 = vor.u32 %v656, %v654
      %v660 = vshll.u32 %v479, 16
      %v662 = vrot.slane %v660, 1
      %v663 = vsel %vm523, %v658, %v662
      %v664 = vshrl.u32 %v479, 16
      %v666 = vor.u32 %v664, %v662
      %v668 = vshll.u32 %v480, 16
      %v670 = vrot.slane %v668, 1
      %v671 = vsel %vm523, %v666, %v670
      %v672 = vshrl.u32 %v480, 16
      %v674 = vor.u32 %v672, %v670
      %v676 = vshll.u32 %v481, 16
      %v678 = vrot.slane %v676, 1
      %v679 = vsel %vm523, %v674, %v678
      %v680 = vshrl.u32 %v481, 16
      %v682 = vor.u32 %v680, %v678
      %v684 = vshll.u32 %v482, 16
      %v686 = vrot.slane %v684, 1
      %v687 = vsel %vm523, %v682, %v686
      %v688 = vshrl.u32 %v482, 16
      %v690 = vor.u32 %v688, %v686
      %v692 = vshll.u32 %v483, 16
      %v694 = vrot.slane %v692, 1
      %v695 = vsel %vm523, %v690, %v694
      %v696 = vshrl.u32 %v483, 16
      %v698 = vor.u32 %v696, %v694
      %v700 = vshll.u32 %v484, 16
      %v702 = vrot.slane %v700, 1
      %v703 = vsel %vm523, %v698, %v702
      %v704 = vshrl.u32 %v484, 16
      %v706 = vor.u32 %v704, %v702
      %v708 = vshll.u32 %v485, 16
      %v710 = vrot.slane %v708, 1
      %v711 = vsel %vm523, %v706, %v710
      %v712 = vshrl.u32 %v485, 16
      %v714 = vor.u32 %v712, %v710
      %v716 = vshll.u32 %v502, 16
      %v718 = vrot.slane %v716, 1
      %v719 = vsel %vm523, %v714, %v718
      %v728 = vunpack.c.l.b16 %v515
      %v729 = vunpack.c.l.b16 %v516
      %v730 = vunpack.c.l.b16 %v517
      %v731 = vunpack.c.l.b16 %v518
      %v732 = vunpack.c.l.b16 %v519
      %v733 = vunpack.c.l.b16 %v520
      %v734 = vunpack.c.l.b16 %v521
      %v735 = vunpack.c.l.b16 %v522
      %v736 = vpack.c.b16 %v729, %v728
      %v737 = vpack.c.b16 %v731, %v730
      %v738 = vpack.c.b16 %v733, %v732
      %v739 = vpack.c.b16 %v735, %v734
      %vm744 = vcmask 523264
      %v746 = vsel %vm744, %v535, 0
      %v749 = vsel %vm744, %v543, 0
      %v752 = vsel %vm744, %v551, 0
      %v755 = vsel %vm744, %v559, 0
      %v758 = vsel %vm744, %v567, 0
      %v761 = vsel %vm744, %v575, 0
      %v764 = vsel %vm744, %v583, 0
      %v767 = vsel %vm744, %v591, 0
      %v770 = vsel %vm744, %v599, 0
      %v773 = vsel %vm744, %v607, 0
      %v776 = vsel %vm744, %v615, 0
      %v779 = vsel %vm744, %v623, 0
      %v782 = vsel %vm744, %v631, 0
      %v785 = vsel %vm744, %v639, 0
      %v788 = vsel %vm744, %v647, 0
      %v791 = vsel %vm744, %v655, 0
      %v794 = vsel %vm744, %v663, 0
      %v797 = vsel %vm744, %v671, 0
      %v800 = vsel %vm744, %v679, 0
      %v803 = vsel %vm744, %v687, 0
      %v806 = vsel %vm744, %v695, 0
      %v809 = vsel %vm744, %v703, 0
      %v812 = vsel %vm744, %v711, 0
      %v815 = vsel %vm744, %v719, 0
      %817 = vmatpush.bf16.msra.mxu0 0
      %818 = vmatpush.bf16.msra.mxu0 0
      %819 = vmatpush.bf16.msra.mxu0 0
      %820 = vmatpush.bf16.msra.mxu0 0
      %821 = vmatpush.bf16.msra.mxu0 %v739
      %822 = vmatpush.bf16.msra.mxu0 %v738
      %823 = vmatpush.bf16.msra.mxu0 %v737
      %824 = vmatpush.bf16.msra.mxu0 %v736
      %825 = vmatmul.bf16.gmra.mxu0 %v746
      %v826 = vpop.f32.mrf.mxu0
      %v827 = vadd.f32 0.0, %v826
      %v828 = vpop.f32.mrf.mxu0
      %v829 = vadd.f32 0.0, %v828
      %830 = vmatmul.bf16.gmra.mxu0 %v749
      %v831 = vpop.f32.mrf.mxu0
      %v832 = vadd.f32 0.0, %v831
      %v833 = vpop.f32.mrf.mxu0
      %v834 = vadd.f32 0.0, %v833
      %835 = vmatmul.bf16.gmra.mxu0 %v752
      %v836 = vpop.f32.mrf.mxu0
      %v837 = vadd.f32 0.0, %v836
      %v838 = vpop.f32.mrf.mxu0
      %v839 = vadd.f32 0.0, %v838
      %840 = vmatmul.bf16.gmra.mxu0 %v755
      %v841 = vpop.f32.mrf.mxu0
      %v842 = vadd.f32 0.0, %v841
      %v843 = vpop.f32.mrf.mxu0
      %v844 = vadd.f32 0.0, %v843
      %845 = vmatmul.bf16.gmra.mxu0 %v758
      %v846 = vpop.f32.mrf.mxu0
      %v847 = vadd.f32 0.0, %v846
      %v848 = vpop.f32.mrf.mxu0
      %v849 = vadd.f32 0.0, %v848
      %850 = vmatmul.bf16.gmra.mxu0 %v761
      %v851 = vpop.f32.mrf.mxu0
      %v852 = vadd.f32 0.0, %v851
      %v853 = vpop.f32.mrf.mxu0
      %v854 = vadd.f32 0.0, %v853
      %855 = vmatmul.bf16.gmra.mxu0 %v764
      %v856 = vpop.f32.mrf.mxu0
      %v857 = vadd.f32 0.0, %v856
      %v858 = vpop.f32.mrf.mxu0
      %v859 = vadd.f32 0.0, %v858
      %860 = vmatmul.bf16.gmra.mxu0 %v767
      %v861 = vpop.f32.mrf.mxu0
      %v862 = vadd.f32 0.0, %v861
      %v863 = vpop.f32.mrf.mxu0
      %v864 = vadd.f32 0.0, %v863
      %865 = vmatmul.bf16.gmra.mxu0 %v770
      %v866 = vpop.f32.mrf.mxu0
      %v867 = vadd.f32 0.0, %v866
      %v868 = vpop.f32.mrf.mxu0
      %v869 = vadd.f32 0.0, %v868
      %870 = vmatmul.bf16.gmra.mxu0 %v773
      %v871 = vpop.f32.mrf.mxu0
      %v872 = vadd.f32 0.0, %v871
      %v873 = vpop.f32.mrf.mxu0
      %v874 = vadd.f32 0.0, %v873
      %875 = vmatmul.bf16.gmra.mxu0 %v776
      %v876 = vpop.f32.mrf.mxu0
      %v877 = vadd.f32 0.0, %v876
      %v878 = vpop.f32.mrf.mxu0
      %v879 = vadd.f32 0.0, %v878
      %880 = vmatmul.bf16.gmra.mxu0 %v779
      %v881 = vpop.f32.mrf.mxu0
      %v882 = vadd.f32 0.0, %v881
      %v883 = vpop.f32.mrf.mxu0
      %v884 = vadd.f32 0.0, %v883
      %885 = vmatmul.bf16.gmra.mxu0 %v782
      %v886 = vpop.f32.mrf.mxu0
      %v887 = vadd.f32 0.0, %v886
      %v888 = vpop.f32.mrf.mxu0
      %v889 = vadd.f32 0.0, %v888
      %890 = vmatmul.bf16.gmra.mxu0 %v785
      %v891 = vpop.f32.mrf.mxu0
      %v892 = vadd.f32 0.0, %v891
      %v893 = vpop.f32.mrf.mxu0
      %v894 = vadd.f32 0.0, %v893
      %895 = vmatmul.bf16.gmra.mxu0 %v788
      %v896 = vpop.f32.mrf.mxu0
      %v897 = vadd.f32 0.0, %v896
      %v898 = vpop.f32.mrf.mxu0
      %v899 = vadd.f32 0.0, %v898
      %900 = vmatmul.bf16.gmra.mxu0 %v791
      %v901 = vpop.f32.mrf.mxu0
      %v902 = vadd.f32 0.0, %v901
      %v903 = vpop.f32.mrf.mxu0
      %v904 = vadd.f32 0.0, %v903
      %905 = vmatmul.bf16.gmra.mxu0 %v794
      %v906 = vpop.f32.mrf.mxu0
      %v907 = vadd.f32 0.0, %v906
      %v908 = vpop.f32.mrf.mxu0
      %v909 = vadd.f32 0.0, %v908
      %910 = vmatmul.bf16.gmra.mxu0 %v797
      %v911 = vpop.f32.mrf.mxu0
      %v912 = vadd.f32 0.0, %v911
      %v913 = vpop.f32.mrf.mxu0
      %v914 = vadd.f32 0.0, %v913
      %915 = vmatmul.bf16.gmra.mxu0 %v800
      %v916 = vpop.f32.mrf.mxu0
      %v917 = vadd.f32 0.0, %v916
      %v918 = vpop.f32.mrf.mxu0
      %v919 = vadd.f32 0.0, %v918
      %920 = vmatmul.bf16.gmra.mxu0 %v803
      %v921 = vpop.f32.mrf.mxu0
      %v922 = vadd.f32 0.0, %v921
      %v923 = vpop.f32.mrf.mxu0
      %v924 = vadd.f32 0.0, %v923
      %925 = vmatmul.bf16.gmra.mxu0 %v806
      %v926 = vpop.f32.mrf.mxu0
      %v927 = vadd.f32 0.0, %v926
      %v928 = vpop.f32.mrf.mxu0
      %v929 = vadd.f32 0.0, %v928
      %930 = vmatmul.bf16.gmra.mxu0 %v809
      %v931 = vpop.f32.mrf.mxu0
      %v932 = vadd.f32 0.0, %v931
      %v933 = vpop.f32.mrf.mxu0
      %v934 = vadd.f32 0.0, %v933
      %935 = vmatmul.bf16.gmra.mxu0 %v812
      %v936 = vpop.f32.mrf.mxu0
      %v937 = vadd.f32 0.0, %v936
      %v938 = vpop.f32.mrf.mxu0
      %v939 = vadd.f32 0.0, %v938
      %940 = vmatmul.bf16.gmra.mxu0 %v815
      %v941 = vpop.f32.mrf.mxu0
      %v942 = vadd.f32 0.0, %v941
      %v943 = vpop.f32.mrf.mxu0
      %v944 = vadd.f32 0.0, %v943
      %945 = vdwg.mxu0
      %v954 = vunpack.c.l.b16 %v506
      %v955 = vunpack.c.l.b16 %v507
      %v956 = vunpack.c.l.b16 %v508
      %v957 = vunpack.c.l.b16 %v509
      %v958 = vunpack.c.l.b16 %v510
      %v959 = vunpack.c.l.b16 %v511
      %v960 = vunpack.c.l.b16 %v512
      %v961 = vunpack.c.l.b16 %v513
      %v962 = vpack.c.b16 %v955, %v954
      %v963 = vpack.c.b16 %v957, %v956
      %v964 = vpack.c.b16 %v959, %v958
      %v965 = vpack.c.b16 %v961, %v960
      %v970 = vsel %vm744, %v462, 0
      %v972 = vsel %vm744, %v463, 0
      %v974 = vsel %vm744, %v464, 0
      %v976 = vsel %vm744, %v465, 0
      %v978 = vsel %vm744, %v466, 0
      %v980 = vsel %vm744, %v467, 0
      %v982 = vsel %vm744, %v468, 0
      %v984 = vsel %vm744, %v469, 0
      %v986 = vsel %vm744, %v470, 0
      %v988 = vsel %vm744, %v471, 0
      %v990 = vsel %vm744, %v472, 0
      %v992 = vsel %vm744, %v473, 0
      %v994 = vsel %vm744, %v474, 0
      %v996 = vsel %vm744, %v475, 0
      %v998 = vsel %vm744, %v476, 0
      %v1000 = vsel %vm744, %v477, 0
      %v1002 = vsel %vm744, %v478, 0
      %v1004 = vsel %vm744, %v479, 0
      %v1006 = vsel %vm744, %v480, 0
      %v1008 = vsel %vm744, %v481, 0
      %v1010 = vsel %vm744, %v482, 0
      %v1012 = vsel %vm744, %v483, 0
      %v1014 = vsel %vm744, %v484, 0
      %v1016 = vsel %vm744, %v485, 0
      %1018 = vmatpush.bf16.msra.mxu0 0
      %1019 = vmatpush.bf16.msra.mxu0 0
      %1020 = vmatpush.bf16.msra.mxu0 0
      %1021 = vmatpush.bf16.msra.mxu0 0
      %1022 = vmatpush.bf16.msra.mxu0 %v965
      %1023 = vmatpush.bf16.msra.mxu0 %v964
      %1024 = vmatpush.bf16.msra.mxu0 %v963
      %1025 = vmatpush.bf16.msra.mxu0 %v962
      %1026 = vmatmul.bf16.gmra.mxu0 %v970
      %v1027 = vpop.f32.mrf.mxu0
      %v1028 = vadd.f32 %v827, %v1027
      %v1029 = vpop.f32.mrf.mxu0
      %v1030 = vadd.f32 %v829, %v1029
      %1031 = vmatmul.bf16.gmra.mxu0 %v972
      %v1032 = vpop.f32.mrf.mxu0
      %v1033 = vadd.f32 %v832, %v1032
      %v1034 = vpop.f32.mrf.mxu0
      %v1035 = vadd.f32 %v834, %v1034
      %1036 = vmatmul.bf16.gmra.mxu0 %v974
      %v1037 = vpop.f32.mrf.mxu0
      %v1038 = vadd.f32 %v837, %v1037
      %v1039 = vpop.f32.mrf.mxu0
      %v1040 = vadd.f32 %v839, %v1039
      %1041 = vmatmul.bf16.gmra.mxu0 %v976
      %v1042 = vpop.f32.mrf.mxu0
      %v1043 = vadd.f32 %v842, %v1042
      %v1044 = vpop.f32.mrf.mxu0
      %v1045 = vadd.f32 %v844, %v1044
      %1046 = vmatmul.bf16.gmra.mxu0 %v978
      %v1047 = vpop.f32.mrf.mxu0
      %v1048 = vadd.f32 %v847, %v1047
      %v1049 = vpop.f32.mrf.mxu0
      %v1050 = vadd.f32 %v849, %v1049
      %1051 = vmatmul.bf16.gmra.mxu0 %v980
      %v1052 = vpop.f32.mrf.mxu0
      %v1053 = vadd.f32 %v852, %v1052
      %v1054 = vpop.f32.mrf.mxu0
      %v1055 = vadd.f32 %v854, %v1054
      %1056 = vmatmul.bf16.gmra.mxu0 %v982
      %v1057 = vpop.f32.mrf.mxu0
      %v1058 = vadd.f32 %v857, %v1057
      %v1059 = vpop.f32.mrf.mxu0
      %v1060 = vadd.f32 %v859, %v1059
      %1061 = vmatmul.bf16.gmra.mxu0 %v984
      %v1062 = vpop.f32.mrf.mxu0
      %v1063 = vadd.f32 %v862, %v1062
      %v1064 = vpop.f32.mrf.mxu0
      %v1065 = vadd.f32 %v864, %v1064
      %1066 = vmatmul.bf16.gmra.mxu0 %v986
      %v1067 = vpop.f32.mrf.mxu0
      %v1068 = vadd.f32 %v867, %v1067
      %v1069 = vpop.f32.mrf.mxu0
      %v1070 = vadd.f32 %v869, %v1069
      %1071 = vmatmul.bf16.gmra.mxu0 %v988
      %v1072 = vpop.f32.mrf.mxu0
      %v1073 = vadd.f32 %v872, %v1072
      %v1074 = vpop.f32.mrf.mxu0
      %v1075 = vadd.f32 %v874, %v1074
      %1076 = vmatmul.bf16.gmra.mxu0 %v990
      %v1077 = vpop.f32.mrf.mxu0
      %v1078 = vadd.f32 %v877, %v1077
      %v1079 = vpop.f32.mrf.mxu0
      %v1080 = vadd.f32 %v879, %v1079
      %1081 = vmatmul.bf16.gmra.mxu0 %v992
      %v1082 = vpop.f32.mrf.mxu0
      %v1083 = vadd.f32 %v882, %v1082
      %v1084 = vpop.f32.mrf.mxu0
      %v1085 = vadd.f32 %v884, %v1084
      %1086 = vmatmul.bf16.gmra.mxu0 %v994
      %v1087 = vpop.f32.mrf.mxu0
      %v1088 = vadd.f32 %v887, %v1087
      %v1089 = vpop.f32.mrf.mxu0
      %v1090 = vadd.f32 %v889, %v1089
      %1091 = vmatmul.bf16.gmra.mxu0 %v996
      %v1092 = vpop.f32.mrf.mxu0
      %v1093 = vadd.f32 %v892, %v1092
      %v1094 = vpop.f32.mrf.mxu0
      %v1095 = vadd.f32 %v894, %v1094
      %1096 = vmatmul.bf16.gmra.mxu0 %v998
      %v1097 = vpop.f32.mrf.mxu0
      %v1098 = vadd.f32 %v897, %v1097
      %v1099 = vpop.f32.mrf.mxu0
      %v1100 = vadd.f32 %v899, %v1099
      %1101 = vmatmul.bf16.gmra.mxu0 %v1000
      %v1102 = vpop.f32.mrf.mxu0
      %v1103 = vadd.f32 %v902, %v1102
      %v1104 = vpop.f32.mrf.mxu0
      %v1105 = vadd.f32 %v904, %v1104
      %1106 = vmatmul.bf16.gmra.mxu0 %v1002
      %v1107 = vpop.f32.mrf.mxu0
      %v1108 = vadd.f32 %v907, %v1107
      %v1109 = vpop.f32.mrf.mxu0
      %v1110 = vadd.f32 %v909, %v1109
      %1111 = vmatmul.bf16.gmra.mxu0 %v1004
      %v1112 = vpop.f32.mrf.mxu0
      %v1113 = vadd.f32 %v912, %v1112
      %v1114 = vpop.f32.mrf.mxu0
      %v1115 = vadd.f32 %v914, %v1114
      %1116 = vmatmul.bf16.gmra.mxu0 %v1006
      %v1117 = vpop.f32.mrf.mxu0
      %v1118 = vadd.f32 %v917, %v1117
      %v1119 = vpop.f32.mrf.mxu0
      %v1120 = vadd.f32 %v919, %v1119
      %1121 = vmatmul.bf16.gmra.mxu0 %v1008
      %v1122 = vpop.f32.mrf.mxu0
      %v1123 = vadd.f32 %v922, %v1122
      %v1124 = vpop.f32.mrf.mxu0
      %v1125 = vadd.f32 %v924, %v1124
      %1126 = vmatmul.bf16.gmra.mxu0 %v1010
      %v1127 = vpop.f32.mrf.mxu0
      %v1128 = vadd.f32 %v927, %v1127
      %v1129 = vpop.f32.mrf.mxu0
      %v1130 = vadd.f32 %v929, %v1129
      %1131 = vmatmul.bf16.gmra.mxu0 %v1012
      %v1132 = vpop.f32.mrf.mxu0
      %v1133 = vadd.f32 %v932, %v1132
      %v1134 = vpop.f32.mrf.mxu0
      %v1135 = vadd.f32 %v934, %v1134
      %1136 = vmatmul.bf16.gmra.mxu0 %v1014
      %v1137 = vpop.f32.mrf.mxu0
      %v1138 = vadd.f32 %v937, %v1137
      %v1139 = vpop.f32.mrf.mxu0
      %v1140 = vadd.f32 %v939, %v1139
      %1141 = vmatmul.bf16.gmra.mxu0 %v1016
      %v1142 = vpop.f32.mrf.mxu0
      %v1143 = vadd.f32 %v942, %v1142
      %v1144 = vpop.f32.mrf.mxu0
      %v1145 = vadd.f32 %v944, %v1144
      %1146 = vdwg.mxu0
      %s1147 = scalar_lea.vmem %s2, 64
      %v1148 = vld [vmem:[%s1147] sm:$0xf]
      %v1149 = vld [vmem:[%s1147 + $0x4] sm:$0xf]
      %v1150 = vld [vmem:[%s1147 + $0x8] sm:$0xf]
      %v1151 = vld [vmem:[%s1147 + $0xc] sm:$0xf]
      %v1152 = vld [vmem:[%s1147 + $0x10] sm:$0xf]
      %v1153 = vld [vmem:[%s1147 + $0x14] sm:$0xf]
      %v1154 = vld [vmem:[%s1147 + $0x18] sm:$0xf]
      %v1155 = vld [vmem:[%s1147 + $0x1c] sm:$0xf]
      %vm1156 = vcmask 1046528
      %v1157 = vrot.slane %v462, 1
      %v1158 = vrot.slane %v463, 1
      %v1159 = vsel %vm1156, %v1157, %v1158
      %v1160 = vrot.slane %v464, 1
      %v1161 = vsel %vm1156, %v1158, %v1160
      %v1162 = vrot.slane %v465, 1
      %v1163 = vsel %vm1156, %v1160, %v1162
      %v1164 = vrot.slane %v466, 1
      %v1165 = vsel %vm1156, %v1162, %v1164
      %v1166 = vrot.slane %v467, 1
      %v1167 = vsel %vm1156, %v1164, %v1166
      %v1168 = vrot.slane %v468, 1
      %v1169 = vsel %vm1156, %v1166, %v1168
      %v1170 = vrot.slane %v469, 1
      %v1171 = vsel %vm1156, %v1168, %v1170
      %v1172 = vrot.slane %v470, 1
      %v1173 = vsel %vm1156, %v1170, %v1172
      %v1174 = vrot.slane %v471, 1
      %v1175 = vsel %vm1156, %v1172, %v1174
      %v1176 = vrot.slane %v472, 1
      %v1177 = vsel %vm1156, %v1174, %v1176
      %v1178 = vrot.slane %v473, 1
      %v1179 = vsel %vm1156, %v1176, %v1178
      %v1180 = vrot.slane %v474, 1
      %v1181 = vsel %vm1156, %v1178, %v1180
      %v1182 = vrot.slane %v475, 1
      %v1183 = vsel %vm1156, %v1180, %v1182
      %v1184 = vrot.slane %v476, 1
      %v1185 = vsel %vm1156, %v1182, %v1184
      %v1186 = vrot.slane %v477, 1
      %v1187 = vsel %vm1156, %v1184, %v1186
      %v1188 = vrot.slane %v478, 1
      %v1189 = vsel %vm1156, %v1186, %v1188
      %v1190 = vrot.slane %v479, 1
      %v1191 = vsel %vm1156, %v1188, %v1190
      %v1192 = vrot.slane %v480, 1
      %v1193 = vsel %vm1156, %v1190, %v1192
      %v1194 = vrot.slane %v481, 1
      %v1195 = vsel %vm1156, %v1192, %v1194
      %v1196 = vrot.slane %v482, 1
      %v1197 = vsel %vm1156, %v1194, %v1196
      %v1198 = vrot.slane %v483, 1
      %v1199 = vsel %vm1156, %v1196, %v1198
      %v1200 = vrot.slane %v484, 1
      %v1201 = vsel %vm1156, %v1198, %v1200
      %v1202 = vrot.slane %v485, 1
      %v1203 = vsel %vm1156, %v1200, %v1202
      %v1204 = vrot.slane %v502, 1
      %v1205 = vsel %vm1156, %v1202, %v1204
      %v1214 = vunpack.c.l.b16 %v1148
      %v1215 = vunpack.c.l.b16 %v1149
      %v1216 = vunpack.c.l.b16 %v1150
      %v1217 = vunpack.c.l.b16 %v1151
      %v1218 = vunpack.c.l.b16 %v1152
      %v1219 = vunpack.c.l.b16 %v1153
      %v1220 = vunpack.c.l.b16 %v1154
      %v1221 = vunpack.c.l.b16 %v1155
      %v1222 = vpack.c.b16 %v1215, %v1214
      %v1223 = vpack.c.b16 %v1217, %v1216
      %v1224 = vpack.c.b16 %v1219, %v1218
      %v1225 = vpack.c.b16 %v1221, %v1220
      %v1231 = vsel %vm744, %v1159, 0
      %v1234 = vsel %vm744, %v1161, 0
      %v1237 = vsel %vm744, %v1163, 0
      %v1240 = vsel %vm744, %v1165, 0
      %v1243 = vsel %vm744, %v1167, 0
      %v1246 = vsel %vm744, %v1169, 0
      %v1249 = vsel %vm744, %v1171, 0
      %v1252 = vsel %vm744, %v1173, 0
      %v1255 = vsel %vm744, %v1175, 0
      %v1258 = vsel %vm744, %v1177, 0
      %v1261 = vsel %vm744, %v1179, 0
      %v1264 = vsel %vm744, %v1181, 0
      %v1267 = vsel %vm744, %v1183, 0
      %v1270 = vsel %vm744, %v1185, 0
      %v1273 = vsel %vm744, %v1187, 0
      %v1276 = vsel %vm744, %v1189, 0
      %v1279 = vsel %vm744, %v1191, 0
      %v1282 = vsel %vm744, %v1193, 0
      %v1285 = vsel %vm744, %v1195, 0
      %v1288 = vsel %vm744, %v1197, 0
      %v1291 = vsel %vm744, %v1199, 0
      %v1294 = vsel %vm744, %v1201, 0
      %v1297 = vsel %vm744, %v1203, 0
      %v1300 = vsel %vm744, %v1205, 0
      %1302 = vmatpush.bf16.msra.mxu0 0
      %1303 = vmatpush.bf16.msra.mxu0 0
      %1304 = vmatpush.bf16.msra.mxu0 0
      %1305 = vmatpush.bf16.msra.mxu0 0
      %1306 = vmatpush.bf16.msra.mxu0 %v1225
      %1307 = vmatpush.bf16.msra.mxu0 %v1224
      %1308 = vmatpush.bf16.msra.mxu0 %v1223
      %1309 = vmatpush.bf16.msra.mxu0 %v1222
      %1310 = vmatmul.bf16.gmra.mxu0 %v1231
      %v1311 = vpop.f32.mrf.mxu0
      %v1312 = vadd.f32 0.0, %v1311
      %v1313 = vpop.f32.mrf.mxu0
      %v1314 = vadd.f32 0.0, %v1313
      %1315 = vmatmul.bf16.gmra.mxu0 %v1234
      %v1316 = vpop.f32.mrf.mxu0
      %v1317 = vadd.f32 0.0, %v1316
      %v1318 = vpop.f32.mrf.mxu0
      %v1319 = vadd.f32 0.0, %v1318
      %1320 = vmatmul.bf16.gmra.mxu0 %v1237
      %v1321 = vpop.f32.mrf.mxu0
      %v1322 = vadd.f32 0.0, %v1321
      %v1323 = vpop.f32.mrf.mxu0
      %v1324 = vadd.f32 0.0, %v1323
      %1325 = vmatmul.bf16.gmra.mxu0 %v1240
      %v1326 = vpop.f32.mrf.mxu0
      %v1327 = vadd.f32 0.0, %v1326
      %v1328 = vpop.f32.mrf.mxu0
      %v1329 = vadd.f32 0.0, %v1328
      %1330 = vmatmul.bf16.gmra.mxu0 %v1243
      %v1331 = vpop.f32.mrf.mxu0
      %v1332 = vadd.f32 0.0, %v1331
      %v1333 = vpop.f32.mrf.mxu0
      %v1334 = vadd.f32 0.0, %v1333
      %1335 = vmatmul.bf16.gmra.mxu0 %v1246
      %v1336 = vpop.f32.mrf.mxu0
      %v1337 = vadd.f32 0.0, %v1336
      %v1338 = vpop.f32.mrf.mxu0
      %v1339 = vadd.f32 0.0, %v1338
      %1340 = vmatmul.bf16.gmra.mxu0 %v1249
      %v1341 = vpop.f32.mrf.mxu0
      %v1342 = vadd.f32 0.0, %v1341
      %v1343 = vpop.f32.mrf.mxu0
      %v1344 = vadd.f32 0.0, %v1343
      %1345 = vmatmul.bf16.gmra.mxu0 %v1252
      %v1346 = vpop.f32.mrf.mxu0
      %v1347 = vadd.f32 0.0, %v1346
      %v1348 = vpop.f32.mrf.mxu0
      %v1349 = vadd.f32 0.0, %v1348
      %1350 = vmatmul.bf16.gmra.mxu0 %v1255
      %v1351 = vpop.f32.mrf.mxu0
      %v1352 = vadd.f32 0.0, %v1351
      %v1353 = vpop.f32.mrf.mxu0
      %v1354 = vadd.f32 0.0, %v1353
      %1355 = vmatmul.bf16.gmra.mxu0 %v1258
      %v1356 = vpop.f32.mrf.mxu0
      %v1357 = vadd.f32 0.0, %v1356
      %v1358 = vpop.f32.mrf.mxu0
      %v1359 = vadd.f32 0.0, %v1358
      %1360 = vmatmul.bf16.gmra.mxu0 %v1261
      %v1361 = vpop.f32.mrf.mxu0
      %v1362 = vadd.f32 0.0, %v1361
      %v1363 = vpop.f32.mrf.mxu0
      %v1364 = vadd.f32 0.0, %v1363
      %1365 = vmatmul.bf16.gmra.mxu0 %v1264
      %v1366 = vpop.f32.mrf.mxu0
      %v1367 = vadd.f32 0.0, %v1366
      %v1368 = vpop.f32.mrf.mxu0
      %v1369 = vadd.f32 0.0, %v1368
      %1370 = vmatmul.bf16.gmra.mxu0 %v1267
      %v1371 = vpop.f32.mrf.mxu0
      %v1372 = vadd.f32 0.0, %v1371
      %v1373 = vpop.f32.mrf.mxu0
      %v1374 = vadd.f32 0.0, %v1373
      %1375 = vmatmul.bf16.gmra.mxu0 %v1270
      %v1376 = vpop.f32.mrf.mxu0
      %v1377 = vadd.f32 0.0, %v1376
      %v1378 = vpop.f32.mrf.mxu0
      %v1379 = vadd.f32 0.0, %v1378
      %1380 = vmatmul.bf16.gmra.mxu0 %v1273
      %v1381 = vpop.f32.mrf.mxu0
      %v1382 = vadd.f32 0.0, %v1381
      %v1383 = vpop.f32.mrf.mxu0
      %v1384 = vadd.f32 0.0, %v1383
      %1385 = vmatmul.bf16.gmra.mxu0 %v1276
      %v1386 = vpop.f32.mrf.mxu0
      %v1387 = vadd.f32 0.0, %v1386
      %v1388 = vpop.f32.mrf.mxu0
      %v1389 = vadd.f32 0.0, %v1388
      %1390 = vmatmul.bf16.gmra.mxu0 %v1279
      %v1391 = vpop.f32.mrf.mxu0
      %v1392 = vadd.f32 0.0, %v1391
      %v1393 = vpop.f32.mrf.mxu0
      %v1394 = vadd.f32 0.0, %v1393
      %1395 = vmatmul.bf16.gmra.mxu0 %v1282
      %v1396 = vpop.f32.mrf.mxu0
      %v1397 = vadd.f32 0.0, %v1396
      %v1398 = vpop.f32.mrf.mxu0
      %v1399 = vadd.f32 0.0, %v1398
      %1400 = vmatmul.bf16.gmra.mxu0 %v1285
      %v1401 = vpop.f32.mrf.mxu0
      %v1402 = vadd.f32 0.0, %v1401
      %v1403 = vpop.f32.mrf.mxu0
      %v1404 = vadd.f32 0.0, %v1403
      %1405 = vmatmul.bf16.gmra.mxu0 %v1288
      %v1406 = vpop.f32.mrf.mxu0
      %v1407 = vadd.f32 0.0, %v1406
      %v1408 = vpop.f32.mrf.mxu0
      %v1409 = vadd.f32 0.0, %v1408
      %1410 = vmatmul.bf16.gmra.mxu0 %v1291
      %v1411 = vpop.f32.mrf.mxu0
      %v1412 = vadd.f32 0.0, %v1411
      %v1413 = vpop.f32.mrf.mxu0
      %v1414 = vadd.f32 0.0, %v1413
      %1415 = vmatmul.bf16.gmra.mxu0 %v1294
      %v1416 = vpop.f32.mrf.mxu0
      %v1417 = vadd.f32 0.0, %v1416
      %v1418 = vpop.f32.mrf.mxu0
      %v1419 = vadd.f32 0.0, %v1418
      %1420 = vmatmul.bf16.gmra.mxu0 %v1297
      %v1421 = vpop.f32.mrf.mxu0
      %v1422 = vadd.f32 0.0, %v1421
      %v1423 = vpop.f32.mrf.mxu0
      %v1424 = vadd.f32 0.0, %v1423
      %1425 = vmatmul.bf16.gmra.mxu0 %v1300
      %v1426 = vpop.f32.mrf.mxu0
      %v1427 = vadd.f32 0.0, %v1426
      %v1428 = vpop.f32.mrf.mxu0
      %v1429 = vadd.f32 0.0, %v1428
      %1430 = vdwg.mxu0
      %v1431 = vadd.f32 %v1028, %v1312
      %v1432 = vadd.f32 %v1030, %v1314
      %v1433 = vadd.f32 %v1033, %v1317
      %v1434 = vadd.f32 %v1035, %v1319
      %v1435 = vadd.f32 %v1038, %v1322
      %v1436 = vadd.f32 %v1040, %v1324
      %v1437 = vadd.f32 %v1043, %v1327
      %v1438 = vadd.f32 %v1045, %v1329
      %v1439 = vadd.f32 %v1048, %v1332
      %v1440 = vadd.f32 %v1050, %v1334
      %v1441 = vadd.f32 %v1053, %v1337
      %v1442 = vadd.f32 %v1055, %v1339
      %v1443 = vadd.f32 %v1058, %v1342
      %v1444 = vadd.f32 %v1060, %v1344
      %v1445 = vadd.f32 %v1063, %v1347
      %v1446 = vadd.f32 %v1065, %v1349
      %v1447 = vadd.f32 %v1068, %v1352
      %v1448 = vadd.f32 %v1070, %v1354
      %v1449 = vadd.f32 %v1073, %v1357
      %v1450 = vadd.f32 %v1075, %v1359
      %v1451 = vadd.f32 %v1078, %v1362
      %v1452 = vadd.f32 %v1080, %v1364
      %v1453 = vadd.f32 %v1083, %v1367
      %v1454 = vadd.f32 %v1085, %v1369
      %v1455 = vadd.f32 %v1088, %v1372
      %v1456 = vadd.f32 %v1090, %v1374
      %v1457 = vadd.f32 %v1093, %v1377
      %v1458 = vadd.f32 %v1095, %v1379
      %v1459 = vadd.f32 %v1098, %v1382
      %v1460 = vadd.f32 %v1100, %v1384
      %v1461 = vadd.f32 %v1103, %v1387
      %v1462 = vadd.f32 %v1105, %v1389
      %v1463 = vadd.f32 %v1108, %v1392
      %v1464 = vadd.f32 %v1110, %v1394
      %v1465 = vadd.f32 %v1113, %v1397
      %v1466 = vadd.f32 %v1115, %v1399
      %v1467 = vadd.f32 %v1118, %v1402
      %v1468 = vadd.f32 %v1120, %v1404
      %v1469 = vadd.f32 %v1123, %v1407
      %v1470 = vadd.f32 %v1125, %v1409
      %v1471 = vadd.f32 %v1128, %v1412
      %v1472 = vadd.f32 %v1130, %v1414
      %v1473 = vadd.f32 %v1133, %v1417
      %v1474 = vadd.f32 %v1135, %v1419
      %v1475 = vadd.f32 %v1138, %v1422
      %v1476 = vadd.f32 %v1140, %v1424
      %v1477 = vadd.f32 %v1143, %v1427
      %v1478 = vadd.f32 %v1145, %v1429
      %s1479 = scalar_lea.vmem %s2, 96
      %v1480 = vld [vmem:[%s1479] sm:$0xf]
      %v1481 = vld [vmem:[%s1479 + $0x4] sm:$0xf]
      %v1482 = vld [vmem:[%s1479 + $0x8] sm:$0xf]
      %v1483 = vld [vmem:[%s1479 + $0xc] sm:$0xf]
      %v1484 = vld [vmem:[%s1479 + $0x10] sm:$0xf]
      %v1485 = vld [vmem:[%s1479 + $0x14] sm:$0xf]
      %v1486 = vld [vmem:[%s1479 + $0x18] sm:$0xf]
      %v1487 = vld [vmem:[%s1479 + $0x1c] sm:$0xf]
      %vm1488 = vcmask 1043456
      %v1489 = vrot.slane %v463, 4
      %v1490 = vrot.slane %v464, 4
      %v1491 = vsel %vm1488, %v1489, %v1490
      %v1492 = vrot.slane %v465, 4
      %v1493 = vsel %vm1488, %v1490, %v1492
      %v1494 = vrot.slane %v466, 4
      %v1495 = vsel %vm1488, %v1492, %v1494
      %v1496 = vrot.slane %v467, 4
      %v1497 = vsel %vm1488, %v1494, %v1496
      %v1498 = vrot.slane %v468, 4
      %v1499 = vsel %vm1488, %v1496, %v1498
      %v1500 = vrot.slane %v469, 4
      %v1501 = vsel %vm1488, %v1498, %v1500
      %v1502 = vrot.slane %v470, 4
      %v1503 = vsel %vm1488, %v1500, %v1502
      %v1504 = vrot.slane %v471, 4
      %v1505 = vsel %vm1488, %v1502, %v1504
      %v1506 = vrot.slane %v472, 4
      %v1507 = vsel %vm1488, %v1504, %v1506
      %v1508 = vrot.slane %v473, 4
      %v1509 = vsel %vm1488, %v1506, %v1508
      %v1510 = vrot.slane %v474, 4
      %v1511 = vsel %vm1488, %v1508, %v1510
      %v1512 = vrot.slane %v475, 4
      %v1513 = vsel %vm1488, %v1510, %v1512
      %v1514 = vrot.slane %v476, 4
      %v1515 = vsel %vm1488, %v1512, %v1514
      %v1516 = vrot.slane %v477, 4
      %v1517 = vsel %vm1488, %v1514, %v1516
      %v1518 = vrot.slane %v478, 4
      %v1519 = vsel %vm1488, %v1516, %v1518
      %v1520 = vrot.slane %v479, 4
      %v1521 = vsel %vm1488, %v1518, %v1520
      %v1522 = vrot.slane %v480, 4
      %v1523 = vsel %vm1488, %v1520, %v1522
      %v1524 = vrot.slane %v481, 4
      %v1525 = vsel %vm1488, %v1522, %v1524
      %v1526 = vrot.slane %v482, 4
      %v1527 = vsel %vm1488, %v1524, %v1526
      %v1528 = vrot.slane %v483, 4
      %v1529 = vsel %vm1488, %v1526, %v1528
      %v1530 = vrot.slane %v484, 4
      %v1531 = vsel %vm1488, %v1528, %v1530
      %v1532 = vrot.slane %v485, 4
      %v1533 = vsel %vm1488, %v1530, %v1532
      %v1534 = vrot.slane %v502, 4
      %v1535 = vsel %vm1488, %v1532, %v1534
      %v1536 = vrot.slane %v503, 4
      %v1537 = vsel %vm1488, %v1534, %v1536
      %v1546 = vunpack.c.l.b16 %v1480
      %v1547 = vunpack.c.l.b16 %v1481
      %v1548 = vunpack.c.l.b16 %v1482
      %v1549 = vunpack.c.l.b16 %v1483
      %v1550 = vunpack.c.l.b16 %v1484
      %v1551 = vunpack.c.l.b16 %v1485
      %v1552 = vunpack.c.l.b16 %v1486
      %v1553 = vunpack.c.l.b16 %v1487
      %v1554 = vpack.c.b16 %v1547, %v1546
      %v1555 = vpack.c.b16 %v1549, %v1548
      %v1556 = vpack.c.b16 %v1551, %v1550
      %v1557 = vpack.c.b16 %v1553, %v1552
      %v1563 = vsel %vm744, %v1491, 0
      %v1566 = vsel %vm744, %v1493, 0
      %v1569 = vsel %vm744, %v1495, 0
      %v1572 = vsel %vm744, %v1497, 0
      %v1575 = vsel %vm744, %v1499, 0
      %v1578 = vsel %vm744, %v1501, 0
      %v1581 = vsel %vm744, %v1503, 0
      %v1584 = vsel %vm744, %v1505, 0
      %v1587 = vsel %vm744, %v1507, 0
      %v1590 = vsel %vm744, %v1509, 0
      %v1593 = vsel %vm744, %v1511, 0
      %v1596 = vsel %vm744, %v1513, 0
      %v1599 = vsel %vm744, %v1515, 0
      %v1602 = vsel %vm744, %v1517, 0
      %v1605 = vsel %vm744, %v1519, 0
      %v1608 = vsel %vm744, %v1521, 0
      %v1611 = vsel %vm744, %v1523, 0
      %v1614 = vsel %vm744, %v1525, 0
      %v1617 = vsel %vm744, %v1527, 0
      %v1620 = vsel %vm744, %v1529, 0
      %v1623 = vsel %vm744, %v1531, 0
      %v1626 = vsel %vm744, %v1533, 0
      %v1629 = vsel %vm744, %v1535, 0
      %v1632 = vsel %vm744, %v1537, 0
      %1634 = vmatpush.bf16.msra.mxu0 0
      %1635 = vmatpush.bf16.msra.mxu0 0
      %1636 = vmatpush.bf16.msra.mxu0 0
      %1637 = vmatpush.bf16.msra.mxu0 0
      %1638 = vmatpush.bf16.msra.mxu0 %v1557
      %1639 = vmatpush.bf16.msra.mxu0 %v1556
      %1640 = vmatpush.bf16.msra.mxu0 %v1555
      %1641 = vmatpush.bf16.msra.mxu0 %v1554
      %1642 = vmatmul.bf16.gmra.mxu0 %v1563
      %v1643 = vpop.f32.mrf.mxu0
      %v1644 = vadd.f32 0.0, %v1643
      %v1645 = vpop.f32.mrf.mxu0
      %v1646 = vadd.f32 0.0, %v1645
      %1647 = vmatmul.bf16.gmra.mxu0 %v1566
      %v1648 = vpop.f32.mrf.mxu0
      %v1649 = vadd.f32 0.0, %v1648
      %v1650 = vpop.f32.mrf.mxu0
      %v1651 = vadd.f32 0.0, %v1650
      %1652 = vmatmul.bf16.gmra.mxu0 %v1569
      %v1653 = vpop.f32.mrf.mxu0
      %v1654 = vadd.f32 0.0, %v1653
      %v1655 = vpop.f32.mrf.mxu0
      %v1656 = vadd.f32 0.0, %v1655
      %1657 = vmatmul.bf16.gmra.mxu0 %v1572
      %v1658 = vpop.f32.mrf.mxu0
      %v1659 = vadd.f32 0.0, %v1658
      %v1660 = vpop.f32.mrf.mxu0
      %v1661 = vadd.f32 0.0, %v1660
      %1662 = vmatmul.bf16.gmra.mxu0 %v1575
      %v1663 = vpop.f32.mrf.mxu0
      %v1664 = vadd.f32 0.0, %v1663
      %v1665 = vpop.f32.mrf.mxu0
      %v1666 = vadd.f32 0.0, %v1665
      %1667 = vmatmul.bf16.gmra.mxu0 %v1578
      %v1668 = vpop.f32.mrf.mxu0
      %v1669 = vadd.f32 0.0, %v1668
      %v1670 = vpop.f32.mrf.mxu0
      %v1671 = vadd.f32 0.0, %v1670
      %1672 = vmatmul.bf16.gmra.mxu0 %v1581
      %v1673 = vpop.f32.mrf.mxu0
      %v1674 = vadd.f32 0.0, %v1673
      %v1675 = vpop.f32.mrf.mxu0
      %v1676 = vadd.f32 0.0, %v1675
      %1677 = vmatmul.bf16.gmra.mxu0 %v1584
      %v1678 = vpop.f32.mrf.mxu0
      %v1679 = vadd.f32 0.0, %v1678
      %v1680 = vpop.f32.mrf.mxu0
      %v1681 = vadd.f32 0.0, %v1680
      %1682 = vmatmul.bf16.gmra.mxu0 %v1587
      %v1683 = vpop.f32.mrf.mxu0
      %v1684 = vadd.f32 0.0, %v1683
      %v1685 = vpop.f32.mrf.mxu0
      %v1686 = vadd.f32 0.0, %v1685
      %1687 = vmatmul.bf16.gmra.mxu0 %v1590
      %v1688 = vpop.f32.mrf.mxu0
      %v1689 = vadd.f32 0.0, %v1688
      %v1690 = vpop.f32.mrf.mxu0
      %v1691 = vadd.f32 0.0, %v1690
      %1692 = vmatmul.bf16.gmra.mxu0 %v1593
      %v1693 = vpop.f32.mrf.mxu0
      %v1694 = vadd.f32 0.0, %v1693
      %v1695 = vpop.f32.mrf.mxu0
      %v1696 = vadd.f32 0.0, %v1695
      %1697 = vmatmul.bf16.gmra.mxu0 %v1596
      %v1698 = vpop.f32.mrf.mxu0
      %v1699 = vadd.f32 0.0, %v1698
      %v1700 = vpop.f32.mrf.mxu0
      %v1701 = vadd.f32 0.0, %v1700
      %1702 = vmatmul.bf16.gmra.mxu0 %v1599
      %v1703 = vpop.f32.mrf.mxu0
      %v1704 = vadd.f32 0.0, %v1703
      %v1705 = vpop.f32.mrf.mxu0
      %v1706 = vadd.f32 0.0, %v1705
      %1707 = vmatmul.bf16.gmra.mxu0 %v1602
      %v1708 = vpop.f32.mrf.mxu0
      %v1709 = vadd.f32 0.0, %v1708
      %v1710 = vpop.f32.mrf.mxu0
      %v1711 = vadd.f32 0.0, %v1710
      %1712 = vmatmul.bf16.gmra.mxu0 %v1605
      %v1713 = vpop.f32.mrf.mxu0
      %v1714 = vadd.f32 0.0, %v1713
      %v1715 = vpop.f32.mrf.mxu0
      %v1716 = vadd.f32 0.0, %v1715
      %1717 = vmatmul.bf16.gmra.mxu0 %v1608
      %v1718 = vpop.f32.mrf.mxu0
      %v1719 = vadd.f32 0.0, %v1718
      %v1720 = vpop.f32.mrf.mxu0
      %v1721 = vadd.f32 0.0, %v1720
      %1722 = vmatmul.bf16.gmra.mxu0 %v1611
      %v1723 = vpop.f32.mrf.mxu0
      %v1724 = vadd.f32 0.0, %v1723
      %v1725 = vpop.f32.mrf.mxu0
      %v1726 = vadd.f32 0.0, %v1725
      %1727 = vmatmul.bf16.gmra.mxu0 %v1614
      %v1728 = vpop.f32.mrf.mxu0
      %v1729 = vadd.f32 0.0, %v1728
      %v1730 = vpop.f32.mrf.mxu0
      %v1731 = vadd.f32 0.0, %v1730
      %1732 = vmatmul.bf16.gmra.mxu0 %v1617
      %v1733 = vpop.f32.mrf.mxu0
      %v1734 = vadd.f32 0.0, %v1733
      %v1735 = vpop.f32.mrf.mxu0
      %v1736 = vadd.f32 0.0, %v1735
      %1737 = vmatmul.bf16.gmra.mxu0 %v1620
      %v1738 = vpop.f32.mrf.mxu0
      %v1739 = vadd.f32 0.0, %v1738
      %v1740 = vpop.f32.mrf.mxu0
      %v1741 = vadd.f32 0.0, %v1740
      %1742 = vmatmul.bf16.gmra.mxu0 %v1623
      %v1743 = vpop.f32.mrf.mxu0
      %v1744 = vadd.f32 0.0, %v1743
      %v1745 = vpop.f32.mrf.mxu0
      %v1746 = vadd.f32 0.0, %v1745
      %1747 = vmatmul.bf16.gmra.mxu0 %v1626
      %v1748 = vpop.f32.mrf.mxu0
      %v1749 = vadd.f32 0.0, %v1748
      %v1750 = vpop.f32.mrf.mxu0
      %v1751 = vadd.f32 0.0, %v1750
      %1752 = vmatmul.bf16.gmra.mxu0 %v1629
      %v1753 = vpop.f32.mrf.mxu0
      %v1754 = vadd.f32 0.0, %v1753
      %v1755 = vpop.f32.mrf.mxu0
      %v1756 = vadd.f32 0.0, %v1755
      %1757 = vmatmul.bf16.gmra.mxu0 %v1632
      %v1758 = vpop.f32.mrf.mxu0
      %v1759 = vadd.f32 0.0, %v1758
      %v1760 = vpop.f32.mrf.mxu0
      %v1761 = vadd.f32 0.0, %v1760
      %1762 = vdwg.mxu0
      %v1763 = vadd.f32 %v1431, %v1644
      %v1764 = vadd.f32 %v1432, %v1646
      %v1765 = vadd.f32 %v1433, %v1649
      %v1766 = vadd.f32 %v1434, %v1651
      %v1767 = vadd.f32 %v1435, %v1654
      %v1768 = vadd.f32 %v1436, %v1656
      %v1769 = vadd.f32 %v1437, %v1659
      %v1770 = vadd.f32 %v1438, %v1661
      %v1771 = vadd.f32 %v1439, %v1664
      %v1772 = vadd.f32 %v1440, %v1666
      %v1773 = vadd.f32 %v1441, %v1669
      %v1774 = vadd.f32 %v1442, %v1671
      %v1775 = vadd.f32 %v1443, %v1674
      %v1776 = vadd.f32 %v1444, %v1676
      %v1777 = vadd.f32 %v1445, %v1679
      %v1778 = vadd.f32 %v1446, %v1681
      %v1779 = vadd.f32 %v1447, %v1684
      %v1780 = vadd.f32 %v1448, %v1686
      %v1781 = vadd.f32 %v1449, %v1689
      %v1782 = vadd.f32 %v1450, %v1691
      %v1783 = vadd.f32 %v1451, %v1694
      %v1784 = vadd.f32 %v1452, %v1696
      %v1785 = vadd.f32 %v1453, %v1699
      %v1786 = vadd.f32 %v1454, %v1701
      %v1787 = vadd.f32 %v1455, %v1704
      %v1788 = vadd.f32 %v1456, %v1706
      %v1789 = vadd.f32 %v1457, %v1709
      %v1790 = vadd.f32 %v1458, %v1711
      %v1791 = vadd.f32 %v1459, %v1714
      %v1792 = vadd.f32 %v1460, %v1716
      %v1793 = vadd.f32 %v1461, %v1719
      %v1794 = vadd.f32 %v1462, %v1721
      %v1795 = vadd.f32 %v1463, %v1724
      %v1796 = vadd.f32 %v1464, %v1726
      %v1797 = vadd.f32 %v1465, %v1729
      %v1798 = vadd.f32 %v1466, %v1731
      %v1799 = vadd.f32 %v1467, %v1734
      %v1800 = vadd.f32 %v1468, %v1736
      %v1801 = vadd.f32 %v1469, %v1739
      %v1802 = vadd.f32 %v1470, %v1741
      %v1803 = vadd.f32 %v1471, %v1744
      %v1804 = vadd.f32 %v1472, %v1746
      %v1805 = vadd.f32 %v1473, %v1749
      %v1806 = vadd.f32 %v1474, %v1751
      %v1807 = vadd.f32 %v1475, %v1754
      %v1808 = vadd.f32 %v1476, %v1756
      %v1809 = vadd.f32 %v1477, %v1759
      %v1810 = vadd.f32 %v1478, %v1761
      %s1811 = scalar_lea.vmem %s2, 128
      %v1812 = vld [vmem:[%s1811] sm:$0xf]
      %v1813 = vld [vmem:[%s1811 + $0x4] sm:$0xf]
      %v1814 = vld [vmem:[%s1811 + $0x8] sm:$0xf]
      %v1815 = vld [vmem:[%s1811 + $0xc] sm:$0xf]
      %v1816 = vld [vmem:[%s1811 + $0x10] sm:$0xf]
      %v1817 = vld [vmem:[%s1811 + $0x14] sm:$0xf]
      %v1818 = vld [vmem:[%s1811 + $0x18] sm:$0xf]
      %v1819 = vld [vmem:[%s1811 + $0x1c] sm:$0xf]
      %vm1820 = vsmask.f32 3328
      %v1821 = vrot.slane %v536, 4
      %v1822 = vrot.slane %v532, 5
      %v1823 = vor.u32 %v1821, %v1822
      %v1824 = vrot.slane %v544, 4
      %v1825 = vrot.slane %v540, 5
      %v1826 = vor.u32 %v1824, %v1825
      %v1827 = vsel %vm1820, %v1823, %v1826
      %v1828 = vrot.slane %v552, 4
      %v1829 = vrot.slane %v548, 5
      %v1830 = vor.u32 %v1828, %v1829
      %v1831 = vsel %vm1820, %v1826, %v1830
      %v1832 = vrot.slane %v560, 4
      %v1833 = vrot.slane %v556, 5
      %v1834 = vor.u32 %v1832, %v1833
      %v1835 = vsel %vm1820, %v1830, %v1834
      %v1836 = vrot.slane %v568, 4
      %v1837 = vrot.slane %v564, 5
      %v1838 = vor.u32 %v1836, %v1837
      %v1839 = vsel %vm1820, %v1834, %v1838
      %v1840 = vrot.slane %v576, 4
      %v1841 = vrot.slane %v572, 5
      %v1842 = vor.u32 %v1840, %v1841
      %v1843 = vsel %vm1820, %v1838, %v1842
      %v1844 = vrot.slane %v584, 4
      %v1845 = vrot.slane %v580, 5
      %v1846 = vor.u32 %v1844, %v1845
      %v1847 = vsel %vm1820, %v1842, %v1846
      %v1848 = vrot.slane %v592, 4
      %v1849 = vrot.slane %v588, 5
      %v1850 = vor.u32 %v1848, %v1849
      %v1851 = vsel %vm1820, %v1846, %v1850
      %v1852 = vrot.slane %v600, 4
      %v1853 = vrot.slane %v596, 5
      %v1854 = vor.u32 %v1852, %v1853
      %v1855 = vsel %vm1820, %v1850, %v1854
      %v1856 = vrot.slane %v608, 4
      %v1857 = vrot.slane %v604, 5
      %v1858 = vor.u32 %v1856, %v1857
      %v1859 = vsel %vm1820, %v1854, %v1858
      %v1860 = vrot.slane %v616, 4
      %v1861 = vrot.slane %v612, 5
      %v1862 = vor.u32 %v1860, %v1861
      %v1863 = vsel %vm1820, %v1858, %v1862
      %v1864 = vrot.slane %v624, 4
      %v1865 = vrot.slane %v620, 5
      %v1866 = vor.u32 %v1864, %v1865
      %v1867 = vsel %vm1820, %v1862, %v1866
      %v1868 = vrot.slane %v632, 4
      %v1869 = vrot.slane %v628, 5
      %v1870 = vor.u32 %v1868, %v1869
      %v1871 = vsel %vm1820, %v1866, %v1870
      %v1872 = vrot.slane %v640, 4
      %v1873 = vrot.slane %v636, 5
      %v1874 = vor.u32 %v1872, %v1873
      %v1875 = vsel %vm1820, %v1870, %v1874
      %v1876 = vrot.slane %v648, 4
      %v1877 = vrot.slane %v644, 5
      %v1878 = vor.u32 %v1876, %v1877
      %v1879 = vsel %vm1820, %v1874, %v1878
      %v1880 = vrot.slane %v656, 4
      %v1881 = vrot.slane %v652, 5
      %v1882 = vor.u32 %v1880, %v1881
      %v1883 = vsel %vm1820, %v1878, %v1882
      %v1884 = vrot.slane %v664, 4
      %v1885 = vrot.slane %v660, 5
      %v1886 = vor.u32 %v1884, %v1885
      %v1887 = vsel %vm1820, %v1882, %v1886
      %v1888 = vrot.slane %v672, 4
      %v1889 = vrot.slane %v668, 5
      %v1890 = vor.u32 %v1888, %v1889
      %v1891 = vsel %vm1820, %v1886, %v1890
      %v1892 = vrot.slane %v680, 4
      %v1893 = vrot.slane %v676, 5
      %v1894 = vor.u32 %v1892, %v1893
      %v1895 = vsel %vm1820, %v1890, %v1894
      %v1896 = vrot.slane %v688, 4
      %v1897 = vrot.slane %v684, 5
      %v1898 = vor.u32 %v1896, %v1897
      %v1899 = vsel %vm1820, %v1894, %v1898
      %v1900 = vrot.slane %v696, 4
      %v1901 = vrot.slane %v692, 5
      %v1902 = vor.u32 %v1900, %v1901
      %v1903 = vsel %vm1820, %v1898, %v1902
      %v1904 = vrot.slane %v704, 4
      %v1905 = vrot.slane %v700, 5
      %v1906 = vor.u32 %v1904, %v1905
      %v1907 = vsel %vm1820, %v1902, %v1906
      %v1908 = vrot.slane %v712, 4
      %v1909 = vrot.slane %v708, 5
      %v1910 = vor.u32 %v1908, %v1909
      %v1911 = vsel %vm1820, %v1906, %v1910
      %v1912 = vshrl.u32 %v502, 16
      %v1914 = vrot.slane %v1912, 4
      %v1915 = vrot.slane %v716, 5
      %v1916 = vor.u32 %v1914, %v1915
      %v1917 = vsel %vm1820, %v1910, %v1916
      %v1919 = vshrl.u32 %v503, 16
      %v1921 = vrot.slane %v1919, 4
      %v1922 = vshll.u32 %v503, 16
      %v1924 = vrot.slane %v1922, 5
      %v1925 = vor.u32 %v1921, %v1924
      %v1926 = vsel %vm1820, %v1916, %v1925
      %v1935 = vunpack.c.l.b16 %v1812
      %v1936 = vunpack.c.l.b16 %v1813
      %v1937 = vunpack.c.l.b16 %v1814
      %v1938 = vunpack.c.l.b16 %v1815
      %v1939 = vunpack.c.l.b16 %v1816
      %v1940 = vunpack.c.l.b16 %v1817
      %v1941 = vunpack.c.l.b16 %v1818
      %v1942 = vunpack.c.l.b16 %v1819
      %v1943 = vpack.c.b16 %v1936, %v1935
      %v1944 = vpack.c.b16 %v1938, %v1937
      %v1945 = vpack.c.b16 %v1940, %v1939
      %v1946 = vpack.c.b16 %v1942, %v1941
      %v1952 = vsel %vm744, %v1827, 0
      %v1955 = vsel %vm744, %v1831, 0
      %v1958 = vsel %vm744, %v1835, 0
      %v1961 = vsel %vm744, %v1839, 0
      %v1964 = vsel %vm744, %v1843, 0
      %v1967 = vsel %vm744, %v1847, 0
      %v1970 = vsel %vm744, %v1851, 0
      %v1973 = vsel %vm744, %v1855, 0
      %v1976 = vsel %vm744, %v1859, 0
      %v1979 = vsel %vm744, %v1863, 0
      %v1982 = vsel %vm744, %v1867, 0
      %v1985 = vsel %vm744, %v1871, 0
      %v1988 = vsel %vm744, %v1875, 0
      %v1991 = vsel %vm744, %v1879, 0
      %v1994 = vsel %vm744, %v1883, 0
      %v1997 = vsel %vm744, %v1887, 0
      %v2000 = vsel %vm744, %v1891, 0
      %v2003 = vsel %vm744, %v1895, 0
      %v2006 = vsel %vm744, %v1899, 0
      %v2009 = vsel %vm744, %v1903, 0
      %v2012 = vsel %vm744, %v1907, 0
      %v2015 = vsel %vm744, %v1911, 0
      %v2018 = vsel %vm744, %v1917, 0
      %v2021 = vsel %vm744, %v1926, 0
      %2023 = vmatpush.bf16.msra.mxu0 0
      %2024 = vmatpush.bf16.msra.mxu0 0
      %2025 = vmatpush.bf16.msra.mxu0 0
      %2026 = vmatpush.bf16.msra.mxu0 0
      %2027 = vmatpush.bf16.msra.mxu0 %v1946
      %2028 = vmatpush.bf16.msra.mxu0 %v1945
      %2029 = vmatpush.bf16.msra.mxu0 %v1944
      %2030 = vmatpush.bf16.msra.mxu0 %v1943
      %2031 = vmatmul.bf16.gmra.mxu0 %v1952
      %v2032 = vpop.f32.mrf.mxu0
      %v2033 = vadd.f32 0.0, %v2032
      %v2034 = vpop.f32.mrf.mxu0
      %v2035 = vadd.f32 0.0, %v2034
      %2036 = vmatmul.bf16.gmra.mxu0 %v1955
      %v2037 = vpop.f32.mrf.mxu0
      %v2038 = vadd.f32 0.0, %v2037
      %v2039 = vpop.f32.mrf.mxu0
      %v2040 = vadd.f32 0.0, %v2039
      %2041 = vmatmul.bf16.gmra.mxu0 %v1958
      %v2042 = vpop.f32.mrf.mxu0
      %v2043 = vadd.f32 0.0, %v2042
      %v2044 = vpop.f32.mrf.mxu0
      %v2045 = vadd.f32 0.0, %v2044
      %2046 = vmatmul.bf16.gmra.mxu0 %v1961
      %v2047 = vpop.f32.mrf.mxu0
      %v2048 = vadd.f32 0.0, %v2047
      %v2049 = vpop.f32.mrf.mxu0
      %v2050 = vadd.f32 0.0, %v2049
      %2051 = vmatmul.bf16.gmra.mxu0 %v1964
      %v2052 = vpop.f32.mrf.mxu0
      %v2053 = vadd.f32 0.0, %v2052
      %v2054 = vpop.f32.mrf.mxu0
      %v2055 = vadd.f32 0.0, %v2054
      %2056 = vmatmul.bf16.gmra.mxu0 %v1967
      %v2057 = vpop.f32.mrf.mxu0
      %v2058 = vadd.f32 0.0, %v2057
      %v2059 = vpop.f32.mrf.mxu0
      %v2060 = vadd.f32 0.0, %v2059
      %2061 = vmatmul.bf16.gmra.mxu0 %v1970
      %v2062 = vpop.f32.mrf.mxu0
      %v2063 = vadd.f32 0.0, %v2062
      %v2064 = vpop.f32.mrf.mxu0
      %v2065 = vadd.f32 0.0, %v2064
      %2066 = vmatmul.bf16.gmra.mxu0 %v1973
      %v2067 = vpop.f32.mrf.mxu0
      %v2068 = vadd.f32 0.0, %v2067
      %v2069 = vpop.f32.mrf.mxu0
      %v2070 = vadd.f32 0.0, %v2069
      %2071 = vmatmul.bf16.gmra.mxu0 %v1976
      %v2072 = vpop.f32.mrf.mxu0
      %v2073 = vadd.f32 0.0, %v2072
      %v2074 = vpop.f32.mrf.mxu0
      %v2075 = vadd.f32 0.0, %v2074
      %2076 = vmatmul.bf16.gmra.mxu0 %v1979
      %v2077 = vpop.f32.mrf.mxu0
      %v2078 = vadd.f32 0.0, %v2077
      %v2079 = vpop.f32.mrf.mxu0
      %v2080 = vadd.f32 0.0, %v2079
      %2081 = vmatmul.bf16.gmra.mxu0 %v1982
      %v2082 = vpop.f32.mrf.mxu0
      %v2083 = vadd.f32 0.0, %v2082
      %v2084 = vpop.f32.mrf.mxu0
      %v2085 = vadd.f32 0.0, %v2084
      %2086 = vmatmul.bf16.gmra.mxu0 %v1985
      %v2087 = vpop.f32.mrf.mxu0
      %v2088 = vadd.f32 0.0, %v2087
      %v2089 = vpop.f32.mrf.mxu0
      %v2090 = vadd.f32 0.0, %v2089
      %2091 = vmatmul.bf16.gmra.mxu0 %v1988
      %v2092 = vpop.f32.mrf.mxu0
      %v2093 = vadd.f32 0.0, %v2092
      %v2094 = vpop.f32.mrf.mxu0
      %v2095 = vadd.f32 0.0, %v2094
      %2096 = vmatmul.bf16.gmra.mxu0 %v1991
      %v2097 = vpop.f32.mrf.mxu0
      %v2098 = vadd.f32 0.0, %v2097
      %v2099 = vpop.f32.mrf.mxu0
      %v2100 = vadd.f32 0.0, %v2099
      %2101 = vmatmul.bf16.gmra.mxu0 %v1994
      %v2102 = vpop.f32.mrf.mxu0
      %v2103 = vadd.f32 0.0, %v2102
      %v2104 = vpop.f32.mrf.mxu0
      %v2105 = vadd.f32 0.0, %v2104
      %2106 = vmatmul.bf16.gmra.mxu0 %v1997
      %v2107 = vpop.f32.mrf.mxu0
      %v2108 = vadd.f32 0.0, %v2107
      %v2109 = vpop.f32.mrf.mxu0
      %v2110 = vadd.f32 0.0, %v2109
      %2111 = vmatmul.bf16.gmra.mxu0 %v2000
      %v2112 = vpop.f32.mrf.mxu0
      %v2113 = vadd.f32 0.0, %v2112
      %v2114 = vpop.f32.mrf.mxu0
      %v2115 = vadd.f32 0.0, %v2114
      %2116 = vmatmul.bf16.gmra.mxu0 %v2003
      %v2117 = vpop.f32.mrf.mxu0
      %v2118 = vadd.f32 0.0, %v2117
      %v2119 = vpop.f32.mrf.mxu0
      %v2120 = vadd.f32 0.0, %v2119
      %2121 = vmatmul.bf16.gmra.mxu0 %v2006
      %v2122 = vpop.f32.mrf.mxu0
      %v2123 = vadd.f32 0.0, %v2122
      %v2124 = vpop.f32.mrf.mxu0
      %v2125 = vadd.f32 0.0, %v2124
      %2126 = vmatmul.bf16.gmra.mxu0 %v2009
      %v2127 = vpop.f32.mrf.mxu0
      %v2128 = vadd.f32 0.0, %v2127
      %v2129 = vpop.f32.mrf.mxu0
      %v2130 = vadd.f32 0.0, %v2129
      %2131 = vmatmul.bf16.gmra.mxu0 %v2012
      %v2132 = vpop.f32.mrf.mxu0
      %v2133 = vadd.f32 0.0, %v2132
      %v2134 = vpop.f32.mrf.mxu0
      %v2135 = vadd.f32 0.0, %v2134
      %2136 = vmatmul.bf16.gmra.mxu0 %v2015
      %v2137 = vpop.f32.mrf.mxu0
      %v2138 = vadd.f32 0.0, %v2137
      %v2139 = vpop.f32.mrf.mxu0
      %v2140 = vadd.f32 0.0, %v2139
      %2141 = vmatmul.bf16.gmra.mxu0 %v2018
      %v2142 = vpop.f32.mrf.mxu0
      %v2143 = vadd.f32 0.0, %v2142
      %v2144 = vpop.f32.mrf.mxu0
      %v2145 = vadd.f32 0.0, %v2144
      %2146 = vmatmul.bf16.gmra.mxu0 %v2021
      %v2147 = vpop.f32.mrf.mxu0
      %v2148 = vadd.f32 0.0, %v2147
      %v2149 = vpop.f32.mrf.mxu0
      %v2150 = vadd.f32 0.0, %v2149
      %2151 = vdwg.mxu0
      %v2152 = vadd.f32 %v1763, %v2033
      %v2153 = vadd.f32 %v1764, %v2035
      %v2154 = vadd.f32 %v1765, %v2038
      %v2155 = vadd.f32 %v1766, %v2040
      %v2156 = vadd.f32 %v1767, %v2043
      %v2157 = vadd.f32 %v1768, %v2045
      %v2158 = vadd.f32 %v1769, %v2048
      %v2159 = vadd.f32 %v1770, %v2050
      %v2160 = vadd.f32 %v1771, %v2053
      %v2161 = vadd.f32 %v1772, %v2055
      %v2162 = vadd.f32 %v1773, %v2058
      %v2163 = vadd.f32 %v1774, %v2060
      %v2164 = vadd.f32 %v1775, %v2063
      %v2165 = vadd.f32 %v1776, %v2065
      %v2166 = vadd.f32 %v1777, %v2068
      %v2167 = vadd.f32 %v1778, %v2070
      %v2168 = vadd.f32 %v1779, %v2073
      %v2169 = vadd.f32 %v1780, %v2075
      %v2170 = vadd.f32 %v1781, %v2078
      %v2171 = vadd.f32 %v1782, %v2080
      %v2172 = vadd.f32 %v1783, %v2083
      %v2173 = vadd.f32 %v1784, %v2085
      %v2174 = vadd.f32 %v1785, %v2088
      %v2175 = vadd.f32 %v1786, %v2090
      %v2176 = vadd.f32 %v1787, %v2093
      %v2177 = vadd.f32 %v1788, %v2095
      %v2178 = vadd.f32 %v1789, %v2098
      %v2179 = vadd.f32 %v1790, %v2100
      %v2180 = vadd.f32 %v1791, %v2103
      %v2181 = vadd.f32 %v1792, %v2105
      %v2182 = vadd.f32 %v1793, %v2108
      %v2183 = vadd.f32 %v1794, %v2110
      %v2184 = vadd.f32 %v1795, %v2113
      %v2185 = vadd.f32 %v1796, %v2115
      %v2186 = vadd.f32 %v1797, %v2118
      %v2187 = vadd.f32 %v1798, %v2120
      %v2188 = vadd.f32 %v1799, %v2123
      %v2189 = vadd.f32 %v1800, %v2125
      %v2190 = vadd.f32 %v1801, %v2128
      %v2191 = vadd.f32 %v1802, %v2130
      %v2192 = vadd.f32 %v1803, %v2133
      %v2193 = vadd.f32 %v1804, %v2135
      %v2194 = vadd.f32 %v1805, %v2138
      %v2195 = vadd.f32 %v1806, %v2140
      %v2196 = vadd.f32 %v1807, %v2143
      %v2197 = vadd.f32 %v1808, %v2145
      %v2198 = vadd.f32 %v1809, %v2148
      %v2199 = vadd.f32 %v1810, %v2150
      %s2200 = scalar_lea.vmem %s2, 160
      %v2201 = vld [vmem:[%s2200] sm:$0xf]
      %v2202 = vld [vmem:[%s2200 + $0x4] sm:$0xf]
      %v2203 = vld [vmem:[%s2200 + $0x8] sm:$0xf]
      %v2204 = vld [vmem:[%s2200 + $0xc] sm:$0xf]
      %v2205 = vld [vmem:[%s2200 + $0x10] sm:$0xf]
      %v2206 = vld [vmem:[%s2200 + $0x14] sm:$0xf]
      %v2207 = vld [vmem:[%s2200 + $0x18] sm:$0xf]
      %v2208 = vld [vmem:[%s2200 + $0x1c] sm:$0xf]
      %vm2209 = vcmask 1042432
      %v2210 = vrot.slane %v463, 5
      %v2211 = vrot.slane %v464, 5
      %v2212 = vsel %vm2209, %v2210, %v2211
      %v2213 = vrot.slane %v465, 5
      %v2214 = vsel %vm2209, %v2211, %v2213
      %v2215 = vrot.slane %v466, 5
      %v2216 = vsel %vm2209, %v2213, %v2215
      %v2217 = vrot.slane %v467, 5
      %v2218 = vsel %vm2209, %v2215, %v2217
      %v2219 = vrot.slane %v468, 5
      %v2220 = vsel %vm2209, %v2217, %v2219
      %v2221 = vrot.slane %v469, 5
      %v2222 = vsel %vm2209, %v2219, %v2221
      %v2223 = vrot.slane %v470, 5
      %v2224 = vsel %vm2209, %v2221, %v2223
      %v2225 = vrot.slane %v471, 5
      %v2226 = vsel %vm2209, %v2223, %v2225
      %v2227 = vrot.slane %v472, 5
      %v2228 = vsel %vm2209, %v2225, %v2227
      %v2229 = vrot.slane %v473, 5
      %v2230 = vsel %vm2209, %v2227, %v2229
      %v2231 = vrot.slane %v474, 5
      %v2232 = vsel %vm2209, %v2229, %v2231
      %v2233 = vrot.slane %v475, 5
      %v2234 = vsel %vm2209, %v2231, %v2233
      %v2235 = vrot.slane %v476, 5
      %v2236 = vsel %vm2209, %v2233, %v2235
      %v2237 = vrot.slane %v477, 5
      %v2238 = vsel %vm2209, %v2235, %v2237
      %v2239 = vrot.slane %v478, 5
      %v2240 = vsel %vm2209, %v2237, %v2239
      %v2241 = vrot.slane %v479, 5
      %v2242 = vsel %vm2209, %v2239, %v2241
      %v2243 = vrot.slane %v480, 5
      %v2244 = vsel %vm2209, %v2241, %v2243
      %v2245 = vrot.slane %v481, 5
      %v2246 = vsel %vm2209, %v2243, %v2245
      %v2247 = vrot.slane %v482, 5
      %v2248 = vsel %vm2209, %v2245, %v2247
      %v2249 = vrot.slane %v483, 5
      %v2250 = vsel %vm2209, %v2247, %v2249
      %v2251 = vrot.slane %v484, 5
      %v2252 = vsel %vm2209, %v2249, %v2251
      %v2253 = vrot.slane %v485, 5
      %v2254 = vsel %vm2209, %v2251, %v2253
      %v2255 = vrot.slane %v502, 5
      %v2256 = vsel %vm2209, %v2253, %v2255
      %v2257 = vrot.slane %v503, 5
      %v2258 = vsel %vm2209, %v2255, %v2257
      %v2267 = vunpack.c.l.b16 %v2201
      %v2268 = vunpack.c.l.b16 %v2202
      %v2269 = vunpack.c.l.b16 %v2203
      %v2270 = vunpack.c.l.b16 %v2204
      %v2271 = vunpack.c.l.b16 %v2205
      %v2272 = vunpack.c.l.b16 %v2206
      %v2273 = vunpack.c.l.b16 %v2207
      %v2274 = vunpack.c.l.b16 %v2208
      %v2275 = vpack.c.b16 %v2268, %v2267
      %v2276 = vpack.c.b16 %v2270, %v2269
      %v2277 = vpack.c.b16 %v2272, %v2271
      %v2278 = vpack.c.b16 %v2274, %v2273
      %v2284 = vsel %vm744, %v2212, 0
      %v2287 = vsel %vm744, %v2214, 0
      %v2290 = vsel %vm744, %v2216, 0
      %v2293 = vsel %vm744, %v2218, 0
      %v2296 = vsel %vm744, %v2220, 0
      %v2299 = vsel %vm744, %v2222, 0
      %v2302 = vsel %vm744, %v2224, 0
      %v2305 = vsel %vm744, %v2226, 0
      %v2308 = vsel %vm744, %v2228, 0
      %v2311 = vsel %vm744, %v2230, 0
      %v2314 = vsel %vm744, %v2232, 0
      %v2317 = vsel %vm744, %v2234, 0
      %v2320 = vsel %vm744, %v2236, 0
      %v2323 = vsel %vm744, %v2238, 0
      %v2326 = vsel %vm744, %v2240, 0
      %v2329 = vsel %vm744, %v2242, 0
      %v2332 = vsel %vm744, %v2244, 0
      %v2335 = vsel %vm744, %v2246, 0
      %v2338 = vsel %vm744, %v2248, 0
      %v2341 = vsel %vm744, %v2250, 0
      %v2344 = vsel %vm744, %v2252, 0
      %v2347 = vsel %vm744, %v2254, 0
      %v2350 = vsel %vm744, %v2256, 0
      %v2353 = vsel %vm744, %v2258, 0
      %2355 = vmatpush.bf16.msra.mxu0 0
      %2356 = vmatpush.bf16.msra.mxu0 0
      %2357 = vmatpush.bf16.msra.mxu0 0
      %2358 = vmatpush.bf16.msra.mxu0 0
      %2359 = vmatpush.bf16.msra.mxu0 %v2278
      %2360 = vmatpush.bf16.msra.mxu0 %v2277
      %2361 = vmatpush.bf16.msra.mxu0 %v2276
      %2362 = vmatpush.bf16.msra.mxu0 %v2275
      %2363 = vmatmul.bf16.gmra.mxu0 %v2284
      %v2364 = vpop.f32.mrf.mxu0
      %v2365 = vadd.f32 0.0, %v2364
      %v2366 = vpop.f32.mrf.mxu0
      %v2367 = vadd.f32 0.0, %v2366
      %2368 = vmatmul.bf16.gmra.mxu0 %v2287
      %v2369 = vpop.f32.mrf.mxu0
      %v2370 = vadd.f32 0.0, %v2369
      %v2371 = vpop.f32.mrf.mxu0
      %v2372 = vadd.f32 0.0, %v2371
      %2373 = vmatmul.bf16.gmra.mxu0 %v2290
      %v2374 = vpop.f32.mrf.mxu0
      %v2375 = vadd.f32 0.0, %v2374
      %v2376 = vpop.f32.mrf.mxu0
      %v2377 = vadd.f32 0.0, %v2376
      %2378 = vmatmul.bf16.gmra.mxu0 %v2293
      %v2379 = vpop.f32.mrf.mxu0
      %v2380 = vadd.f32 0.0, %v2379
      %v2381 = vpop.f32.mrf.mxu0
      %v2382 = vadd.f32 0.0, %v2381
      %2383 = vmatmul.bf16.gmra.mxu0 %v2296
      %v2384 = vpop.f32.mrf.mxu0
      %v2385 = vadd.f32 0.0, %v2384
      %v2386 = vpop.f32.mrf.mxu0
      %v2387 = vadd.f32 0.0, %v2386
      %2388 = vmatmul.bf16.gmra.mxu0 %v2299
      %v2389 = vpop.f32.mrf.mxu0
      %v2390 = vadd.f32 0.0, %v2389
      %v2391 = vpop.f32.mrf.mxu0
      %v2392 = vadd.f32 0.0, %v2391
      %2393 = vmatmul.bf16.gmra.mxu0 %v2302
      %v2394 = vpop.f32.mrf.mxu0
      %v2395 = vadd.f32 0.0, %v2394
      %v2396 = vpop.f32.mrf.mxu0
      %v2397 = vadd.f32 0.0, %v2396
      %2398 = vmatmul.bf16.gmra.mxu0 %v2305
      %v2399 = vpop.f32.mrf.mxu0
      %v2400 = vadd.f32 0.0, %v2399
      %v2401 = vpop.f32.mrf.mxu0
      %v2402 = vadd.f32 0.0, %v2401
      %2403 = vmatmul.bf16.gmra.mxu0 %v2308
      %v2404 = vpop.f32.mrf.mxu0
      %v2405 = vadd.f32 0.0, %v2404
      %v2406 = vpop.f32.mrf.mxu0
      %v2407 = vadd.f32 0.0, %v2406
      %2408 = vmatmul.bf16.gmra.mxu0 %v2311
      %v2409 = vpop.f32.mrf.mxu0
      %v2410 = vadd.f32 0.0, %v2409
      %v2411 = vpop.f32.mrf.mxu0
      %v2412 = vadd.f32 0.0, %v2411
      %2413 = vmatmul.bf16.gmra.mxu0 %v2314
      %v2414 = vpop.f32.mrf.mxu0
      %v2415 = vadd.f32 0.0, %v2414
      %v2416 = vpop.f32.mrf.mxu0
      %v2417 = vadd.f32 0.0, %v2416
      %2418 = vmatmul.bf16.gmra.mxu0 %v2317
      %v2419 = vpop.f32.mrf.mxu0
      %v2420 = vadd.f32 0.0, %v2419
      %v2421 = vpop.f32.mrf.mxu0
      %v2422 = vadd.f32 0.0, %v2421
      %2423 = vmatmul.bf16.gmra.mxu0 %v2320
      %v2424 = vpop.f32.mrf.mxu0
      %v2425 = vadd.f32 0.0, %v2424
      %v2426 = vpop.f32.mrf.mxu0
      %v2427 = vadd.f32 0.0, %v2426
      %2428 = vmatmul.bf16.gmra.mxu0 %v2323
      %v2429 = vpop.f32.mrf.mxu0
      %v2430 = vadd.f32 0.0, %v2429
      %v2431 = vpop.f32.mrf.mxu0
      %v2432 = vadd.f32 0.0, %v2431
      %2433 = vmatmul.bf16.gmra.mxu0 %v2326
      %v2434 = vpop.f32.mrf.mxu0
      %v2435 = vadd.f32 0.0, %v2434
      %v2436 = vpop.f32.mrf.mxu0
      %v2437 = vadd.f32 0.0, %v2436
      %2438 = vmatmul.bf16.gmra.mxu0 %v2329
      %v2439 = vpop.f32.mrf.mxu0
      %v2440 = vadd.f32 0.0, %v2439
      %v2441 = vpop.f32.mrf.mxu0
      %v2442 = vadd.f32 0.0, %v2441
      %2443 = vmatmul.bf16.gmra.mxu0 %v2332
      %v2444 = vpop.f32.mrf.mxu0
      %v2445 = vadd.f32 0.0, %v2444
      %v2446 = vpop.f32.mrf.mxu0
      %v2447 = vadd.f32 0.0, %v2446
      %2448 = vmatmul.bf16.gmra.mxu0 %v2335
      %v2449 = vpop.f32.mrf.mxu0
      %v2450 = vadd.f32 0.0, %v2449
      %v2451 = vpop.f32.mrf.mxu0
      %v2452 = vadd.f32 0.0, %v2451
      %2453 = vmatmul.bf16.gmra.mxu0 %v2338
      %v2454 = vpop.f32.mrf.mxu0
      %v2455 = vadd.f32 0.0, %v2454
      %v2456 = vpop.f32.mrf.mxu0
      %v2457 = vadd.f32 0.0, %v2456
      %2458 = vmatmul.bf16.gmra.mxu0 %v2341
      %v2459 = vpop.f32.mrf.mxu0
      %v2460 = vadd.f32 0.0, %v2459
      %v2461 = vpop.f32.mrf.mxu0
      %v2462 = vadd.f32 0.0, %v2461
      %2463 = vmatmul.bf16.gmra.mxu0 %v2344
      %v2464 = vpop.f32.mrf.mxu0
      %v2465 = vadd.f32 0.0, %v2464
      %v2466 = vpop.f32.mrf.mxu0
      %v2467 = vadd.f32 0.0, %v2466
      %2468 = vmatmul.bf16.gmra.mxu0 %v2347
      %v2469 = vpop.f32.mrf.mxu0
      %v2470 = vadd.f32 0.0, %v2469
      %v2471 = vpop.f32.mrf.mxu0
      %v2472 = vadd.f32 0.0, %v2471
      %2473 = vmatmul.bf16.gmra.mxu0 %v2350
      %v2474 = vpop.f32.mrf.mxu0
      %v2475 = vadd.f32 0.0, %v2474
      %v2476 = vpop.f32.mrf.mxu0
      %v2477 = vadd.f32 0.0, %v2476
      %2478 = vmatmul.bf16.gmra.mxu0 %v2353
      %v2479 = vpop.f32.mrf.mxu0
      %v2480 = vadd.f32 0.0, %v2479
      %v2481 = vpop.f32.mrf.mxu0
      %v2482 = vadd.f32 0.0, %v2481
      %2483 = vdwg.mxu0
      %v2484 = vadd.f32 %v2152, %v2365
      %v2485 = vadd.f32 %v2153, %v2367
      %v2486 = vadd.f32 %v2154, %v2370
      %v2487 = vadd.f32 %v2155, %v2372
      %v2488 = vadd.f32 %v2156, %v2375
      %v2489 = vadd.f32 %v2157, %v2377
      %v2490 = vadd.f32 %v2158, %v2380
      %v2491 = vadd.f32 %v2159, %v2382
      %v2492 = vadd.f32 %v2160, %v2385
      %v2493 = vadd.f32 %v2161, %v2387
      %v2494 = vadd.f32 %v2162, %v2390
      %v2495 = vadd.f32 %v2163, %v2392
      %v2496 = vadd.f32 %v2164, %v2395
      %v2497 = vadd.f32 %v2165, %v2397
      %v2498 = vadd.f32 %v2166, %v2400
      %v2499 = vadd.f32 %v2167, %v2402
      %v2500 = vadd.f32 %v2168, %v2405
      %v2501 = vadd.f32 %v2169, %v2407
      %v2502 = vadd.f32 %v2170, %v2410
      %v2503 = vadd.f32 %v2171, %v2412
      %v2504 = vadd.f32 %v2172, %v2415
      %v2505 = vadd.f32 %v2173, %v2417
      %v2506 = vadd.f32 %v2174, %v2420
      %v2507 = vadd.f32 %v2175, %v2422
      %v2508 = vadd.f32 %v2176, %v2425
      %v2509 = vadd.f32 %v2177, %v2427
      %v2510 = vadd.f32 %v2178, %v2430
      %v2511 = vadd.f32 %v2179, %v2432
      %v2512 = vadd.f32 %v2180, %v2435
      %v2513 = vadd.f32 %v2181, %v2437
      %v2514 = vadd.f32 %v2182, %v2440
      %v2515 = vadd.f32 %v2183, %v2442
      %v2516 = vadd.f32 %v2184, %v2445
      %v2517 = vadd.f32 %v2185, %v2447
      %v2518 = vadd.f32 %v2186, %v2450
      %v2519 = vadd.f32 %v2187, %v2452
      %v2520 = vadd.f32 %v2188, %v2455
      %v2521 = vadd.f32 %v2189, %v2457
      %v2522 = vadd.f32 %v2190, %v2460
      %v2523 = vadd.f32 %v2191, %v2462
      %v2524 = vadd.f32 %v2192, %v2465
      %v2525 = vadd.f32 %v2193, %v2467
      %v2526 = vadd.f32 %v2194, %v2470
      %v2527 = vadd.f32 %v2195, %v2472
      %v2528 = vadd.f32 %v2196, %v2475
      %v2529 = vadd.f32 %v2197, %v2477
      %v2530 = vadd.f32 %v2198, %v2480
      %v2531 = vadd.f32 %v2199, %v2482
      %s2532 = scalar_lea.vmem %s2, 192
      %v2533 = vld [vmem:[%s2532] sm:$0xf]
      %v2534 = vld [vmem:[%s2532 + $0x4] sm:$0xf]
      %v2535 = vld [vmem:[%s2532 + $0x8] sm:$0xf]
      %v2536 = vld [vmem:[%s2532 + $0xc] sm:$0xf]
      %v2537 = vld [vmem:[%s2532 + $0x10] sm:$0xf]
      %v2538 = vld [vmem:[%s2532 + $0x14] sm:$0xf]
      %v2539 = vld [vmem:[%s2532 + $0x18] sm:$0xf]
      %v2540 = vld [vmem:[%s2532 + $0x1c] sm:$0xf]
      %v2549 = vunpack.c.l.b16 %v2533
      %v2550 = vunpack.c.l.b16 %v2534
      %v2551 = vunpack.c.l.b16 %v2535
      %v2552 = vunpack.c.l.b16 %v2536
      %v2553 = vunpack.c.l.b16 %v2537
      %v2554 = vunpack.c.l.b16 %v2538
      %v2555 = vunpack.c.l.b16 %v2539
      %v2556 = vunpack.c.l.b16 %v2540
      %v2557 = vpack.c.b16 %v2550, %v2549
      %v2558 = vpack.c.b16 %v2552, %v2551
      %v2559 = vpack.c.b16 %v2554, %v2553
      %v2560 = vpack.c.b16 %v2556, %v2555
      %v2565 = vsel %vm744, %v502, 0
      %v2567 = vsel %vm744, %v503, 0
      %v2570 = vsel %vm744, %v504, 0
      %2572 = vmatpush.bf16.msra.mxu0 0
      %2573 = vmatpush.bf16.msra.mxu0 0
      %2574 = vmatpush.bf16.msra.mxu0 0
      %2575 = vmatpush.bf16.msra.mxu0 0
      %2576 = vmatpush.bf16.msra.mxu0 %v2560
      %2577 = vmatpush.bf16.msra.mxu0 %v2559
      %2578 = vmatpush.bf16.msra.mxu0 %v2558
      %2579 = vmatpush.bf16.msra.mxu0 %v2557
      %2580 = vmatmul.bf16.gmra.mxu0 %v976
      %v2581 = vpop.f32.mrf.mxu0
      %v2582 = vadd.f32 0.0, %v2581
      %v2583 = vpop.f32.mrf.mxu0
      %v2584 = vadd.f32 0.0, %v2583
      %2585 = vmatmul.bf16.gmra.mxu0 %v978
      %v2586 = vpop.f32.mrf.mxu0
      %v2587 = vadd.f32 0.0, %v2586
      %v2588 = vpop.f32.mrf.mxu0
      %v2589 = vadd.f32 0.0, %v2588
      %2590 = vmatmul.bf16.gmra.mxu0 %v980
      %v2591 = vpop.f32.mrf.mxu0
      %v2592 = vadd.f32 0.0, %v2591
      %v2593 = vpop.f32.mrf.mxu0
      %v2594 = vadd.f32 0.0, %v2593
      %2595 = vmatmul.bf16.gmra.mxu0 %v982
      %v2596 = vpop.f32.mrf.mxu0
      %v2597 = vadd.f32 0.0, %v2596
      %v2598 = vpop.f32.mrf.mxu0
      %v2599 = vadd.f32 0.0, %v2598
      %2600 = vmatmul.bf16.gmra.mxu0 %v984
      %v2601 = vpop.f32.mrf.mxu0
      %v2602 = vadd.f32 0.0, %v2601
      %v2603 = vpop.f32.mrf.mxu0
      %v2604 = vadd.f32 0.0, %v2603
      %2605 = vmatmul.bf16.gmra.mxu0 %v986
      %v2606 = vpop.f32.mrf.mxu0
      %v2607 = vadd.f32 0.0, %v2606
      %v2608 = vpop.f32.mrf.mxu0
      %v2609 = vadd.f32 0.0, %v2608
      %2610 = vmatmul.bf16.gmra.mxu0 %v988
      %v2611 = vpop.f32.mrf.mxu0
      %v2612 = vadd.f32 0.0, %v2611
      %v2613 = vpop.f32.mrf.mxu0
      %v2614 = vadd.f32 0.0, %v2613
      %2615 = vmatmul.bf16.gmra.mxu0 %v990
      %v2616 = vpop.f32.mrf.mxu0
      %v2617 = vadd.f32 0.0, %v2616
      %v2618 = vpop.f32.mrf.mxu0
      %v2619 = vadd.f32 0.0, %v2618
      %2620 = vmatmul.bf16.gmra.mxu0 %v992
      %v2621 = vpop.f32.mrf.mxu0
      %v2622 = vadd.f32 0.0, %v2621
      %v2623 = vpop.f32.mrf.mxu0
      %v2624 = vadd.f32 0.0, %v2623
      %2625 = vmatmul.bf16.gmra.mxu0 %v994
      %v2626 = vpop.f32.mrf.mxu0
      %v2627 = vadd.f32 0.0, %v2626
      %v2628 = vpop.f32.mrf.mxu0
      %v2629 = vadd.f32 0.0, %v2628
      %2630 = vmatmul.bf16.gmra.mxu0 %v996
      %v2631 = vpop.f32.mrf.mxu0
      %v2632 = vadd.f32 0.0, %v2631
      %v2633 = vpop.f32.mrf.mxu0
      %v2634 = vadd.f32 0.0, %v2633
      %2635 = vmatmul.bf16.gmra.mxu0 %v998
      %v2636 = vpop.f32.mrf.mxu0
      %v2637 = vadd.f32 0.0, %v2636
      %v2638 = vpop.f32.mrf.mxu0
      %v2639 = vadd.f32 0.0, %v2638
      %2640 = vmatmul.bf16.gmra.mxu0 %v1000
      %v2641 = vpop.f32.mrf.mxu0
      %v2642 = vadd.f32 0.0, %v2641
      %v2643 = vpop.f32.mrf.mxu0
      %v2644 = vadd.f32 0.0, %v2643
      %2645 = vmatmul.bf16.gmra.mxu0 %v1002
      %v2646 = vpop.f32.mrf.mxu0
      %v2647 = vadd.f32 0.0, %v2646
      %v2648 = vpop.f32.mrf.mxu0
      %v2649 = vadd.f32 0.0, %v2648
      %2650 = vmatmul.bf16.gmra.mxu0 %v1004
      %v2651 = vpop.f32.mrf.mxu0
      %v2652 = vadd.f32 0.0, %v2651
      %v2653 = vpop.f32.mrf.mxu0
      %v2654 = vadd.f32 0.0, %v2653
      %2655 = vmatmul.bf16.gmra.mxu0 %v1006
      %v2656 = vpop.f32.mrf.mxu0
      %v2657 = vadd.f32 0.0, %v2656
      %v2658 = vpop.f32.mrf.mxu0
      %v2659 = vadd.f32 0.0, %v2658
      %2660 = vmatmul.bf16.gmra.mxu0 %v1008
      %v2661 = vpop.f32.mrf.mxu0
      %v2662 = vadd.f32 0.0, %v2661
      %v2663 = vpop.f32.mrf.mxu0
      %v2664 = vadd.f32 0.0, %v2663
      %2665 = vmatmul.bf16.gmra.mxu0 %v1010
      %v2666 = vpop.f32.mrf.mxu0
      %v2667 = vadd.f32 0.0, %v2666
      %v2668 = vpop.f32.mrf.mxu0
      %v2669 = vadd.f32 0.0, %v2668
      %2670 = vmatmul.bf16.gmra.mxu0 %v1012
      %v2671 = vpop.f32.mrf.mxu0
      %v2672 = vadd.f32 0.0, %v2671
      %v2673 = vpop.f32.mrf.mxu0
      %v2674 = vadd.f32 0.0, %v2673
      %2675 = vmatmul.bf16.gmra.mxu0 %v1014
      %v2676 = vpop.f32.mrf.mxu0
      %v2677 = vadd.f32 0.0, %v2676
      %v2678 = vpop.f32.mrf.mxu0
      %v2679 = vadd.f32 0.0, %v2678
      %2680 = vmatmul.bf16.gmra.mxu0 %v1016
      %v2681 = vpop.f32.mrf.mxu0
      %v2682 = vadd.f32 0.0, %v2681
      %v2683 = vpop.f32.mrf.mxu0
      %v2684 = vadd.f32 0.0, %v2683
      %2685 = vmatmul.bf16.gmra.mxu0 %v2565
      %v2686 = vpop.f32.mrf.mxu0
      %v2687 = vadd.f32 0.0, %v2686
      %v2688 = vpop.f32.mrf.mxu0
      %v2689 = vadd.f32 0.0, %v2688
      %2690 = vmatmul.bf16.gmra.mxu0 %v2567
      %v2691 = vpop.f32.mrf.mxu0
      %v2692 = vadd.f32 0.0, %v2691
      %v2693 = vpop.f32.mrf.mxu0
      %v2694 = vadd.f32 0.0, %v2693
      %2695 = vmatmul.bf16.gmra.mxu0 %v2570
      %v2696 = vpop.f32.mrf.mxu0
      %v2697 = vadd.f32 0.0, %v2696
      %v2698 = vpop.f32.mrf.mxu0
      %v2699 = vadd.f32 0.0, %v2698
      %2700 = vdwg.mxu0
      %v2701 = vadd.f32 %v2484, %v2582
      %v2702 = vadd.f32 %v2485, %v2584
      %v2703 = vadd.f32 %v2486, %v2587
      %v2704 = vadd.f32 %v2487, %v2589
      %v2705 = vadd.f32 %v2488, %v2592
      %v2706 = vadd.f32 %v2489, %v2594
      %v2707 = vadd.f32 %v2490, %v2597
      %v2708 = vadd.f32 %v2491, %v2599
      %v2709 = vadd.f32 %v2492, %v2602
      %v2710 = vadd.f32 %v2493, %v2604
      %v2711 = vadd.f32 %v2494, %v2607
      %v2712 = vadd.f32 %v2495, %v2609
      %v2713 = vadd.f32 %v2496, %v2612
      %v2714 = vadd.f32 %v2497, %v2614
      %v2715 = vadd.f32 %v2498, %v2617
      %v2716 = vadd.f32 %v2499, %v2619
      %v2717 = vadd.f32 %v2500, %v2622
      %v2718 = vadd.f32 %v2501, %v2624
      %v2719 = vadd.f32 %v2502, %v2627
      %v2720 = vadd.f32 %v2503, %v2629
      %v2721 = vadd.f32 %v2504, %v2632
      %v2722 = vadd.f32 %v2505, %v2634
      %v2723 = vadd.f32 %v2506, %v2637
      %v2724 = vadd.f32 %v2507, %v2639
      %v2725 = vadd.f32 %v2508, %v2642
      %v2726 = vadd.f32 %v2509, %v2644
      %v2727 = vadd.f32 %v2510, %v2647
      %v2728 = vadd.f32 %v2511, %v2649
      %v2729 = vadd.f32 %v2512, %v2652
      %v2730 = vadd.f32 %v2513, %v2654
      %v2731 = vadd.f32 %v2514, %v2657
      %v2732 = vadd.f32 %v2515, %v2659
      %v2733 = vadd.f32 %v2516, %v2662
      %v2734 = vadd.f32 %v2517, %v2664
      %v2735 = vadd.f32 %v2518, %v2667
      %v2736 = vadd.f32 %v2519, %v2669
      %v2737 = vadd.f32 %v2520, %v2672
      %v2738 = vadd.f32 %v2521, %v2674
      %v2739 = vadd.f32 %v2522, %v2677
      %v2740 = vadd.f32 %v2523, %v2679
      %v2741 = vadd.f32 %v2524, %v2682
      %v2742 = vadd.f32 %v2525, %v2684
      %v2743 = vadd.f32 %v2526, %v2687
      %v2744 = vadd.f32 %v2527, %v2689
      %v2745 = vadd.f32 %v2528, %v2692
      %v2746 = vadd.f32 %v2529, %v2694
      %v2747 = vadd.f32 %v2530, %v2697
      %v2748 = vadd.f32 %v2531, %v2699
      %s2749 = scalar_lea.vmem %s2, 224
      %v2750 = vld [vmem:[%s2749] sm:$0xf]
      %v2751 = vld [vmem:[%s2749 + $0x4] sm:$0xf]
      %v2752 = vld [vmem:[%s2749 + $0x8] sm:$0xf]
      %v2753 = vld [vmem:[%s2749 + $0xc] sm:$0xf]
      %v2754 = vld [vmem:[%s2749 + $0x10] sm:$0xf]
      %v2755 = vld [vmem:[%s2749 + $0x14] sm:$0xf]
      %v2756 = vld [vmem:[%s2749 + $0x18] sm:$0xf]
      %v2757 = vld [vmem:[%s2749 + $0x1c] sm:$0xf]
      %v2758 = vor.u32 %v1912, %v718
      %v2759 = vrot.slane %v1922, 1
      %v2760 = vsel %vm523, %v2758, %v2759
      %v2761 = vor.u32 %v1919, %v2759
      %v2762 = vshll.u32 %v504, 16
      %v2764 = vrot.slane %v2762, 1
      %v2765 = vsel %vm523, %v2761, %v2764
      %v2766 = vshrl.u32 %v504, 16
      %v2768 = vor.u32 %v2766, %v2764
      %v2770 = vshll.u32 %v505, 16
      %v2772 = vrot.slane %v2770, 1
      %v2773 = vsel %vm523, %v2768, %v2772
      %v2782 = vunpack.c.l.b16 %v2750
      %v2783 = vunpack.c.l.b16 %v2751
      %v2784 = vunpack.c.l.b16 %v2752
      %v2785 = vunpack.c.l.b16 %v2753
      %v2786 = vunpack.c.l.b16 %v2754
      %v2787 = vunpack.c.l.b16 %v2755
      %v2788 = vunpack.c.l.b16 %v2756
      %v2789 = vunpack.c.l.b16 %v2757
      %v2790 = vpack.c.b16 %v2783, %v2782
      %v2791 = vpack.c.b16 %v2785, %v2784
      %v2792 = vpack.c.b16 %v2787, %v2786
      %v2793 = vpack.c.b16 %v2789, %v2788
      %v2799 = vsel %vm744, %v2760, 0
      %v2802 = vsel %vm744, %v2765, 0
      %v2805 = vsel %vm744, %v2773, 0
      %2807 = vmatpush.bf16.msra.mxu0 0
      %2808 = vmatpush.bf16.msra.mxu0 0
      %2809 = vmatpush.bf16.msra.mxu0 0
      %2810 = vmatpush.bf16.msra.mxu0 0
      %2811 = vmatpush.bf16.msra.mxu0 %v2793
      %2812 = vmatpush.bf16.msra.mxu0 %v2792
      %2813 = vmatpush.bf16.msra.mxu0 %v2791
      %2814 = vmatpush.bf16.msra.mxu0 %v2790
      %2815 = vmatmul.bf16.gmra.mxu0 %v755
      %v2816 = vpop.f32.mrf.mxu0
      %v2817 = vadd.f32 0.0, %v2816
      %v2818 = vpop.f32.mrf.mxu0
      %v2819 = vadd.f32 0.0, %v2818
      %2820 = vmatmul.bf16.gmra.mxu0 %v758
      %v2821 = vpop.f32.mrf.mxu0
      %v2822 = vadd.f32 0.0, %v2821
      %v2823 = vpop.f32.mrf.mxu0
      %v2824 = vadd.f32 0.0, %v2823
      %2825 = vmatmul.bf16.gmra.mxu0 %v761
      %v2826 = vpop.f32.mrf.mxu0
      %v2827 = vadd.f32 0.0, %v2826
      %v2828 = vpop.f32.mrf.mxu0
      %v2829 = vadd.f32 0.0, %v2828
      %2830 = vmatmul.bf16.gmra.mxu0 %v764
      %v2831 = vpop.f32.mrf.mxu0
      %v2832 = vadd.f32 0.0, %v2831
      %v2833 = vpop.f32.mrf.mxu0
      %v2834 = vadd.f32 0.0, %v2833
      %2835 = vmatmul.bf16.gmra.mxu0 %v767
      %v2836 = vpop.f32.mrf.mxu0
      %v2837 = vadd.f32 0.0, %v2836
      %v2838 = vpop.f32.mrf.mxu0
      %v2839 = vadd.f32 0.0, %v2838
      %2840 = vmatmul.bf16.gmra.mxu0 %v770
      %v2841 = vpop.f32.mrf.mxu0
      %v2842 = vadd.f32 0.0, %v2841
      %v2843 = vpop.f32.mrf.mxu0
      %v2844 = vadd.f32 0.0, %v2843
      %2845 = vmatmul.bf16.gmra.mxu0 %v773
      %v2846 = vpop.f32.mrf.mxu0
      %v2847 = vadd.f32 0.0, %v2846
      %v2848 = vpop.f32.mrf.mxu0
      %v2849 = vadd.f32 0.0, %v2848
      %2850 = vmatmul.bf16.gmra.mxu0 %v776
      %v2851 = vpop.f32.mrf.mxu0
      %v2852 = vadd.f32 0.0, %v2851
      %v2853 = vpop.f32.mrf.mxu0
      %v2854 = vadd.f32 0.0, %v2853
      %2855 = vmatmul.bf16.gmra.mxu0 %v779
      %v2856 = vpop.f32.mrf.mxu0
      %v2857 = vadd.f32 0.0, %v2856
      %v2858 = vpop.f32.mrf.mxu0
      %v2859 = vadd.f32 0.0, %v2858
      %2860 = vmatmul.bf16.gmra.mxu0 %v782
      %v2861 = vpop.f32.mrf.mxu0
      %v2862 = vadd.f32 0.0, %v2861
      %v2863 = vpop.f32.mrf.mxu0
      %v2864 = vadd.f32 0.0, %v2863
      %2865 = vmatmul.bf16.gmra.mxu0 %v785
      %v2866 = vpop.f32.mrf.mxu0
      %v2867 = vadd.f32 0.0, %v2866
      %v2868 = vpop.f32.mrf.mxu0
      %v2869 = vadd.f32 0.0, %v2868
      %2870 = vmatmul.bf16.gmra.mxu0 %v788
      %v2871 = vpop.f32.mrf.mxu0
      %v2872 = vadd.f32 0.0, %v2871
      %v2873 = vpop.f32.mrf.mxu0
      %v2874 = vadd.f32 0.0, %v2873
      %2875 = vmatmul.bf16.gmra.mxu0 %v791
      %v2876 = vpop.f32.mrf.mxu0
      %v2877 = vadd.f32 0.0, %v2876
      %v2878 = vpop.f32.mrf.mxu0
      %v2879 = vadd.f32 0.0, %v2878
      %2880 = vmatmul.bf16.gmra.mxu0 %v794
      %v2881 = vpop.f32.mrf.mxu0
      %v2882 = vadd.f32 0.0, %v2881
      %v2883 = vpop.f32.mrf.mxu0
      %v2884 = vadd.f32 0.0, %v2883
      %2885 = vmatmul.bf16.gmra.mxu0 %v797
      %v2886 = vpop.f32.mrf.mxu0
      %v2887 = vadd.f32 0.0, %v2886
      %v2888 = vpop.f32.mrf.mxu0
      %v2889 = vadd.f32 0.0, %v2888
      %2890 = vmatmul.bf16.gmra.mxu0 %v800
      %v2891 = vpop.f32.mrf.mxu0
      %v2892 = vadd.f32 0.0, %v2891
      %v2893 = vpop.f32.mrf.mxu0
      %v2894 = vadd.f32 0.0, %v2893
      %2895 = vmatmul.bf16.gmra.mxu0 %v803
      %v2896 = vpop.f32.mrf.mxu0
      %v2897 = vadd.f32 0.0, %v2896
      %v2898 = vpop.f32.mrf.mxu0
      %v2899 = vadd.f32 0.0, %v2898
      %2900 = vmatmul.bf16.gmra.mxu0 %v806
      %v2901 = vpop.f32.mrf.mxu0
      %v2902 = vadd.f32 0.0, %v2901
      %v2903 = vpop.f32.mrf.mxu0
      %v2904 = vadd.f32 0.0, %v2903
      %2905 = vmatmul.bf16.gmra.mxu0 %v809
      %v2906 = vpop.f32.mrf.mxu0
      %v2907 = vadd.f32 0.0, %v2906
      %v2908 = vpop.f32.mrf.mxu0
      %v2909 = vadd.f32 0.0, %v2908
      %2910 = vmatmul.bf16.gmra.mxu0 %v812
      %v2911 = vpop.f32.mrf.mxu0
      %v2912 = vadd.f32 0.0, %v2911
      %v2913 = vpop.f32.mrf.mxu0
      %v2914 = vadd.f32 0.0, %v2913
      %2915 = vmatmul.bf16.gmra.mxu0 %v815
      %v2916 = vpop.f32.mrf.mxu0
      %v2917 = vadd.f32 0.0, %v2916
      %v2918 = vpop.f32.mrf.mxu0
      %v2919 = vadd.f32 0.0, %v2918
      %2920 = vmatmul.bf16.gmra.mxu0 %v2799
      %v2921 = vpop.f32.mrf.mxu0
      %v2922 = vadd.f32 0.0, %v2921
      %v2923 = vpop.f32.mrf.mxu0
      %v2924 = vadd.f32 0.0, %v2923
      %2925 = vmatmul.bf16.gmra.mxu0 %v2802
      %v2926 = vpop.f32.mrf.mxu0
      %v2927 = vadd.f32 0.0, %v2926
      %v2928 = vpop.f32.mrf.mxu0
      %v2929 = vadd.f32 0.0, %v2928
      %2930 = vmatmul.bf16.gmra.mxu0 %v2805
      %v2931 = vpop.f32.mrf.mxu0
      %v2932 = vadd.f32 0.0, %v2931
      %v2933 = vpop.f32.mrf.mxu0
      %v2934 = vadd.f32 0.0, %v2933
      %2935 = vdwg.mxu0
      %v2936 = vadd.f32 %v2701, %v2817
      %v2937 = vadd.f32 %v2702, %v2819
      %v2938 = vadd.f32 %v2703, %v2822
      %v2939 = vadd.f32 %v2704, %v2824
      %v2940 = vadd.f32 %v2705, %v2827
      %v2941 = vadd.f32 %v2706, %v2829
      %v2942 = vadd.f32 %v2707, %v2832
      %v2943 = vadd.f32 %v2708, %v2834
      %v2944 = vadd.f32 %v2709, %v2837
      %v2945 = vadd.f32 %v2710, %v2839
      %v2946 = vadd.f32 %v2711, %v2842
      %v2947 = vadd.f32 %v2712, %v2844
      %v2948 = vadd.f32 %v2713, %v2847
      %v2949 = vadd.f32 %v2714, %v2849
      %v2950 = vadd.f32 %v2715, %v2852
      %v2951 = vadd.f32 %v2716, %v2854
      %v2952 = vadd.f32 %v2717, %v2857
      %v2953 = vadd.f32 %v2718, %v2859
      %v2954 = vadd.f32 %v2719, %v2862
      %v2955 = vadd.f32 %v2720, %v2864
      %v2956 = vadd.f32 %v2721, %v2867
      %v2957 = vadd.f32 %v2722, %v2869
      %v2958 = vadd.f32 %v2723, %v2872
      %v2959 = vadd.f32 %v2724, %v2874
      %v2960 = vadd.f32 %v2725, %v2877
      %v2961 = vadd.f32 %v2726, %v2879
      %v2962 = vadd.f32 %v2727, %v2882
      %v2963 = vadd.f32 %v2728, %v2884
      %v2964 = vadd.f32 %v2729, %v2887
      %v2965 = vadd.f32 %v2730, %v2889
      %v2966 = vadd.f32 %v2731, %v2892
      %v2967 = vadd.f32 %v2732, %v2894
      %v2968 = vadd.f32 %v2733, %v2897
      %v2969 = vadd.f32 %v2734, %v2899
      %v2970 = vadd.f32 %v2735, %v2902
      %v2971 = vadd.f32 %v2736, %v2904
      %v2972 = vadd.f32 %v2737, %v2907
      %v2973 = vadd.f32 %v2738, %v2909
      %v2974 = vadd.f32 %v2739, %v2912
      %v2975 = vadd.f32 %v2740, %v2914
      %v2976 = vadd.f32 %v2741, %v2917
      %v2977 = vadd.f32 %v2742, %v2919
      %v2978 = vadd.f32 %v2743, %v2922
      %v2979 = vadd.f32 %v2744, %v2924
      %v2980 = vadd.f32 %v2745, %v2927
      %v2981 = vadd.f32 %v2746, %v2929
      %v2982 = vadd.f32 %v2747, %v2932
      %v2983 = vadd.f32 %v2748, %v2934
      %s2984 = scalar_lea.vmem %s2, 256
      %v2985 = vld [vmem:[%s2984] sm:$0xf]
      %v2986 = vld [vmem:[%s2984 + $0x4] sm:$0xf]
      %v2987 = vld [vmem:[%s2984 + $0x8] sm:$0xf]
      %v2988 = vld [vmem:[%s2984 + $0xc] sm:$0xf]
      %v2989 = vld [vmem:[%s2984 + $0x10] sm:$0xf]
      %v2990 = vld [vmem:[%s2984 + $0x14] sm:$0xf]
      %v2991 = vld [vmem:[%s2984 + $0x18] sm:$0xf]
      %v2992 = vld [vmem:[%s2984 + $0x1c] sm:$0xf]
      %v2993 = vrot.slane %v503, 1
      %v2994 = vsel %vm1156, %v1204, %v2993
      %v2995 = vrot.slane %v504, 1
      %v2996 = vsel %vm1156, %v2993, %v2995
      %v2997 = vrot.slane %v505, 1
      %v2998 = vsel %vm1156, %v2995, %v2997
      %v3007 = vunpack.c.l.b16 %v2985
      %v3008 = vunpack.c.l.b16 %v2986
      %v3009 = vunpack.c.l.b16 %v2987
      %v3010 = vunpack.c.l.b16 %v2988
      %v3011 = vunpack.c.l.b16 %v2989
      %v3012 = vunpack.c.l.b16 %v2990
      %v3013 = vunpack.c.l.b16 %v2991
      %v3014 = vunpack.c.l.b16 %v2992
      %v3015 = vpack.c.b16 %v3008, %v3007
      %v3016 = vpack.c.b16 %v3010, %v3009
      %v3017 = vpack.c.b16 %v3012, %v3011
      %v3018 = vpack.c.b16 %v3014, %v3013
      %v3024 = vsel %vm744, %v2994, 0
      %v3027 = vsel %vm744, %v2996, 0
      %v3030 = vsel %vm744, %v2998, 0
      %3032 = vmatpush.bf16.msra.mxu0 0
      %3033 = vmatpush.bf16.msra.mxu0 0
      %3034 = vmatpush.bf16.msra.mxu0 0
      %3035 = vmatpush.bf16.msra.mxu0 0
      %3036 = vmatpush.bf16.msra.mxu0 %v3018
      %3037 = vmatpush.bf16.msra.mxu0 %v3017
      %3038 = vmatpush.bf16.msra.mxu0 %v3016
      %3039 = vmatpush.bf16.msra.mxu0 %v3015
      %3040 = vmatmul.bf16.gmra.mxu0 %v1240
      %v3041 = vpop.f32.mrf.mxu0
      %v3042 = vadd.f32 0.0, %v3041
      %v3043 = vpop.f32.mrf.mxu0
      %v3044 = vadd.f32 0.0, %v3043
      %3045 = vmatmul.bf16.gmra.mxu0 %v1243
      %v3046 = vpop.f32.mrf.mxu0
      %v3047 = vadd.f32 0.0, %v3046
      %v3048 = vpop.f32.mrf.mxu0
      %v3049 = vadd.f32 0.0, %v3048
      %3050 = vmatmul.bf16.gmra.mxu0 %v1246
      %v3051 = vpop.f32.mrf.mxu0
      %v3052 = vadd.f32 0.0, %v3051
      %v3053 = vpop.f32.mrf.mxu0
      %v3054 = vadd.f32 0.0, %v3053
      %3055 = vmatmul.bf16.gmra.mxu0 %v1249
      %v3056 = vpop.f32.mrf.mxu0
      %v3057 = vadd.f32 0.0, %v3056
      %v3058 = vpop.f32.mrf.mxu0
      %v3059 = vadd.f32 0.0, %v3058
      %3060 = vmatmul.bf16.gmra.mxu0 %v1252
      %v3061 = vpop.f32.mrf.mxu0
      %v3062 = vadd.f32 0.0, %v3061
      %v3063 = vpop.f32.mrf.mxu0
      %v3064 = vadd.f32 0.0, %v3063
      %3065 = vmatmul.bf16.gmra.mxu0 %v1255
      %v3066 = vpop.f32.mrf.mxu0
      %v3067 = vadd.f32 0.0, %v3066
      %v3068 = vpop.f32.mrf.mxu0
      %v3069 = vadd.f32 0.0, %v3068
      %3070 = vmatmul.bf16.gmra.mxu0 %v1258
      %v3071 = vpop.f32.mrf.mxu0
      %v3072 = vadd.f32 0.0, %v3071
      %v3073 = vpop.f32.mrf.mxu0
      %v3074 = vadd.f32 0.0, %v3073
      %3075 = vmatmul.bf16.gmra.mxu0 %v1261
      %v3076 = vpop.f32.mrf.mxu0
      %v3077 = vadd.f32 0.0, %v3076
      %v3078 = vpop.f32.mrf.mxu0
      %v3079 = vadd.f32 0.0, %v3078
      %3080 = vmatmul.bf16.gmra.mxu0 %v1264
      %v3081 = vpop.f32.mrf.mxu0
      %v3082 = vadd.f32 0.0, %v3081
      %v3083 = vpop.f32.mrf.mxu0
      %v3084 = vadd.f32 0.0, %v3083
      %3085 = vmatmul.bf16.gmra.mxu0 %v1267
      %v3086 = vpop.f32.mrf.mxu0
      %v3087 = vadd.f32 0.0, %v3086
      %v3088 = vpop.f32.mrf.mxu0
      %v3089 = vadd.f32 0.0, %v3088
      %3090 = vmatmul.bf16.gmra.mxu0 %v1270
      %v3091 = vpop.f32.mrf.mxu0
      %v3092 = vadd.f32 0.0, %v3091
      %v3093 = vpop.f32.mrf.mxu0
      %v3094 = vadd.f32 0.0, %v3093
      %3095 = vmatmul.bf16.gmra.mxu0 %v1273
      %v3096 = vpop.f32.mrf.mxu0
      %v3097 = vadd.f32 0.0, %v3096
      %v3098 = vpop.f32.mrf.mxu0
      %v3099 = vadd.f32 0.0, %v3098
      %3100 = vmatmul.bf16.gmra.mxu0 %v1276
      %v3101 = vpop.f32.mrf.mxu0
      %v3102 = vadd.f32 0.0, %v3101
      %v3103 = vpop.f32.mrf.mxu0
      %v3104 = vadd.f32 0.0, %v3103
      %3105 = vmatmul.bf16.gmra.mxu0 %v1279
      %v3106 = vpop.f32.mrf.mxu0
      %v3107 = vadd.f32 0.0, %v3106
      %v3108 = vpop.f32.mrf.mxu0
      %v3109 = vadd.f32 0.0, %v3108
      %3110 = vmatmul.bf16.gmra.mxu0 %v1282
      %v3111 = vpop.f32.mrf.mxu0
      %v3112 = vadd.f32 0.0, %v3111
      %v3113 = vpop.f32.mrf.mxu0
      %v3114 = vadd.f32 0.0, %v3113
      %3115 = vmatmul.bf16.gmra.mxu0 %v1285
      %v3116 = vpop.f32.mrf.mxu0
      %v3117 = vadd.f32 0.0, %v3116
      %v3118 = vpop.f32.mrf.mxu0
      %v3119 = vadd.f32 0.0, %v3118
      %3120 = vmatmul.bf16.gmra.mxu0 %v1288
      %v3121 = vpop.f32.mrf.mxu0
      %v3122 = vadd.f32 0.0, %v3121
      %v3123 = vpop.f32.mrf.mxu0
      %v3124 = vadd.f32 0.0, %v3123
      %3125 = vmatmul.bf16.gmra.mxu0 %v1291
      %v3126 = vpop.f32.mrf.mxu0
      %v3127 = vadd.f32 0.0, %v3126
      %v3128 = vpop.f32.mrf.mxu0
      %v3129 = vadd.f32 0.0, %v3128
      %3130 = vmatmul.bf16.gmra.mxu0 %v1294
      %v3131 = vpop.f32.mrf.mxu0
      %v3132 = vadd.f32 0.0, %v3131
      %v3133 = vpop.f32.mrf.mxu0
      %v3134 = vadd.f32 0.0, %v3133
      %3135 = vmatmul.bf16.gmra.mxu0 %v1297
      %v3136 = vpop.f32.mrf.mxu0
      %v3137 = vadd.f32 0.0, %v3136
      %v3138 = vpop.f32.mrf.mxu0
      %v3139 = vadd.f32 0.0, %v3138
      %3140 = vmatmul.bf16.gmra.mxu0 %v1300
      %v3141 = vpop.f32.mrf.mxu0
      %v3142 = vadd.f32 0.0, %v3141
      %v3143 = vpop.f32.mrf.mxu0
      %v3144 = vadd.f32 0.0, %v3143
      %3145 = vmatmul.bf16.gmra.mxu0 %v3024
      %v3146 = vpop.f32.mrf.mxu0
      %v3147 = vadd.f32 0.0, %v3146
      %v3148 = vpop.f32.mrf.mxu0
      %v3149 = vadd.f32 0.0, %v3148
      %3150 = vmatmul.bf16.gmra.mxu0 %v3027
      %v3151 = vpop.f32.mrf.mxu0
      %v3152 = vadd.f32 0.0, %v3151
      %v3153 = vpop.f32.mrf.mxu0
      %v3154 = vadd.f32 0.0, %v3153
      %3155 = vmatmul.bf16.gmra.mxu0 %v3030
      %v3156 = vpop.f32.mrf.mxu0
      %v3157 = vadd.f32 0.0, %v3156
      %v3158 = vpop.f32.mrf.mxu0
      %v3159 = vadd.f32 0.0, %v3158
      %3160 = vdwg.mxu0
      %v3161 = vadd.f32 %v2936, %v3042
      %v3162 = vadd.f32 %v2937, %v3044
      %v3163 = vadd.f32 %v2938, %v3047
      %v3164 = vadd.f32 %v2939, %v3049
      %v3165 = vadd.f32 %v2940, %v3052
      %v3166 = vadd.f32 %v2941, %v3054
      %v3167 = vadd.f32 %v2942, %v3057
      %v3168 = vadd.f32 %v2943, %v3059
      %v3169 = vadd.f32 %v2944, %v3062
      %v3170 = vadd.f32 %v2945, %v3064
      %v3171 = vadd.f32 %v2946, %v3067
      %v3172 = vadd.f32 %v2947, %v3069
      %v3173 = vadd.f32 %v2948, %v3072
      %v3174 = vadd.f32 %v2949, %v3074
      %v3175 = vadd.f32 %v2950, %v3077
      %v3176 = vadd.f32 %v2951, %v3079
      %v3177 = vadd.f32 %v2952, %v3082
      %v3178 = vadd.f32 %v2953, %v3084
      %v3179 = vadd.f32 %v2954, %v3087
      %v3180 = vadd.f32 %v2955, %v3089
      %v3181 = vadd.f32 %v2956, %v3092
      %v3182 = vadd.f32 %v2957, %v3094
      %v3183 = vadd.f32 %v2958, %v3097
      %v3184 = vadd.f32 %v2959, %v3099
      %v3185 = vadd.f32 %v2960, %v3102
      %v3186 = vadd.f32 %v2961, %v3104
      %v3187 = vadd.f32 %v2962, %v3107
      %v3188 = vadd.f32 %v2963, %v3109
      %v3189 = vadd.f32 %v2964, %v3112
      %v3190 = vadd.f32 %v2965, %v3114
      %v3191 = vadd.f32 %v2966, %v3117
      %v3192 = vadd.f32 %v2967, %v3119
      %v3193 = vadd.f32 %v2968, %v3122
      %v3194 = vadd.f32 %v2969, %v3124
      %v3195 = vadd.f32 %v2970, %v3127
      %v3196 = vadd.f32 %v2971, %v3129
      %v3197 = vadd.f32 %v2972, %v3132
      %v3198 = vadd.f32 %v2973, %v3134
      %v3199 = vadd.f32 %v2974, %v3137
      %v3200 = vadd.f32 %v2975, %v3139
      %v3201 = vadd.f32 %v2976, %v3142
      %v3202 = vadd.f32 %v2977, %v3144
      %v3203 = vadd.f32 %v2978, %v3147
      %v3204 = vadd.f32 %v2979, %v3149
      %v3205 = vadd.f32 %v2980, %v3152
      %v3206 = vadd.f32 %v2981, %v3154
      %v3207 = vadd.f32 %v2982, %v3157
      %v3208 = vadd.f32 %v2983, %v3159
      %v3209 = vld [vmem:[%s3] sm:$0x1]
      %v3211 = vperm.slane %v3209, 0
      %v3213 = vadd.f32 %v3161, %v3211
      %v3214 = vadd.f32 %v3162, %v3211
      %v3215 = vadd.f32 %v3163, %v3211
      %v3216 = vadd.f32 %v3164, %v3211
      %v3217 = vadd.f32 %v3165, %v3211
      %v3218 = vadd.f32 %v3166, %v3211
      %v3219 = vadd.f32 %v3167, %v3211
      %v3220 = vadd.f32 %v3168, %v3211
      %v3221 = vadd.f32 %v3169, %v3211
      %v3222 = vadd.f32 %v3170, %v3211
      %v3223 = vadd.f32 %v3171, %v3211
      %v3224 = vadd.f32 %v3172, %v3211
      %v3225 = vadd.f32 %v3173, %v3211
      %v3226 = vadd.f32 %v3174, %v3211
      %v3227 = vadd.f32 %v3175, %v3211
      %v3228 = vadd.f32 %v3176, %v3211
      %v3229 = vadd.f32 %v3177, %v3211
      %v3230 = vadd.f32 %v3178, %v3211
      %v3231 = vadd.f32 %v3179, %v3211
      %v3232 = vadd.f32 %v3180, %v3211
      %v3233 = vadd.f32 %v3181, %v3211
      %v3234 = vadd.f32 %v3182, %v3211
      %v3235 = vadd.f32 %v3183, %v3211
      %v3236 = vadd.f32 %v3184, %v3211
      %v3237 = vadd.f32 %v3185, %v3211
      %v3238 = vadd.f32 %v3186, %v3211
      %v3239 = vadd.f32 %v3187, %v3211
      %v3240 = vadd.f32 %v3188, %v3211
      %v3241 = vadd.f32 %v3189, %v3211
      %v3242 = vadd.f32 %v3190, %v3211
      %v3243 = vadd.f32 %v3191, %v3211
      %v3244 = vadd.f32 %v3192, %v3211
      %v3245 = vadd.f32 %v3193, %v3211
      %v3246 = vadd.f32 %v3194, %v3211
      %v3247 = vadd.f32 %v3195, %v3211
      %v3248 = vadd.f32 %v3196, %v3211
      %v3249 = vadd.f32 %v3197, %v3211
      %v3250 = vadd.f32 %v3198, %v3211
      %v3251 = vadd.f32 %v3199, %v3211
      %v3252 = vadd.f32 %v3200, %v3211
      %v3253 = vadd.f32 %v3201, %v3211
      %v3254 = vadd.f32 %v3202, %v3211
      %v3255 = vadd.f32 %v3203, %v3211
      %v3256 = vadd.f32 %v3204, %v3211
      %v3257 = vadd.f32 %v3205, %v3211
      %v3258 = vadd.f32 %v3206, %v3211
      %v3259 = vadd.f32 %v3207, %v3211
      %v3260 = vadd.f32 %v3208, %v3211
      %v3261 = vmax.f32 %v3213, 0.0
      %v3262 = vmax.f32 %v3214, 0.0
      %v3263 = vmax.f32 %v3215, 0.0
      %v3264 = vmax.f32 %v3216, 0.0
      %v3265 = vmax.f32 %v3217, 0.0
      %v3266 = vmax.f32 %v3218, 0.0
      %v3267 = vmax.f32 %v3219, 0.0
      %v3268 = vmax.f32 %v3220, 0.0
      %v3269 = vmax.f32 %v3221, 0.0
      %v3270 = vmax.f32 %v3222, 0.0
      %v3271 = vmax.f32 %v3223, 0.0
      %v3272 = vmax.f32 %v3224, 0.0
      %v3273 = vmax.f32 %v3225, 0.0
      %v3274 = vmax.f32 %v3226, 0.0
      %v3275 = vmax.f32 %v3227, 0.0
      %v3276 = vmax.f32 %v3228, 0.0
      %v3277 = vmax.f32 %v3229, 0.0
      %v3278 = vmax.f32 %v3230, 0.0
      %v3279 = vmax.f32 %v3231, 0.0
      %v3280 = vmax.f32 %v3232, 0.0
      %v3281 = vmax.f32 %v3233, 0.0
      %v3282 = vmax.f32 %v3234, 0.0
      %v3283 = vmax.f32 %v3235, 0.0
      %v3284 = vmax.f32 %v3236, 0.0
      %v3285 = vmax.f32 %v3237, 0.0
      %v3286 = vmax.f32 %v3238, 0.0
      %v3287 = vmax.f32 %v3239, 0.0
      %v3288 = vmax.f32 %v3240, 0.0
      %v3289 = vmax.f32 %v3241, 0.0
      %v3290 = vmax.f32 %v3242, 0.0
      %v3291 = vmax.f32 %v3243, 0.0
      %v3292 = vmax.f32 %v3244, 0.0
      %v3293 = vmax.f32 %v3245, 0.0
      %v3294 = vmax.f32 %v3246, 0.0
      %v3295 = vmax.f32 %v3247, 0.0
      %v3296 = vmax.f32 %v3248, 0.0
      %v3297 = vmax.f32 %v3249, 0.0
      %v3298 = vmax.f32 %v3250, 0.0
      %v3299 = vmax.f32 %v3251, 0.0
      %v3300 = vmax.f32 %v3252, 0.0
      %v3301 = vmax.f32 %v3253, 0.0
      %v3302 = vmax.f32 %v3254, 0.0
      %v3303 = vmax.f32 %v3255, 0.0
      %v3304 = vmax.f32 %v3256, 0.0
      %v3305 = vmax.f32 %v3257, 0.0
      %v3306 = vmax.f32 %v3258, 0.0
      %v3307 = vmax.f32 %v3259, 0.0
      %v3308 = vmax.f32 %v3260, 0.0
      %v3309 = vmax.f32 %v3261, %v3264
      %v3310 = vmax.f32 %v3262, %v3265
      %v3311 = vmax.f32 %v3263, %v3266
      %v3312 = vmax.f32 %v3267, %v3270
      %v3313 = vmax.f32 %v3268, %v3271
      %v3314 = vmax.f32 %v3269, %v3272
      %v3315 = vmax.f32 %v3273, %v3276
      %v3316 = vmax.f32 %v3274, %v3277
      %v3317 = vmax.f32 %v3275, %v3278
      %v3318 = vmax.f32 %v3279, %v3282
      %v3319 = vmax.f32 %v3280, %v3283
      %v3320 = vmax.f32 %v3281, %v3284
      %v3321 = vmax.f32 %v3285, %v3288
      %v3322 = vmax.f32 %v3286, %v3289
      %v3323 = vmax.f32 %v3287, %v3290
      %v3324 = vmax.f32 %v3291, %v3294
      %v3325 = vmax.f32 %v3292, %v3295
      %v3326 = vmax.f32 %v3293, %v3296
      %v3327 = vmax.f32 %v3297, %v3300
      %v3328 = vmax.f32 %v3298, %v3301
      %v3329 = vmax.f32 %v3299, %v3302
      %v3330 = vmax.f32 %v3303, %v3306
      %v3331 = vmax.f32 %v3304, %v3307
      %v3332 = vmax.f32 %v3305, %v3308
      %3333 = vst.msk [vmem:[#allocation2] sm:$0xff] %vm744, %v3309
      %3334 = vst.msk [vmem:[#allocation2 + $0x8] sm:$0xff] %vm744, %v3310
      %3335 = vst.msk [vmem:[#allocation2 + $0x10] sm:$0xff] %vm744, %v3311
      %3336 = vst.msk [vmem:[#allocation2 + $0x18] sm:$0xff] %vm744, %v3312
      %3337 = vst.msk [vmem:[#allocation2 + $0x20] sm:$0xff] %vm744, %v3313
      %3338 = vst.msk [vmem:[#allocation2 + $0x28] sm:$0xff] %vm744, %v3314
      %3339 = vst.msk [vmem:[#allocation2 + $0x30] sm:$0xff] %vm744, %v3315
      %3340 = vst.msk [vmem:[#allocation2 + $0x38] sm:$0xff] %vm744, %v3316
      %3341 = vst.msk [vmem:[#allocation2 + $0x40] sm:$0xff] %vm744, %v3317
      %3342 = vst.msk [vmem:[#allocation2 + $0x48] sm:$0xff] %vm744, %v3318
      %3343 = vst.msk [vmem:[#allocation2 + $0x50] sm:$0xff] %vm744, %v3319
      %3344 = vst.msk [vmem:[#allocation2 + $0x58] sm:$0xff] %vm744, %v3320
      %3345 = vst.msk [vmem:[#allocation2 + $0x60] sm:$0xff] %vm744, %v3321
      %3346 = vst.msk [vmem:[#allocation2 + $0x68] sm:$0xff] %vm744, %v3322
      %3347 = vst.msk [vmem:[#allocation2 + $0x70] sm:$0xff] %vm744, %v3323
      %3348 = vst.msk [vmem:[#allocation2 + $0x78] sm:$0xff] %vm744, %v3324
      %3349 = vst.msk [vmem:[#allocation2 + $0x80] sm:$0xff] %vm744, %v3325
      %3350 = vst.msk [vmem:[#allocation2 + $0x88] sm:$0xff] %vm744, %v3326
      %3351 = vst.msk [vmem:[#allocation2 + $0x90] sm:$0xff] %vm744, %v3327
      %3352 = vst.msk [vmem:[#allocation2 + $0x98] sm:$0xff] %vm744, %v3328
      %3353 = vst.msk [vmem:[#allocation2 + $0xa0] sm:$0xff] %vm744, %v3329
      %3354 = vst.msk [vmem:[#allocation2 + $0xa8] sm:$0xff] %vm744, %v3330
      %3355 = vst.msk [vmem:[#allocation2 + $0xb0] sm:$0xff] %vm744, %v3331
      %3356 = vst.msk [vmem:[#allocation2 + $0xb8] sm:$0xff] %vm744, %v3332
      %v3357 = vld [vmem:[#allocation2] ss:$2 sm:$0xff]
      %s3358 = scalar_lea.vmem [#allocation2], 16
      %v3359 = vld [vmem:[%s3358] ss:$2 sm:$0xf]
      %s3360 = scalar_lea.vmem [#allocation2], 24
      %v3361 = vld [vmem:[%s3360] ss:$2 sm:$0xff]
      %s3362 = scalar_lea.vmem [#allocation2], 40
      %v3363 = vld [vmem:[%s3362] ss:$2 sm:$0xf]
      %s3364 = scalar_lea.vmem [#allocation2], 48
      %v3365 = vld [vmem:[%s3364] ss:$2 sm:$0xff]
      %s3366 = scalar_lea.vmem [#allocation2], 64
      %v3367 = vld [vmem:[%s3366] ss:$2 sm:$0xf]
      %s3368 = scalar_lea.vmem [#allocation2], 72
      %v3369 = vld [vmem:[%s3368] ss:$2 sm:$0xff]
      %s3370 = scalar_lea.vmem [#allocation2], 88
      %v3371 = vld [vmem:[%s3370] ss:$2 sm:$0xf]
      %s3372 = scalar_lea.vmem [#allocation2], 96
      %v3373 = vld [vmem:[%s3372] ss:$2 sm:$0xff]
      %s3374 = scalar_lea.vmem [#allocation2], 112
      %v3375 = vld [vmem:[%s3374] ss:$2 sm:$0xf]
      %s3376 = scalar_lea.vmem [#allocation2], 120
      %v3377 = vld [vmem:[%s3376] ss:$2 sm:$0xff]
      %s3378 = scalar_lea.vmem [#allocation2], 136
      %v3379 = vld [vmem:[%s3378] ss:$2 sm:$0xf]
      %s3380 = scalar_lea.vmem [#allocation2], 144
      %v3381 = vld [vmem:[%s3380] ss:$2 sm:$0xff]
      %s3382 = scalar_lea.vmem [#allocation2], 160
      %v3383 = vld [vmem:[%s3382] ss:$2 sm:$0xf]
      %s3384 = scalar_lea.vmem [#allocation2], 168
      %v3385 = vld [vmem:[%s3384] ss:$2 sm:$0xff]
      %s3386 = scalar_lea.vmem [#allocation2], 184
      %v3387 = vld [vmem:[%s3386] ss:$2 sm:$0xf]
      %s3388 = scalar_lea.vmem [#allocation2], 1
      %v3389 = vld [vmem:[%s3388] ss:$2 sm:$0xff]
      %s3390 = scalar_lea.vmem [#allocation2], 17
      %v3391 = vld [vmem:[%s3390] ss:$2 sm:$0xf]
      %s3392 = scalar_lea.vmem [#allocation2], 25
      %v3393 = vld [vmem:[%s3392] ss:$2 sm:$0xff]
      %s3394 = scalar_lea.vmem [#allocation2], 41
      %v3395 = vld [vmem:[%s3394] ss:$2 sm:$0xf]
      %s3396 = scalar_lea.vmem [#allocation2], 49
      %v3397 = vld [vmem:[%s3396] ss:$2 sm:$0xff]
      %s3398 = scalar_lea.vmem [#allocation2], 65
      %v3399 = vld [vmem:[%s3398] ss:$2 sm:$0xf]
      %s3400 = scalar_lea.vmem [#allocation2], 73
      %v3401 = vld [vmem:[%s3400] ss:$2 sm:$0xff]
      %s3402 = scalar_lea.vmem [#allocation2], 89
      %v3403 = vld [vmem:[%s3402] ss:$2 sm:$0xf]
      %s3404 = scalar_lea.vmem [#allocation2], 97
      %v3405 = vld [vmem:[%s3404] ss:$2 sm:$0xff]
      %s3406 = scalar_lea.vmem [#allocation2], 113
      %v3407 = vld [vmem:[%s3406] ss:$2 sm:$0xf]
      %s3408 = scalar_lea.vmem [#allocation2], 121
      %v3409 = vld [vmem:[%s3408] ss:$2 sm:$0xff]
      %s3410 = scalar_lea.vmem [#allocation2], 137
      %v3411 = vld [vmem:[%s3410] ss:$2 sm:$0xf]
      %s3412 = scalar_lea.vmem [#allocation2], 145
      %v3413 = vld [vmem:[%s3412] ss:$2 sm:$0xff]
      %s3414 = scalar_lea.vmem [#allocation2], 161
      %v3415 = vld [vmem:[%s3414] ss:$2 sm:$0xf]
      %s3416 = scalar_lea.vmem [#allocation2], 169
      %v3417 = vld [vmem:[%s3416] ss:$2 sm:$0xff]
      %s3418 = scalar_lea.vmem [#allocation2], 185
      %v3419 = vld [vmem:[%s3418] ss:$2 sm:$0xf]
      %v3420 = vmax.f32 %v3357, %v3389
      %v3421 = vmax.f32 %v3359, %v3391
      %v3422 = vmax.f32 %v3361, %v3393
      %v3423 = vmax.f32 %v3363, %v3395
      %v3424 = vmax.f32 %v3365, %v3397
      %v3425 = vmax.f32 %v3367, %v3399
      %v3426 = vmax.f32 %v3369, %v3401
      %v3427 = vmax.f32 %v3371, %v3403
      %v3428 = vmax.f32 %v3373, %v3405
      %v3429 = vmax.f32 %v3375, %v3407
      %v3430 = vmax.f32 %v3377, %v3409
      %v3431 = vmax.f32 %v3379, %v3411
      %v3432 = vmax.f32 %v3381, %v3413
      %v3433 = vmax.f32 %v3383, %v3415
      %v3434 = vmax.f32 %v3385, %v3417
      %v3435 = vmax.f32 %v3387, %v3419
      %v3436 = vpack.c.bf16 %v3420, %v3420
      %v3437 = vpack.c.bf16 %v3421, %v3421
      %v3438 = vpack.c.bf16 %v3422, %v3422
      %v3439 = vpack.c.bf16 %v3423, %v3423
      %v3440 = vpack.c.bf16 %v3424, %v3424
      %v3441 = vpack.c.bf16 %v3425, %v3425
      %v3442 = vpack.c.bf16 %v3426, %v3426
      %v3443 = vpack.c.bf16 %v3427, %v3427
      %v3444 = vpack.c.bf16 %v3428, %v3428
      %v3445 = vpack.c.bf16 %v3429, %v3429
      %v3446 = vpack.c.bf16 %v3430, %v3430
      %v3447 = vpack.c.bf16 %v3431, %v3431
      %v3448 = vpack.c.bf16 %v3432, %v3432
      %v3449 = vpack.c.bf16 %v3433, %v3433
      %v3450 = vpack.c.bf16 %v3434, %v3434
      %v3451 = vpack.c.bf16 %v3435, %v3435
      %vm3452 = vcmask 519168
      %3453 = vst.msk [vmem:[%s307] sm:$0xf] %vm3452, %v3436
      %vm3454 = vcmask 517120
      %3455 = vst.msk [vmem:[%s307 + $0x4] sm:$0x3] %vm3454, %v3437
      %3456 = vst.msk [vmem:[%s307 + $0x8] sm:$0xf] %vm3452, %v3438
      %3457 = vst.msk [vmem:[%s307 + $0xc] sm:$0x3] %vm3454, %v3439
      %3458 = vst.msk [vmem:[%s307 + $0x10] sm:$0xf] %vm3452, %v3440
      %3459 = vst.msk [vmem:[%s307 + $0x14] sm:$0x3] %vm3454, %v3441
      %3460 = vst.msk [vmem:[%s307 + $0x18] sm:$0xf] %vm3452, %v3442
      %3461 = vst.msk [vmem:[%s307 + $0x1c] sm:$0x3] %vm3454, %v3443
      %3462 = vst.msk [vmem:[%s307 + $0x20] sm:$0xf] %vm3452, %v3444
      %3463 = vst.msk [vmem:[%s307 + $0x24] sm:$0x3] %vm3454, %v3445
      %3464 = vst.msk [vmem:[%s307 + $0x28] sm:$0xf] %vm3452, %v3446
      %3465 = vst.msk [vmem:[%s307 + $0x2c] sm:$0x3] %vm3454, %v3447
      %3466 = vst.msk [vmem:[%s307 + $0x30] sm:$0xf] %vm3452, %v3448
      %3467 = vst.msk [vmem:[%s307 + $0x34] sm:$0x3] %vm3454, %v3449
      %3468 = vst.msk [vmem:[%s307 + $0x38] sm:$0xf] %vm3452, %v3450
      %3469 = vst.msk [vmem:[%s307 + $0x3c] sm:$0x3] %vm3454, %v3451
      %s3470 = smul.u32 8, %s20
      %p3471 = scmp.lt.s32.totalorder %s19, 1
      %s3472 = scalar_select %p3471, %s19, 1
      %p3473 = scmp.lt.s32.totalorder %s3470, 7
      %s3474 = scalar_select %p3473, %s3470, 7
      %s3475 = smul.addr %s3474, 2
      %s3476 = smul.addr %s3472, 16
      %s3477 = sadd.s32 %s3475, %s3476
      %s3478 = smul.addr %s3477, 4
      %s3479 = scalar_lea.vmem %s4, %s3478
      // Predicated region
      $region37: #{vgg19_slice1.6} parent=35 // pred_check
        %p3480 = pneg %p149
      $region38: #{vgg19_slice1.6} parent=35 // pred_check_branch
        %3482 = sbr.rel (%p3480) target = $region40
      $region39: #{vgg19_slice1.6} parent=35 // pred_region
        %s3483 = smul.u32 8, %s20
      $region40: #{vgg19_slice1.6} parent=35 // pred_fallthru
        _
    $region36: #{vgg19_slice1.6} parent=5 // pred_fallthru
      _
    %p3484 = scmp.le.s32.totalorder 2, %s10
    // Predicated region
    $region41: #{vgg19_slice1.6} parent=5 // pred_check
      %p3485 = pneg %p3484
    $region42: #{vgg19_slice1.6} parent=5 // pred_check_branch
      %3487 = sbr.rel (%p3485) target = $region44
    $region43: #{vgg19_slice1.6} parent=5 // pred_region
      %s3488 = ssub.s32 %s10, 2
      // Predicated region
      $region45: #{vgg19_slice1.6} parent=43 // pred_check
        %p3489 = pneg %p155
      $region46: #{vgg19_slice1.6} parent=43 // pred_check_branch
        %3491 = sbr.rel (%p3489) target = $region48
      $region47: #{vgg19_slice1.6} parent=43 // pred_region
        %s3492 = smul.u32 8, %s22
        %p3493 = scmp.lt.s32.totalorder %s21, 1
        %s3494 = scalar_select %p3493, %s21, 1
        %p3495 = scmp.lt.s32.totalorder %s3492, 7
        %s3496 = scalar_select %p3495, %s3492, 7
        %s3497 = smul.addr %s3496, 2
        %s3498 = smul.addr %s3494, 16
        %s3499 = sadd.s32 %s3497, %s3498
        %s3500 = smul.addr %s3499, 4
        %s3501 = scalar_lea.vmem %s4, %s3500
      $region48: #{vgg19_slice1.6} parent=43 // pred_fallthru
        _
    $region44: #{vgg19_slice1.6} parent=5 // pred_fallthru
      _
  $region6: #{vgg19_slice1.6} parent=0 // loop_footer
    %s14 = sadd.s32 1, %s10
  $region7: #{vgg19_slice1.6} parent=0 // loop_footer_branch
    %9 = sbr.rel target = $region3
  $region8: #{vgg19_slice1.6} parent=0 // loop_exit
    _

// kernel: vgg19_slice1.8
$region0: #{vgg19_slice1.8}
  #allocation0 [shape = 'u32[]', space=smem, size = 0x4, offset = 0x4, fixed_abs, tag = 'smem constant byte address 0x4 - core index']
  #allocation1 [shape = 'u32[72,128]{1,0:T(1,128)}', space=vmem, size = 0x9000, scoped, tag = 'internal scratch']
  #allocation2 [shape = 'f32[4,16,128]{2,1,0:T(8,128)}', space=vmem, size = 0x8000, scoped, tag = 'scratch operand']
  %s0 = inlined_call_operand.vmem [shape: bf16[2,192,128], index: 0, kind: input, shape index: {}, may-alias: {0,1}]
  %s1 = inlined_call_operand.vmem [shape: bf16[2,192,128], index: 1, kind: input, shape index: {}, may-alias: {0,1}]
  %s2 = inlined_call_operand.vmem [shape: bf16[1152,128], index: 2, kind: input, shape index: {}]
  %s3 = inlined_call_operand.vmem [shape: f32[1,128], index: 3, kind: input, shape index: {}]
  %s4 = inlined_call_operand.vmem [shape: bf16[2,4,8,128], index: 4, kind: output, shape index: {}]
  %s5 = sld [smem:[#allocation0]]
  $region49: #{vgg19_slice1.8} parent=0
    _
  %s7 = ssub.s32 1, %s5
  %s8 = scalar_select 0, %s7, %s5
  loop: start=0, step=1, limit=4
  $region2: #{vgg19_slice1.8} parent=0 // loop_pre_header
    _
  $region3: #{vgg19_slice1.8} parent=0 // loop_header
    %s10 = sphi 0, %s14
    %p11 = scmp.ge.s32.totalorder %s10, 4
    %s17 = sphi 0, %s29
    %s18 = sphi 0, %s25
    %s19 = sphi 0, %s17
    %s20 = sphi 0, %s18
    %s21 = sphi 0, %s19
    %s22 = sphi 0, %s20
    %s34 = sphi 0, %s36
    %s37 = sphi 0, %s34
    %s38 = sphi 0, %s37
    %s54 = sphi 0, %s38
    %s66 = sphi 0, %s68
    %s69 = sphi 0, %s66
    %s70 = sphi 0, %s69
    %s86 = sphi 0, %s70
    %s90 = sphi 0, %s90
    %s92 = sphi 0, %s90
    %s93 = sphi 0, %s92
    %s107 = sphi 0, %s93
    %s111 = sphi 0, %s111
    %s113 = sphi 0, %s111
    %s114 = sphi 0, %s113
    %s128 = sphi 0, %s114
    %s136 = sphi 0, %s138
    %s139 = sphi 0, %s136
    %s140 = sphi 0, %s139
    %s156 = sphi 0, %s140
  $region4: #{vgg19_slice1.8} parent=0 // loop_header_branch
    %13 = sbr.rel (%p11) target = $region8
  $region5: #{vgg19_slice1.8} parent=0 // loop_body
    %s15 = ssub.s32 %s10, 1
    %s16 = ssub.s32 %s10, 2
    %s23 = sadd.s32 1, %s18
    %p24 = scmp.ge.s32.totalorder %s23, 1
    %s25 = scalar_select %p24, 0, %s23
    %s26 = sadd.s32 1, %s17
    %s27 = scalar_select %p24, %s26, %s17
    %p28 = scmp.ge.s32.totalorder %s27, 2
    %s29 = scalar_select %p28, 0, %s27
    %s30 = ssub.s32 %s17, %s29
    %s31 = ssub.s32 %s18, %s25
    %s32 = sor.u32 %s30, %s31
    %p33 = scmp.eq.s32.totalorder %s32, 0
    %s35 = sadd.s32 %s34, 1
    %s36 = scalar_select %p33, %s34, %s35
    %p39 = pneg %p33
    %p40 = scmp.eq.s32.totalorder %s10, 1
    %p41 = por %p39, %p40
    %p42 = scmp.ne.s32.totalorder %s34, %s37
    %p43 = scmp.eq.s32.totalorder %s10, 0
    %p44 = por %p42, %p43
    %p45 = scmp.ne.s32.totalorder %s34, %s37
    %p46 = scmp.eq.s32.totalorder %s15, 1
    %p47 = por %p45, %p46
    %p48 = scmp.ne.s32.totalorder %s37, %s38
    %p49 = scmp.eq.s32.totalorder %s15, 0
    %p50 = por %p48, %p49
    %p51 = scmp.ne.s32.totalorder %s37, %s38
    %p52 = scmp.eq.s32.totalorder %s16, 1
    %p53 = por %p51, %p52
    %p55 = scmp.ne.s32.totalorder %s38, %s54
    %p56 = scmp.eq.s32.totalorder %s16, 0
    %p57 = por %p55, %p56
    %s58 = sadd.s32 %s18, 1
    %s59 = smul.u32 %s58, 2
    %s60 = sadd.s32 %s25, 1
    %s61 = smul.u32 %s60, 2
    %s62 = ssub.s32 %s17, %s29
    %s63 = ssub.s32 %s59, %s61
    %s64 = sor.u32 %s62, %s63
    %p65 = scmp.eq.s32.totalorder %s64, 0
    %s67 = sadd.s32 %s66, 1
    %s68 = scalar_select %p65, %s66, %s67
    %p71 = pneg %p65
    %p72 = scmp.eq.s32.totalorder %s10, 1
    %p73 = por %p71, %p72
    %p74 = scmp.ne.s32.totalorder %s66, %s69
    %p75 = scmp.eq.s32.totalorder %s10, 0
    %p76 = por %p74, %p75
    %p77 = scmp.ne.s32.totalorder %s66, %s69
    %p78 = scmp.eq.s32.totalorder %s15, 1
    %p79 = por %p77, %p78
    %p80 = scmp.ne.s32.totalorder %s69, %s70
    %p81 = scmp.eq.s32.totalorder %s15, 0
    %p82 = por %p80, %p81
    %p83 = scmp.ne.s32.totalorder %s69, %s70
    %p84 = scmp.eq.s32.totalorder %s16, 1
    %p85 = por %p83, %p84
    %p87 = scmp.ne.s32.totalorder %s70, %s86
    %p88 = scmp.eq.s32.totalorder %s16, 0
    %p89 = por %p87, %p88
    %s91 = sadd.s32 %s90, 1
    %p94 = scmp.eq.s32.totalorder %s10, 1
    %p95 = scmp.ne.s32.totalorder %s90, %s92
    %p96 = scmp.eq.s32.totalorder %s10, 0
    %p97 = por %p95, %p96
    %p98 = scmp.ne.s32.totalorder %s90, %s92
    %p99 = scmp.eq.s32.totalorder %s15, 1
    %p100 = por %p98, %p99
    %p101 = scmp.ne.s32.totalorder %s92, %s93
    %p102 = scmp.eq.s32.totalorder %s15, 0
    %p103 = por %p101, %p102
    %p104 = scmp.ne.s32.totalorder %s92, %s93
    %p105 = scmp.eq.s32.totalorder %s16, 1
    %p106 = por %p104, %p105
    %p108 = scmp.ne.s32.totalorder %s93, %s107
    %p109 = scmp.eq.s32.totalorder %s16, 0
    %p110 = por %p108, %p109
    %s112 = sadd.s32 %s111, 1
    %p115 = scmp.eq.s32.totalorder %s10, 1
    %p116 = scmp.ne.s32.totalorder %s111, %s113
    %p117 = scmp.eq.s32.totalorder %s10, 0
    %p118 = por %p116, %p117
    %p119 = scmp.ne.s32.totalorder %s111, %s113
    %p120 = scmp.eq.s32.totalorder %s15, 1
    %p121 = por %p119, %p120
    %p122 = scmp.ne.s32.totalorder %s113, %s114
    %p123 = scmp.eq.s32.totalorder %s15, 0
    %p124 = por %p122, %p123
    %p125 = scmp.ne.s32.totalorder %s113, %s114
    %p126 = scmp.eq.s32.totalorder %s16, 1
    %p127 = por %p125, %p126
    %p129 = scmp.ne.s32.totalorder %s114, %s128
    %p130 = scmp.eq.s32.totalorder %s16, 0
    %p131 = por %p129, %p130
    %s132 = ssub.s32 %s17, %s29
    %s133 = ssub.s32 %s18, %s25
    %s134 = sor.u32 %s132, %s133
    %p135 = scmp.eq.s32.totalorder %s134, 0
    %s137 = sadd.s32 %s136, 1
    %s138 = scalar_select %p135, %s136, %s137
    %p141 = pneg %p135
    %p142 = scmp.eq.s32.totalorder %s10, 1
    %p143 = por %p141, %p142
    %p144 = scmp.ne.s32.totalorder %s136, %s139
    %p145 = scmp.eq.s32.totalorder %s10, 0
    %p146 = por %p144, %p145
    %p147 = scmp.ne.s32.totalorder %s136, %s139
    %p148 = scmp.eq.s32.totalorder %s15, 1
    %p149 = por %p147, %p148
    %p150 = scmp.ne.s32.totalorder %s139, %s140
    %p151 = scmp.eq.s32.totalorder %s15, 0
    %p152 = por %p150, %p151
    %p153 = scmp.ne.s32.totalorder %s139, %s140
    %p154 = scmp.eq.s32.totalorder %s16, 1
    %p155 = por %p153, %p154
    %p157 = scmp.ne.s32.totalorder %s140, %s156
    %p158 = scmp.eq.s32.totalorder %s16, 0
    %p159 = por %p157, %p158
    %p160 = scmp.le.s32.totalorder 1, %s10
    %p161 = scmp.lt.s32.totalorder %s10, 3
    %p162 = pnand %p160, %p161
    %p163 = pneg %p162
    // Predicated region
    $region9: #{vgg19_slice1.8} parent=5 // pred_check
      _
    $region10: #{vgg19_slice1.8} parent=5 // pred_check_branch
      %165 = sbr.rel (%p162) target = $region12
    $region11: #{vgg19_slice1.8} parent=5 // pred_region
      %s166 = ssub.s32 %s10, 1
      // Predicated region
      $region13: #{vgg19_slice1.8} parent=11 // pred_check
        %p167 = pneg %p103
      $region14: #{vgg19_slice1.8} parent=11 // pred_check_branch
        %169 = sbr.rel (%p167) target = $region16
      $region15: #{vgg19_slice1.8} parent=11 // pred_region
        _
      $region16: #{vgg19_slice1.8} parent=11 // pred_fallthru
        _
      // Predicated region
      $region17: #{vgg19_slice1.8} parent=11 // pred_check
        %p170 = pneg %p124
      $region18: #{vgg19_slice1.8} parent=11 // pred_check_branch
        %172 = sbr.rel (%p170) target = $region20
      $region19: #{vgg19_slice1.8} parent=11 // pred_region
        _
      $region20: #{vgg19_slice1.8} parent=11 // pred_fallthru
        _
    $region12: #{vgg19_slice1.8} parent=5 // pred_fallthru
      _
    %p173 = scmp.lt.s32.totalorder %s10, 2
    // Predicated region
    $region21: #{vgg19_slice1.8} parent=5 // pred_check
      %p174 = pneg %p173
    $region22: #{vgg19_slice1.8} parent=5 // pred_check_branch
      %176 = sbr.rel (%p174) target = $region24
    $region23: #{vgg19_slice1.8} parent=5 // pred_region
      // Predicated region
      $region25: #{vgg19_slice1.8} parent=23 // pred_check
        %p177 = pneg %p44
      $region26: #{vgg19_slice1.8} parent=23 // pred_check_branch
        %179 = sbr.rel (%p177) target = $region28
      $region27: #{vgg19_slice1.8} parent=23 // pred_region
        %s180 = smul.u32 16, %s18
        %s181 = ssub.s32 24, %s180
        %p182 = scmp.lt.s32.totalorder %s181, 16
        %s183 = scalar_select %p182, %s181, 16
        %s184 = smul.u32 4, %s183
        %p185 = scmp.lt.s32.totalorder %s17, 1
        %s186 = scalar_select %p185, %s17, 1
        %p187 = scmp.lt.s32.totalorder %s180, 23
        %s188 = scalar_select %p187, %s180, 23
        %s189 = smul.addr %s186, 24
        %s190 = sadd.s32 %s188, %s189
        %s191 = smul.addr %s190, 4
        %s192 = scalar_lea.vmem %s0, %s191
        %s193 = smul.u32 16, %s18
        %s194 = ssub.s32 24, %s193
        %p195 = scmp.lt.s32.totalorder %s194, 16
        %s196 = scalar_select %p195, %s194, 16
        %s197 = smul.u32 4, %s196
      $region28: #{vgg19_slice1.8} parent=23 // pred_fallthru
        _
      // Predicated region
      $region29: #{vgg19_slice1.8} parent=23 // pred_check
        %p198 = pneg %p76
      $region30: #{vgg19_slice1.8} parent=23 // pred_check_branch
        %200 = sbr.rel (%p198) target = $region32
      $region31: #{vgg19_slice1.8} parent=23 // pred_region
        %s201 = sadd.s32 %s18, 1
        %s202 = smul.u32 %s201, 2
        %s203 = smul.u32 8, %s202
        %p204 = scmp.lt.s32.totalorder %s17, 1
        %s205 = scalar_select %p204, %s17, 1
        %p206 = scmp.lt.s32.totalorder %s203, 23
        %s207 = scalar_select %p206, %s203, 23
        %s208 = smul.addr %s205, 24
        %s209 = sadd.s32 %s207, %s208
        %s210 = smul.addr %s209, 4
        %s211 = scalar_lea.vmem %s1, %s210
        %s212 = sadd.s32 %s18, 1
        %s213 = smul.u32 %s212, 2
        %s214 = smul.u32 8, %s213
      $region32: #{vgg19_slice1.8} parent=23 // pred_fallthru
        _
    $region24: #{vgg19_slice1.8} parent=5 // pred_fallthru
      _
    %p215 = scmp.le.s32.totalorder 1, %s10
    %p216 = scmp.lt.s32.totalorder %s10, 3
    %p217 = pnand %p215, %p216
    %p218 = pneg %p217
    // Predicated region
    $region33: #{vgg19_slice1.8} parent=5 // pred_check
      _
    $region34: #{vgg19_slice1.8} parent=5 // pred_check_branch
      %220 = sbr.rel (%p217) target = $region36
    $region35: #{vgg19_slice1.8} parent=5 // pred_region
      %s221 = ssub.s32 %s10, 1
      %s222 = smul.u32 16, %s20
      %s223 = ssub.s32 24, %s222
      %p224 = scmp.lt.s32.totalorder %s223, 16
      %s225 = scalar_select %p224, %s223, 16
      %s226 = smul.u32 4, %s225
      %p227 = scmp.lt.s32.totalorder %s19, 1
      %s228 = scalar_select %p227, %s19, 1
      %p229 = scmp.lt.s32.totalorder %s222, 23
      %s230 = scalar_select %p229, %s222, 23
      %s231 = smul.addr %s228, 24
      %s232 = sadd.s32 %s230, %s231
      %s233 = smul.addr %s232, 4
      %s234 = scalar_lea.vmem %s0, %s233
      %p235 = pneg %p50
      %p236 = pneg %p47
      %s237 = sadd.s32 %s20, 1
      %s238 = smul.u32 %s237, 2
      %s239 = smul.u32 8, %s238
      %p240 = scmp.lt.s32.totalorder %s19, 1
      %s241 = scalar_select %p240, %s19, 1
      %p242 = scmp.lt.s32.totalorder %s239, 23
      %s243 = scalar_select %p242, %s239, 23
      %s244 = smul.addr %s241, 24
      %s245 = sadd.s32 %s243, %s244
      %s246 = smul.addr %s245, 4
      %s247 = scalar_lea.vmem %s1, %s246
      %p248 = pneg %p82
      %p249 = pneg %p79
      %p250 = pneg %p103
      %p251 = pneg %p100
      %p252 = pneg %p124
      %p253 = pneg %p121
      %p254 = pneg %p152
      %p255 = pneg %p149
      %s256 = smul.u32 4, %s20
      %p257 = scmp.lt.s32.totalorder %s19, 1
      %s258 = scalar_select %p257, %s19, 1
      %p259 = scmp.lt.s32.totalorder %s256, 3
      %s260 = scalar_select %p259, %s256, 3
      %s261 = smul.addr %s258, 4
      %s262 = sadd.s32 %s260, %s261
      %s263 = smul.addr %s262, 4
      %s264 = scalar_lea.vmem %s4, %s263
      %s265 = smul.u32 16, %s20
      %s266 = ssub.s32 24, %s265
      %p267 = scmp.lt.s32.totalorder %s266, 16
      %s268 = scalar_select %p267, %s266, 16
      %s269 = smul.u32 4, %s268
      %p270 = scmp.lt.s32.totalorder %s19, 1
      %s271 = scalar_select %p270, %s19, 1
      %p272 = scmp.lt.s32.totalorder %s265, 23
      %s273 = scalar_select %p272, %s265, 23
      %s274 = smul.addr %s271, 24
      %s275 = sadd.s32 %s273, %s274
      %s276 = smul.addr %s275, 4
      %s277 = scalar_lea.vmem %s0, %s276
      %s278 = smul.u32 16, %s20
      %s279 = ssub.s32 24, %s278
      %p280 = scmp.lt.s32.totalorder %s279, 16
      %s281 = scalar_select %p280, %s279, 16
      %s282 = smul.u32 4, %s281
      %s283 = sadd.s32 %s20, 1
      %s284 = smul.u32 %s283, 2
      %s285 = smul.u32 8, %s284
      %p286 = scmp.lt.s32.totalorder %s19, 1
      %s287 = scalar_select %p286, %s19, 1
      %p288 = scmp.lt.s32.totalorder %s285, 23
      %s289 = scalar_select %p288, %s285, 23
      %s290 = smul.addr %s287, 24
      %s291 = sadd.s32 %s289, %s290
      %s292 = smul.addr %s291, 4
      %s293 = scalar_lea.vmem %s1, %s292
      %s294 = sadd.s32 %s20, 1
      %s295 = smul.u32 %s294, 2
      %s296 = smul.u32 8, %s295
      %s297 = smul.u32 4, %s20
      %p298 = scmp.lt.s32.totalorder %s19, 1
      %s299 = scalar_select %p298, %s19, 1
      %p300 = scmp.lt.s32.totalorder %s297, 3
      %s301 = scalar_select %p300, %s297, 3
      %s302 = smul.addr %s299, 4
      %s303 = sadd.s32 %s301, %s302
      %s304 = smul.addr %s303, 4
      %s305 = scalar_lea.vmem %s4, %s304
      %s306 = smul.u32 4, %s20
      %v307 = vld [vmem:[%s277] sm:$0xf]
      %v308 = vld [vmem:[%s277 + $0x4] sm:$0xf]
      %v309 = vld [vmem:[%s277 + $0x8] sm:$0xf]
      %v310 = vld [vmem:[%s277 + $0xc] sm:$0xf]
      %v311 = vld [vmem:[%s277 + $0x10] sm:$0xf]
      %v312 = vld [vmem:[%s277 + $0x14] sm:$0xf]
      %v313 = vld [vmem:[%s277 + $0x18] sm:$0xf]
      %v314 = vld [vmem:[%s277 + $0x1c] sm:$0xf]
      %v315 = vld [vmem:[%s277 + $0x20] sm:$0xf]
      %v316 = vld [vmem:[%s277 + $0x24] sm:$0xf]
      %v317 = vld [vmem:[%s277 + $0x28] sm:$0xf]
      %v318 = vld [vmem:[%s277 + $0x2c] sm:$0xf]
      %v319 = vld [vmem:[%s277 + $0x30] sm:$0xf]
      %v320 = vld [vmem:[%s277 + $0x34] sm:$0xf]
      %v321 = vld [vmem:[%s277 + $0x38] sm:$0xf]
      %v322 = vld [vmem:[%s277 + $0x3c] sm:$0xf]
      %v323 = vld [vmem:[%s293] sm:$0xf]
      %v324 = vld [vmem:[%s293 + $0x4] sm:$0xf]
      %v325 = vld [vmem:[%s293 + $0x8] sm:$0xf]
      %v326 = vld [vmem:[%s293 + $0xc] sm:$0xf]
      %v327 = vld [vmem:[%s293 + $0x10] sm:$0xf]
      %v328 = vld [vmem:[%s293 + $0x14] sm:$0xf]
      %v345 = vunpack.c.l.b16 %v307
      %v346 = vunpack.c.l.b16 %v308
      %v347 = vunpack.c.l.b16 %v309
      %v348 = vunpack.c.l.b16 %v310
      %v349 = vunpack.c.l.b16 %v311
      %v350 = vunpack.c.l.b16 %v312
      %v351 = vunpack.c.l.b16 %v313
      %v352 = vunpack.c.l.b16 %v314
      %v353 = vunpack.c.l.b16 %v315
      %v354 = vunpack.c.l.b16 %v316
      %v355 = vunpack.c.l.b16 %v317
      %v356 = vunpack.c.l.b16 %v318
      %v357 = vunpack.c.l.b16 %v319
      %v358 = vunpack.c.l.b16 %v320
      %v359 = vunpack.c.l.b16 %v321
      %v360 = vunpack.c.l.b16 %v322
      %v361 = vpack.c.b16 %v346, %v345
      %v362 = vpack.c.b16 %v348, %v347
      %v363 = vpack.c.b16 %v350, %v349
      %v364 = vpack.c.b16 %v352, %v351
      %v365 = vpack.c.b16 %v354, %v353
      %v366 = vpack.c.b16 %v356, %v355
      %v367 = vpack.c.b16 %v358, %v357
      %v368 = vpack.c.b16 %v360, %v359
      %v383 = vunpack.c.l.b16 %v323
      %v384 = vunpack.c.l.b16 %v324
      %v385 = vunpack.c.l.b16 %v325
      %v386 = vunpack.c.l.b16 %v326
      %v387 = vunpack.c.l.b16 %v327
      %v388 = vunpack.c.l.b16 %v328
      %v389 = vpack.c.b16 %v384, %v383
      %v390 = vpack.c.b16 %v386, %v385
      %v391 = vpack.c.b16 %v388, %v387
      %vm394 = vsmask.f32 7424
      %v396 = vshrl.u32 %v361, 16
      %v398 = vshll.u32 %v361, 16
      %v400 = vrot.slane %v398, 1
      %v401 = vor.u32 %v396, %v400
      %v403 = vshll.u32 %v362, 16
      %v405 = vrot.slane %v403, 1
      %v406 = vsel %vm394, %v401, %v405
      %v407 = vshrl.u32 %v362, 16
      %v409 = vor.u32 %v407, %v405
      %v411 = vshll.u32 %v363, 16
      %v413 = vrot.slane %v411, 1
      %v414 = vsel %vm394, %v409, %v413
      %v415 = vshrl.u32 %v363, 16
      %v417 = vor.u32 %v415, %v413
      %v419 = vshll.u32 %v364, 16
      %v421 = vrot.slane %v419, 1
      %v422 = vsel %vm394, %v417, %v421
      %v423 = vshrl.u32 %v364, 16
      %v425 = vor.u32 %v423, %v421
      %v427 = vshll.u32 %v365, 16
      %v429 = vrot.slane %v427, 1
      %v430 = vsel %vm394, %v425, %v429
      %v431 = vshrl.u32 %v365, 16
      %v433 = vor.u32 %v431, %v429
      %v435 = vshll.u32 %v366, 16
      %v437 = vrot.slane %v435, 1
      %v438 = vsel %vm394, %v433, %v437
      %v439 = vshrl.u32 %v366, 16
      %v441 = vor.u32 %v439, %v437
      %v443 = vshll.u32 %v367, 16
      %v445 = vrot.slane %v443, 1
      %v446 = vsel %vm394, %v441, %v445
      %v447 = vshrl.u32 %v367, 16
      %v449 = vor.u32 %v447, %v445
      %v451 = vshll.u32 %v368, 16
      %v453 = vrot.slane %v451, 1
      %v454 = vsel %vm394, %v449, %v453
      %v455 = vshrl.u32 %v368, 16
      %v457 = vor.u32 %v455, %v453
      %v459 = vshll.u32 %v389, 16
      %v461 = vrot.slane %v459, 1
      %v462 = vsel %vm394, %v457, %v461
      %vm471 = vcmask 1046528
      %v472 = vrot.slane %v361, 1
      %v473 = vrot.slane %v362, 1
      %v474 = vsel %vm471, %v472, %v473
      %v475 = vrot.slane %v363, 1
      %v476 = vsel %vm471, %v473, %v475
      %v477 = vrot.slane %v364, 1
      %v478 = vsel %vm471, %v475, %v477
      %v479 = vrot.slane %v365, 1
      %v480 = vsel %vm471, %v477, %v479
      %v481 = vrot.slane %v366, 1
      %v482 = vsel %vm471, %v479, %v481
      %v483 = vrot.slane %v367, 1
      %v484 = vsel %vm471, %v481, %v483
      %v485 = vrot.slane %v368, 1
      %v486 = vsel %vm471, %v483, %v485
      %v487 = vrot.slane %v389, 1
      %v488 = vsel %vm471, %v485, %v487
      %v497 = vshrl.u32 %v389, 16
      %v499 = vor.u32 %v497, %v461
      %v501 = vshll.u32 %v390, 16
      %v503 = vrot.slane %v501, 1
      %v504 = vsel %vm394, %v499, %v503
      %v506 = vrot.slane %v390, 1
      %v507 = vsel %vm471, %v487, %v506
      %v509 = vshrl.u32 %v390, 16
      %v511 = vor.u32 %v509, %v503
      %v513 = vshll.u32 %v391, 16
      %v515 = vrot.slane %v513, 1
      %v516 = vsel %vm394, %v511, %v515
      %v518 = vrot.slane %v391, 1
      %v519 = vsel %vm471, %v506, %v518
      %v521 = vld [vmem:[%s2] sm:$0xf]
      %v522 = vld [vmem:[%s2 + $0x4] sm:$0xf]
      %v523 = vld [vmem:[%s2 + $0x8] sm:$0xf]
      %v524 = vld [vmem:[%s2 + $0xc] sm:$0xf]
      %v525 = vld [vmem:[%s2 + $0x10] sm:$0xf]
      %v526 = vld [vmem:[%s2 + $0x14] sm:$0xf]
      %v527 = vld [vmem:[%s2 + $0x18] sm:$0xf]
      %v528 = vld [vmem:[%s2 + $0x1c] sm:$0xf]
      %v529 = vld [vmem:[%s2 + $0x20] sm:$0xf]
      %v530 = vld [vmem:[%s2 + $0x24] sm:$0xf]
      %v531 = vld [vmem:[%s2 + $0x28] sm:$0xf]
      %v532 = vld [vmem:[%s2 + $0x2c] sm:$0xf]
      %v533 = vld [vmem:[%s2 + $0x30] sm:$0xf]
      %v534 = vld [vmem:[%s2 + $0x34] sm:$0xf]
      %v535 = vld [vmem:[%s2 + $0x38] sm:$0xf]
      %v536 = vld [vmem:[%s2 + $0x3c] sm:$0xf]
      %v537 = vld [vmem:[%s2 + $0x40] sm:$0xf]
      %v538 = vld [vmem:[%s2 + $0x44] sm:$0xf]
      %v539 = vld [vmem:[%s2 + $0x48] sm:$0xf]
      %v540 = vld [vmem:[%s2 + $0x4c] sm:$0xf]
      %v541 = vld [vmem:[%s2 + $0x50] sm:$0xf]
      %v542 = vld [vmem:[%s2 + $0x54] sm:$0xf]
      %v543 = vld [vmem:[%s2 + $0x58] sm:$0xf]
      %v544 = vld [vmem:[%s2 + $0x5c] sm:$0xf]
      %v545 = vld [vmem:[%s2 + $0x60] sm:$0xf]
      %v546 = vld [vmem:[%s2 + $0x64] sm:$0xf]
      %v547 = vld [vmem:[%s2 + $0x68] sm:$0xf]
      %v548 = vld [vmem:[%s2 + $0x6c] sm:$0xf]
      %v549 = vld [vmem:[%s2 + $0x70] sm:$0xf]
      %v550 = vld [vmem:[%s2 + $0x74] sm:$0xf]
      %v551 = vld [vmem:[%s2 + $0x78] sm:$0xf]
      %v552 = vld [vmem:[%s2 + $0x7c] sm:$0xf]
      %v553 = vld [vmem:[%s2 + $0x80] sm:$0xf]
      %v554 = vld [vmem:[%s2 + $0x84] sm:$0xf]
      %v555 = vld [vmem:[%s2 + $0x88] sm:$0xf]
      %v556 = vld [vmem:[%s2 + $0x8c] sm:$0xf]
      %v557 = vld [vmem:[%s2 + $0x90] sm:$0xf]
      %v558 = vld [vmem:[%s2 + $0x94] sm:$0xf]
      %v559 = vld [vmem:[%s2 + $0x98] sm:$0xf]
      %v560 = vld [vmem:[%s2 + $0x9c] sm:$0xf]
      %v561 = vld [vmem:[%s2 + $0xa0] sm:$0xf]
      %v562 = vld [vmem:[%s2 + $0xa4] sm:$0xf]
      %v563 = vld [vmem:[%s2 + $0xa8] sm:$0xf]
      %v564 = vld [vmem:[%s2 + $0xac] sm:$0xf]
      %v565 = vld [vmem:[%s2 + $0xb0] sm:$0xf]
      %v566 = vld [vmem:[%s2 + $0xb4] sm:$0xf]
      %v567 = vld [vmem:[%s2 + $0xb8] sm:$0xf]
      %v568 = vld [vmem:[%s2 + $0xbc] sm:$0xf]
      %v569 = vld [vmem:[%s2 + $0xc0] sm:$0xf]
      %v570 = vld [vmem:[%s2 + $0xc4] sm:$0xf]
      %v571 = vld [vmem:[%s2 + $0xc8] sm:$0xf]
      %v572 = vld [vmem:[%s2 + $0xcc] sm:$0xf]
      %v573 = vld [vmem:[%s2 + $0xd0] sm:$0xf]
      %v574 = vld [vmem:[%s2 + $0xd4] sm:$0xf]
      %v575 = vld [vmem:[%s2 + $0xd8] sm:$0xf]
      %v576 = vld [vmem:[%s2 + $0xdc] sm:$0xf]
      %v577 = vld [vmem:[%s2 + $0xe0] sm:$0xf]
      %v578 = vld [vmem:[%s2 + $0xe4] sm:$0xf]
      %v579 = vld [vmem:[%s2 + $0xe8] sm:$0xf]
      %v580 = vld [vmem:[%s2 + $0xec] sm:$0xf]
      %v581 = vld [vmem:[%s2 + $0xf0] sm:$0xf]
      %v582 = vld [vmem:[%s2 + $0xf4] sm:$0xf]
      %v583 = vld [vmem:[%s2 + $0xf8] sm:$0xf]
      %v584 = vld [vmem:[%s2 + $0xfc] sm:$0xf]
      %v585 = vld [vmem:[%s2 + $0x100] sm:$0xf]
      %v586 = vld [vmem:[%s2 + $0x104] sm:$0xf]
      %v587 = vld [vmem:[%s2 + $0x108] sm:$0xf]
      %v588 = vld [vmem:[%s2 + $0x10c] sm:$0xf]
      %v589 = vld [vmem:[%s2 + $0x110] sm:$0xf]
      %v590 = vld [vmem:[%s2 + $0x114] sm:$0xf]
      %v591 = vld [vmem:[%s2 + $0x118] sm:$0xf]
      %v592 = vld [vmem:[%s2 + $0x11c] sm:$0xf]
      %v593 = vld [vmem:[%s2 + $0x120] sm:$0xf]
      %v594 = vld [vmem:[%s2 + $0x124] sm:$0xf]
      %v595 = vld [vmem:[%s2 + $0x128] sm:$0xf]
      %v596 = vld [vmem:[%s2 + $0x12c] sm:$0xf]
      %v597 = vld [vmem:[%s2 + $0x130] sm:$0xf]
      %v598 = vld [vmem:[%s2 + $0x134] sm:$0xf]
      %v599 = vld [vmem:[%s2 + $0x138] sm:$0xf]
      %v600 = vld [vmem:[%s2 + $0x13c] sm:$0xf]
      %v601 = vld [vmem:[%s2 + $0x140] sm:$0xf]
      %v602 = vld [vmem:[%s2 + $0x144] sm:$0xf]
      %v603 = vld [vmem:[%s2 + $0x148] sm:$0xf]
      %v604 = vld [vmem:[%s2 + $0x14c] sm:$0xf]
      %v605 = vld [vmem:[%s2 + $0x150] sm:$0xf]
      %v606 = vld [vmem:[%s2 + $0x154] sm:$0xf]
      %v607 = vld [vmem:[%s2 + $0x158] sm:$0xf]
      %v608 = vld [vmem:[%s2 + $0x15c] sm:$0xf]
      %v609 = vld [vmem:[%s2 + $0x160] sm:$0xf]
      %v610 = vld [vmem:[%s2 + $0x164] sm:$0xf]
      %v611 = vld [vmem:[%s2 + $0x168] sm:$0xf]
      %v612 = vld [vmem:[%s2 + $0x16c] sm:$0xf]
      %v613 = vld [vmem:[%s2 + $0x170] sm:$0xf]
      %v614 = vld [vmem:[%s2 + $0x174] sm:$0xf]
      %v615 = vld [vmem:[%s2 + $0x178] sm:$0xf]
      %v616 = vld [vmem:[%s2 + $0x17c] sm:$0xf]
      %v617 = vld [vmem:[%s2 + $0x180] sm:$0xf]
      %v618 = vld [vmem:[%s2 + $0x184] sm:$0xf]
      %v619 = vld [vmem:[%s2 + $0x188] sm:$0xf]
      %v620 = vld [vmem:[%s2 + $0x18c] sm:$0xf]
      %v621 = vld [vmem:[%s2 + $0x190] sm:$0xf]
      %v622 = vld [vmem:[%s2 + $0x194] sm:$0xf]
      %v623 = vld [vmem:[%s2 + $0x198] sm:$0xf]
      %v624 = vld [vmem:[%s2 + $0x19c] sm:$0xf]
      %v625 = vld [vmem:[%s2 + $0x1a0] sm:$0xf]
      %v626 = vld [vmem:[%s2 + $0x1a4] sm:$0xf]
      %v627 = vld [vmem:[%s2 + $0x1a8] sm:$0xf]
      %v628 = vld [vmem:[%s2 + $0x1ac] sm:$0xf]
      %v629 = vld [vmem:[%s2 + $0x1b0] sm:$0xf]
      %v630 = vld [vmem:[%s2 + $0x1b4] sm:$0xf]
      %v631 = vld [vmem:[%s2 + $0x1b8] sm:$0xf]
      %v632 = vld [vmem:[%s2 + $0x1bc] sm:$0xf]
      %v633 = vld [vmem:[%s2 + $0x1c0] sm:$0xf]
      %v634 = vld [vmem:[%s2 + $0x1c4] sm:$0xf]
      %v635 = vld [vmem:[%s2 + $0x1c8] sm:$0xf]
      %v636 = vld [vmem:[%s2 + $0x1cc] sm:$0xf]
      %v637 = vld [vmem:[%s2 + $0x1d0] sm:$0xf]
      %v638 = vld [vmem:[%s2 + $0x1d4] sm:$0xf]
      %v639 = vld [vmem:[%s2 + $0x1d8] sm:$0xf]
      %v640 = vld [vmem:[%s2 + $0x1dc] sm:$0xf]
      %v641 = vld [vmem:[%s2 + $0x1e0] sm:$0xf]
      %v642 = vld [vmem:[%s2 + $0x1e4] sm:$0xf]
      %v643 = vld [vmem:[%s2 + $0x1e8] sm:$0xf]
      %v644 = vld [vmem:[%s2 + $0x1ec] sm:$0xf]
      %v645 = vld [vmem:[%s2 + $0x1f0] sm:$0xf]
      %v646 = vld [vmem:[%s2 + $0x1f4] sm:$0xf]
      %v647 = vld [vmem:[%s2 + $0x1f8] sm:$0xf]
      %v648 = vld [vmem:[%s2 + $0x1fc] sm:$0xf]
      %v649 = vld [vmem:[%s2 + $0x200] sm:$0xf]
      %v650 = vld [vmem:[%s2 + $0x204] sm:$0xf]
      %v651 = vld [vmem:[%s2 + $0x208] sm:$0xf]
      %v652 = vld [vmem:[%s2 + $0x20c] sm:$0xf]
      %v653 = vld [vmem:[%s2 + $0x210] sm:$0xf]
      %v654 = vld [vmem:[%s2 + $0x214] sm:$0xf]
      %v655 = vld [vmem:[%s2 + $0x218] sm:$0xf]
      %v656 = vld [vmem:[%s2 + $0x21c] sm:$0xf]
      %v657 = vld [vmem:[%s2 + $0x220] sm:$0xf]
      %v658 = vld [vmem:[%s2 + $0x224] sm:$0xf]
      %v659 = vld [vmem:[%s2 + $0x228] sm:$0xf]
      %v660 = vld [vmem:[%s2 + $0x22c] sm:$0xf]
      %v661 = vld [vmem:[%s2 + $0x230] sm:$0xf]
      %v662 = vld [vmem:[%s2 + $0x234] sm:$0xf]
      %v663 = vld [vmem:[%s2 + $0x238] sm:$0xf]
      %v664 = vld [vmem:[%s2 + $0x23c] sm:$0xf]
      %v665 = vld [vmem:[%s3] sm:$0x1]
      %v667 = vperm.slane %v665, 0
      %v813 = vunpack.c.l.b16 %v521
      %v814 = vunpack.c.l.b16 %v522
      %v815 = vunpack.c.l.b16 %v523
      %v816 = vunpack.c.l.b16 %v524
      %v817 = vunpack.c.l.b16 %v525
      %v818 = vunpack.c.l.b16 %v526
      %v819 = vunpack.c.l.b16 %v527
      %v820 = vunpack.c.l.b16 %v528
      %v821 = vunpack.c.l.b16 %v529
      %v822 = vunpack.c.l.b16 %v530
      %v823 = vunpack.c.l.b16 %v531
      %v824 = vunpack.c.l.b16 %v532
      %v825 = vunpack.c.l.b16 %v533
      %v826 = vunpack.c.l.b16 %v534
      %v827 = vunpack.c.l.b16 %v535
      %v828 = vunpack.c.l.b16 %v536
      %v829 = vunpack.c.l.b16 %v537
      %v830 = vunpack.c.l.b16 %v538
      %v831 = vunpack.c.l.b16 %v539
      %v832 = vunpack.c.l.b16 %v540
      %v833 = vunpack.c.l.b16 %v541
      %v834 = vunpack.c.l.b16 %v542
      %v835 = vunpack.c.l.b16 %v543
      %v836 = vunpack.c.l.b16 %v544
      %v837 = vunpack.c.l.b16 %v545
      %v838 = vunpack.c.l.b16 %v546
      %v839 = vunpack.c.l.b16 %v547
      %v840 = vunpack.c.l.b16 %v548
      %v841 = vunpack.c.l.b16 %v549
      %v842 = vunpack.c.l.b16 %v550
      %v843 = vunpack.c.l.b16 %v551
      %v844 = vunpack.c.l.b16 %v552
      %v845 = vunpack.c.l.b16 %v553
      %v846 = vunpack.c.l.b16 %v554
      %v847 = vunpack.c.l.b16 %v555
      %v848 = vunpack.c.l.b16 %v556
      %v849 = vunpack.c.l.b16 %v557
      %v850 = vunpack.c.l.b16 %v558
      %v851 = vunpack.c.l.b16 %v559
      %v852 = vunpack.c.l.b16 %v560
      %v853 = vunpack.c.l.b16 %v561
      %v854 = vunpack.c.l.b16 %v562
      %v855 = vunpack.c.l.b16 %v563
      %v856 = vunpack.c.l.b16 %v564
      %v857 = vunpack.c.l.b16 %v565
      %v858 = vunpack.c.l.b16 %v566
      %v859 = vunpack.c.l.b16 %v567
      %v860 = vunpack.c.l.b16 %v568
      %v861 = vunpack.c.l.b16 %v569
      %v862 = vunpack.c.l.b16 %v570
      %v863 = vunpack.c.l.b16 %v571
      %v864 = vunpack.c.l.b16 %v572
      %v865 = vunpack.c.l.b16 %v573
      %v866 = vunpack.c.l.b16 %v574
      %v867 = vunpack.c.l.b16 %v575
      %v868 = vunpack.c.l.b16 %v576
      %v869 = vunpack.c.l.b16 %v577
      %v870 = vunpack.c.l.b16 %v578
      %v871 = vunpack.c.l.b16 %v579
      %v872 = vunpack.c.l.b16 %v580
      %v873 = vunpack.c.l.b16 %v581
      %v874 = vunpack.c.l.b16 %v582
      %v875 = vunpack.c.l.b16 %v583
      %v876 = vunpack.c.l.b16 %v584
      %v877 = vunpack.c.l.b16 %v585
      %v878 = vunpack.c.l.b16 %v586
      %v879 = vunpack.c.l.b16 %v587
      %v880 = vunpack.c.l.b16 %v588
      %v881 = vunpack.c.l.b16 %v589
      %v882 = vunpack.c.l.b16 %v590
      %v883 = vunpack.c.l.b16 %v591
      %v884 = vunpack.c.l.b16 %v592
      %v885 = vunpack.c.l.b16 %v593
      %v886 = vunpack.c.l.b16 %v594
      %v887 = vunpack.c.l.b16 %v595
      %v888 = vunpack.c.l.b16 %v596
      %v889 = vunpack.c.l.b16 %v597
      %v890 = vunpack.c.l.b16 %v598
      %v891 = vunpack.c.l.b16 %v599
      %v892 = vunpack.c.l.b16 %v600
      %v893 = vunpack.c.l.b16 %v601
      %v894 = vunpack.c.l.b16 %v602
      %v895 = vunpack.c.l.b16 %v603
      %v896 = vunpack.c.l.b16 %v604
      %v897 = vunpack.c.l.b16 %v605
      %v898 = vunpack.c.l.b16 %v606
      %v899 = vunpack.c.l.b16 %v607
      %v900 = vunpack.c.l.b16 %v608
      %v901 = vunpack.c.l.b16 %v609
      %v902 = vunpack.c.l.b16 %v610
      %v903 = vunpack.c.l.b16 %v611
      %v904 = vunpack.c.l.b16 %v612
      %v905 = vunpack.c.l.b16 %v613
      %v906 = vunpack.c.l.b16 %v614
      %v907 = vunpack.c.l.b16 %v615
      %v908 = vunpack.c.l.b16 %v616
      %v909 = vunpack.c.l.b16 %v617
      %v910 = vunpack.c.l.b16 %v618
      %v911 = vunpack.c.l.b16 %v619
      %v912 = vunpack.c.l.b16 %v620
      %v913 = vunpack.c.l.b16 %v621
      %v914 = vunpack.c.l.b16 %v622
      %v915 = vunpack.c.l.b16 %v623
      %v916 = vunpack.c.l.b16 %v624
      %v917 = vunpack.c.l.b16 %v625
      %v918 = vunpack.c.l.b16 %v626
      %v919 = vunpack.c.l.b16 %v627
      %v920 = vunpack.c.l.b16 %v628
      %v921 = vunpack.c.l.b16 %v629
      %v922 = vunpack.c.l.b16 %v630
      %v923 = vunpack.c.l.b16 %v631
      %v924 = vunpack.c.l.b16 %v632
      %v925 = vunpack.c.l.b16 %v633
      %v926 = vunpack.c.l.b16 %v634
      %v927 = vunpack.c.l.b16 %v635
      %v928 = vunpack.c.l.b16 %v636
      %v929 = vunpack.c.l.b16 %v637
      %v930 = vunpack.c.l.b16 %v638
      %v931 = vunpack.c.l.b16 %v639
      %v932 = vunpack.c.l.b16 %v640
      %v933 = vunpack.c.l.b16 %v641
      %v934 = vunpack.c.l.b16 %v642
      %v935 = vunpack.c.l.b16 %v643
      %v936 = vunpack.c.l.b16 %v644
      %v937 = vunpack.c.l.b16 %v645
      %v938 = vunpack.c.l.b16 %v646
      %v939 = vunpack.c.l.b16 %v647
      %v940 = vunpack.c.l.b16 %v648
      %v941 = vunpack.c.l.b16 %v649
      %v942 = vunpack.c.l.b16 %v650
      %v943 = vunpack.c.l.b16 %v651
      %v944 = vunpack.c.l.b16 %v652
      %v945 = vunpack.c.l.b16 %v653
      %v946 = vunpack.c.l.b16 %v654
      %v947 = vunpack.c.l.b16 %v655
      %v948 = vunpack.c.l.b16 %v656
      %v949 = vunpack.c.l.b16 %v657
      %v950 = vunpack.c.l.b16 %v658
      %v951 = vunpack.c.l.b16 %v659
      %v952 = vunpack.c.l.b16 %v660
      %v953 = vunpack.c.l.b16 %v661
      %v954 = vunpack.c.l.b16 %v662
      %v955 = vunpack.c.l.b16 %v663
      %v956 = vunpack.c.l.b16 %v664
      %v957 = vpack.c.b16 %v814, %v813
      %v958 = vpack.c.b16 %v816, %v815
      %v959 = vpack.c.b16 %v818, %v817
      %v960 = vpack.c.b16 %v820, %v819
      %v961 = vpack.c.b16 %v822, %v821
      %v962 = vpack.c.b16 %v824, %v823
      %v963 = vpack.c.b16 %v826, %v825
      %v964 = vpack.c.b16 %v828, %v827
      %v965 = vpack.c.b16 %v830, %v829
      %v966 = vpack.c.b16 %v832, %v831
      %v967 = vpack.c.b16 %v834, %v833
      %v968 = vpack.c.b16 %v836, %v835
      %v969 = vpack.c.b16 %v838, %v837
      %v970 = vpack.c.b16 %v840, %v839
      %v971 = vpack.c.b16 %v842, %v841
      %v972 = vpack.c.b16 %v844, %v843
      %v973 = vpack.c.b16 %v846, %v845
      %v974 = vpack.c.b16 %v848, %v847
      %v975 = vpack.c.b16 %v850, %v849
      %v976 = vpack.c.b16 %v852, %v851
      %v977 = vpack.c.b16 %v854, %v853
      %v978 = vpack.c.b16 %v856, %v855
      %v979 = vpack.c.b16 %v858, %v857
      %v980 = vpack.c.b16 %v860, %v859
      %v981 = vpack.c.b16 %v862, %v861
      %v982 = vpack.c.b16 %v864, %v863
      %v983 = vpack.c.b16 %v866, %v865
      %v984 = vpack.c.b16 %v868, %v867
      %v985 = vpack.c.b16 %v870, %v869
      %v986 = vpack.c.b16 %v872, %v871
      %v987 = vpack.c.b16 %v874, %v873
      %v988 = vpack.c.b16 %v876, %v875
      %v989 = vpack.c.b16 %v878, %v877
      %v990 = vpack.c.b16 %v880, %v879
      %v991 = vpack.c.b16 %v882, %v881
      %v992 = vpack.c.b16 %v884, %v883
      %v993 = vpack.c.b16 %v886, %v885
      %v994 = vpack.c.b16 %v888, %v887
      %v995 = vpack.c.b16 %v890, %v889
      %v996 = vpack.c.b16 %v892, %v891
      %v997 = vpack.c.b16 %v894, %v893
      %v998 = vpack.c.b16 %v896, %v895
      %v999 = vpack.c.b16 %v898, %v897
      %v1000 = vpack.c.b16 %v900, %v899
      %v1001 = vpack.c.b16 %v902, %v901
      %v1002 = vpack.c.b16 %v904, %v903
      %v1003 = vpack.c.b16 %v906, %v905
      %v1004 = vpack.c.b16 %v908, %v907
      %v1005 = vpack.c.b16 %v910, %v909
      %v1006 = vpack.c.b16 %v912, %v911
      %v1007 = vpack.c.b16 %v914, %v913
      %v1008 = vpack.c.b16 %v916, %v915
      %v1009 = vpack.c.b16 %v918, %v917
      %v1010 = vpack.c.b16 %v920, %v919
      %v1011 = vpack.c.b16 %v922, %v921
      %v1012 = vpack.c.b16 %v924, %v923
      %v1013 = vpack.c.b16 %v926, %v925
      %v1014 = vpack.c.b16 %v928, %v927
      %v1015 = vpack.c.b16 %v930, %v929
      %v1016 = vpack.c.b16 %v932, %v931
      %v1017 = vpack.c.b16 %v934, %v933
      %v1018 = vpack.c.b16 %v936, %v935
      %v1019 = vpack.c.b16 %v938, %v937
      %v1020 = vpack.c.b16 %v940, %v939
      %v1021 = vpack.c.b16 %v942, %v941
      %v1022 = vpack.c.b16 %v944, %v943
      %v1023 = vpack.c.b16 %v946, %v945
      %v1024 = vpack.c.b16 %v948, %v947
      %v1025 = vpack.c.b16 %v950, %v949
      %v1026 = vpack.c.b16 %v952, %v951
      %v1027 = vpack.c.b16 %v954, %v953
      %v1028 = vpack.c.b16 %v956, %v955
      %1101 = vmatpush.bf16.msra.mxu0 %v964
      %1102 = vmatpush.bf16.msra.mxu0 %v963
      %1103 = vmatpush.bf16.msra.mxu0 %v962
      %1104 = vmatpush.bf16.msra.mxu0 %v961
      %1105 = vmatpush.bf16.msra.mxu0 %v960
      %1106 = vmatpush.bf16.msra.mxu0 %v959
      %1107 = vmatpush.bf16.msra.mxu0 %v958
      %1108 = vmatpush.bf16.msra.mxu0 %v957
      %1109 = vmatmul.bf16.gmra.mxu0 %v361
      %v1110 = vpop.f32.mrf.mxu0
      %v1111 = vadd.f32 %v667, %v1110
      %v1112 = vpop.f32.mrf.mxu0
      %v1113 = vadd.f32 %v667, %v1112
      %1114 = vmatmul.bf16.gmra.mxu0 %v362
      %v1115 = vpop.f32.mrf.mxu0
      %v1116 = vadd.f32 %v667, %v1115
      %v1117 = vpop.f32.mrf.mxu0
      %v1118 = vadd.f32 %v667, %v1117
      %1119 = vmatmul.bf16.gmra.mxu0 %v363
      %v1120 = vpop.f32.mrf.mxu0
      %v1121 = vadd.f32 %v667, %v1120
      %v1122 = vpop.f32.mrf.mxu0
      %v1123 = vadd.f32 %v667, %v1122
      %1124 = vmatmul.bf16.gmra.mxu0 %v364
      %v1125 = vpop.f32.mrf.mxu0
      %v1126 = vadd.f32 %v667, %v1125
      %v1127 = vpop.f32.mrf.mxu0
      %v1128 = vadd.f32 %v667, %v1127
      %1129 = vmatmul.bf16.gmra.mxu0 %v365
      %v1130 = vpop.f32.mrf.mxu0
      %v1131 = vadd.f32 %v667, %v1130
      %v1132 = vpop.f32.mrf.mxu0
      %v1133 = vadd.f32 %v667, %v1132
      %1134 = vmatmul.bf16.gmra.mxu0 %v366
      %v1135 = vpop.f32.mrf.mxu0
      %v1136 = vadd.f32 %v667, %v1135
      %v1137 = vpop.f32.mrf.mxu0
      %v1138 = vadd.f32 %v667, %v1137
      %1139 = vmatmul.bf16.gmra.mxu0 %v367
      %v1140 = vpop.f32.mrf.mxu0
      %v1141 = vadd.f32 %v667, %v1140
      %v1142 = vpop.f32.mrf.mxu0
      %v1143 = vadd.f32 %v667, %v1142
      %1144 = vmatmul.bf16.gmra.mxu0 %v368
      %v1145 = vpop.f32.mrf.mxu0
      %v1146 = vadd.f32 %v667, %v1145
      %v1147 = vpop.f32.mrf.mxu0
      %v1148 = vadd.f32 %v667, %v1147
      %1149 = vdwg.mxu0
      %1150 = vmatpush.bf16.msra.mxu0 %v972
      %1151 = vmatpush.bf16.msra.mxu0 %v971
      %1152 = vmatpush.bf16.msra.mxu0 %v970
      %1153 = vmatpush.bf16.msra.mxu0 %v969
      %1154 = vmatpush.bf16.msra.mxu0 %v968
      %1155 = vmatpush.bf16.msra.mxu0 %v967
      %1156 = vmatpush.bf16.msra.mxu0 %v966
      %1157 = vmatpush.bf16.msra.mxu0 %v965
      %1158 = vmatmul.bf16.gmra.mxu0 %v406
      %v1159 = vpop.f32.mrf.mxu0
      %v1160 = vadd.f32 %v1111, %v1159
      %v1161 = vpop.f32.mrf.mxu0
      %v1162 = vadd.f32 %v1113, %v1161
      %1163 = vmatmul.bf16.gmra.mxu0 %v414
      %v1164 = vpop.f32.mrf.mxu0
      %v1165 = vadd.f32 %v1116, %v1164
      %v1166 = vpop.f32.mrf.mxu0
      %v1167 = vadd.f32 %v1118, %v1166
      %1168 = vmatmul.bf16.gmra.mxu0 %v422
      %v1169 = vpop.f32.mrf.mxu0
      %v1170 = vadd.f32 %v1121, %v1169
      %v1171 = vpop.f32.mrf.mxu0
      %v1172 = vadd.f32 %v1123, %v1171
      %1173 = vmatmul.bf16.gmra.mxu0 %v430
      %v1174 = vpop.f32.mrf.mxu0
      %v1175 = vadd.f32 %v1126, %v1174
      %v1176 = vpop.f32.mrf.mxu0
      %v1177 = vadd.f32 %v1128, %v1176
      %1178 = vmatmul.bf16.gmra.mxu0 %v438
      %v1179 = vpop.f32.mrf.mxu0
      %v1180 = vadd.f32 %v1131, %v1179
      %v1181 = vpop.f32.mrf.mxu0
      %v1182 = vadd.f32 %v1133, %v1181
      %1183 = vmatmul.bf16.gmra.mxu0 %v446
      %v1184 = vpop.f32.mrf.mxu0
      %v1185 = vadd.f32 %v1136, %v1184
      %v1186 = vpop.f32.mrf.mxu0
      %v1187 = vadd.f32 %v1138, %v1186
      %1188 = vmatmul.bf16.gmra.mxu0 %v454
      %v1189 = vpop.f32.mrf.mxu0
      %v1190 = vadd.f32 %v1141, %v1189
      %v1191 = vpop.f32.mrf.mxu0
      %v1192 = vadd.f32 %v1143, %v1191
      %1193 = vmatmul.bf16.gmra.mxu0 %v462
      %v1194 = vpop.f32.mrf.mxu0
      %v1195 = vadd.f32 %v1146, %v1194
      %v1196 = vpop.f32.mrf.mxu0
      %v1197 = vadd.f32 %v1148, %v1196
      %1198 = vdwg.mxu0
      %1199 = vmatpush.bf16.msra.mxu0 %v980
      %1200 = vmatpush.bf16.msra.mxu0 %v979
      %1201 = vmatpush.bf16.msra.mxu0 %v978
      %1202 = vmatpush.bf16.msra.mxu0 %v977
      %1203 = vmatpush.bf16.msra.mxu0 %v976
      %1204 = vmatpush.bf16.msra.mxu0 %v975
      %1205 = vmatpush.bf16.msra.mxu0 %v974
      %1206 = vmatpush.bf16.msra.mxu0 %v973
      %1207 = vmatmul.bf16.gmra.mxu0 %v474
      %v1208 = vpop.f32.mrf.mxu0
      %v1209 = vadd.f32 %v1160, %v1208
      %v1210 = vpop.f32.mrf.mxu0
      %v1211 = vadd.f32 %v1162, %v1210
      %1212 = vmatmul.bf16.gmra.mxu0 %v476
      %v1213 = vpop.f32.mrf.mxu0
      %v1214 = vadd.f32 %v1165, %v1213
      %v1215 = vpop.f32.mrf.mxu0
      %v1216 = vadd.f32 %v1167, %v1215
      %1217 = vmatmul.bf16.gmra.mxu0 %v478
      %v1218 = vpop.f32.mrf.mxu0
      %v1219 = vadd.f32 %v1170, %v1218
      %v1220 = vpop.f32.mrf.mxu0
      %v1221 = vadd.f32 %v1172, %v1220
      %1222 = vmatmul.bf16.gmra.mxu0 %v480
      %v1223 = vpop.f32.mrf.mxu0
      %v1224 = vadd.f32 %v1175, %v1223
      %v1225 = vpop.f32.mrf.mxu0
      %v1226 = vadd.f32 %v1177, %v1225
      %1227 = vmatmul.bf16.gmra.mxu0 %v482
      %v1228 = vpop.f32.mrf.mxu0
      %v1229 = vadd.f32 %v1180, %v1228
      %v1230 = vpop.f32.mrf.mxu0
      %v1231 = vadd.f32 %v1182, %v1230
      %1232 = vmatmul.bf16.gmra.mxu0 %v484
      %v1233 = vpop.f32.mrf.mxu0
      %v1234 = vadd.f32 %v1185, %v1233
      %v1235 = vpop.f32.mrf.mxu0
      %v1236 = vadd.f32 %v1187, %v1235
      %1237 = vmatmul.bf16.gmra.mxu0 %v486
      %v1238 = vpop.f32.mrf.mxu0
      %v1239 = vadd.f32 %v1190, %v1238
      %v1240 = vpop.f32.mrf.mxu0
      %v1241 = vadd.f32 %v1192, %v1240
      %1242 = vmatmul.bf16.gmra.mxu0 %v488
      %v1243 = vpop.f32.mrf.mxu0
      %v1244 = vadd.f32 %v1195, %v1243
      %v1245 = vpop.f32.mrf.mxu0
      %v1246 = vadd.f32 %v1197, %v1245
      %1247 = vdwg.mxu0
      %1248 = vmatpush.bf16.msra.mxu0 %v988
      %1249 = vmatpush.bf16.msra.mxu0 %v987
      %1250 = vmatpush.bf16.msra.mxu0 %v986
      %1251 = vmatpush.bf16.msra.mxu0 %v985
      %1252 = vmatpush.bf16.msra.mxu0 %v984
      %1253 = vmatpush.bf16.msra.mxu0 %v983
      %1254 = vmatpush.bf16.msra.mxu0 %v982
      %1255 = vmatpush.bf16.msra.mxu0 %v981
      %1256 = vmatmul.bf16.gmra.mxu0 %v362
      %v1257 = vpop.f32.mrf.mxu0
      %v1258 = vadd.f32 %v1209, %v1257
      %v1259 = vpop.f32.mrf.mxu0
      %v1260 = vadd.f32 %v1211, %v1259
      %1261 = vmatmul.bf16.gmra.mxu0 %v363
      %v1262 = vpop.f32.mrf.mxu0
      %v1263 = vadd.f32 %v1214, %v1262
      %v1264 = vpop.f32.mrf.mxu0
      %v1265 = vadd.f32 %v1216, %v1264
      %1266 = vmatmul.bf16.gmra.mxu0 %v364
      %v1267 = vpop.f32.mrf.mxu0
      %v1268 = vadd.f32 %v1219, %v1267
      %v1269 = vpop.f32.mrf.mxu0
      %v1270 = vadd.f32 %v1221, %v1269
      %1271 = vmatmul.bf16.gmra.mxu0 %v365
      %v1272 = vpop.f32.mrf.mxu0
      %v1273 = vadd.f32 %v1224, %v1272
      %v1274 = vpop.f32.mrf.mxu0
      %v1275 = vadd.f32 %v1226, %v1274
      %1276 = vmatmul.bf16.gmra.mxu0 %v366
      %v1277 = vpop.f32.mrf.mxu0
      %v1278 = vadd.f32 %v1229, %v1277
      %v1279 = vpop.f32.mrf.mxu0
      %v1280 = vadd.f32 %v1231, %v1279
      %1281 = vmatmul.bf16.gmra.mxu0 %v367
      %v1282 = vpop.f32.mrf.mxu0
      %v1283 = vadd.f32 %v1234, %v1282
      %v1284 = vpop.f32.mrf.mxu0
      %v1285 = vadd.f32 %v1236, %v1284
      %1286 = vmatmul.bf16.gmra.mxu0 %v368
      %v1287 = vpop.f32.mrf.mxu0
      %v1288 = vadd.f32 %v1239, %v1287
      %v1289 = vpop.f32.mrf.mxu0
      %v1290 = vadd.f32 %v1241, %v1289
      %1291 = vmatmul.bf16.gmra.mxu0 %v389
      %v1292 = vpop.f32.mrf.mxu0
      %v1293 = vadd.f32 %v1244, %v1292
      %v1294 = vpop.f32.mrf.mxu0
      %v1295 = vadd.f32 %v1246, %v1294
      %1296 = vdwg.mxu0
      %1297 = vmatpush.bf16.msra.mxu0 %v996
      %1298 = vmatpush.bf16.msra.mxu0 %v995
      %1299 = vmatpush.bf16.msra.mxu0 %v994
      %1300 = vmatpush.bf16.msra.mxu0 %v993
      %1301 = vmatpush.bf16.msra.mxu0 %v992
      %1302 = vmatpush.bf16.msra.mxu0 %v991
      %1303 = vmatpush.bf16.msra.mxu0 %v990
      %1304 = vmatpush.bf16.msra.mxu0 %v989
      %1305 = vmatmul.bf16.gmra.mxu0 %v414
      %v1306 = vpop.f32.mrf.mxu0
      %v1307 = vadd.f32 %v1258, %v1306
      %v1308 = vpop.f32.mrf.mxu0
      %v1309 = vadd.f32 %v1260, %v1308
      %1310 = vmatmul.bf16.gmra.mxu0 %v422
      %v1311 = vpop.f32.mrf.mxu0
      %v1312 = vadd.f32 %v1263, %v1311
      %v1313 = vpop.f32.mrf.mxu0
      %v1314 = vadd.f32 %v1265, %v1313
      %1315 = vmatmul.bf16.gmra.mxu0 %v430
      %v1316 = vpop.f32.mrf.mxu0
      %v1317 = vadd.f32 %v1268, %v1316
      %v1318 = vpop.f32.mrf.mxu0
      %v1319 = vadd.f32 %v1270, %v1318
      %1320 = vmatmul.bf16.gmra.mxu0 %v438
      %v1321 = vpop.f32.mrf.mxu0
      %v1322 = vadd.f32 %v1273, %v1321
      %v1323 = vpop.f32.mrf.mxu0
      %v1324 = vadd.f32 %v1275, %v1323
      %1325 = vmatmul.bf16.gmra.mxu0 %v446
      %v1326 = vpop.f32.mrf.mxu0
      %v1327 = vadd.f32 %v1278, %v1326
      %v1328 = vpop.f32.mrf.mxu0
      %v1329 = vadd.f32 %v1280, %v1328
      %1330 = vmatmul.bf16.gmra.mxu0 %v454
      %v1331 = vpop.f32.mrf.mxu0
      %v1332 = vadd.f32 %v1283, %v1331
      %v1333 = vpop.f32.mrf.mxu0
      %v1334 = vadd.f32 %v1285, %v1333
      %1335 = vmatmul.bf16.gmra.mxu0 %v462
      %v1336 = vpop.f32.mrf.mxu0
      %v1337 = vadd.f32 %v1288, %v1336
      %v1338 = vpop.f32.mrf.mxu0
      %v1339 = vadd.f32 %v1290, %v1338
      %1340 = vmatmul.bf16.gmra.mxu0 %v504
      %v1341 = vpop.f32.mrf.mxu0
      %v1342 = vadd.f32 %v1293, %v1341
      %v1343 = vpop.f32.mrf.mxu0
      %v1344 = vadd.f32 %v1295, %v1343
      %1345 = vdwg.mxu0
      %1346 = vmatpush.bf16.msra.mxu0 %v1004
      %1347 = vmatpush.bf16.msra.mxu0 %v1003
      %1348 = vmatpush.bf16.msra.mxu0 %v1002
      %1349 = vmatpush.bf16.msra.mxu0 %v1001
      %1350 = vmatpush.bf16.msra.mxu0 %v1000
      %1351 = vmatpush.bf16.msra.mxu0 %v999
      %1352 = vmatpush.bf16.msra.mxu0 %v998
      %1353 = vmatpush.bf16.msra.mxu0 %v997
      %1354 = vmatmul.bf16.gmra.mxu0 %v476
      %v1355 = vpop.f32.mrf.mxu0
      %v1356 = vadd.f32 %v1307, %v1355
      %v1357 = vpop.f32.mrf.mxu0
      %v1358 = vadd.f32 %v1309, %v1357
      %1359 = vmatmul.bf16.gmra.mxu0 %v478
      %v1360 = vpop.f32.mrf.mxu0
      %v1361 = vadd.f32 %v1312, %v1360
      %v1362 = vpop.f32.mrf.mxu0
      %v1363 = vadd.f32 %v1314, %v1362
      %1364 = vmatmul.bf16.gmra.mxu0 %v480
      %v1365 = vpop.f32.mrf.mxu0
      %v1366 = vadd.f32 %v1317, %v1365
      %v1367 = vpop.f32.mrf.mxu0
      %v1368 = vadd.f32 %v1319, %v1367
      %1369 = vmatmul.bf16.gmra.mxu0 %v482
      %v1370 = vpop.f32.mrf.mxu0
      %v1371 = vadd.f32 %v1322, %v1370
      %v1372 = vpop.f32.mrf.mxu0
      %v1373 = vadd.f32 %v1324, %v1372
      %1374 = vmatmul.bf16.gmra.mxu0 %v484
      %v1375 = vpop.f32.mrf.mxu0
      %v1376 = vadd.f32 %v1327, %v1375
      %v1377 = vpop.f32.mrf.mxu0
      %v1378 = vadd.f32 %v1329, %v1377
      %1379 = vmatmul.bf16.gmra.mxu0 %v486
      %v1380 = vpop.f32.mrf.mxu0
      %v1381 = vadd.f32 %v1332, %v1380
      %v1382 = vpop.f32.mrf.mxu0
      %v1383 = vadd.f32 %v1334, %v1382
      %1384 = vmatmul.bf16.gmra.mxu0 %v488
      %v1385 = vpop.f32.mrf.mxu0
      %v1386 = vadd.f32 %v1337, %v1385
      %v1387 = vpop.f32.mrf.mxu0
      %v1388 = vadd.f32 %v1339, %v1387
      %1389 = vmatmul.bf16.gmra.mxu0 %v507
      %v1390 = vpop.f32.mrf.mxu0
      %v1391 = vadd.f32 %v1342, %v1390
      %v1392 = vpop.f32.mrf.mxu0
      %v1393 = vadd.f32 %v1344, %v1392
      %1394 = vdwg.mxu0
      %1395 = vmatpush.bf16.msra.mxu0 %v1012
      %1396 = vmatpush.bf16.msra.mxu0 %v1011
      %1397 = vmatpush.bf16.msra.mxu0 %v1010
      %1398 = vmatpush.bf16.msra.mxu0 %v1009
      %1399 = vmatpush.bf16.msra.mxu0 %v1008
      %1400 = vmatpush.bf16.msra.mxu0 %v1007
      %1401 = vmatpush.bf16.msra.mxu0 %v1006
      %1402 = vmatpush.bf16.msra.mxu0 %v1005
      %1403 = vmatmul.bf16.gmra.mxu0 %v363
      %v1404 = vpop.f32.mrf.mxu0
      %v1405 = vadd.f32 %v1356, %v1404
      %v1406 = vpop.f32.mrf.mxu0
      %v1407 = vadd.f32 %v1358, %v1406
      %1408 = vmatmul.bf16.gmra.mxu0 %v364
      %v1409 = vpop.f32.mrf.mxu0
      %v1410 = vadd.f32 %v1361, %v1409
      %v1411 = vpop.f32.mrf.mxu0
      %v1412 = vadd.f32 %v1363, %v1411
      %1413 = vmatmul.bf16.gmra.mxu0 %v365
      %v1414 = vpop.f32.mrf.mxu0
      %v1415 = vadd.f32 %v1366, %v1414
      %v1416 = vpop.f32.mrf.mxu0
      %v1417 = vadd.f32 %v1368, %v1416
      %1418 = vmatmul.bf16.gmra.mxu0 %v366
      %v1419 = vpop.f32.mrf.mxu0
      %v1420 = vadd.f32 %v1371, %v1419
      %v1421 = vpop.f32.mrf.mxu0
      %v1422 = vadd.f32 %v1373, %v1421
      %1423 = vmatmul.bf16.gmra.mxu0 %v367
      %v1424 = vpop.f32.mrf.mxu0
      %v1425 = vadd.f32 %v1376, %v1424
      %v1426 = vpop.f32.mrf.mxu0
      %v1427 = vadd.f32 %v1378, %v1426
      %1428 = vmatmul.bf16.gmra.mxu0 %v368
      %v1429 = vpop.f32.mrf.mxu0
      %v1430 = vadd.f32 %v1381, %v1429
      %v1431 = vpop.f32.mrf.mxu0
      %v1432 = vadd.f32 %v1383, %v1431
      %1433 = vmatmul.bf16.gmra.mxu0 %v389
      %v1434 = vpop.f32.mrf.mxu0
      %v1435 = vadd.f32 %v1386, %v1434
      %v1436 = vpop.f32.mrf.mxu0
      %v1437 = vadd.f32 %v1388, %v1436
      %1438 = vmatmul.bf16.gmra.mxu0 %v390
      %v1439 = vpop.f32.mrf.mxu0
      %v1440 = vadd.f32 %v1391, %v1439
      %v1441 = vpop.f32.mrf.mxu0
      %v1442 = vadd.f32 %v1393, %v1441
      %1443 = vdwg.mxu0
      %1444 = vmatpush.bf16.msra.mxu0 %v1020
      %1445 = vmatpush.bf16.msra.mxu0 %v1019
      %1446 = vmatpush.bf16.msra.mxu0 %v1018
      %1447 = vmatpush.bf16.msra.mxu0 %v1017
      %1448 = vmatpush.bf16.msra.mxu0 %v1016
      %1449 = vmatpush.bf16.msra.mxu0 %v1015
      %1450 = vmatpush.bf16.msra.mxu0 %v1014
      %1451 = vmatpush.bf16.msra.mxu0 %v1013
      %1452 = vmatmul.bf16.gmra.mxu0 %v422
      %v1453 = vpop.f32.mrf.mxu0
      %v1454 = vadd.f32 %v1405, %v1453
      %v1455 = vpop.f32.mrf.mxu0
      %v1456 = vadd.f32 %v1407, %v1455
      %1457 = vmatmul.bf16.gmra.mxu0 %v430
      %v1458 = vpop.f32.mrf.mxu0
      %v1459 = vadd.f32 %v1410, %v1458
      %v1460 = vpop.f32.mrf.mxu0
      %v1461 = vadd.f32 %v1412, %v1460
      %1462 = vmatmul.bf16.gmra.mxu0 %v438
      %v1463 = vpop.f32.mrf.mxu0
      %v1464 = vadd.f32 %v1415, %v1463
      %v1465 = vpop.f32.mrf.mxu0
      %v1466 = vadd.f32 %v1417, %v1465
      %1467 = vmatmul.bf16.gmra.mxu0 %v446
      %v1468 = vpop.f32.mrf.mxu0
      %v1469 = vadd.f32 %v1420, %v1468
      %v1470 = vpop.f32.mrf.mxu0
      %v1471 = vadd.f32 %v1422, %v1470
      %1472 = vmatmul.bf16.gmra.mxu0 %v454
      %v1473 = vpop.f32.mrf.mxu0
      %v1474 = vadd.f32 %v1425, %v1473
      %v1475 = vpop.f32.mrf.mxu0
      %v1476 = vadd.f32 %v1427, %v1475
      %1477 = vmatmul.bf16.gmra.mxu0 %v462
      %v1478 = vpop.f32.mrf.mxu0
      %v1479 = vadd.f32 %v1430, %v1478
      %v1480 = vpop.f32.mrf.mxu0
      %v1481 = vadd.f32 %v1432, %v1480
      %1482 = vmatmul.bf16.gmra.mxu0 %v504
      %v1483 = vpop.f32.mrf.mxu0
      %v1484 = vadd.f32 %v1435, %v1483
      %v1485 = vpop.f32.mrf.mxu0
      %v1486 = vadd.f32 %v1437, %v1485
      %1487 = vmatmul.bf16.gmra.mxu0 %v516
      %v1488 = vpop.f32.mrf.mxu0
      %v1489 = vadd.f32 %v1440, %v1488
      %v1490 = vpop.f32.mrf.mxu0
      %v1491 = vadd.f32 %v1442, %v1490
      %1492 = vdwg.mxu0
      %1493 = vmatpush.bf16.msra.mxu0 %v1028
      %1494 = vmatpush.bf16.msra.mxu0 %v1027
      %1495 = vmatpush.bf16.msra.mxu0 %v1026
      %1496 = vmatpush.bf16.msra.mxu0 %v1025
      %1497 = vmatpush.bf16.msra.mxu0 %v1024
      %1498 = vmatpush.bf16.msra.mxu0 %v1023
      %1499 = vmatpush.bf16.msra.mxu0 %v1022
      %1500 = vmatpush.bf16.msra.mxu0 %v1021
      %1501 = vmatmul.bf16.gmra.mxu0 %v478
      %v1502 = vpop.f32.mrf.mxu0
      %v1503 = vadd.f32 %v1454, %v1502
      %v1504 = vpop.f32.mrf.mxu0
      %v1505 = vadd.f32 %v1456, %v1504
      %1506 = vmatmul.bf16.gmra.mxu0 %v480
      %v1507 = vpop.f32.mrf.mxu0
      %v1508 = vadd.f32 %v1459, %v1507
      %v1509 = vpop.f32.mrf.mxu0
      %v1510 = vadd.f32 %v1461, %v1509
      %1511 = vmatmul.bf16.gmra.mxu0 %v482
      %v1512 = vpop.f32.mrf.mxu0
      %v1513 = vadd.f32 %v1464, %v1512
      %v1514 = vpop.f32.mrf.mxu0
      %v1515 = vadd.f32 %v1466, %v1514
      %1516 = vmatmul.bf16.gmra.mxu0 %v484
      %v1517 = vpop.f32.mrf.mxu0
      %v1518 = vadd.f32 %v1469, %v1517
      %v1519 = vpop.f32.mrf.mxu0
      %v1520 = vadd.f32 %v1471, %v1519
      %1521 = vmatmul.bf16.gmra.mxu0 %v486
      %v1522 = vpop.f32.mrf.mxu0
      %v1523 = vadd.f32 %v1474, %v1522
      %v1524 = vpop.f32.mrf.mxu0
      %v1525 = vadd.f32 %v1476, %v1524
      %1526 = vmatmul.bf16.gmra.mxu0 %v488
      %v1527 = vpop.f32.mrf.mxu0
      %v1528 = vadd.f32 %v1479, %v1527
      %v1529 = vpop.f32.mrf.mxu0
      %v1530 = vadd.f32 %v1481, %v1529
      %1531 = vmatmul.bf16.gmra.mxu0 %v507
      %v1532 = vpop.f32.mrf.mxu0
      %v1533 = vadd.f32 %v1484, %v1532
      %v1534 = vpop.f32.mrf.mxu0
      %v1535 = vadd.f32 %v1486, %v1534
      %1536 = vmatmul.bf16.gmra.mxu0 %v519
      %v1537 = vpop.f32.mrf.mxu0
      %v1538 = vadd.f32 %v1489, %v1537
      %v1539 = vpop.f32.mrf.mxu0
      %v1540 = vadd.f32 %v1491, %v1539
      %1541 = vdwg.mxu0
      %v1542 = vmax.f32 %v1503, 0.0
      %v1543 = vmax.f32 %v1505, 0.0
      %v1544 = vmax.f32 %v1508, 0.0
      %v1545 = vmax.f32 %v1510, 0.0
      %v1546 = vmax.f32 %v1513, 0.0
      %v1547 = vmax.f32 %v1515, 0.0
      %v1548 = vmax.f32 %v1518, 0.0
      %v1549 = vmax.f32 %v1520, 0.0
      %v1550 = vmax.f32 %v1523, 0.0
      %v1551 = vmax.f32 %v1525, 0.0
      %v1552 = vmax.f32 %v1528, 0.0
      %v1553 = vmax.f32 %v1530, 0.0
      %v1554 = vmax.f32 %v1533, 0.0
      %v1555 = vmax.f32 %v1535, 0.0
      %v1556 = vmax.f32 %v1538, 0.0
      %v1557 = vmax.f32 %v1540, 0.0
      %v1558 = vmax.f32 %v1542, %v1544
      %v1559 = vmax.f32 %v1543, %v1545
      %v1560 = vmax.f32 %v1546, %v1548
      %v1561 = vmax.f32 %v1547, %v1549
      %v1562 = vmax.f32 %v1550, %v1552
      %v1563 = vmax.f32 %v1551, %v1553
      %v1564 = vmax.f32 %v1554, %v1556
      %v1565 = vmax.f32 %v1555, %v1557
      %1566 = vst [vmem:[#allocation2] sm:$0xff] %v1558
      %1567 = vst [vmem:[#allocation2 + $0x8] sm:$0xff] %v1559
      %1568 = vst [vmem:[#allocation2 + $0x10] sm:$0xff] %v1560
      %1569 = vst [vmem:[#allocation2 + $0x18] sm:$0xff] %v1561
      %1570 = vst [vmem:[#allocation2 + $0x20] sm:$0xff] %v1562
      %1571 = vst [vmem:[#allocation2 + $0x28] sm:$0xff] %v1563
      %1572 = vst [vmem:[#allocation2 + $0x30] sm:$0xff] %v1564
      %1573 = vst [vmem:[#allocation2 + $0x38] sm:$0xff] %v1565
      %v1574 = vld [vmem:[#allocation2] ss:$2 sm:$0xff]
      %s1575 = scalar_lea.vmem [#allocation2], 16
      %v1576 = vld [vmem:[%s1575] ss:$2 sm:$0xff]
      %s1577 = scalar_lea.vmem [#allocation2], 32
      %v1578 = vld [vmem:[%s1577] ss:$2 sm:$0xff]
      %s1579 = scalar_lea.vmem [#allocation2], 48
      %v1580 = vld [vmem:[%s1579] ss:$2 sm:$0xff]
      %s1581 = scalar_lea.vmem [#allocation2], 1
      %v1582 = vld [vmem:[%s1581] ss:$2 sm:$0xff]
      %s1583 = scalar_lea.vmem [#allocation2], 17
      %v1584 = vld [vmem:[%s1583] ss:$2 sm:$0xff]
      %s1585 = scalar_lea.vmem [#allocation2], 33
      %v1586 = vld [vmem:[%s1585] ss:$2 sm:$0xff]
      %s1587 = scalar_lea.vmem [#allocation2], 49
      %v1588 = vld [vmem:[%s1587] ss:$2 sm:$0xff]
      %v1589 = vmax.f32 %v1574, %v1582
      %v1590 = vmax.f32 %v1576, %v1584
      %v1591 = vmax.f32 %v1578, %v1586
      %v1592 = vmax.f32 %v1580, %v1588
      %v1593 = vpack.c.bf16 %v1589, %v1589
      %v1594 = vpack.c.bf16 %v1590, %v1590
      %v1595 = vpack.c.bf16 %v1591, %v1591
      %v1596 = vpack.c.bf16 %v1592, %v1592
      %1597 = vst [vmem:[%s305] sm:$0xf] %v1593
      %1598 = vst [vmem:[%s305 + $0x4] sm:$0xf] %v1594
      %1599 = vst [vmem:[%s305 + $0x8] sm:$0xf] %v1595
      %1600 = vst [vmem:[%s305 + $0xc] sm:$0xf] %v1596
      %s1601 = smul.u32 4, %s20
      %p1602 = scmp.lt.s32.totalorder %s19, 1
      %s1603 = scalar_select %p1602, %s19, 1
      %p1604 = scmp.lt.s32.totalorder %s1601, 3
      %s1605 = scalar_select %p1604, %s1601, 3
      %s1606 = smul.addr %s1603, 4
      %s1607 = sadd.s32 %s1605, %s1606
      %s1608 = smul.addr %s1607, 4
      %s1609 = scalar_lea.vmem %s4, %s1608
      // Predicated region
      $region37: #{vgg19_slice1.8} parent=35 // pred_check
        %p1610 = pneg %p149
      $region38: #{vgg19_slice1.8} parent=35 // pred_check_branch
        %1612 = sbr.rel (%p1610) target = $region40
      $region39: #{vgg19_slice1.8} parent=35 // pred_region
        %s1613 = smul.u32 4, %s20
      $region40: #{vgg19_slice1.8} parent=35 // pred_fallthru
        _
    $region36: #{vgg19_slice1.8} parent=5 // pred_fallthru
      _
    %p1614 = scmp.le.s32.totalorder 2, %s10
    // Predicated region
    $region41: #{vgg19_slice1.8} parent=5 // pred_check
      %p1615 = pneg %p1614
    $region42: #{vgg19_slice1.8} parent=5 // pred_check_branch
      %1617 = sbr.rel (%p1615) target = $region44
    $region43: #{vgg19_slice1.8} parent=5 // pred_region
      %s1618 = ssub.s32 %s10, 2
      // Predicated region
      $region45: #{vgg19_slice1.8} parent=43 // pred_check
        %p1619 = pneg %p155
      $region46: #{vgg19_slice1.8} parent=43 // pred_check_branch
        %1621 = sbr.rel (%p1619) target = $region48
      $region47: #{vgg19_slice1.8} parent=43 // pred_region
        %s1622 = smul.u32 4, %s22
        %p1623 = scmp.lt.s32.totalorder %s21, 1
        %s1624 = scalar_select %p1623, %s21, 1
        %p1625 = scmp.lt.s32.totalorder %s1622, 3
        %s1626 = scalar_select %p1625, %s1622, 3
        %s1627 = smul.addr %s1624, 4
        %s1628 = sadd.s32 %s1626, %s1627
        %s1629 = smul.addr %s1628, 4
        %s1630 = scalar_lea.vmem %s4, %s1629
      $region48: #{vgg19_slice1.8} parent=43 // pred_fallthru
        _
    $region44: #{vgg19_slice1.8} parent=5 // pred_fallthru
      _
  $region6: #{vgg19_slice1.8} parent=0 // loop_footer
    %s14 = sadd.s32 1, %s10
  $region7: #{vgg19_slice1.8} parent=0 // loop_footer_branch
    %9 = sbr.rel target = $region3
  $region8: #{vgg19_slice1.8} parent=0 // loop_exit
    _

// kernel: vgg19_slice1.9
$region0: #{vgg19_slice1.9}
  #allocation0 [shape = 'u32[]', space=smem, size = 0x4, offset = 0x4, fixed_abs, tag = 'smem constant byte address 0x4 - core index']
  #allocation1 [shape = 'u32[72,128]{1,0:T(1,128)}', space=vmem, size = 0x9000, scoped, tag = 'internal scratch']
  %s0 = inlined_call_operand.vmem [shape: bf16[2,64,128], index: 0, kind: input, shape index: {}, may-alias: {0,1}]
  %s1 = inlined_call_operand.vmem [shape: bf16[2,64,128], index: 1, kind: input, shape index: {}, may-alias: {0,1}]
  %s2 = inlined_call_operand.vmem [shape: bf16[1152,256], index: 2, kind: input, shape index: {}]
  %s3 = inlined_call_operand.vmem [shape: f32[1,256], index: 3, kind: input, shape index: {}]
  %s4 = inlined_call_operand.vmem [shape: bf16[2,32,256], index: 4, kind: output, shape index: {}]
  %s5 = sld [smem:[#allocation0]]
  $region49: #{vgg19_slice1.9} parent=0
    _
  %s7 = ssub.s32 1, %s5
  %s8 = scalar_select 0, %s7, %s5
  loop: start=0, step=1, limit=4
  $region2: #{vgg19_slice1.9} parent=0 // loop_pre_header
    _
  $region3: #{vgg19_slice1.9} parent=0 // loop_header
    %s10 = sphi 0, %s14
    %p11 = scmp.ge.s32.totalorder %s10, 4
    %s17 = sphi 0, %s29
    %s18 = sphi 0, %s25
    %s19 = sphi 0, %s17
    %s20 = sphi 0, %s18
    %s21 = sphi 0, %s19
    %s22 = sphi 0, %s20
    %s34 = sphi 0, %s36
    %s37 = sphi 0, %s34
    %s38 = sphi 0, %s37
    %s54 = sphi 0, %s38
    %s64 = sphi 0, %s66
    %s67 = sphi 0, %s64
    %s68 = sphi 0, %s67
    %s84 = sphi 0, %s68
    %s88 = sphi 0, %s88
    %s90 = sphi 0, %s88
    %s91 = sphi 0, %s90
    %s105 = sphi 0, %s91
    %s109 = sphi 0, %s109
    %s111 = sphi 0, %s109
    %s112 = sphi 0, %s111
    %s126 = sphi 0, %s112
    %s134 = sphi 0, %s136
    %s137 = sphi 0, %s134
    %s138 = sphi 0, %s137
    %s154 = sphi 0, %s138
  $region4: #{vgg19_slice1.9} parent=0 // loop_header_branch
    %13 = sbr.rel (%p11) target = $region8
  $region5: #{vgg19_slice1.9} parent=0 // loop_body
    %s15 = ssub.s32 %s10, 1
    %s16 = ssub.s32 %s10, 2
    %s23 = sadd.s32 1, %s18
    %p24 = scmp.ge.s32.totalorder %s23, 1
    %s25 = scalar_select %p24, 0, %s23
    %s26 = sadd.s32 1, %s17
    %s27 = scalar_select %p24, %s26, %s17
    %p28 = scmp.ge.s32.totalorder %s27, 2
    %s29 = scalar_select %p28, 0, %s27
    %s30 = ssub.s32 %s17, %s29
    %s31 = ssub.s32 %s18, %s25
    %s32 = sor.u32 %s30, %s31
    %p33 = scmp.eq.s32.totalorder %s32, 0
    %s35 = sadd.s32 %s34, 1
    %s36 = scalar_select %p33, %s34, %s35
    %p39 = pneg %p33
    %p40 = scmp.eq.s32.totalorder %s10, 1
    %p41 = por %p39, %p40
    %p42 = scmp.ne.s32.totalorder %s34, %s37
    %p43 = scmp.eq.s32.totalorder %s10, 0
    %p44 = por %p42, %p43
    %p45 = scmp.ne.s32.totalorder %s34, %s37
    %p46 = scmp.eq.s32.totalorder %s15, 1
    %p47 = por %p45, %p46
    %p48 = scmp.ne.s32.totalorder %s37, %s38
    %p49 = scmp.eq.s32.totalorder %s15, 0
    %p50 = por %p48, %p49
    %p51 = scmp.ne.s32.totalorder %s37, %s38
    %p52 = scmp.eq.s32.totalorder %s16, 1
    %p53 = por %p51, %p52
    %p55 = scmp.ne.s32.totalorder %s38, %s54
    %p56 = scmp.eq.s32.totalorder %s16, 0
    %p57 = por %p55, %p56
    %s58 = sadd.s32 %s18, 1
    %s59 = sadd.s32 %s25, 1
    %s60 = ssub.s32 %s17, %s29
    %s61 = ssub.s32 %s58, %s59
    %s62 = sor.u32 %s60, %s61
    %p63 = scmp.eq.s32.totalorder %s62, 0
    %s65 = sadd.s32 %s64, 1
    %s66 = scalar_select %p63, %s64, %s65
    %p69 = pneg %p63
    %p70 = scmp.eq.s32.totalorder %s10, 1
    %p71 = por %p69, %p70
    %p72 = scmp.ne.s32.totalorder %s64, %s67
    %p73 = scmp.eq.s32.totalorder %s10, 0
    %p74 = por %p72, %p73
    %p75 = scmp.ne.s32.totalorder %s64, %s67
    %p76 = scmp.eq.s32.totalorder %s15, 1
    %p77 = por %p75, %p76
    %p78 = scmp.ne.s32.totalorder %s67, %s68
    %p79 = scmp.eq.s32.totalorder %s15, 0
    %p80 = por %p78, %p79
    %p81 = scmp.ne.s32.totalorder %s67, %s68
    %p82 = scmp.eq.s32.totalorder %s16, 1
    %p83 = por %p81, %p82
    %p85 = scmp.ne.s32.totalorder %s68, %s84
    %p86 = scmp.eq.s32.totalorder %s16, 0
    %p87 = por %p85, %p86
    %s89 = sadd.s32 %s88, 1
    %p92 = scmp.eq.s32.totalorder %s10, 1
    %p93 = scmp.ne.s32.totalorder %s88, %s90
    %p94 = scmp.eq.s32.totalorder %s10, 0
    %p95 = por %p93, %p94
    %p96 = scmp.ne.s32.totalorder %s88, %s90
    %p97 = scmp.eq.s32.totalorder %s15, 1
    %p98 = por %p96, %p97
    %p99 = scmp.ne.s32.totalorder %s90, %s91
    %p100 = scmp.eq.s32.totalorder %s15, 0
    %p101 = por %p99, %p100
    %p102 = scmp.ne.s32.totalorder %s90, %s91
    %p103 = scmp.eq.s32.totalorder %s16, 1
    %p104 = por %p102, %p103
    %p106 = scmp.ne.s32.totalorder %s91, %s105
    %p107 = scmp.eq.s32.totalorder %s16, 0
    %p108 = por %p106, %p107
    %s110 = sadd.s32 %s109, 1
    %p113 = scmp.eq.s32.totalorder %s10, 1
    %p114 = scmp.ne.s32.totalorder %s109, %s111
    %p115 = scmp.eq.s32.totalorder %s10, 0
    %p116 = por %p114, %p115
    %p117 = scmp.ne.s32.totalorder %s109, %s111
    %p118 = scmp.eq.s32.totalorder %s15, 1
    %p119 = por %p117, %p118
    %p120 = scmp.ne.s32.totalorder %s111, %s112
    %p121 = scmp.eq.s32.totalorder %s15, 0
    %p122 = por %p120, %p121
    %p123 = scmp.ne.s32.totalorder %s111, %s112
    %p124 = scmp.eq.s32.totalorder %s16, 1
    %p125 = por %p123, %p124
    %p127 = scmp.ne.s32.totalorder %s112, %s126
    %p128 = scmp.eq.s32.totalorder %s16, 0
    %p129 = por %p127, %p128
    %s130 = ssub.s32 %s17, %s29
    %s131 = ssub.s32 %s18, %s25
    %s132 = sor.u32 %s130, %s131
    %p133 = scmp.eq.s32.totalorder %s132, 0
    %s135 = sadd.s32 %s134, 1
    %s136 = scalar_select %p133, %s134, %s135
    %p139 = pneg %p133
    %p140 = scmp.eq.s32.totalorder %s10, 1
    %p141 = por %p139, %p140
    %p142 = scmp.ne.s32.totalorder %s134, %s137
    %p143 = scmp.eq.s32.totalorder %s10, 0
    %p144 = por %p142, %p143
    %p145 = scmp.ne.s32.totalorder %s134, %s137
    %p146 = scmp.eq.s32.totalorder %s15, 1
    %p147 = por %p145, %p146
    %p148 = scmp.ne.s32.totalorder %s137, %s138
    %p149 = scmp.eq.s32.totalorder %s15, 0
    %p150 = por %p148, %p149
    %p151 = scmp.ne.s32.totalorder %s137, %s138
    %p152 = scmp.eq.s32.totalorder %s16, 1
    %p153 = por %p151, %p152
    %p155 = scmp.ne.s32.totalorder %s138, %s154
    %p156 = scmp.eq.s32.totalorder %s16, 0
    %p157 = por %p155, %p156
    %p158 = scmp.le.s32.totalorder 1, %s10
    %p159 = scmp.lt.s32.totalorder %s10, 3
    %p160 = pnand %p158, %p159
    %p161 = pneg %p160
    // Predicated region
    $region9: #{vgg19_slice1.9} parent=5 // pred_check
      _
    $region10: #{vgg19_slice1.9} parent=5 // pred_check_branch
      %163 = sbr.rel (%p160) target = $region12
    $region11: #{vgg19_slice1.9} parent=5 // pred_region
      %s164 = ssub.s32 %s10, 1
      // Predicated region
      $region13: #{vgg19_slice1.9} parent=11 // pred_check
        %p165 = pneg %p101
      $region14: #{vgg19_slice1.9} parent=11 // pred_check_branch
        %167 = sbr.rel (%p165) target = $region16
      $region15: #{vgg19_slice1.9} parent=11 // pred_region
        _
      $region16: #{vgg19_slice1.9} parent=11 // pred_fallthru
        _
      // Predicated region
      $region17: #{vgg19_slice1.9} parent=11 // pred_check
        %p168 = pneg %p122
      $region18: #{vgg19_slice1.9} parent=11 // pred_check_branch
        %170 = sbr.rel (%p168) target = $region20
      $region19: #{vgg19_slice1.9} parent=11 // pred_region
        _
      $region20: #{vgg19_slice1.9} parent=11 // pred_fallthru
        _
    $region12: #{vgg19_slice1.9} parent=5 // pred_fallthru
      _
    %p171 = scmp.lt.s32.totalorder %s10, 2
    // Predicated region
    $region21: #{vgg19_slice1.9} parent=5 // pred_check
      %p172 = pneg %p171
    $region22: #{vgg19_slice1.9} parent=5 // pred_check_branch
      %174 = sbr.rel (%p172) target = $region24
    $region23: #{vgg19_slice1.9} parent=5 // pred_region
      // Predicated region
      $region25: #{vgg19_slice1.9} parent=23 // pred_check
        %p175 = pneg %p44
      $region26: #{vgg19_slice1.9} parent=23 // pred_check_branch
        %177 = sbr.rel (%p175) target = $region28
      $region27: #{vgg19_slice1.9} parent=23 // pred_region
        %s178 = smul.u32 4, %s18
        %p179 = scmp.lt.s32.totalorder %s17, 1
        %s180 = scalar_select %p179, %s17, 1
        %p181 = scmp.lt.s32.totalorder %s178, 7
        %s182 = scalar_select %p181, %s178, 7
        %s183 = smul.addr %s180, 8
        %s184 = sadd.s32 %s182, %s183
        %s185 = smul.addr %s184, 4
        %s186 = scalar_lea.vmem %s0, %s185
        %s187 = smul.u32 4, %s18
      $region28: #{vgg19_slice1.9} parent=23 // pred_fallthru
        _
      // Predicated region
      $region29: #{vgg19_slice1.9} parent=23 // pred_check
        %p188 = pneg %p74
      $region30: #{vgg19_slice1.9} parent=23 // pred_check_branch
        %190 = sbr.rel (%p188) target = $region32
      $region31: #{vgg19_slice1.9} parent=23 // pred_region
        %s191 = sadd.s32 %s18, 1
        %s192 = smul.u32 4, %s191
        %p193 = scmp.lt.s32.totalorder %s17, 1
        %s194 = scalar_select %p193, %s17, 1
        %p195 = scmp.lt.s32.totalorder %s192, 7
        %s196 = scalar_select %p195, %s192, 7
        %s197 = smul.addr %s194, 8
        %s198 = sadd.s32 %s196, %s197
        %s199 = smul.addr %s198, 4
        %s200 = scalar_lea.vmem %s1, %s199
        %s201 = sadd.s32 %s18, 1
        %s202 = smul.u32 4, %s201
      $region32: #{vgg19_slice1.9} parent=23 // pred_fallthru
        _
    $region24: #{vgg19_slice1.9} parent=5 // pred_fallthru
      _
    %p203 = scmp.le.s32.totalorder 1, %s10
    %p204 = scmp.lt.s32.totalorder %s10, 3
    %p205 = pnand %p203, %p204
    %p206 = pneg %p205
    // Predicated region
    $region33: #{vgg19_slice1.9} parent=5 // pred_check
      _
    $region34: #{vgg19_slice1.9} parent=5 // pred_check_branch
      %208 = sbr.rel (%p205) target = $region36
    $region35: #{vgg19_slice1.9} parent=5 // pred_region
      %s209 = ssub.s32 %s10, 1
      %s210 = smul.u32 4, %s20
      %p211 = scmp.lt.s32.totalorder %s19, 1
      %s212 = scalar_select %p211, %s19, 1
      %p213 = scmp.lt.s32.totalorder %s210, 7
      %s214 = scalar_select %p213, %s210, 7
      %s215 = smul.addr %s212, 8
      %s216 = sadd.s32 %s214, %s215
      %s217 = smul.addr %s216, 4
      %s218 = scalar_lea.vmem %s0, %s217
      %p219 = pneg %p50
      %p220 = pneg %p47
      %s221 = sadd.s32 %s20, 1
      %s222 = smul.u32 4, %s221
      %p223 = scmp.lt.s32.totalorder %s19, 1
      %s224 = scalar_select %p223, %s19, 1
      %p225 = scmp.lt.s32.totalorder %s222, 7
      %s226 = scalar_select %p225, %s222, 7
      %s227 = smul.addr %s224, 8
      %s228 = sadd.s32 %s226, %s227
      %s229 = smul.addr %s228, 4
      %s230 = scalar_lea.vmem %s1, %s229
      %p231 = pneg %p80
      %p232 = pneg %p77
      %p233 = pneg %p101
      %p234 = pneg %p98
      %p235 = pneg %p122
      %p236 = pneg %p119
      %p237 = pneg %p150
      %p238 = pneg %p147
      %s239 = smul.u32 4, %s20
      %p240 = scmp.lt.s32.totalorder %s19, 1
      %s241 = scalar_select %p240, %s19, 1
      %p242 = scmp.lt.s32.totalorder %s239, 3
      %s243 = scalar_select %p242, %s239, 3
      %s244 = smul.addr %s243, 2
      %s245 = smul.addr %s241, 8
      %s246 = sadd.s32 %s244, %s245
      %s247 = smul.addr %s246, 4
      %s248 = scalar_lea.vmem %s4, %s247
      %s249 = smul.u32 4, %s20
      %p250 = scmp.lt.s32.totalorder %s19, 1
      %s251 = scalar_select %p250, %s19, 1
      %p252 = scmp.lt.s32.totalorder %s249, 7
      %s253 = scalar_select %p252, %s249, 7
      %s254 = smul.addr %s251, 8
      %s255 = sadd.s32 %s253, %s254
      %s256 = smul.addr %s255, 4
      %s257 = scalar_lea.vmem %s0, %s256
      %s258 = smul.u32 4, %s20
      %s259 = sadd.s32 %s20, 1
      %s260 = smul.u32 4, %s259
      %p261 = scmp.lt.s32.totalorder %s19, 1
      %s262 = scalar_select %p261, %s19, 1
      %p263 = scmp.lt.s32.totalorder %s260, 7
      %s264 = scalar_select %p263, %s260, 7
      %s265 = smul.addr %s262, 8
      %s266 = sadd.s32 %s264, %s265
      %s267 = smul.addr %s266, 4
      %s268 = scalar_lea.vmem %s1, %s267
      %s269 = sadd.s32 %s20, 1
      %s270 = smul.u32 4, %s269
      %s271 = smul.u32 4, %s20
      %p272 = scmp.lt.s32.totalorder %s19, 1
      %s273 = scalar_select %p272, %s19, 1
      %p274 = scmp.lt.s32.totalorder %s271, 3
      %s275 = scalar_select %p274, %s271, 3
      %s276 = smul.addr %s275, 2
      %s277 = smul.addr %s273, 8
      %s278 = sadd.s32 %s276, %s277
      %s279 = smul.addr %s278, 4
      %s280 = scalar_lea.vmem %s4, %s279
      %s281 = smul.u32 4, %s20
      %v282 = vld [vmem:[%s257] sm:$0xf]
      %v283 = vld [vmem:[%s257 + $0x4] sm:$0xf]
      %v284 = vld [vmem:[%s257 + $0x8] sm:$0xf]
      %v285 = vld [vmem:[%s257 + $0xc] sm:$0xf]
      %v286 = vld [vmem:[%s268] sm:$0xf]
      %v287 = vld [vmem:[%s268 + $0x4] sm:$0xf]
      %v288 = vld [vmem:[%s268 + $0x8] sm:$0xf]
      %v289 = vld [vmem:[%s268 + $0xc] sm:$0xf]
      %v294 = vunpack.c.l.b16 %v282
      %v295 = vunpack.c.l.b16 %v283
      %v296 = vunpack.c.l.b16 %v284
      %v297 = vunpack.c.l.b16 %v285
      %v298 = vpack.c.b16 %v295, %v294
      %v299 = vpack.c.b16 %v297, %v296
      %v306 = vunpack.c.l.b16 %v286
      %v307 = vunpack.c.l.b16 %v287
      %v308 = vunpack.c.l.b16 %v288
      %v309 = vunpack.c.l.b16 %v289
      %v310 = vpack.c.b16 %v307, %v306
      %v311 = vpack.c.b16 %v309, %v308
      %vm313 = vsmask.f32 7424
      %v315 = vshrl.u32 %v298, 16
      %v317 = vshll.u32 %v298, 16
      %v319 = vrot.slane %v317, 1
      %v320 = vor.u32 %v315, %v319
      %v322 = vshll.u32 %v299, 16
      %v324 = vrot.slane %v322, 1
      %v325 = vsel %vm313, %v320, %v324
      %v326 = vshrl.u32 %v299, 16
      %v328 = vor.u32 %v326, %v324
      %v330 = vshll.u32 %v310, 16
      %v332 = vrot.slane %v330, 1
      %v333 = vsel %vm313, %v328, %v332
      %vm336 = vcmask 1046528
      %v337 = vrot.slane %v298, 1
      %v338 = vrot.slane %v299, 1
      %v339 = vsel %vm336, %v337, %v338
      %v340 = vrot.slane %v310, 1
      %v341 = vsel %vm336, %v338, %v340
      %vm344 = vcmask 1043456
      %v345 = vrot.slane %v298, 4
      %v346 = vrot.slane %v299, 4
      %v347 = vsel %vm344, %v345, %v346
      %v348 = vrot.slane %v310, 4
      %v349 = vsel %vm344, %v346, %v348
      %vm352 = vsmask.f32 3328
      %v353 = vrot.slane %v315, 4
      %v354 = vrot.slane %v317, 5
      %v355 = vor.u32 %v353, %v354
      %v356 = vrot.slane %v326, 4
      %v357 = vrot.slane %v322, 5
      %v358 = vor.u32 %v356, %v357
      %v359 = vsel %vm352, %v355, %v358
      %v360 = vshrl.u32 %v310, 16
      %v362 = vrot.slane %v360, 4
      %v363 = vrot.slane %v330, 5
      %v364 = vor.u32 %v362, %v363
      %v365 = vsel %vm352, %v358, %v364
      %vm368 = vcmask 1042432
      %v369 = vrot.slane %v298, 5
      %v370 = vrot.slane %v299, 5
      %v371 = vsel %vm368, %v369, %v370
      %v372 = vrot.slane %v310, 5
      %v373 = vsel %vm368, %v370, %v372
      %v376 = vor.u32 %v360, %v332
      %v378 = vshll.u32 %v311, 16
      %v380 = vrot.slane %v378, 1
      %v381 = vsel %vm313, %v376, %v380
      %v383 = vrot.slane %v311, 1
      %v384 = vsel %vm336, %v340, %v383
      %v386 = vld [vmem:[%s2] sm:$0xff]
      %v387 = vld [vmem:[%s2 + $0x8] sm:$0xff]
      %v388 = vld [vmem:[%s2 + $0x10] sm:$0xff]
      %v389 = vld [vmem:[%s2 + $0x18] sm:$0xff]
      %v390 = vld [vmem:[%s2 + $0x20] sm:$0xff]
      %v391 = vld [vmem:[%s2 + $0x28] sm:$0xff]
      %v392 = vld [vmem:[%s2 + $0x30] sm:$0xff]
      %v393 = vld [vmem:[%s2 + $0x38] sm:$0xff]
      %v394 = vld [vmem:[%s2 + $0x40] sm:$0xff]
      %v395 = vld [vmem:[%s2 + $0x48] sm:$0xff]
      %v396 = vld [vmem:[%s2 + $0x50] sm:$0xff]
      %v397 = vld [vmem:[%s2 + $0x58] sm:$0xff]
      %v398 = vld [vmem:[%s2 + $0x60] sm:$0xff]
      %v399 = vld [vmem:[%s2 + $0x68] sm:$0xff]
      %v400 = vld [vmem:[%s2 + $0x70] sm:$0xff]
      %v401 = vld [vmem:[%s2 + $0x78] sm:$0xff]
      %v402 = vld [vmem:[%s2 + $0x80] sm:$0xff]
      %v403 = vld [vmem:[%s2 + $0x88] sm:$0xff]
      %v404 = vld [vmem:[%s2 + $0x90] sm:$0xff]
      %v405 = vld [vmem:[%s2 + $0x98] sm:$0xff]
      %v406 = vld [vmem:[%s2 + $0xa0] sm:$0xff]
      %v407 = vld [vmem:[%s2 + $0xa8] sm:$0xff]
      %v408 = vld [vmem:[%s2 + $0xb0] sm:$0xff]
      %v409 = vld [vmem:[%s2 + $0xb8] sm:$0xff]
      %v410 = vld [vmem:[%s2 + $0xc0] sm:$0xff]
      %v411 = vld [vmem:[%s2 + $0xc8] sm:$0xff]
      %v412 = vld [vmem:[%s2 + $0xd0] sm:$0xff]
      %v413 = vld [vmem:[%s2 + $0xd8] sm:$0xff]
      %v414 = vld [vmem:[%s2 + $0xe0] sm:$0xff]
      %v415 = vld [vmem:[%s2 + $0xe8] sm:$0xff]
      %v416 = vld [vmem:[%s2 + $0xf0] sm:$0xff]
      %v417 = vld [vmem:[%s2 + $0xf8] sm:$0xff]
      %v418 = vld [vmem:[%s2 + $0x100] sm:$0xff]
      %v419 = vld [vmem:[%s2 + $0x108] sm:$0xff]
      %v420 = vld [vmem:[%s2 + $0x110] sm:$0xff]
      %v421 = vld [vmem:[%s2 + $0x118] sm:$0xff]
      %v422 = vld [vmem:[%s2 + $0x120] sm:$0xff]
      %v423 = vld [vmem:[%s2 + $0x128] sm:$0xff]
      %v424 = vld [vmem:[%s2 + $0x130] sm:$0xff]
      %v425 = vld [vmem:[%s2 + $0x138] sm:$0xff]
      %v426 = vld [vmem:[%s2 + $0x140] sm:$0xff]
      %v427 = vld [vmem:[%s2 + $0x148] sm:$0xff]
      %v428 = vld [vmem:[%s2 + $0x150] sm:$0xff]
      %v429 = vld [vmem:[%s2 + $0x158] sm:$0xff]
      %v430 = vld [vmem:[%s2 + $0x160] sm:$0xff]
      %v431 = vld [vmem:[%s2 + $0x168] sm:$0xff]
      %v432 = vld [vmem:[%s2 + $0x170] sm:$0xff]
      %v433 = vld [vmem:[%s2 + $0x178] sm:$0xff]
      %v434 = vld [vmem:[%s2 + $0x180] sm:$0xff]
      %v435 = vld [vmem:[%s2 + $0x188] sm:$0xff]
      %v436 = vld [vmem:[%s2 + $0x190] sm:$0xff]
      %v437 = vld [vmem:[%s2 + $0x198] sm:$0xff]
      %v438 = vld [vmem:[%s2 + $0x1a0] sm:$0xff]
      %v439 = vld [vmem:[%s2 + $0x1a8] sm:$0xff]
      %v440 = vld [vmem:[%s2 + $0x1b0] sm:$0xff]
      %v441 = vld [vmem:[%s2 + $0x1b8] sm:$0xff]
      %v442 = vld [vmem:[%s2 + $0x1c0] sm:$0xff]
      %v443 = vld [vmem:[%s2 + $0x1c8] sm:$0xff]
      %v444 = vld [vmem:[%s2 + $0x1d0] sm:$0xff]
      %v445 = vld [vmem:[%s2 + $0x1d8] sm:$0xff]
      %v446 = vld [vmem:[%s2 + $0x1e0] sm:$0xff]
      %v447 = vld [vmem:[%s2 + $0x1e8] sm:$0xff]
      %v448 = vld [vmem:[%s2 + $0x1f0] sm:$0xff]
      %v449 = vld [vmem:[%s2 + $0x1f8] sm:$0xff]
      %v450 = vld [vmem:[%s2 + $0x200] sm:$0xff]
      %v451 = vld [vmem:[%s2 + $0x208] sm:$0xff]
      %v452 = vld [vmem:[%s2 + $0x210] sm:$0xff]
      %v453 = vld [vmem:[%s2 + $0x218] sm:$0xff]
      %v454 = vld [vmem:[%s2 + $0x220] sm:$0xff]
      %v455 = vld [vmem:[%s2 + $0x228] sm:$0xff]
      %v456 = vld [vmem:[%s2 + $0x230] sm:$0xff]
      %v457 = vld [vmem:[%s2 + $0x238] sm:$0xff]
      %v458 = vld [vmem:[%s2 + $0x240] sm:$0xff]
      %v459 = vld [vmem:[%s2 + $0x248] sm:$0xff]
      %v460 = vld [vmem:[%s2 + $0x250] sm:$0xff]
      %v461 = vld [vmem:[%s2 + $0x258] sm:$0xff]
      %v462 = vld [vmem:[%s2 + $0x260] sm:$0xff]
      %v463 = vld [vmem:[%s2 + $0x268] sm:$0xff]
      %v464 = vld [vmem:[%s2 + $0x270] sm:$0xff]
      %v465 = vld [vmem:[%s2 + $0x278] sm:$0xff]
      %v466 = vld [vmem:[%s2 + $0x280] sm:$0xff]
      %v467 = vld [vmem:[%s2 + $0x288] sm:$0xff]
      %v468 = vld [vmem:[%s2 + $0x290] sm:$0xff]
      %v469 = vld [vmem:[%s2 + $0x298] sm:$0xff]
      %v470 = vld [vmem:[%s2 + $0x2a0] sm:$0xff]
      %v471 = vld [vmem:[%s2 + $0x2a8] sm:$0xff]
      %v472 = vld [vmem:[%s2 + $0x2b0] sm:$0xff]
      %v473 = vld [vmem:[%s2 + $0x2b8] sm:$0xff]
      %v474 = vld [vmem:[%s2 + $0x2c0] sm:$0xff]
      %v475 = vld [vmem:[%s2 + $0x2c8] sm:$0xff]
      %v476 = vld [vmem:[%s2 + $0x2d0] sm:$0xff]
      %v477 = vld [vmem:[%s2 + $0x2d8] sm:$0xff]
      %v478 = vld [vmem:[%s2 + $0x2e0] sm:$0xff]
      %v479 = vld [vmem:[%s2 + $0x2e8] sm:$0xff]
      %v480 = vld [vmem:[%s2 + $0x2f0] sm:$0xff]
      %v481 = vld [vmem:[%s2 + $0x2f8] sm:$0xff]
      %v482 = vld [vmem:[%s2 + $0x300] sm:$0xff]
      %v483 = vld [vmem:[%s2 + $0x308] sm:$0xff]
      %v484 = vld [vmem:[%s2 + $0x310] sm:$0xff]
      %v485 = vld [vmem:[%s2 + $0x318] sm:$0xff]
      %v486 = vld [vmem:[%s2 + $0x320] sm:$0xff]
      %v487 = vld [vmem:[%s2 + $0x328] sm:$0xff]
      %v488 = vld [vmem:[%s2 + $0x330] sm:$0xff]
      %v489 = vld [vmem:[%s2 + $0x338] sm:$0xff]
      %v490 = vld [vmem:[%s2 + $0x340] sm:$0xff]
      %v491 = vld [vmem:[%s2 + $0x348] sm:$0xff]
      %v492 = vld [vmem:[%s2 + $0x350] sm:$0xff]
      %v493 = vld [vmem:[%s2 + $0x358] sm:$0xff]
      %v494 = vld [vmem:[%s2 + $0x360] sm:$0xff]
      %v495 = vld [vmem:[%s2 + $0x368] sm:$0xff]
      %v496 = vld [vmem:[%s2 + $0x370] sm:$0xff]
      %v497 = vld [vmem:[%s2 + $0x378] sm:$0xff]
      %v498 = vld [vmem:[%s2 + $0x380] sm:$0xff]
      %v499 = vld [vmem:[%s2 + $0x388] sm:$0xff]
      %v500 = vld [vmem:[%s2 + $0x390] sm:$0xff]
      %v501 = vld [vmem:[%s2 + $0x398] sm:$0xff]
      %v502 = vld [vmem:[%s2 + $0x3a0] sm:$0xff]
      %v503 = vld [vmem:[%s2 + $0x3a8] sm:$0xff]
      %v504 = vld [vmem:[%s2 + $0x3b0] sm:$0xff]
      %v505 = vld [vmem:[%s2 + $0x3b8] sm:$0xff]
      %v506 = vld [vmem:[%s2 + $0x3c0] sm:$0xff]
      %v507 = vld [vmem:[%s2 + $0x3c8] sm:$0xff]
      %v508 = vld [vmem:[%s2 + $0x3d0] sm:$0xff]
      %v509 = vld [vmem:[%s2 + $0x3d8] sm:$0xff]
      %v510 = vld [vmem:[%s2 + $0x3e0] sm:$0xff]
      %v511 = vld [vmem:[%s2 + $0x3e8] sm:$0xff]
      %v512 = vld [vmem:[%s2 + $0x3f0] sm:$0xff]
      %v513 = vld [vmem:[%s2 + $0x3f8] sm:$0xff]
      %v514 = vld [vmem:[%s2 + $0x400] sm:$0xff]
      %v515 = vld [vmem:[%s2 + $0x408] sm:$0xff]
      %v516 = vld [vmem:[%s2 + $0x410] sm:$0xff]
      %v517 = vld [vmem:[%s2 + $0x418] sm:$0xff]
      %v518 = vld [vmem:[%s2 + $0x420] sm:$0xff]
      %v519 = vld [vmem:[%s2 + $0x428] sm:$0xff]
      %v520 = vld [vmem:[%s2 + $0x430] sm:$0xff]
      %v521 = vld [vmem:[%s2 + $0x438] sm:$0xff]
      %v522 = vld [vmem:[%s2 + $0x440] sm:$0xff]
      %v523 = vld [vmem:[%s2 + $0x448] sm:$0xff]
      %v524 = vld [vmem:[%s2 + $0x450] sm:$0xff]
      %v525 = vld [vmem:[%s2 + $0x458] sm:$0xff]
      %v526 = vld [vmem:[%s2 + $0x460] sm:$0xff]
      %v527 = vld [vmem:[%s2 + $0x468] sm:$0xff]
      %v528 = vld [vmem:[%s2 + $0x470] sm:$0xff]
      %v529 = vld [vmem:[%s2 + $0x478] sm:$0xff]
      %v530 = vld [vmem:[%s3] sm:$0x3]
      %v532 = vperm.slane %v530, 0
      %v533 = vperm.slane %v530, 1
      %v680 = vunpack.c.l.b16 %v386
      %v681 = vunpack.c.h.b16 %v386
      %v682 = vunpack.c.l.b16 %v387
      %v683 = vunpack.c.h.b16 %v387
      %v684 = vunpack.c.l.b16 %v388
      %v685 = vunpack.c.h.b16 %v388
      %v686 = vunpack.c.l.b16 %v389
      %v687 = vunpack.c.h.b16 %v389
      %v688 = vunpack.c.l.b16 %v390
      %v689 = vunpack.c.h.b16 %v390
      %v690 = vunpack.c.l.b16 %v391
      %v691 = vunpack.c.h.b16 %v391
      %v692 = vunpack.c.l.b16 %v392
      %v693 = vunpack.c.h.b16 %v392
      %v694 = vunpack.c.l.b16 %v393
      %v695 = vunpack.c.h.b16 %v393
      %v696 = vunpack.c.l.b16 %v394
      %v697 = vunpack.c.h.b16 %v394
      %v698 = vunpack.c.l.b16 %v395
      %v699 = vunpack.c.h.b16 %v395
      %v700 = vunpack.c.l.b16 %v396
      %v701 = vunpack.c.h.b16 %v396
      %v702 = vunpack.c.l.b16 %v397
      %v703 = vunpack.c.h.b16 %v397
      %v704 = vunpack.c.l.b16 %v398
      %v705 = vunpack.c.h.b16 %v398
      %v706 = vunpack.c.l.b16 %v399
      %v707 = vunpack.c.h.b16 %v399
      %v708 = vunpack.c.l.b16 %v400
      %v709 = vunpack.c.h.b16 %v400
      %v710 = vunpack.c.l.b16 %v401
      %v711 = vunpack.c.h.b16 %v401
      %v712 = vunpack.c.l.b16 %v402
      %v713 = vunpack.c.h.b16 %v402
      %v714 = vunpack.c.l.b16 %v403
      %v715 = vunpack.c.h.b16 %v403
      %v716 = vunpack.c.l.b16 %v404
      %v717 = vunpack.c.h.b16 %v404
      %v718 = vunpack.c.l.b16 %v405
      %v719 = vunpack.c.h.b16 %v405
      %v720 = vunpack.c.l.b16 %v406
      %v721 = vunpack.c.h.b16 %v406
      %v722 = vunpack.c.l.b16 %v407
      %v723 = vunpack.c.h.b16 %v407
      %v724 = vunpack.c.l.b16 %v408
      %v725 = vunpack.c.h.b16 %v408
      %v726 = vunpack.c.l.b16 %v409
      %v727 = vunpack.c.h.b16 %v409
      %v728 = vunpack.c.l.b16 %v410
      %v729 = vunpack.c.h.b16 %v410
      %v730 = vunpack.c.l.b16 %v411
      %v731 = vunpack.c.h.b16 %v411
      %v732 = vunpack.c.l.b16 %v412
      %v733 = vunpack.c.h.b16 %v412
      %v734 = vunpack.c.l.b16 %v413
      %v735 = vunpack.c.h.b16 %v413
      %v736 = vunpack.c.l.b16 %v414
      %v737 = vunpack.c.h.b16 %v414
      %v738 = vunpack.c.l.b16 %v415
      %v739 = vunpack.c.h.b16 %v415
      %v740 = vunpack.c.l.b16 %v416
      %v741 = vunpack.c.h.b16 %v416
      %v742 = vunpack.c.l.b16 %v417
      %v743 = vunpack.c.h.b16 %v417
      %v744 = vunpack.c.l.b16 %v418
      %v745 = vunpack.c.h.b16 %v418
      %v746 = vunpack.c.l.b16 %v419
      %v747 = vunpack.c.h.b16 %v419
      %v748 = vunpack.c.l.b16 %v420
      %v749 = vunpack.c.h.b16 %v420
      %v750 = vunpack.c.l.b16 %v421
      %v751 = vunpack.c.h.b16 %v421
      %v752 = vunpack.c.l.b16 %v422
      %v753 = vunpack.c.h.b16 %v422
      %v754 = vunpack.c.l.b16 %v423
      %v755 = vunpack.c.h.b16 %v423
      %v756 = vunpack.c.l.b16 %v424
      %v757 = vunpack.c.h.b16 %v424
      %v758 = vunpack.c.l.b16 %v425
      %v759 = vunpack.c.h.b16 %v425
      %v760 = vunpack.c.l.b16 %v426
      %v761 = vunpack.c.h.b16 %v426
      %v762 = vunpack.c.l.b16 %v427
      %v763 = vunpack.c.h.b16 %v427
      %v764 = vunpack.c.l.b16 %v428
      %v765 = vunpack.c.h.b16 %v428
      %v766 = vunpack.c.l.b16 %v429
      %v767 = vunpack.c.h.b16 %v429
      %v768 = vunpack.c.l.b16 %v430
      %v769 = vunpack.c.h.b16 %v430
      %v770 = vunpack.c.l.b16 %v431
      %v771 = vunpack.c.h.b16 %v431
      %v772 = vunpack.c.l.b16 %v432
      %v773 = vunpack.c.h.b16 %v432
      %v774 = vunpack.c.l.b16 %v433
      %v775 = vunpack.c.h.b16 %v433
      %v776 = vunpack.c.l.b16 %v434
      %v777 = vunpack.c.h.b16 %v434
      %v778 = vunpack.c.l.b16 %v435
      %v779 = vunpack.c.h.b16 %v435
      %v780 = vunpack.c.l.b16 %v436
      %v781 = vunpack.c.h.b16 %v436
      %v782 = vunpack.c.l.b16 %v437
      %v783 = vunpack.c.h.b16 %v437
      %v784 = vunpack.c.l.b16 %v438
      %v785 = vunpack.c.h.b16 %v438
      %v786 = vunpack.c.l.b16 %v439
      %v787 = vunpack.c.h.b16 %v439
      %v788 = vunpack.c.l.b16 %v440
      %v789 = vunpack.c.h.b16 %v440
      %v790 = vunpack.c.l.b16 %v441
      %v791 = vunpack.c.h.b16 %v441
      %v792 = vunpack.c.l.b16 %v442
      %v793 = vunpack.c.h.b16 %v442
      %v794 = vunpack.c.l.b16 %v443
      %v795 = vunpack.c.h.b16 %v443
      %v796 = vunpack.c.l.b16 %v444
      %v797 = vunpack.c.h.b16 %v444
      %v798 = vunpack.c.l.b16 %v445
      %v799 = vunpack.c.h.b16 %v445
      %v800 = vunpack.c.l.b16 %v446
      %v801 = vunpack.c.h.b16 %v446
      %v802 = vunpack.c.l.b16 %v447
      %v803 = vunpack.c.h.b16 %v447
      %v804 = vunpack.c.l.b16 %v448
      %v805 = vunpack.c.h.b16 %v448
      %v806 = vunpack.c.l.b16 %v449
      %v807 = vunpack.c.h.b16 %v449
      %v808 = vunpack.c.l.b16 %v450
      %v809 = vunpack.c.h.b16 %v450
      %v810 = vunpack.c.l.b16 %v451
      %v811 = vunpack.c.h.b16 %v451
      %v812 = vunpack.c.l.b16 %v452
      %v813 = vunpack.c.h.b16 %v452
      %v814 = vunpack.c.l.b16 %v453
      %v815 = vunpack.c.h.b16 %v453
      %v816 = vunpack.c.l.b16 %v454
      %v817 = vunpack.c.h.b16 %v454
      %v818 = vunpack.c.l.b16 %v455
      %v819 = vunpack.c.h.b16 %v455
      %v820 = vunpack.c.l.b16 %v456
      %v821 = vunpack.c.h.b16 %v456
      %v822 = vunpack.c.l.b16 %v457
      %v823 = vunpack.c.h.b16 %v457
      %v824 = vunpack.c.l.b16 %v458
      %v825 = vunpack.c.h.b16 %v458
      %v826 = vunpack.c.l.b16 %v459
      %v827 = vunpack.c.h.b16 %v459
      %v828 = vunpack.c.l.b16 %v460
      %v829 = vunpack.c.h.b16 %v460
      %v830 = vunpack.c.l.b16 %v461
      %v831 = vunpack.c.h.b16 %v461
      %v832 = vunpack.c.l.b16 %v462
      %v833 = vunpack.c.h.b16 %v462
      %v834 = vunpack.c.l.b16 %v463
      %v835 = vunpack.c.h.b16 %v463
      %v836 = vunpack.c.l.b16 %v464
      %v837 = vunpack.c.h.b16 %v464
      %v838 = vunpack.c.l.b16 %v465
      %v839 = vunpack.c.h.b16 %v465
      %v840 = vunpack.c.l.b16 %v466
      %v841 = vunpack.c.h.b16 %v466
      %v842 = vunpack.c.l.b16 %v467
      %v843 = vunpack.c.h.b16 %v467
      %v844 = vunpack.c.l.b16 %v468
      %v845 = vunpack.c.h.b16 %v468
      %v846 = vunpack.c.l.b16 %v469
      %v847 = vunpack.c.h.b16 %v469
      %v848 = vunpack.c.l.b16 %v470
      %v849 = vunpack.c.h.b16 %v470
      %v850 = vunpack.c.l.b16 %v471
      %v851 = vunpack.c.h.b16 %v471
      %v852 = vunpack.c.l.b16 %v472
      %v853 = vunpack.c.h.b16 %v472
      %v854 = vunpack.c.l.b16 %v473
      %v855 = vunpack.c.h.b16 %v473
      %v856 = vunpack.c.l.b16 %v474
      %v857 = vunpack.c.h.b16 %v474
      %v858 = vunpack.c.l.b16 %v475
      %v859 = vunpack.c.h.b16 %v475
      %v860 = vunpack.c.l.b16 %v476
      %v861 = vunpack.c.h.b16 %v476
      %v862 = vunpack.c.l.b16 %v477
      %v863 = vunpack.c.h.b16 %v477
      %v864 = vunpack.c.l.b16 %v478
      %v865 = vunpack.c.h.b16 %v478
      %v866 = vunpack.c.l.b16 %v479
      %v867 = vunpack.c.h.b16 %v479
      %v868 = vunpack.c.l.b16 %v480
      %v869 = vunpack.c.h.b16 %v480
      %v870 = vunpack.c.l.b16 %v481
      %v871 = vunpack.c.h.b16 %v481
      %v872 = vunpack.c.l.b16 %v482
      %v873 = vunpack.c.h.b16 %v482
      %v874 = vunpack.c.l.b16 %v483
      %v875 = vunpack.c.h.b16 %v483
      %v876 = vunpack.c.l.b16 %v484
      %v877 = vunpack.c.h.b16 %v484
      %v878 = vunpack.c.l.b16 %v485
      %v879 = vunpack.c.h.b16 %v485
      %v880 = vunpack.c.l.b16 %v486
      %v881 = vunpack.c.h.b16 %v486
      %v882 = vunpack.c.l.b16 %v487
      %v883 = vunpack.c.h.b16 %v487
      %v884 = vunpack.c.l.b16 %v488
      %v885 = vunpack.c.h.b16 %v488
      %v886 = vunpack.c.l.b16 %v489
      %v887 = vunpack.c.h.b16 %v489
      %v888 = vunpack.c.l.b16 %v490
      %v889 = vunpack.c.h.b16 %v490
      %v890 = vunpack.c.l.b16 %v491
      %v891 = vunpack.c.h.b16 %v491
      %v892 = vunpack.c.l.b16 %v492
      %v893 = vunpack.c.h.b16 %v492
      %v894 = vunpack.c.l.b16 %v493
      %v895 = vunpack.c.h.b16 %v493
      %v896 = vunpack.c.l.b16 %v494
      %v897 = vunpack.c.h.b16 %v494
      %v898 = vunpack.c.l.b16 %v495
      %v899 = vunpack.c.h.b16 %v495
      %v900 = vunpack.c.l.b16 %v496
      %v901 = vunpack.c.h.b16 %v496
      %v902 = vunpack.c.l.b16 %v497
      %v903 = vunpack.c.h.b16 %v497
      %v904 = vunpack.c.l.b16 %v498
      %v905 = vunpack.c.h.b16 %v498
      %v906 = vunpack.c.l.b16 %v499
      %v907 = vunpack.c.h.b16 %v499
      %v908 = vunpack.c.l.b16 %v500
      %v909 = vunpack.c.h.b16 %v500
      %v910 = vunpack.c.l.b16 %v501
      %v911 = vunpack.c.h.b16 %v501
      %v912 = vunpack.c.l.b16 %v502
      %v913 = vunpack.c.h.b16 %v502
      %v914 = vunpack.c.l.b16 %v503
      %v915 = vunpack.c.h.b16 %v503
      %v916 = vunpack.c.l.b16 %v504
      %v917 = vunpack.c.h.b16 %v504
      %v918 = vunpack.c.l.b16 %v505
      %v919 = vunpack.c.h.b16 %v505
      %v920 = vunpack.c.l.b16 %v506
      %v921 = vunpack.c.h.b16 %v506
      %v922 = vunpack.c.l.b16 %v507
      %v923 = vunpack.c.h.b16 %v507
      %v924 = vunpack.c.l.b16 %v508
      %v925 = vunpack.c.h.b16 %v508
      %v926 = vunpack.c.l.b16 %v509
      %v927 = vunpack.c.h.b16 %v509
      %v928 = vunpack.c.l.b16 %v510
      %v929 = vunpack.c.h.b16 %v510
      %v930 = vunpack.c.l.b16 %v511
      %v931 = vunpack.c.h.b16 %v511
      %v932 = vunpack.c.l.b16 %v512
      %v933 = vunpack.c.h.b16 %v512
      %v934 = vunpack.c.l.b16 %v513
      %v935 = vunpack.c.h.b16 %v513
      %v936 = vunpack.c.l.b16 %v514
      %v937 = vunpack.c.h.b16 %v514
      %v938 = vunpack.c.l.b16 %v515
      %v939 = vunpack.c.h.b16 %v515
      %v940 = vunpack.c.l.b16 %v516
      %v941 = vunpack.c.h.b16 %v516
      %v942 = vunpack.c.l.b16 %v517
      %v943 = vunpack.c.h.b16 %v517
      %v944 = vunpack.c.l.b16 %v518
      %v945 = vunpack.c.h.b16 %v518
      %v946 = vunpack.c.l.b16 %v519
      %v947 = vunpack.c.h.b16 %v519
      %v948 = vunpack.c.l.b16 %v520
      %v949 = vunpack.c.h.b16 %v520
      %v950 = vunpack.c.l.b16 %v521
      %v951 = vunpack.c.h.b16 %v521
      %v952 = vunpack.c.l.b16 %v522
      %v953 = vunpack.c.h.b16 %v522
      %v954 = vunpack.c.l.b16 %v523
      %v955 = vunpack.c.h.b16 %v523
      %v956 = vunpack.c.l.b16 %v524
      %v957 = vunpack.c.h.b16 %v524
      %v958 = vunpack.c.l.b16 %v525
      %v959 = vunpack.c.h.b16 %v525
      %v960 = vunpack.c.l.b16 %v526
      %v961 = vunpack.c.h.b16 %v526
      %v962 = vunpack.c.l.b16 %v527
      %v963 = vunpack.c.h.b16 %v527
      %v964 = vunpack.c.l.b16 %v528
      %v965 = vunpack.c.h.b16 %v528
      %v966 = vunpack.c.l.b16 %v529
      %v967 = vunpack.c.h.b16 %v529
      %v968 = vpack.c.b16 %v682, %v680
      %v969 = vpack.c.b16 %v683, %v681
      %v970 = vpack.c.b16 %v686, %v684
      %v971 = vpack.c.b16 %v687, %v685
      %v972 = vpack.c.b16 %v690, %v688
      %v973 = vpack.c.b16 %v691, %v689
      %v974 = vpack.c.b16 %v694, %v692
      %v975 = vpack.c.b16 %v695, %v693
      %v976 = vpack.c.b16 %v698, %v696
      %v977 = vpack.c.b16 %v699, %v697
      %v978 = vpack.c.b16 %v702, %v700
      %v979 = vpack.c.b16 %v703, %v701
      %v980 = vpack.c.b16 %v706, %v704
      %v981 = vpack.c.b16 %v707, %v705
      %v982 = vpack.c.b16 %v710, %v708
      %v983 = vpack.c.b16 %v711, %v709
      %v984 = vpack.c.b16 %v714, %v712
      %v985 = vpack.c.b16 %v715, %v713
      %v986 = vpack.c.b16 %v718, %v716
      %v987 = vpack.c.b16 %v719, %v717
      %v988 = vpack.c.b16 %v722, %v720
      %v989 = vpack.c.b16 %v723, %v721
      %v990 = vpack.c.b16 %v726, %v724
      %v991 = vpack.c.b16 %v727, %v725
      %v992 = vpack.c.b16 %v730, %v728
      %v993 = vpack.c.b16 %v731, %v729
      %v994 = vpack.c.b16 %v734, %v732
      %v995 = vpack.c.b16 %v735, %v733
      %v996 = vpack.c.b16 %v738, %v736
      %v997 = vpack.c.b16 %v739, %v737
      %v998 = vpack.c.b16 %v742, %v740
      %v999 = vpack.c.b16 %v743, %v741
      %v1000 = vpack.c.b16 %v746, %v744
      %v1001 = vpack.c.b16 %v747, %v745
      %v1002 = vpack.c.b16 %v750, %v748
      %v1003 = vpack.c.b16 %v751, %v749
      %v1004 = vpack.c.b16 %v754, %v752
      %v1005 = vpack.c.b16 %v755, %v753
      %v1006 = vpack.c.b16 %v758, %v756
      %v1007 = vpack.c.b16 %v759, %v757
      %v1008 = vpack.c.b16 %v762, %v760
      %v1009 = vpack.c.b16 %v763, %v761
      %v1010 = vpack.c.b16 %v766, %v764
      %v1011 = vpack.c.b16 %v767, %v765
      %v1012 = vpack.c.b16 %v770, %v768
      %v1013 = vpack.c.b16 %v771, %v769
      %v1014 = vpack.c.b16 %v774, %v772
      %v1015 = vpack.c.b16 %v775, %v773
      %v1016 = vpack.c.b16 %v778, %v776
      %v1017 = vpack.c.b16 %v779, %v777
      %v1018 = vpack.c.b16 %v782, %v780
      %v1019 = vpack.c.b16 %v783, %v781
      %v1020 = vpack.c.b16 %v786, %v784
      %v1021 = vpack.c.b16 %v787, %v785
      %v1022 = vpack.c.b16 %v790, %v788
      %v1023 = vpack.c.b16 %v791, %v789
      %v1024 = vpack.c.b16 %v794, %v792
      %v1025 = vpack.c.b16 %v795, %v793
      %v1026 = vpack.c.b16 %v798, %v796
      %v1027 = vpack.c.b16 %v799, %v797
      %v1028 = vpack.c.b16 %v802, %v800
      %v1029 = vpack.c.b16 %v803, %v801
      %v1030 = vpack.c.b16 %v806, %v804
      %v1031 = vpack.c.b16 %v807, %v805
      %v1032 = vpack.c.b16 %v810, %v808
      %v1033 = vpack.c.b16 %v811, %v809
      %v1034 = vpack.c.b16 %v814, %v812
      %v1035 = vpack.c.b16 %v815, %v813
      %v1036 = vpack.c.b16 %v818, %v816
      %v1037 = vpack.c.b16 %v819, %v817
      %v1038 = vpack.c.b16 %v822, %v820
      %v1039 = vpack.c.b16 %v823, %v821
      %v1040 = vpack.c.b16 %v826, %v824
      %v1041 = vpack.c.b16 %v827, %v825
      %v1042 = vpack.c.b16 %v830, %v828
      %v1043 = vpack.c.b16 %v831, %v829
      %v1044 = vpack.c.b16 %v834, %v832
      %v1045 = vpack.c.b16 %v835, %v833
      %v1046 = vpack.c.b16 %v838, %v836
      %v1047 = vpack.c.b16 %v839, %v837
      %v1048 = vpack.c.b16 %v842, %v840
      %v1049 = vpack.c.b16 %v843, %v841
      %v1050 = vpack.c.b16 %v846, %v844
      %v1051 = vpack.c.b16 %v847, %v845
      %v1052 = vpack.c.b16 %v850, %v848
      %v1053 = vpack.c.b16 %v851, %v849
      %v1054 = vpack.c.b16 %v854, %v852
      %v1055 = vpack.c.b16 %v855, %v853
      %v1056 = vpack.c.b16 %v858, %v856
      %v1057 = vpack.c.b16 %v859, %v857
      %v1058 = vpack.c.b16 %v862, %v860
      %v1059 = vpack.c.b16 %v863, %v861
      %v1060 = vpack.c.b16 %v866, %v864
      %v1061 = vpack.c.b16 %v867, %v865
      %v1062 = vpack.c.b16 %v870, %v868
      %v1063 = vpack.c.b16 %v871, %v869
      %v1064 = vpack.c.b16 %v874, %v872
      %v1065 = vpack.c.b16 %v875, %v873
      %v1066 = vpack.c.b16 %v878, %v876
      %v1067 = vpack.c.b16 %v879, %v877
      %v1068 = vpack.c.b16 %v882, %v880
      %v1069 = vpack.c.b16 %v883, %v881
      %v1070 = vpack.c.b16 %v886, %v884
      %v1071 = vpack.c.b16 %v887, %v885
      %v1072 = vpack.c.b16 %v890, %v888
      %v1073 = vpack.c.b16 %v891, %v889
      %v1074 = vpack.c.b16 %v894, %v892
      %v1075 = vpack.c.b16 %v895, %v893
      %v1076 = vpack.c.b16 %v898, %v896
      %v1077 = vpack.c.b16 %v899, %v897
      %v1078 = vpack.c.b16 %v902, %v900
      %v1079 = vpack.c.b16 %v903, %v901
      %v1080 = vpack.c.b16 %v906, %v904
      %v1081 = vpack.c.b16 %v907, %v905
      %v1082 = vpack.c.b16 %v910, %v908
      %v1083 = vpack.c.b16 %v911, %v909
      %v1084 = vpack.c.b16 %v914, %v912
      %v1085 = vpack.c.b16 %v915, %v913
      %v1086 = vpack.c.b16 %v918, %v916
      %v1087 = vpack.c.b16 %v919, %v917
      %v1088 = vpack.c.b16 %v922, %v920
      %v1089 = vpack.c.b16 %v923, %v921
      %v1090 = vpack.c.b16 %v926, %v924
      %v1091 = vpack.c.b16 %v927, %v925
      %v1092 = vpack.c.b16 %v930, %v928
      %v1093 = vpack.c.b16 %v931, %v929
      %v1094 = vpack.c.b16 %v934, %v932
      %v1095 = vpack.c.b16 %v935, %v933
      %v1096 = vpack.c.b16 %v938, %v936
      %v1097 = vpack.c.b16 %v939, %v937
      %v1098 = vpack.c.b16 %v942, %v940
      %v1099 = vpack.c.b16 %v943, %v941
      %v1100 = vpack.c.b16 %v946, %v944
      %v1101 = vpack.c.b16 %v947, %v945
      %v1102 = vpack.c.b16 %v950, %v948
      %v1103 = vpack.c.b16 %v951, %v949
      %v1104 = vpack.c.b16 %v954, %v952
      %v1105 = vpack.c.b16 %v955, %v953
      %v1106 = vpack.c.b16 %v958, %v956
      %v1107 = vpack.c.b16 %v959, %v957
      %v1108 = vpack.c.b16 %v962, %v960
      %v1109 = vpack.c.b16 %v963, %v961
      %v1110 = vpack.c.b16 %v966, %v964
      %v1111 = vpack.c.b16 %v967, %v965
      %1256 = vmatpush.bf16.msra.mxu0 %v982
      %1257 = vmatpush.bf16.msra.mxu0 %v980
      %1258 = vmatpush.bf16.msra.mxu0 %v978
      %1259 = vmatpush.bf16.msra.mxu0 %v976
      %1260 = vmatpush.bf16.msra.mxu0 %v974
      %1261 = vmatpush.bf16.msra.mxu0 %v972
      %1262 = vmatpush.bf16.msra.mxu0 %v970
      %1263 = vmatpush.bf16.msra.mxu0 %v968
      %1264 = vmatmul.bf16.gmra.mxu0 %v298
      %v1265 = vpop.f32.mrf.mxu0
      %v1266 = vadd.f32 %v532, %v1265
      %v1267 = vpop.f32.mrf.mxu0
      %v1268 = vadd.f32 %v532, %v1267
      %1269 = vmatmul.bf16.gmra.mxu0 %v299
      %v1270 = vpop.f32.mrf.mxu0
      %v1271 = vadd.f32 %v532, %v1270
      %v1272 = vpop.f32.mrf.mxu0
      %v1273 = vadd.f32 %v532, %v1272
      %1274 = vdwg.mxu0
      %1275 = vmatpush.bf16.msra.mxu0 %v998
      %1276 = vmatpush.bf16.msra.mxu0 %v996
      %1277 = vmatpush.bf16.msra.mxu0 %v994
      %1278 = vmatpush.bf16.msra.mxu0 %v992
      %1279 = vmatpush.bf16.msra.mxu0 %v990
      %1280 = vmatpush.bf16.msra.mxu0 %v988
      %1281 = vmatpush.bf16.msra.mxu0 %v986
      %1282 = vmatpush.bf16.msra.mxu0 %v984
      %1283 = vmatmul.bf16.gmra.mxu0 %v325
      %v1284 = vpop.f32.mrf.mxu0
      %v1285 = vadd.f32 %v1266, %v1284
      %v1286 = vpop.f32.mrf.mxu0
      %v1287 = vadd.f32 %v1268, %v1286
      %1288 = vmatmul.bf16.gmra.mxu0 %v333
      %v1289 = vpop.f32.mrf.mxu0
      %v1290 = vadd.f32 %v1271, %v1289
      %v1291 = vpop.f32.mrf.mxu0
      %v1292 = vadd.f32 %v1273, %v1291
      %1293 = vdwg.mxu0
      %1294 = vmatpush.bf16.msra.mxu0 %v1014
      %1295 = vmatpush.bf16.msra.mxu0 %v1012
      %1296 = vmatpush.bf16.msra.mxu0 %v1010
      %1297 = vmatpush.bf16.msra.mxu0 %v1008
      %1298 = vmatpush.bf16.msra.mxu0 %v1006
      %1299 = vmatpush.bf16.msra.mxu0 %v1004
      %1300 = vmatpush.bf16.msra.mxu0 %v1002
      %1301 = vmatpush.bf16.msra.mxu0 %v1000
      %1302 = vmatmul.bf16.gmra.mxu0 %v339
      %v1303 = vpop.f32.mrf.mxu0
      %v1304 = vadd.f32 %v1285, %v1303
      %v1305 = vpop.f32.mrf.mxu0
      %v1306 = vadd.f32 %v1287, %v1305
      %1307 = vmatmul.bf16.gmra.mxu0 %v341
      %v1308 = vpop.f32.mrf.mxu0
      %v1309 = vadd.f32 %v1290, %v1308
      %v1310 = vpop.f32.mrf.mxu0
      %v1311 = vadd.f32 %v1292, %v1310
      %1312 = vdwg.mxu0
      %1313 = vmatpush.bf16.msra.mxu0 %v1030
      %1314 = vmatpush.bf16.msra.mxu0 %v1028
      %1315 = vmatpush.bf16.msra.mxu0 %v1026
      %1316 = vmatpush.bf16.msra.mxu0 %v1024
      %1317 = vmatpush.bf16.msra.mxu0 %v1022
      %1318 = vmatpush.bf16.msra.mxu0 %v1020
      %1319 = vmatpush.bf16.msra.mxu0 %v1018
      %1320 = vmatpush.bf16.msra.mxu0 %v1016
      %1321 = vmatmul.bf16.gmra.mxu0 %v347
      %v1322 = vpop.f32.mrf.mxu0
      %v1323 = vadd.f32 %v1304, %v1322
      %v1324 = vpop.f32.mrf.mxu0
      %v1325 = vadd.f32 %v1306, %v1324
      %1326 = vmatmul.bf16.gmra.mxu0 %v349
      %v1327 = vpop.f32.mrf.mxu0
      %v1328 = vadd.f32 %v1309, %v1327
      %v1329 = vpop.f32.mrf.mxu0
      %v1330 = vadd.f32 %v1311, %v1329
      %1331 = vdwg.mxu0
      %1332 = vmatpush.bf16.msra.mxu0 %v1046
      %1333 = vmatpush.bf16.msra.mxu0 %v1044
      %1334 = vmatpush.bf16.msra.mxu0 %v1042
      %1335 = vmatpush.bf16.msra.mxu0 %v1040
      %1336 = vmatpush.bf16.msra.mxu0 %v1038
      %1337 = vmatpush.bf16.msra.mxu0 %v1036
      %1338 = vmatpush.bf16.msra.mxu0 %v1034
      %1339 = vmatpush.bf16.msra.mxu0 %v1032
      %1340 = vmatmul.bf16.gmra.mxu0 %v359
      %v1341 = vpop.f32.mrf.mxu0
      %v1342 = vadd.f32 %v1323, %v1341
      %v1343 = vpop.f32.mrf.mxu0
      %v1344 = vadd.f32 %v1325, %v1343
      %1345 = vmatmul.bf16.gmra.mxu0 %v365
      %v1346 = vpop.f32.mrf.mxu0
      %v1347 = vadd.f32 %v1328, %v1346
      %v1348 = vpop.f32.mrf.mxu0
      %v1349 = vadd.f32 %v1330, %v1348
      %1350 = vdwg.mxu0
      %1351 = vmatpush.bf16.msra.mxu0 %v1062
      %1352 = vmatpush.bf16.msra.mxu0 %v1060
      %1353 = vmatpush.bf16.msra.mxu0 %v1058
      %1354 = vmatpush.bf16.msra.mxu0 %v1056
      %1355 = vmatpush.bf16.msra.mxu0 %v1054
      %1356 = vmatpush.bf16.msra.mxu0 %v1052
      %1357 = vmatpush.bf16.msra.mxu0 %v1050
      %1358 = vmatpush.bf16.msra.mxu0 %v1048
      %1359 = vmatmul.bf16.gmra.mxu0 %v371
      %v1360 = vpop.f32.mrf.mxu0
      %v1361 = vadd.f32 %v1342, %v1360
      %v1362 = vpop.f32.mrf.mxu0
      %v1363 = vadd.f32 %v1344, %v1362
      %1364 = vmatmul.bf16.gmra.mxu0 %v373
      %v1365 = vpop.f32.mrf.mxu0
      %v1366 = vadd.f32 %v1347, %v1365
      %v1367 = vpop.f32.mrf.mxu0
      %v1368 = vadd.f32 %v1349, %v1367
      %1369 = vdwg.mxu0
      %1370 = vmatpush.bf16.msra.mxu0 %v1078
      %1371 = vmatpush.bf16.msra.mxu0 %v1076
      %1372 = vmatpush.bf16.msra.mxu0 %v1074
      %1373 = vmatpush.bf16.msra.mxu0 %v1072
      %1374 = vmatpush.bf16.msra.mxu0 %v1070
      %1375 = vmatpush.bf16.msra.mxu0 %v1068
      %1376 = vmatpush.bf16.msra.mxu0 %v1066
      %1377 = vmatpush.bf16.msra.mxu0 %v1064
      %1378 = vmatmul.bf16.gmra.mxu0 %v299
      %v1379 = vpop.f32.mrf.mxu0
      %v1380 = vadd.f32 %v1361, %v1379
      %v1381 = vpop.f32.mrf.mxu0
      %v1382 = vadd.f32 %v1363, %v1381
      %1383 = vmatmul.bf16.gmra.mxu0 %v310
      %v1384 = vpop.f32.mrf.mxu0
      %v1385 = vadd.f32 %v1366, %v1384
      %v1386 = vpop.f32.mrf.mxu0
      %v1387 = vadd.f32 %v1368, %v1386
      %1388 = vdwg.mxu0
      %1389 = vmatpush.bf16.msra.mxu0 %v1094
      %1390 = vmatpush.bf16.msra.mxu0 %v1092
      %1391 = vmatpush.bf16.msra.mxu0 %v1090
      %1392 = vmatpush.bf16.msra.mxu0 %v1088
      %1393 = vmatpush.bf16.msra.mxu0 %v1086
      %1394 = vmatpush.bf16.msra.mxu0 %v1084
      %1395 = vmatpush.bf16.msra.mxu0 %v1082
      %1396 = vmatpush.bf16.msra.mxu0 %v1080
      %1397 = vmatmul.bf16.gmra.mxu0 %v333
      %v1398 = vpop.f32.mrf.mxu0
      %v1399 = vadd.f32 %v1380, %v1398
      %v1400 = vpop.f32.mrf.mxu0
      %v1401 = vadd.f32 %v1382, %v1400
      %1402 = vmatmul.bf16.gmra.mxu0 %v381
      %v1403 = vpop.f32.mrf.mxu0
      %v1404 = vadd.f32 %v1385, %v1403
      %v1405 = vpop.f32.mrf.mxu0
      %v1406 = vadd.f32 %v1387, %v1405
      %1407 = vdwg.mxu0
      %1408 = vmatpush.bf16.msra.mxu0 %v1110
      %1409 = vmatpush.bf16.msra.mxu0 %v1108
      %1410 = vmatpush.bf16.msra.mxu0 %v1106
      %1411 = vmatpush.bf16.msra.mxu0 %v1104
      %1412 = vmatpush.bf16.msra.mxu0 %v1102
      %1413 = vmatpush.bf16.msra.mxu0 %v1100
      %1414 = vmatpush.bf16.msra.mxu0 %v1098
      %1415 = vmatpush.bf16.msra.mxu0 %v1096
      %1416 = vmatmul.bf16.gmra.mxu0 %v341
      %v1417 = vpop.f32.mrf.mxu0
      %v1418 = vadd.f32 %v1399, %v1417
      %v1419 = vpop.f32.mrf.mxu0
      %v1420 = vadd.f32 %v1401, %v1419
      %1421 = vmatmul.bf16.gmra.mxu0 %v384
      %v1422 = vpop.f32.mrf.mxu0
      %v1423 = vadd.f32 %v1404, %v1422
      %v1424 = vpop.f32.mrf.mxu0
      %v1425 = vadd.f32 %v1406, %v1424
      %1426 = vdwg.mxu0
      %1427 = vmatpush.bf16.msra.mxu0 %v983
      %1428 = vmatpush.bf16.msra.mxu0 %v981
      %1429 = vmatpush.bf16.msra.mxu0 %v979
      %1430 = vmatpush.bf16.msra.mxu0 %v977
      %1431 = vmatpush.bf16.msra.mxu0 %v975
      %1432 = vmatpush.bf16.msra.mxu0 %v973
      %1433 = vmatpush.bf16.msra.mxu0 %v971
      %1434 = vmatpush.bf16.msra.mxu0 %v969
      %1435 = vmatmul.bf16.gmra.mxu0 %v298
      %v1436 = vpop.f32.mrf.mxu0
      %v1437 = vadd.f32 %v533, %v1436
      %v1438 = vpop.f32.mrf.mxu0
      %v1439 = vadd.f32 %v533, %v1438
      %1440 = vmatmul.bf16.gmra.mxu0 %v299
      %v1441 = vpop.f32.mrf.mxu0
      %v1442 = vadd.f32 %v533, %v1441
      %v1443 = vpop.f32.mrf.mxu0
      %v1444 = vadd.f32 %v533, %v1443
      %1445 = vdwg.mxu0
      %1446 = vmatpush.bf16.msra.mxu0 %v999
      %1447 = vmatpush.bf16.msra.mxu0 %v997
      %1448 = vmatpush.bf16.msra.mxu0 %v995
      %1449 = vmatpush.bf16.msra.mxu0 %v993
      %1450 = vmatpush.bf16.msra.mxu0 %v991
      %1451 = vmatpush.bf16.msra.mxu0 %v989
      %1452 = vmatpush.bf16.msra.mxu0 %v987
      %1453 = vmatpush.bf16.msra.mxu0 %v985
      %1454 = vmatmul.bf16.gmra.mxu0 %v325
      %v1455 = vpop.f32.mrf.mxu0
      %v1456 = vadd.f32 %v1437, %v1455
      %v1457 = vpop.f32.mrf.mxu0
      %v1458 = vadd.f32 %v1439, %v1457
      %1459 = vmatmul.bf16.gmra.mxu0 %v333
      %v1460 = vpop.f32.mrf.mxu0
      %v1461 = vadd.f32 %v1442, %v1460
      %v1462 = vpop.f32.mrf.mxu0
      %v1463 = vadd.f32 %v1444, %v1462
      %1464 = vdwg.mxu0
      %1465 = vmatpush.bf16.msra.mxu0 %v1015
      %1466 = vmatpush.bf16.msra.mxu0 %v1013
      %1467 = vmatpush.bf16.msra.mxu0 %v1011
      %1468 = vmatpush.bf16.msra.mxu0 %v1009
      %1469 = vmatpush.bf16.msra.mxu0 %v1007
      %1470 = vmatpush.bf16.msra.mxu0 %v1005
      %1471 = vmatpush.bf16.msra.mxu0 %v1003
      %1472 = vmatpush.bf16.msra.mxu0 %v1001
      %1473 = vmatmul.bf16.gmra.mxu0 %v339
      %v1474 = vpop.f32.mrf.mxu0
      %v1475 = vadd.f32 %v1456, %v1474
      %v1476 = vpop.f32.mrf.mxu0
      %v1477 = vadd.f32 %v1458, %v1476
      %1478 = vmatmul.bf16.gmra.mxu0 %v341
      %v1479 = vpop.f32.mrf.mxu0
      %v1480 = vadd.f32 %v1461, %v1479
      %v1481 = vpop.f32.mrf.mxu0
      %v1482 = vadd.f32 %v1463, %v1481
      %1483 = vdwg.mxu0
      %1484 = vmatpush.bf16.msra.mxu0 %v1031
      %1485 = vmatpush.bf16.msra.mxu0 %v1029
      %1486 = vmatpush.bf16.msra.mxu0 %v1027
      %1487 = vmatpush.bf16.msra.mxu0 %v1025
      %1488 = vmatpush.bf16.msra.mxu0 %v1023
      %1489 = vmatpush.bf16.msra.mxu0 %v1021
      %1490 = vmatpush.bf16.msra.mxu0 %v1019
      %1491 = vmatpush.bf16.msra.mxu0 %v1017
      %1492 = vmatmul.bf16.gmra.mxu0 %v347
      %v1493 = vpop.f32.mrf.mxu0
      %v1494 = vadd.f32 %v1475, %v1493
      %v1495 = vpop.f32.mrf.mxu0
      %v1496 = vadd.f32 %v1477, %v1495
      %1497 = vmatmul.bf16.gmra.mxu0 %v349
      %v1498 = vpop.f32.mrf.mxu0
      %v1499 = vadd.f32 %v1480, %v1498
      %v1500 = vpop.f32.mrf.mxu0
      %v1501 = vadd.f32 %v1482, %v1500
      %1502 = vdwg.mxu0
      %1503 = vmatpush.bf16.msra.mxu0 %v1047
      %1504 = vmatpush.bf16.msra.mxu0 %v1045
      %1505 = vmatpush.bf16.msra.mxu0 %v1043
      %1506 = vmatpush.bf16.msra.mxu0 %v1041
      %1507 = vmatpush.bf16.msra.mxu0 %v1039
      %1508 = vmatpush.bf16.msra.mxu0 %v1037
      %1509 = vmatpush.bf16.msra.mxu0 %v1035
      %1510 = vmatpush.bf16.msra.mxu0 %v1033
      %1511 = vmatmul.bf16.gmra.mxu0 %v359
      %v1512 = vpop.f32.mrf.mxu0
      %v1513 = vadd.f32 %v1494, %v1512
      %v1514 = vpop.f32.mrf.mxu0
      %v1515 = vadd.f32 %v1496, %v1514
      %1516 = vmatmul.bf16.gmra.mxu0 %v365
      %v1517 = vpop.f32.mrf.mxu0
      %v1518 = vadd.f32 %v1499, %v1517
      %v1519 = vpop.f32.mrf.mxu0
      %v1520 = vadd.f32 %v1501, %v1519
      %1521 = vdwg.mxu0
      %1522 = vmatpush.bf16.msra.mxu0 %v1063
      %1523 = vmatpush.bf16.msra.mxu0 %v1061
      %1524 = vmatpush.bf16.msra.mxu0 %v1059
      %1525 = vmatpush.bf16.msra.mxu0 %v1057
      %1526 = vmatpush.bf16.msra.mxu0 %v1055
      %1527 = vmatpush.bf16.msra.mxu0 %v1053
      %1528 = vmatpush.bf16.msra.mxu0 %v1051
      %1529 = vmatpush.bf16.msra.mxu0 %v1049
      %1530 = vmatmul.bf16.gmra.mxu0 %v371
      %v1531 = vpop.f32.mrf.mxu0
      %v1532 = vadd.f32 %v1513, %v1531
      %v1533 = vpop.f32.mrf.mxu0
      %v1534 = vadd.f32 %v1515, %v1533
      %1535 = vmatmul.bf16.gmra.mxu0 %v373
      %v1536 = vpop.f32.mrf.mxu0
      %v1537 = vadd.f32 %v1518, %v1536
      %v1538 = vpop.f32.mrf.mxu0
      %v1539 = vadd.f32 %v1520, %v1538
      %1540 = vdwg.mxu0
      %1541 = vmatpush.bf16.msra.mxu0 %v1079
      %1542 = vmatpush.bf16.msra.mxu0 %v1077
      %1543 = vmatpush.bf16.msra.mxu0 %v1075
      %1544 = vmatpush.bf16.msra.mxu0 %v1073
      %1545 = vmatpush.bf16.msra.mxu0 %v1071
      %1546 = vmatpush.bf16.msra.mxu0 %v1069
      %1547 = vmatpush.bf16.msra.mxu0 %v1067
      %1548 = vmatpush.bf16.msra.mxu0 %v1065
      %1549 = vmatmul.bf16.gmra.mxu0 %v299
      %v1550 = vpop.f32.mrf.mxu0
      %v1551 = vadd.f32 %v1532, %v1550
      %v1552 = vpop.f32.mrf.mxu0
      %v1553 = vadd.f32 %v1534, %v1552
      %1554 = vmatmul.bf16.gmra.mxu0 %v310
      %v1555 = vpop.f32.mrf.mxu0
      %v1556 = vadd.f32 %v1537, %v1555
      %v1557 = vpop.f32.mrf.mxu0
      %v1558 = vadd.f32 %v1539, %v1557
      %1559 = vdwg.mxu0
      %1560 = vmatpush.bf16.msra.mxu0 %v1095
      %1561 = vmatpush.bf16.msra.mxu0 %v1093
      %1562 = vmatpush.bf16.msra.mxu0 %v1091
      %1563 = vmatpush.bf16.msra.mxu0 %v1089
      %1564 = vmatpush.bf16.msra.mxu0 %v1087
      %1565 = vmatpush.bf16.msra.mxu0 %v1085
      %1566 = vmatpush.bf16.msra.mxu0 %v1083
      %1567 = vmatpush.bf16.msra.mxu0 %v1081
      %1568 = vmatmul.bf16.gmra.mxu0 %v333
      %v1569 = vpop.f32.mrf.mxu0
      %v1570 = vadd.f32 %v1551, %v1569
      %v1571 = vpop.f32.mrf.mxu0
      %v1572 = vadd.f32 %v1553, %v1571
      %1573 = vmatmul.bf16.gmra.mxu0 %v381
      %v1574 = vpop.f32.mrf.mxu0
      %v1575 = vadd.f32 %v1556, %v1574
      %v1576 = vpop.f32.mrf.mxu0
      %v1577 = vadd.f32 %v1558, %v1576
      %1578 = vdwg.mxu0
      %1579 = vmatpush.bf16.msra.mxu0 %v1111
      %1580 = vmatpush.bf16.msra.mxu0 %v1109
      %1581 = vmatpush.bf16.msra.mxu0 %v1107
      %1582 = vmatpush.bf16.msra.mxu0 %v1105
      %1583 = vmatpush.bf16.msra.mxu0 %v1103
      %1584 = vmatpush.bf16.msra.mxu0 %v1101
      %1585 = vmatpush.bf16.msra.mxu0 %v1099
      %1586 = vmatpush.bf16.msra.mxu0 %v1097
      %1587 = vmatmul.bf16.gmra.mxu0 %v341
      %v1588 = vpop.f32.mrf.mxu0
      %v1589 = vadd.f32 %v1570, %v1588
      %v1590 = vpop.f32.mrf.mxu0
      %v1591 = vadd.f32 %v1572, %v1590
      %1592 = vmatmul.bf16.gmra.mxu0 %v384
      %v1593 = vpop.f32.mrf.mxu0
      %v1594 = vadd.f32 %v1575, %v1593
      %v1595 = vpop.f32.mrf.mxu0
      %v1596 = vadd.f32 %v1577, %v1595
      %1597 = vdwg.mxu0
      %v1598 = vmax.f32 %v1418, 0.0
      %v1599 = vmax.f32 %v1589, 0.0
      %v1600 = vmax.f32 %v1420, 0.0
      %v1601 = vmax.f32 %v1591, 0.0
      %v1602 = vmax.f32 %v1423, 0.0
      %v1603 = vmax.f32 %v1594, 0.0
      %v1604 = vmax.f32 %v1425, 0.0
      %v1605 = vmax.f32 %v1596, 0.0
      %v1606 = vpack.c.bf16 %v1599, %v1598
      %v1607 = vpack.c.bf16 %v1601, %v1600
      %v1608 = vpack.c.bf16 %v1603, %v1602
      %v1609 = vpack.c.bf16 %v1605, %v1604
      %1610 = vst [vmem:[%s280] sm:$0xff] %v1606
      %1611 = vst [vmem:[%s280 + $0x8] sm:$0xff] %v1607
      %1612 = vst [vmem:[%s280 + $0x10] sm:$0xff] %v1608
      %1613 = vst [vmem:[%s280 + $0x18] sm:$0xff] %v1609
      %s1614 = smul.u32 4, %s20
      %p1615 = scmp.lt.s32.totalorder %s19, 1
      %s1616 = scalar_select %p1615, %s19, 1
      %p1617 = scmp.lt.s32.totalorder %s1614, 3
      %s1618 = scalar_select %p1617, %s1614, 3
      %s1619 = smul.addr %s1618, 2
      %s1620 = smul.addr %s1616, 8
      %s1621 = sadd.s32 %s1619, %s1620
      %s1622 = smul.addr %s1621, 4
      %s1623 = scalar_lea.vmem %s4, %s1622
      // Predicated region
      $region37: #{vgg19_slice1.9} parent=35 // pred_check
        %p1624 = pneg %p147
      $region38: #{vgg19_slice1.9} parent=35 // pred_check_branch
        %1626 = sbr.rel (%p1624) target = $region40
      $region39: #{vgg19_slice1.9} parent=35 // pred_region
        %s1627 = smul.u32 4, %s20
      $region40: #{vgg19_slice1.9} parent=35 // pred_fallthru
        _
    $region36: #{vgg19_slice1.9} parent=5 // pred_fallthru
      _
    %p1628 = scmp.le.s32.totalorder 2, %s10
    // Predicated region
    $region41: #{vgg19_slice1.9} parent=5 // pred_check
      %p1629 = pneg %p1628
    $region42: #{vgg19_slice1.9} parent=5 // pred_check_branch
      %1631 = sbr.rel (%p1629) target = $region44
    $region43: #{vgg19_slice1.9} parent=5 // pred_region
      %s1632 = ssub.s32 %s10, 2
      // Predicated region
      $region45: #{vgg19_slice1.9} parent=43 // pred_check
        %p1633 = pneg %p153
      $region46: #{vgg19_slice1.9} parent=43 // pred_check_branch
        %1635 = sbr.rel (%p1633) target = $region48
      $region47: #{vgg19_slice1.9} parent=43 // pred_region
        %s1636 = smul.u32 4, %s22
        %p1637 = scmp.lt.s32.totalorder %s21, 1
        %s1638 = scalar_select %p1637, %s21, 1
        %p1639 = scmp.lt.s32.totalorder %s1636, 3
        %s1640 = scalar_select %p1639, %s1636, 3
        %s1641 = smul.addr %s1640, 2
        %s1642 = smul.addr %s1638, 8
        %s1643 = sadd.s32 %s1641, %s1642
        %s1644 = smul.addr %s1643, 4
        %s1645 = scalar_lea.vmem %s4, %s1644
      $region48: #{vgg19_slice1.9} parent=43 // pred_fallthru
        _
    $region44: #{vgg19_slice1.9} parent=5 // pred_fallthru
      _
  $region6: #{vgg19_slice1.9} parent=0 // loop_footer
    %s14 = sadd.s32 1, %s10
  $region7: #{vgg19_slice1.9} parent=0 // loop_footer_branch
    %9 = sbr.rel target = $region3
  $region8: #{vgg19_slice1.9} parent=0 // loop_exit
    _

</llo_original>
